<compile_context>
chip_gen: v7x
topology: tpu7x:2x2x1
jax: 0.10.0
libtpu: 0.0.40
codegen_flags: <defaults>
</compile_context>

<pallas_src>
import functools

import jax
import jax.numpy as jnp
from jax import lax
from jax.experimental import pallas as pl
from jax.experimental.pallas import tpu as pltpu


# ----------------------------------------------------------------------------
# Row-tiled (N, K) @ (K, M) + bias kernel (bf16 operands, f32 acc).  Used for
# the final fc layer only (input projection is folded into the embedding).
# ----------------------------------------------------------------------------
def matmul_bias_kernel(x_ref, w_ref, b_ref, o_ref):
    o_ref[...] = (jnp.dot(x_ref[...], w_ref[...],
                          preferred_element_type=jnp.float32)
                  + b_ref[...]).astype(o_ref.dtype)


def _row_tile(n, k, m, budget_bytes=8 * 1024 * 1024):
    """Largest row tile (divisor of n) whose double-buffered windows fit."""
    candidates = [t for t in (n, 1024, 512, 256, 128, 64, 32, 16, 8)
                  if t <= n and n % t == 0]
    weights = k * m * 2 + m * 4                      # resident W (bf16) + b (f32)
    for t in candidates:
        need = 2 * (t * k * 2 + t * m * 4) + weights  # dbl-buffered x + out
        if need <= budget_bytes:
            return t
    return candidates[-1]


def matmul_bias(x, w, b, *, out_dtype=jnp.float32):
    """x: (N, K) bf16, w: (K, M) bf16, b: (1, M) f32 -> (N, M)."""
    N, K = x.shape
    M = w.shape[1]
    tn = _row_tile(N, K, M)
    return pl.pallas_call(
        matmul_bias_kernel,
        grid=(N // tn,),
        in_specs=[
            pl.BlockSpec((tn, K), lambda i: (i, 0)),
            pl.BlockSpec((K, M), lambda i: (0, 0)),
            pl.BlockSpec((1, M), lambda i: (0, 0)),
        ],
        out_specs=pl.BlockSpec((tn, M), lambda i: (i, 0)),
        out_shape=jax.ShapeDtypeStruct((N, M), out_dtype),
        compiler_params=pltpu.CompilerParams(
            dimension_semantics=("parallel",),
            vmem_limit_bytes=32 * 1024 * 1024),
    )(x, w, b)


# ----------------------------------------------------------------------------
# Fused 2-layer LSTM kernel.  grid axis 0 = time chunks ("arbitrary").
# Layer-0 input gates (incl. folded bias) are precomputed via the embedding
# table; per step only the serially dependent matmuls remain.
# ----------------------------------------------------------------------------
def fused_lstm_kernel(gx1_ref, whh0_ref, wih1_ref, whh1_ref, b1_ref,
                      h01_ref, c01_ref, h02_ref, c02_ref,
                      y_ref, hn1_ref, cn1_ref, hn2_ref, cn2_ref,
                      h1_scr, c1_scr, h2_scr, c2_scr):
    chunk = pl.program_id(0)
    t_chunk = gx1_ref.shape[0]
    H = h1_scr.shape[-1]

    @pl.when(chunk == 0)
    def _():
        h1_scr[...] = h01_ref[...]
        c1_scr[...] = c01_ref[...]
        h2_scr[...] = h02_ref[...]
        c2_scr[...] = c02_ref[...]

    whh0 = whh0_ref[...]             # (H, 4H)  bf16, resident for the chunk
    wih1 = wih1_ref[...]             # (H, 4H)  bf16
    whh1 = whh1_ref[...]             # (H, 4H)  bf16
    b1 = b1_ref[...]                 # (1, 4H)  f32

    def cell(gates, c_prev):
        # Reordered [i, f, o, g] layout -> 1 wide sigmoid + 1 tanh push.
        sig = jax.nn.sigmoid(gates[:, :3 * H])
        g_g = jnp.tanh(gates[:, 3 * H:])
        i_g = sig[:, 0 * H:1 * H]
        f_g = sig[:, 1 * H:2 * H]
        o_g = sig[:, 2 * H:3 * H]
        c_new = f_g * c_prev + i_g * g_g
        h_new = o_g * jnp.tanh(c_new)
        return h_new, c_new

    def step(t, carry):
        h1, c1, h2, c2 = carry
        # Independent prev-state matmuls issued back-to-back (MXU pipelines).
        g1_h = jnp.dot(h1.astype(jnp.bfloat16), whh0,
                       preferred_element_type=jnp.float32)
        g2_h = jnp.dot(h2.astype(jnp.bfloat16), whh1,
                       preferred_element_type=jnp.float32)
        # layer 0: input gates (+ folded biases) precomputed in gx1.
        h1, c1 = cell(gx1_ref[t] + g1_h, c1)
        # layer 1: only h1_t @ W_ih1 sits after cell 0 on the serial path.
        g2 = g2_h + jnp.dot(h1.astype(jnp.bfloat16), wih1,
                            preferred_element_type=jnp.float32) + b1
        h2, c2 = cell(g2, c2)
        y_ref[t] = h2.astype(y_ref.dtype)
        return h1, c1, h2, c2

    carry = (h1_scr[...], c1_scr[...], h2_scr[...], c2_scr[...])
    if t_chunk <= 16:
        # Short chunk: trace-time unroll (full LLO scheduler visibility).
        for t in range(t_chunk):
            carry = step(t, carry)
    else:
        # Long chunk: bounded live ranges, partial unroll.
        carry = lax.fori_loop(0, t_chunk, step, carry, unroll=4)
    h1, c1, h2, c2 = carry

    h1_scr[...] = h1
    c1_scr[...] = c1
    h2_scr[...] = h2
    c2_scr[...] = c2

    @pl.when(chunk == pl.num_programs(0) - 1)
    def _():
        hn1_ref[...] = h1
        cn1_ref[...] = c1
        hn2_ref[...] = h2
        cn2_ref[...] = c2


def _pick_t_chunk(T, B, H, budget_bytes=24 * 1024 * 1024):
    """Largest divisor of T whose double-buffered gx1/y chunks + weights fit.
    Budget conservative enough for v7x's 64 MiB VMEM; v5e/v6e have headroom."""
    weights = 3 * H * 4 * H * 2 + 4 * H * 4
    state = 8 * B * H * 4
    best = 1
    for tc in range(1, T + 1):
        if T % tc:
            continue
        need = 2 * (tc * B * 4 * H * 4 + tc * B * H * 2) + weights + state
        if need <= budget_bytes:
            best = tc
    return best


def fused_lstm(gx1, whh0_t, wih1_t, whh1_t, b1, h01, c01, h02, c02, *, t_chunk):
    """gx1: (T, B, 4H) f32 precomputed layer-0 input gates.
    Returns y (T, B, H) bf16 and final (h, c) per layer in f32."""
    T, B, G = gx1.shape
    H = whh0_t.shape[0]
    assert T % t_chunk == 0, "t_chunk must divide T"
    n_chunks = T // t_chunk

    state_spec = lambda: pl.BlockSpec((B, H), lambda c: (0, 0))
    return pl.pallas_call(
        fused_lstm_kernel,
        grid=(n_chunks,),
        in_specs=[
            pl.BlockSpec((t_chunk, B, G), lambda c: (c, 0, 0)),   # gx1 chunk
            pl.BlockSpec((H, G), lambda c: (0, 0)),               # W_hh0^T
            pl.BlockSpec((H, G), lambda c: (0, 0)),               # W_ih1^T
            pl.BlockSpec((H, G), lambda c: (0, 0)),               # W_hh1^T
            pl.BlockSpec((1, G), lambda c: (0, 0)),               # b1 folded
            state_spec(), state_spec(), state_spec(), state_spec(),
        ],
        out_specs=[
            pl.BlockSpec((t_chunk, B, H), lambda c: (c, 0, 0)),   # y chunk
            state_spec(), state_spec(), state_spec(), state_spec(),
        ],
        out_shape=[
            jax.ShapeDtypeStruct((T, B, H), jnp.bfloat16),
            jax.ShapeDtypeStruct((B, H), jnp.float32),
            jax.ShapeDtypeStruct((B, H), jnp.float32),
            jax.ShapeDtypeStruct((B, H), jnp.float32),
            jax.ShapeDtypeStruct((B, H), jnp.float32),
        ],
        scratch_shapes=[pltpu.VMEM((B, H), jnp.float32)] * 4,
        compiler_params=pltpu.CompilerParams(
            dimension_semantics=("arbitrary",),                   # recurrent
            vmem_limit_bytes=32 * 1024 * 1024),
    )(gx1, whh0_t, wih1_t, whh1_t, b1, h01, c01, h02, c02)


# ----------------------------------------------------------------------------
# Full RNN.forward
# ----------------------------------------------------------------------------
@functools.partial(jax.jit, static_argnames=("vocab_size", "t_chunk"))
def rnn_forward(tokens, h0_all, c0_all, params, *, vocab_size, t_chunk=None):
    # Layer-0 input projection is folded into the embedding table: one gather
    # (plain JAX glue, same as the original embedding lookup), no matmul.
    gx1 = params["emb_gates"][tokens]                  # (B, T, 4H) f32
    gx1 = jnp.transpose(gx1, (1, 0, 2))                # (T, B, 4H)
    T, B, G = gx1.shape
    H = G // 4
    if t_chunk is None:
        t_chunk = _pick_t_chunk(T, B, H)

    # Fused two-layer recurrent kernel.
    y, hn1, cn1, hn2, cn2 = fused_lstm(
        gx1, params["w_hh_0_t"], params["w_ih_1_t"], params["w_hh_1_t"],
        params["b_1"], h0_all[0], c0_all[0], h0_all[1], c0_all[1],
        t_chunk=t_chunk)

    # fc on a lane-dense padded vocab dim; slice back to V outside the kernel.
    lstm_out = jnp.transpose(y, (1, 0, 2)).reshape(B * T, H)     # (B*T, H) bf16
    out_pad = matmul_bias(lstm_out, params["fc_w_pad"], params["fc_b_pad"])
    out = out_pad[:, :vocab_size]

    hidden = (jnp.stack([hn1, hn2], axis=0), jnp.stack([cn1, cn2], axis=0))
    return out, hidden


# ----------------------------------------------------------------------------
# Parameter packing: PyTorch-layout f32 masters -> kernel layout.
#   * gate reorder [i, f, g, o] -> [i, f, o, g]
#   * layer-0 input projection + folded biases baked into the embedding table
#   * bf16 matmul operands, transposed weights, lane-padded fc
# ----------------------------------------------------------------------------
def _reorder_gates(x, H):
    """PyTorch [i, f, g, o] -> [i, f, o, g] along the leading 4H axis."""
    return jnp.concatenate(
        [x[0 * H:1 * H], x[1 * H:2 * H], x[3 * H:4 * H], x[2 * H:3 * H]],
        axis=0)


def prepare_params(master, vocab_size, hidden_dim):
    H, V = hidden_dim, vocab_size
    v_pad = ((V + 127) // 128) * 128
    p = {}

    # Layer 0: fold x @ W_ih0^T + (b_ih0 + b_hh0) into the embedding (f32, once).
    w_ih0 = _reorder_gates(master["w_ih_0"], H)                     # (4H, E)
    b0 = _reorder_gates(master["b_ih_0"] + master["b_hh_0"], H)     # (4H,)
    p["emb_gates"] = master["embedding"] @ w_ih0.T + b0[None, :]    # (V, 4H) f32
    p["w_hh_0_t"] = _reorder_gates(master["w_hh_0"], H).T.astype(jnp.bfloat16)

    # Layer 1: keep W_ih and W_hh separate (no per-step concat in the kernel).
    p["w_ih_1_t"] = _reorder_gates(master["w_ih_1"], H).T.astype(jnp.bfloat16)
    p["w_hh_1_t"] = _reorder_gates(master["w_hh_1"], H).T.astype(jnp.bfloat16)
    p["b_1"] = _reorder_gates(master["b_ih_1"] + master["b_hh_1"],
                              H).reshape(1, 4 * H).astype(jnp.float32)

    # fc, padded to a lane-dense vocab dim.
    p["fc_w_pad"] = jnp.zeros((H, v_pad), jnp.bfloat16).at[:, :V].set(
        master["fc_w"].T.astype(jnp.bfloat16))
    p["fc_b_pad"] = jnp.zeros((1, v_pad), jnp.float32).at[:, :V].set(
        master["fc_b"][None, :])
    return p


# ----------------------------------------------------------------------------
# Pure-JAX f32 reference (PyTorch semantics) for correctness checking.
# ----------------------------------------------------------------------------
def rnn_forward_ref(tokens, h0_all, c0_all, master):
    emb = master["embedding"][tokens]
    x = jnp.transpose(emb, (1, 0, 2))                              # (T, B, E)
    num_layers = h0_all.shape[0]
    hs, cs = [], []
    for layer in range(num_layers):
        w_ih = master[f"w_ih_{layer}"]                             # (4H, in)
        w_hh = master[f"w_hh_{layer}"]                             # (4H, H)
        b = master[f"b_ih_{layer}"] + master[f"b_hh_{layer}"]
        H = w_hh.shape[1]

        def step(carry, x_t, w_ih=w_ih, w_hh=w_hh, b=b, H=H):
            h, c = carry
            gates = x_t @ w_ih.T + h @ w_hh.T + b
            i = jax.nn.sigmoid(gates[:, 0 * H:1 * H])
            f = jax.nn.sigmoid(gates[:, 1 * H:2 * H])
            g = jnp.tanh(gates[:, 2 * H:3 * H])
            o = jax.nn.sigmoid(gates[:, 3 * H:4 * H])
            c_new = f * c + i * g
            h_new = o * jnp.tanh(c_new)
            return (h_new, c_new), h_new

        (hn, cn), ys = jax.lax.scan(step, (h0_all[layer], c0_all[layer]), x)
        x = ys
        hs.append(hn)
        cs.append(cn)
    lstm_out = jnp.transpose(x, (1, 0, 2))
    B, T, H = lstm_out.shape
    out = lstm_out.reshape(B * T, H) @ master["fc_w"].T + master["fc_b"]
    return out, (jnp.stack(hs, axis=0), jnp.stack(cs, axis=0))


if __name__ == "__main__":
    # Small shapes consistent with the module (hidden scaled down 512 -> 128).
    vocab_size = 90
    embedding_dim = 8
    hidden_dim = 128
    num_layers = 2
    batch = 8
    seq = 16

    key = jax.random.PRNGKey(0)
    keys = jax.random.split(key, 20)

    def init(k, shape, scale=0.1):
        return (scale * jax.random.normal(k, shape)).astype(jnp.float32)

    master = {"embedding": init(keys[0], (vocab_size, embedding_dim))}
    ki = 1
    for layer in range(num_layers):
        in_dim = embedding_dim if layer == 0 else hidden_dim
        master[f"w_ih_{layer}"] = init(keys[ki], (4 * hidden_dim, in_dim)); ki += 1
        master[f"w_hh_{layer}"] = init(keys[ki], (4 * hidden_dim, hidden_dim)); ki += 1
        master[f"b_ih_{layer}"] = init(keys[ki], (4 * hidden_dim,)); ki += 1
        master[f"b_hh_{layer}"] = init(keys[ki], (4 * hidden_dim,)); ki += 1
    master["fc_w"] = init(keys[ki], (vocab_size, hidden_dim)); ki += 1
    master["fc_b"] = init(keys[ki], (vocab_size,)); ki += 1

    params = prepare_params(master, vocab_size, hidden_dim)

    tokens = jax.random.randint(keys[19], (batch, seq), 0, vocab_size,
                                dtype=jnp.int32)

    # init_hidden equivalent
    h0 = jnp.zeros((num_layers, batch, hidden_dim), jnp.float32)
    c0 = jnp.zeros((num_layers, batch, hidden_dim), jnp.float32)

    out, (hn, cn) = rnn_forward(tokens, h0, c0, params, vocab_size=vocab_size)
    jax.block_until_ready((out, hn, cn))

    # Correctness check vs pure-JAX f32 reference (bf16 matmul operands in the
    # Pallas path -> loosened tolerances).
    out_r, (hn_r, cn_r) = rnn_forward_ref(tokens, h0, c0, master)
    assert out.shape == (batch * seq, vocab_size)
    assert hn.shape == (num_layers, batch, hidden_dim)
    assert cn.shape == (num_layers, batch, hidden_dim)
    assert jnp.allclose(out, out_r, atol=2e-2, rtol=2e-2)
    assert jnp.allclose(hn, hn_r, atol=2e-2, rtol=2e-2)
    assert jnp.allclose(cn, cn_r, atol=2e-2, rtol=2e-2)

    print("KERNEL_OK")
</pallas_src>

<mosaic_0001>
module attributes {stable_mosaic.version = 11 : i64} {
  func.func @matmul_bias_kernel(%arg0: i32, %arg1: memref<128x128xbf16, #tpu.memory_space<vmem>>, %arg2: memref<128x128xbf16, #tpu.memory_space<vmem>>, %arg3: memref<1x128xf32, #tpu.memory_space<vmem>>, %arg4: memref<128x128xf32, #tpu.memory_space<vmem>>) attributes {dimension_semantics = [#tpu.dimension_semantics<parallel>], iteration_bounds = array<i64: 1>, scalar_prefetch = 0 : i64, scratch_operands = 0 : i64, tpu.core_type = #tpu.core_type<tc>, window_params = [{transform_indices = @transform_0, window_bounds = array<i64: 128, 128>}, {pipeline_mode = #tpu.pipeline_mode<synchronous>, transform_indices = @transform_1, window_bounds = array<i64: 128, 128>}, {pipeline_mode = #tpu.pipeline_mode<synchronous>, transform_indices = @transform_2, window_bounds = array<i64: 1, 128>}, {transform_indices = @transform_3, window_bounds = array<i64: 128, 128>}]} {
    %c0 = arith.constant 0 : index
    %c0_0 = arith.constant 0 : index
    %0 = vector.load %arg1[%c0, %c0_0] : memref<128x128xbf16, #tpu.memory_space<vmem>>, vector<128x128xbf16>
    %c0_1 = arith.constant 0 : index
    %c0_2 = arith.constant 0 : index
    %1 = vector.load %arg2[%c0_1, %c0_2] : memref<128x128xbf16, #tpu.memory_space<vmem>>, vector<128x128xbf16>
    %cst = arith.constant dense<0.000000e+00> : vector<128x128xf32>
    %2 = tpu.matmul %0, %1, %cst {dimension_numbers = #tpu.dot_dimension_numbers<[1], [0], [0], [1], [0, 0, 1, 1], [], []>} : vector<128x128xbf16>, vector<128x128xbf16>, vector<128x128xf32> -> vector<128x128xf32>
    %c0_3 = arith.constant 0 : index
    %c0_4 = arith.constant 0 : index
    %3 = vector.load %arg3[%c0_3, %c0_4] : memref<1x128xf32, #tpu.memory_space<vmem>>, vector<1x128xf32>
    %4 = vector.broadcast %3 : vector<1x128xf32> to vector<128x128xf32>
    %5 = arith.addf %2, %4 : vector<128x128xf32>
    %c0_5 = arith.constant 0 : index
    %c0_6 = arith.constant 0 : index
    %6 = vector.load %arg4[%c0_5, %c0_6] : memref<128x128xf32, #tpu.memory_space<vmem>>, vector<128x128xf32>
    tpu.vector_store %arg4[%c0_5, %c0_6], %5 {strides = array<i32>} : memref<128x128xf32, #tpu.memory_space<vmem>>, vector<128x128xf32>,
    return
  }
  func.func @transform_0(%arg0: i32) -> (i32, i32) {
    %c0_i32 = arith.constant 0 : i32
    %c0_i32_0 = arith.constant 0 : i32
    return %arg0, %c0_i32 : i32, i32
  }
  func.func @transform_1(%arg0: i32) -> (i32, i32) {
    %c0_i32 = arith.constant 0 : i32
    %c0_i32_0 = arith.constant 0 : i32
    %c0_i32_1 = arith.constant 0 : i32
    return %c0_i32, %c0_i32_0 : i32, i32
  }
  func.func @transform_2(%arg0: i32) -> (i32, i32) {
    %c0_i32 = arith.constant 0 : i32
    %c0_i32_0 = arith.constant 0 : i32
    %c0_i32_1 = arith.constant 0 : i32
    return %c0_i32, %c0_i32_0 : i32, i32
  }
  func.func @transform_3(%arg0: i32) -> (i32, i32) {
    %c0_i32 = arith.constant 0 : i32
    %c0_i32_0 = arith.constant 0 : i32
    return %arg0, %c0_i32 : i32, i32
  }
}

module attributes {stable_mosaic.version = 11 : i64} {
  func.func @fused_lstm_kernel(%arg0: i32, %arg1: memref<16x8x512xf32, #tpu.memory_space<vmem>>, %arg2: memref<128x512xbf16, #tpu.memory_space<vmem>>, %arg3: memref<128x512xbf16, #tpu.memory_space<vmem>>, %arg4: memref<128x512xbf16, #tpu.memory_space<vmem>>, %arg5: memref<1x512xf32, #tpu.memory_space<vmem>>, %arg6: memref<8x128xf32, #tpu.memory_space<vmem>>, %arg7: memref<8x128xf32, #tpu.memory_space<vmem>>, %arg8: memref<8x128xf32, #tpu.memory_space<vmem>>, %arg9: memref<8x128xf32, #tpu.memory_space<vmem>>, %arg10: memref<16x8x128xbf16, #tpu.memory_space<vmem>>, %arg11: memref<8x128xf32, #tpu.memory_space<vmem>>, %arg12: memref<8x128xf32, #tpu.memory_space<vmem>>, %arg13: memref<8x128xf32, #tpu.memory_space<vmem>>, %arg14: memref<8x128xf32, #tpu.memory_space<vmem>>, %arg15: memref<8x128xf32, #tpu.memory_space<vmem>>, %arg16: memref<8x128xf32, #tpu.memory_space<vmem>>, %arg17: memref<8x128xf32, #tpu.memory_space<vmem>>, %arg18: memref<8x128xf32, #tpu.memory_space<vmem>>) attributes {dimension_semantics = [#tpu.dimension_semantics<arbitrary>], iteration_bounds = array<i64: 1>, scalar_prefetch = 0 : i64, scratch_operands = 4 : i64, tpu.core_type = #tpu.core_type<tc>, window_params = [{transform_indices = @transform_0, window_bounds = array<i64: 16, 8, 512>}, {pipeline_mode = #tpu.pipeline_mode<synchronous>, transform_indices = @transform_1, window_bounds = array<i64: 128, 512>}, {pipeline_mode = #tpu.pipeline_mode<synchronous>, transform_indices = @transform_2, window_bounds = array<i64: 128, 512>}, {pipeline_mode = #tpu.pipeline_mode<synchronous>, transform_indices = @transform_3, window_bounds = array<i64: 128, 512>}, {pipeline_mode = #tpu.pipeline_mode<synchronous>, transform_indices = @transform_4, window_bounds = array<i64: 1, 512>}, {pipeline_mode = #tpu.pipeline_mode<synchronous>, transform_indices = @transform_5, window_bounds = array<i64: 8, 128>}, {pipeline_mode = #tpu.pipeline_mode<synchronous>, transform_indices = @transform_6, window_bounds = array<i64: 8, 128>}, {pipeline_mode = #tpu.pipeline_mode<synchronous>, transform_indices = @transform_7, window_bounds = array<i64: 8, 128>}, {pipeline_mode = #tpu.pipeline_mode<synchronous>, transform_indices = @transform_8, window_bounds = array<i64: 8, 128>}, {transform_indices = @transform_9, window_bounds = array<i64: 16, 8, 128>}, {pipeline_mode = #tpu.pipeline_mode<synchronous>, transform_indices = @transform_10, window_bounds = array<i64: 8, 128>}, {pipeline_mode = #tpu.pipeline_mode<synchronous>, transform_indices = @transform_11, window_bounds = array<i64: 8, 128>}, {pipeline_mode = #tpu.pipeline_mode<synchronous>, transform_indices = @transform_12, window_bounds = array<i64: 8, 128>}, {pipeline_mode = #tpu.pipeline_mode<synchronous>, transform_indices = @transform_13, window_bounds = array<i64: 8, 128>}]} {
    %c0_i32 = arith.constant 0 : i32
    %0 = arith.cmpi eq, %arg0, %c0_i32 : i32
    %1 = arith.extui %0 : i1 to i32
    %c0_i32_0 = arith.constant 0 : i32
    %2 = arith.cmpi ne, %1, %c0_i32_0 : i32
    scf.if %2 {
      %c0_186 = arith.constant 0 : index
      %c0_187 = arith.constant 0 : index
      %786 = vector.load %arg6[%c0_186, %c0_187] : memref<8x128xf32, #tpu.memory_space<vmem>>, vector<8x128xf32>
      %c0_188 = arith.constant 0 : index
      %c0_189 = arith.constant 0 : index
      %787 = vector.load %arg15[%c0_188, %c0_189] : memref<8x128xf32, #tpu.memory_space<vmem>>, vector<8x128xf32>
      tpu.vector_store %arg15[%c0_188, %c0_189], %786 {strides = array<i32>} : memref<8x128xf32, #tpu.memory_space<vmem>>, vector<8x128xf32>,
      %c0_190 = arith.constant 0 : index
      %c0_191 = arith.constant 0 : index
      %788 = vector.load %arg7[%c0_190, %c0_191] : memref<8x128xf32, #tpu.memory_space<vmem>>, vector<8x128xf32>
      %c0_192 = arith.constant 0 : index
      %c0_193 = arith.constant 0 : index
      %789 = vector.load %arg16[%c0_192, %c0_193] : memref<8x128xf32, #tpu.memory_space<vmem>>, vector<8x128xf32>
      tpu.vector_store %arg16[%c0_192, %c0_193], %788 {strides = array<i32>} : memref<8x128xf32, #tpu.memory_space<vmem>>, vector<8x128xf32>,
      %c0_194 = arith.constant 0 : index
      %c0_195 = arith.constant 0 : index
      %790 = vector.load %arg8[%c0_194, %c0_195] : memref<8x128xf32, #tpu.memory_space<vmem>>, vector<8x128xf32>
      %c0_196 = arith.constant 0 : index
      %c0_197 = arith.constant 0 : index
      %791 = vector.load %arg17[%c0_196, %c0_197] : memref<8x128xf32, #tpu.memory_space<vmem>>, vector<8x128xf32>
      tpu.vector_store %arg17[%c0_196, %c0_197], %790 {strides = array<i32>} : memref<8x128xf32, #tpu.memory_space<vmem>>, vector<8x128xf32>,
      %c0_198 = arith.constant 0 : index
      %c0_199 = arith.constant 0 : index
      %792 = vector.load %arg9[%c0_198, %c0_199] : memref<8x128xf32, #tpu.memory_space<vmem>>, vector<8x128xf32>
      %c0_200 = arith.constant 0 : index
      %c0_201 = arith.constant 0 : index
      %793 = vector.load %arg18[%c0_200, %c0_201] : memref<8x128xf32, #tpu.memory_space<vmem>>, vector<8x128xf32>
      tpu.vector_store %arg18[%c0_200, %c0_201], %792 {strides = array<i32>} : memref<8x128xf32, #tpu.memory_space<vmem>>, vector<8x128xf32>,
    } else {
    }
    %c0 = arith.constant 0 : index
    %c0_1 = arith.constant 0 : index
    %3 = vector.load %arg2[%c0, %c0_1] : memref<128x512xbf16, #tpu.memory_space<vmem>>, vector<128x512xbf16>
    %c0_2 = arith.constant 0 : index
    %c0_3 = arith.constant 0 : index
    %4 = vector.load %arg3[%c0_2, %c0_3] : memref<128x512xbf16, #tpu.memory_space<vmem>>, vector<128x512xbf16>
    %c0_4 = arith.constant 0 : index
    %c0_5 = arith.constant 0 : index
    %5 = vector.load %arg4[%c0_4, %c0_5] : memref<128x512xbf16, #tpu.memory_space<vmem>>, vector<128x512xbf16>
    %c0_6 = arith.constant 0 : index
    %c0_7 = arith.constant 0 : index
    %6 = vector.load %arg5[%c0_6, %c0_7] : memref<1x512xf32, #tpu.memory_space<vmem>>, vector<1x512xf32>
    %c0_8 = arith.constant 0 : index
    %c0_9 = arith.constant 0 : index
    %7 = vector.load %arg15[%c0_8, %c0_9] : memref<8x128xf32, #tpu.memory_space<vmem>>, vector<8x128xf32>
    %c0_10 = arith.constant 0 : index
    %c0_11 = arith.constant 0 : index
    %8 = vector.load %arg16[%c0_10, %c0_11] : memref<8x128xf32, #tpu.memory_space<vmem>>, vector<8x128xf32>
    %c0_12 = arith.constant 0 : index
    %c0_13 = arith.constant 0 : index
    %9 = vector.load %arg17[%c0_12, %c0_13] : memref<8x128xf32, #tpu.memory_space<vmem>>, vector<8x128xf32>
    %c0_14 = arith.constant 0 : index
    %c0_15 = arith.constant 0 : index
    %10 = vector.load %arg18[%c0_14, %c0_15] : memref<8x128xf32, #tpu.memory_space<vmem>>, vector<8x128xf32>
    %11 = arith.truncf %7 : vector<8x128xf32> to vector<8x128xbf16>
    %cst = arith.constant dense<0.000000e+00> : vector<8x512xf32>
    %12 = tpu.matmul %11, %3, %cst {dimension_numbers = #tpu.dot_dimension_numbers<[1], [0], [0], [1], [0, 0, 1, 1], [], []>} : vector<8x128xbf16>, vector<128x512xbf16>, vector<8x512xf32> -> vector<8x512xf32>
    %13 = arith.truncf %9 : vector<8x128xf32> to vector<8x128xbf16>
    %cst_16 = arith.constant dense<0.000000e+00> : vector<8x512xf32>
    %14 = tpu.matmul %13, %5, %cst_16 {dimension_numbers = #tpu.dot_dimension_numbers<[1], [0], [0], [1], [0, 0, 1, 1], [], []>} : vector<8x128xbf16>, vector<128x512xbf16>, vector<8x512xf32> -> vector<8x512xf32>
    %c0_17 = arith.constant 0 : index
    %c0_18 = arith.constant 0 : index
    %c0_19 = arith.constant 0 : index
    %15 = vector.load %arg1[%c0_17, %c0_18, %c0_19] : memref<16x8x512xf32, #tpu.memory_space<vmem>>, vector<1x8x512xf32>
    %16 = vector.shape_cast %15 : vector<1x8x512xf32> to vector<8x512xf32>
    %17 = arith.addf %16, %12 : vector<8x512xf32>
    %18 = vector.extract_strided_slice %17 {offsets = [0, 0], sizes = [8, 384], strides = [1, 1]} : vector<8x512xf32> to vector<8x384xf32>
    %19 = arith.negf %18 : vector<8x384xf32>
    %20 = math.exp %19 : vector<8x384xf32>
    %cst_20 = arith.constant 1.000000e+00 : f32
    %21 = vector.broadcast %cst_20 : f32 to vector<8x384xf32>
    %22 = arith.addf %21, %20 : vector<8x384xf32>
    %23 = arith.divf %21, %22 : vector<8x384xf32>
    %24 = vector.extract_strided_slice %17 {offsets = [0, 384], sizes = [8, 128], strides = [1, 1]} : vector<8x512xf32> to vector<8x128xf32>
    %25 = math.tanh %24 : vector<8x128xf32>
    %26 = vector.extract_strided_slice %23 {offsets = [0, 0], sizes = [8, 128], strides = [1, 1]} : vector<8x384xf32> to vector<8x128xf32>
    %27 = vector.extract_strided_slice %23 {offsets = [0, 128], sizes = [8, 128], strides = [1, 1]} : vector<8x384xf32> to vector<8x128xf32>
    %28 = vector.extract_strided_slice %23 {offsets = [0, 256], sizes = [8, 128], strides = [1, 1]} : vector<8x384xf32> to vector<8x128xf32>
    %29 = arith.mulf %27, %8 : vector<8x128xf32>
    %30 = arith.mulf %26, %25 : vector<8x128xf32>
    %31 = arith.addf %29, %30 : vector<8x128xf32>
    %32 = math.tanh %31 : vector<8x128xf32>
    %33 = arith.mulf %28, %32 : vector<8x128xf32>
    %34 = arith.truncf %33 : vector<8x128xf32> to vector<8x128xbf16>
    %cst_21 = arith.constant dense<0.000000e+00> : vector<8x512xf32>
    %35 = tpu.matmul %34, %4, %cst_21 {dimension_numbers = #tpu.dot_dimension_numbers<[1], [0], [0], [1], [0, 0, 1, 1], [], []>} : vector<8x128xbf16>, vector<128x512xbf16>, vector<8x512xf32> -> vector<8x512xf32>
    %36 = arith.addf %14, %35 : vector<8x512xf32>
    %37 = vector.broadcast %6 : vector<1x512xf32> to vector<8x512xf32>
    %38 = arith.addf %36, %37 : vector<8x512xf32>
    %39 = vector.extract_strided_slice %38 {offsets = [0, 0], sizes = [8, 384], strides = [1, 1]} : vector<8x512xf32> to vector<8x384xf32>
    %40 = arith.negf %39 : vector<8x384xf32>
    %41 = math.exp %40 : vector<8x384xf32>
    %cst_22 = arith.constant 1.000000e+00 : f32
    %42 = vector.broadcast %cst_22 : f32 to vector<8x384xf32>
    %43 = arith.addf %42, %41 : vector<8x384xf32>
    %44 = arith.divf %42, %43 : vector<8x384xf32>
    %45 = vector.extract_strided_slice %38 {offsets = [0, 384], sizes = [8, 128], strides = [1, 1]} : vector<8x512xf32> to vector<8x128xf32>
    %46 = math.tanh %45 : vector<8x128xf32>
    %47 = vector.extract_strided_slice %44 {offsets = [0, 0], sizes = [8, 128], strides = [1, 1]} : vector<8x384xf32> to vector<8x128xf32>
    %48 = vector.extract_strided_slice %44 {offsets = [0, 128], sizes = [8, 128], strides = [1, 1]} : vector<8x384xf32> to vector<8x128xf32>
    %49 = vector.extract_strided_slice %44 {offsets = [0, 256], sizes = [8, 128], strides = [1, 1]} : vector<8x384xf32> to vector<8x128xf32>
    %50 = arith.mulf %48, %10 : vector<8x128xf32>
    %51 = arith.mulf %47, %46 : vector<8x128xf32>
    %52 = arith.addf %50, %51 : vector<8x128xf32>
    %53 = math.tanh %52 : vector<8x128xf32>
    %54 = arith.mulf %49, %53 : vector<8x128xf32>
    %55 = arith.truncf %54 : vector<8x128xf32> to vector<8x128xbf16>
    %c0_23 = arith.constant 0 : index
    %c0_24 = arith.constant 0 : index
    %c0_25 = arith.constant 0 : index
    %56 = vector.load %arg10[%c0_23, %c0_24, %c0_25] : memref<16x8x128xbf16, #tpu.memory_space<vmem>>, vector<1x8x128xbf16>
    %57 = vector.shape_cast %56 : vector<1x8x128xbf16> to vector<8x128xbf16>
    %58 = vector.shape_cast %55 : vector<8x128xbf16> to vector<1x8x128xbf16>
    tpu.vector_store %arg10[%c0_23, %c0_24, %c0_25], %58 {strides = array<i32>} : memref<16x8x128xbf16, #tpu.memory_space<vmem>>, vector<1x8x128xbf16>,
    %59 = arith.truncf %33 : vector<8x128xf32> to vector<8x128xbf16>
    %cst_26 = arith.constant dense<0.000000e+00> : vector<8x512xf32>
    %60 = tpu.matmul %59, %3, %cst_26 {dimension_numbers = #tpu.dot_dimension_numbers<[1], [0], [0], [1], [0, 0, 1, 1], [], []>} : vector<8x128xbf16>, vector<128x512xbf16>, vector<8x512xf32> -> vector<8x512xf32>
    %61 = arith.truncf %54 : vector<8x128xf32> to vector<8x128xbf16>
    %cst_27 = arith.constant dense<0.000000e+00> : vector<8x512xf32>
    %62 = tpu.matmul %61, %5, %cst_27 {dimension_numbers = #tpu.dot_dimension_numbers<[1], [0], [0], [1], [0, 0, 1, 1], [], []>} : vector<8x128xbf16>, vector<128x512xbf16>, vector<8x512xf32> -> vector<8x512xf32>
    %c1 = arith.constant 1 : index
    %c0_28 = arith.constant 0 : index
    %c0_29 = arith.constant 0 : index
    %63 = vector.load %arg1[%c1, %c0_28, %c0_29] : memref<16x8x512xf32, #tpu.memory_space<vmem>>, vector<1x8x512xf32>
    %64 = vector.shape_cast %63 : vector<1x8x512xf32> to vector<8x512xf32>
    %65 = arith.addf %64, %60 : vector<8x512xf32>
    %66 = vector.extract_strided_slice %65 {offsets = [0, 0], sizes = [8, 384], strides = [1, 1]} : vector<8x512xf32> to vector<8x384xf32>
    %67 = arith.negf %66 : vector<8x384xf32>
    %68 = math.exp %67 : vector<8x384xf32>
    %cst_30 = arith.constant 1.000000e+00 : f32
    %69 = vector.broadcast %cst_30 : f32 to vector<8x384xf32>
    %70 = arith.addf %69, %68 : vector<8x384xf32>
    %71 = arith.divf %69, %70 : vector<8x384xf32>
    %72 = vector.extract_strided_slice %65 {offsets = [0, 384], sizes = [8, 128], strides = [1, 1]} : vector<8x512xf32> to vector<8x128xf32>
    %73 = math.tanh %72 : vector<8x128xf32>
    %74 = vector.extract_strided_slice %71 {offsets = [0, 0], sizes = [8, 128], strides = [1, 1]} : vector<8x384xf32> to vector<8x128xf32>
    %75 = vector.extract_strided_slice %71 {offsets = [0, 128], sizes = [8, 128], strides = [1, 1]} : vector<8x384xf32> to vector<8x128xf32>
    %76 = vector.extract_strided_slice %71 {offsets = [0, 256], sizes = [8, 128], strides = [1, 1]} : vector<8x384xf32> to vector<8x128xf32>
    %77 = arith.mulf %75, %31 : vector<8x128xf32>
    %78 = arith.mulf %74, %73 : vector<8x128xf32>
    %79 = arith.addf %77, %78 : vector<8x128xf32>
    %80 = math.tanh %79 : vector<8x128xf32>
    %81 = arith.mulf %76, %80 : vector<8x128xf32>
    %82 = arith.truncf %81 : vector<8x128xf32> to vector<8x128xbf16>
    %cst_31 = arith.constant dense<0.000000e+00> : vector<8x512xf32>
    %83 = tpu.matmul %82, %4, %cst_31 {dimension_numbers = #tpu.dot_dimension_numbers<[1], [0], [0], [1], [0, 0, 1, 1], [], []>} : vector<8x128xbf16>, vector<128x512xbf16>, vector<8x512xf32> -> vector<8x512xf32>
    %84 = arith.addf %62, %83 : vector<8x512xf32>
    %85 = vector.broadcast %6 : vector<1x512xf32> to vector<8x512xf32>
    %86 = arith.addf %84, %85 : vector<8x512xf32>
    %87 = vector.extract_strided_slice %86 {offsets = [0, 0], sizes = [8, 384], strides = [1, 1]} : vector<8x512xf32> to vector<8x384xf32>
    %88 = arith.negf %87 : vector<8x384xf32>
    %89 = math.exp %88 : vector<8x384xf32>
    %cst_32 = arith.constant 1.000000e+00 : f32
    %90 = vector.broadcast %cst_32 : f32 to vector<8x384xf32>
    %91 = arith.addf %90, %89 : vector<8x384xf32>
    %92 = arith.divf %90, %91 : vector<8x384xf32>
    %93 = vector.extract_strided_slice %86 {offsets = [0, 384], sizes = [8, 128], strides = [1, 1]} : vector<8x512xf32> to vector<8x128xf32>
    %94 = math.tanh %93 : vector<8x128xf32>
    %95 = vector.extract_strided_slice %92 {offsets = [0, 0], sizes = [8, 128], strides = [1, 1]} : vector<8x384xf32> to vector<8x128xf32>
    %96 = vector.extract_strided_slice %92 {offsets = [0, 128], sizes = [8, 128], strides = [1, 1]} : vector<8x384xf32> to vector<8x128xf32>
    %97 = vector.extract_strided_slice %92 {offsets = [0, 256], sizes = [8, 128], strides = [1, 1]} : vector<8x384xf32> to vector<8x128xf32>
    %98 = arith.mulf %96, %52 : vector<8x128xf32>
    %99 = arith.mulf %95, %94 : vector<8x128xf32>
    %100 = arith.addf %98, %99 : vector<8x128xf32>
    %101 = math.tanh %100 : vector<8x128xf32>
    %102 = arith.mulf %97, %101 : vector<8x128xf32>
    %103 = arith.truncf %102 : vector<8x128xf32> to vector<8x128xbf16>
    %c1_33 = arith.constant 1 : index
    %c0_34 = arith.constant 0 : index
    %c0_35 = arith.constant 0 : index
    %104 = vector.load %arg10[%c1_33, %c0_34, %c0_35] : memref<16x8x128xbf16, #tpu.memory_space<vmem>>, vector<1x8x128xbf16>
    %105 = vector.shape_cast %104 : vector<1x8x128xbf16> to vector<8x128xbf16>
    %106 = vector.shape_cast %103 : vector<8x128xbf16> to vector<1x8x128xbf16>
    tpu.vector_store %arg10[%c1_33, %c0_34, %c0_35], %106 {strides = array<i32>} : memref<16x8x128xbf16, #tpu.memory_space<vmem>>, vector<1x8x128xbf16>,
    %107 = arith.truncf %81 : vector<8x128xf32> to vector<8x128xbf16>
    %cst_36 = arith.constant dense<0.000000e+00> : vector<8x512xf32>
    %108 = tpu.matmul %107, %3, %cst_36 {dimension_numbers = #tpu.dot_dimension_numbers<[1], [0], [0], [1], [0, 0, 1, 1], [], []>} : vector<8x128xbf16>, vector<128x512xbf16>, vector<8x512xf32> -> vector<8x512xf32>
    %109 = arith.truncf %102 : vector<8x128xf32> to vector<8x128xbf16>
    %cst_37 = arith.constant dense<0.000000e+00> : vector<8x512xf32>
    %110 = tpu.matmul %109, %5, %cst_37 {dimension_numbers = #tpu.dot_dimension_numbers<[1], [0], [0], [1], [0, 0, 1, 1], [], []>} : vector<8x128xbf16>, vector<128x512xbf16>, vector<8x512xf32> -> vector<8x512xf32>
    %c2 = arith.constant 2 : index
    %c0_38 = arith.constant 0 : index
    %c0_39 = arith.constant 0 : index
    %111 = vector.load %arg1[%c2, %c0_38, %c0_39] : memref<16x8x512xf32, #tpu.memory_space<vmem>>, vector<1x8x512xf32>
    %112 = vector.shape_cast %111 : vector<1x8x512xf32> to vector<8x512xf32>
    %113 = arith.addf %112, %108 : vector<8x512xf32>
    %114 = vector.extract_strided_slice %113 {offsets = [0, 0], sizes = [8, 384], strides = [1, 1]} : vector<8x512xf32> to vector<8x384xf32>
    %115 = arith.negf %114 : vector<8x384xf32>
    %116 = math.exp %115 : vector<8x384xf32>
    %cst_40 = arith.constant 1.000000e+00 : f32
    %117 = vector.broadcast %cst_40 : f32 to vector<8x384xf32>
    %118 = arith.addf %117, %116 : vector<8x384xf32>
    %119 = arith.divf %117, %118 : vector<8x384xf32>
    %120 = vector.extract_strided_slice %113 {offsets = [0, 384], sizes = [8, 128], strides = [1, 1]} : vector<8x512xf32> to vector<8x128xf32>
    %121 = math.tanh %120 : vector<8x128xf32>
    %122 = vector.extract_strided_slice %119 {offsets = [0, 0], sizes = [8, 128], strides = [1, 1]} : vector<8x384xf32> to vector<8x128xf32>
    %123 = vector.extract_strided_slice %119 {offsets = [0, 128], sizes = [8, 128], strides = [1, 1]} : vector<8x384xf32> to vector<8x128xf32>
    %124 = vector.extract_strided_slice %119 {offsets = [0, 256], sizes = [8, 128], strides = [1, 1]} : vector<8x384xf32> to vector<8x128xf32>
    %125 = arith.mulf %123, %79 : vector<8x128xf32>
    %126 = arith.mulf %122, %121 : vector<8x128xf32>
    %127 = arith.addf %125, %126 : vector<8x128xf32>
    %128 = math.tanh %127 : vector<8x128xf32>
    %129 = arith.mulf %124, %128 : vector<8x128xf32>
    %130 = arith.truncf %129 : vector<8x128xf32> to vector<8x128xbf16>
    %cst_41 = arith.constant dense<0.000000e+00> : vector<8x512xf32>
    %131 = tpu.matmul %130, %4, %cst_41 {dimension_numbers = #tpu.dot_dimension_numbers<[1], [0], [0], [1], [0, 0, 1, 1], [], []>} : vector<8x128xbf16>, vector<128x512xbf16>, vector<8x512xf32> -> vector<8x512xf32>
    %132 = arith.addf %110, %131 : vector<8x512xf32>
    %133 = vector.broadcast %6 : vector<1x512xf32> to vector<8x512xf32>
    %134 = arith.addf %132, %133 : vector<8x512xf32>
    %135 = vector.extract_strided_slice %134 {offsets = [0, 0], sizes = [8, 384], strides = [1, 1]} : vector<8x512xf32> to vector<8x384xf32>
    %136 = arith.negf %135 : vector<8x384xf32>
    %137 = math.exp %136 : vector<8x384xf32>
    %cst_42 = arith.constant 1.000000e+00 : f32
    %138 = vector.broadcast %cst_42 : f32 to vector<8x384xf32>
    %139 = arith.addf %138, %137 : vector<8x384xf32>
    %140 = arith.divf %138, %139 : vector<8x384xf32>
    %141 = vector.extract_strided_slice %134 {offsets = [0, 384], sizes = [8, 128], strides = [1, 1]} : vector<8x512xf32> to vector<8x128xf32>
    %142 = math.tanh %141 : vector<8x128xf32>
    %143 = vector.extract_strided_slice %140 {offsets = [0, 0], sizes = [8, 128], strides = [1, 1]} : vector<8x384xf32> to vector<8x128xf32>
    %144 = vector.extract_strided_slice %140 {offsets = [0, 128], sizes = [8, 128], strides = [1, 1]} : vector<8x384xf32> to vector<8x128xf32>
    %145 = vector.extract_strided_slice %140 {offsets = [0, 256], sizes = [8, 128], strides = [1, 1]} : vector<8x384xf32> to vector<8x128xf32>
    %146 = arith.mulf %144, %100 : vector<8x128xf32>
    %147 = arith.mulf %143, %142 : vector<8x128xf32>
    %148 = arith.addf %146, %147 : vector<8x128xf32>
    %149 = math.tanh %148 : vector<8x128xf32>
    %150 = arith.mulf %145, %149 : vector<8x128xf32>
    %151 = arith.truncf %150 : vector<8x128xf32> to vector<8x128xbf16>
    %c2_43 = arith.constant 2 : index
    %c0_44 = arith.constant 0 : index
    %c0_45 = arith.constant 0 : index
    %152 = vector.load %arg10[%c2_43, %c0_44, %c0_45] : memref<16x8x128xbf16, #tpu.memory_space<vmem>>, vector<1x8x128xbf16>
    %153 = vector.shape_cast %152 : vector<1x8x128xbf16> to vector<8x128xbf16>
    %154 = vector.shape_cast %151 : vector<8x128xbf16> to vector<1x8x128xbf16>
    tpu.vector_store %arg10[%c2_43, %c0_44, %c0_45], %154 {strides = array<i32>} : memref<16x8x128xbf16, #tpu.memory_space<vmem>>, vector<1x8x128xbf16>,
    %155 = arith.truncf %129 : vector<8x128xf32> to vector<8x128xbf16>
    %cst_46 = arith.constant dense<0.000000e+00> : vector<8x512xf32>
    %156 = tpu.matmul %155, %3, %cst_46 {dimension_numbers = #tpu.dot_dimension_numbers<[1], [0], [0], [1], [0, 0, 1, 1], [], []>} : vector<8x128xbf16>, vector<128x512xbf16>, vector<8x512xf32> -> vector<8x512xf32>
    %157 = arith.truncf %150 : vector<8x128xf32> to vector<8x128xbf16>
    %cst_47 = arith.constant dense<0.000000e+00> : vector<8x512xf32>
    %158 = tpu.matmul %157, %5, %cst_47 {dimension_numbers = #tpu.dot_dimension_numbers<[1], [0], [0], [1], [0, 0, 1, 1], [], []>} : vector<8x128xbf16>, vector<128x512xbf16>, vector<8x512xf32> -> vector<8x512xf32>
    %c3 = arith.constant 3 : index
    %c0_48 = arith.constant 0 : index
    %c0_49 = arith.constant 0 : index
    %159 = vector.load %arg1[%c3, %c0_48, %c0_49] : memref<16x8x512xf32, #tpu.memory_space<vmem>>, vector<1x8x512xf32>
    %160 = vector.shape_cast %159 : vector<1x8x512xf32> to vector<8x512xf32>
    %161 = arith.addf %160, %156 : vector<8x512xf32>
    %162 = vector.extract_strided_slice %161 {offsets = [0, 0], sizes = [8, 384], strides = [1, 1]} : vector<8x512xf32> to vector<8x384xf32>
    %163 = arith.negf %162 : vector<8x384xf32>
    %164 = math.exp %163 : vector<8x384xf32>
    %cst_50 = arith.constant 1.000000e+00 : f32
    %165 = vector.broadcast %cst_50 : f32 to vector<8x384xf32>
    %166 = arith.addf %165, %164 : vector<8x384xf32>
    %167 = arith.divf %165, %166 : vector<8x384xf32>
    %168 = vector.extract_strided_slice %161 {offsets = [0, 384], sizes = [8, 128], strides = [1, 1]} : vector<8x512xf32> to vector<8x128xf32>
    %169 = math.tanh %168 : vector<8x128xf32>
    %170 = vector.extract_strided_slice %167 {offsets = [0, 0], sizes = [8, 128], strides = [1, 1]} : vector<8x384xf32> to vector<8x128xf32>
    %171 = vector.extract_strided_slice %167 {offsets = [0, 128], sizes = [8, 128], strides = [1, 1]} : vector<8x384xf32> to vector<8x128xf32>
    %172 = vector.extract_strided_slice %167 {offsets = [0, 256], sizes = [8, 128], strides = [1, 1]} : vector<8x384xf32> to vector<8x128xf32>
    %173 = arith.mulf %171, %127 : vector<8x128xf32>
    %174 = arith.mulf %170, %169 : vector<8x128xf32>
    %175 = arith.addf %173, %174 : vector<8x128xf32>
    %176 = math.tanh %175 : vector<8x128xf32>
    %177 = arith.mulf %172, %176 : vector<8x128xf32>
    %178 = arith.truncf %177 : vector<8x128xf32> to vector<8x128xbf16>
    %cst_51 = arith.constant dense<0.000000e+00> : vector<8x512xf32>
    %179 = tpu.matmul %178, %4, %cst_51 {dimension_numbers = #tpu.dot_dimension_numbers<[1], [0], [0], [1], [0, 0, 1, 1], [], []>} : vector<8x128xbf16>, vector<128x512xbf16>, vector<8x512xf32> -> vector<8x512xf32>
    %180 = arith.addf %158, %179 : vector<8x512xf32>
    %181 = vector.broadcast %6 : vector<1x512xf32> to vector<8x512xf32>
    %182 = arith.addf %180, %181 : vector<8x512xf32>
    %183 = vector.extract_strided_slice %182 {offsets = [0, 0], sizes = [8, 384], strides = [1, 1]} : vector<8x512xf32> to vector<8x384xf32>
    %184 = arith.negf %183 : vector<8x384xf32>
    %185 = math.exp %184 : vector<8x384xf32>
    %cst_52 = arith.constant 1.000000e+00 : f32
    %186 = vector.broadcast %cst_52 : f32 to vector<8x384xf32>
    %187 = arith.addf %186, %185 : vector<8x384xf32>
    %188 = arith.divf %186, %187 : vector<8x384xf32>
    %189 = vector.extract_strided_slice %182 {offsets = [0, 384], sizes = [8, 128], strides = [1, 1]} : vector<8x512xf32> to vector<8x128xf32>
    %190 = math.tanh %189 : vector<8x128xf32>
    %191 = vector.extract_strided_slice %188 {offsets = [0, 0], sizes = [8, 128], strides = [1, 1]} : vector<8x384xf32> to vector<8x128xf32>
    %192 = vector.extract_strided_slice %188 {offsets = [0, 128], sizes = [8, 128], strides = [1, 1]} : vector<8x384xf32> to vector<8x128xf32>
    %193 = vector.extract_strided_slice %188 {offsets = [0, 256], sizes = [8, 128], strides = [1, 1]} : vector<8x384xf32> to vector<8x128xf32>
    %194 = arith.mulf %192, %148 : vector<8x128xf32>
    %195 = arith.mulf %191, %190 : vector<8x128xf32>
    %196 = arith.addf %194, %195 : vector<8x128xf32>
    %197 = math.tanh %196 : vector<8x128xf32>
    %198 = arith.mulf %193, %197 : vector<8x128xf32>
    %199 = arith.truncf %198 : vector<8x128xf32> to vector<8x128xbf16>
    %c3_53 = arith.constant 3 : index
    %c0_54 = arith.constant 0 : index
    %c0_55 = arith.constant 0 : index
    %200 = vector.load %arg10[%c3_53, %c0_54, %c0_55] : memref<16x8x128xbf16, #tpu.memory_space<vmem>>, vector<1x8x128xbf16>
    %201 = vector.shape_cast %200 : vector<1x8x128xbf16> to vector<8x128xbf16>
    %202 = vector.shape_cast %199 : vector<8x128xbf16> to vector<1x8x128xbf16>
    tpu.vector_store %arg10[%c3_53, %c0_54, %c0_55], %202 {strides = array<i32>} : memref<16x8x128xbf16, #tpu.memory_space<vmem>>, vector<1x8x128xbf16>,
    %203 = arith.truncf %177 : vector<8x128xf32> to vector<8x128xbf16>
    %cst_56 = arith.constant dense<0.000000e+00> : vector<8x512xf32>
    %204 = tpu.matmul %203, %3, %cst_56 {dimension_numbers = #tpu.dot_dimension_numbers<[1], [0], [0], [1], [0, 0, 1, 1], [], []>} : vector<8x128xbf16>, vector<128x512xbf16>, vector<8x512xf32> -> vector<8x512xf32>
    %205 = arith.truncf %198 : vector<8x128xf32> to vector<8x128xbf16>
    %cst_57 = arith.constant dense<0.000000e+00> : vector<8x512xf32>
    %206 = tpu.matmul %205, %5, %cst_57 {dimension_numbers = #tpu.dot_dimension_numbers<[1], [0], [0], [1], [0, 0, 1, 1], [], []>} : vector<8x128xbf16>, vector<128x512xbf16>, vector<8x512xf32> -> vector<8x512xf32>
    %c4 = arith.constant 4 : index
    %c0_58 = arith.constant 0 : index
    %c0_59 = arith.constant 0 : index
    %207 = vector.load %arg1[%c4, %c0_58, %c0_59] : memref<16x8x512xf32, #tpu.memory_space<vmem>>, vector<1x8x512xf32>
    %208 = vector.shape_cast %207 : vector<1x8x512xf32> to vector<8x512xf32>
    %209 = arith.addf %208, %204 : vector<8x512xf32>
    %210 = vector.extract_strided_slice %209 {offsets = [0, 0], sizes = [8, 384], strides = [1, 1]} : vector<8x512xf32> to vector<8x384xf32>
    %211 = arith.negf %210 : vector<8x384xf32>
    %212 = math.exp %211 : vector<8x384xf32>
    %cst_60 = arith.constant 1.000000e+00 : f32
    %213 = vector.broadcast %cst_60 : f32 to vector<8x384xf32>
    %214 = arith.addf %213, %212 : vector<8x384xf32>
    %215 = arith.divf %213, %214 : vector<8x384xf32>
    %216 = vector.extract_strided_slice %209 {offsets = [0, 384], sizes = [8, 128], strides = [1, 1]} : vector<8x512xf32> to vector<8x128xf32>
    %217 = math.tanh %216 : vector<8x128xf32>
    %218 = vector.extract_strided_slice %215 {offsets = [0, 0], sizes = [8, 128], strides = [1, 1]} : vector<8x384xf32> to vector<8x128xf32>
    %219 = vector.extract_strided_slice %215 {offsets = [0, 128], sizes = [8, 128], strides = [1, 1]} : vector<8x384xf32> to vector<8x128xf32>
    %220 = vector.extract_strided_slice %215 {offsets = [0, 256], sizes = [8, 128], strides = [1, 1]} : vector<8x384xf32> to vector<8x128xf32>
    %221 = arith.mulf %219, %175 : vector<8x128xf32>
    %222 = arith.mulf %218, %217 : vector<8x128xf32>
    %223 = arith.addf %221, %222 : vector<8x128xf32>
    %224 = math.tanh %223 : vector<8x128xf32>
    %225 = arith.mulf %220, %224 : vector<8x128xf32>
    %226 = arith.truncf %225 : vector<8x128xf32> to vector<8x128xbf16>
    %cst_61 = arith.constant dense<0.000000e+00> : vector<8x512xf32>
    %227 = tpu.matmul %226, %4, %cst_61 {dimension_numbers = #tpu.dot_dimension_numbers<[1], [0], [0], [1], [0, 0, 1, 1], [], []>} : vector<8x128xbf16>, vector<128x512xbf16>, vector<8x512xf32> -> vector<8x512xf32>
    %228 = arith.addf %206, %227 : vector<8x512xf32>
    %229 = vector.broadcast %6 : vector<1x512xf32> to vector<8x512xf32>
    %230 = arith.addf %228, %229 : vector<8x512xf32>
    %231 = vector.extract_strided_slice %230 {offsets = [0, 0], sizes = [8, 384], strides = [1, 1]} : vector<8x512xf32> to vector<8x384xf32>
    %232 = arith.negf %231 : vector<8x384xf32>
    %233 = math.exp %232 : vector<8x384xf32>
    %cst_62 = arith.constant 1.000000e+00 : f32
    %234 = vector.broadcast %cst_62 : f32 to vector<8x384xf32>
    %235 = arith.addf %234, %233 : vector<8x384xf32>
    %236 = arith.divf %234, %235 : vector<8x384xf32>
    %237 = vector.extract_strided_slice %230 {offsets = [0, 384], sizes = [8, 128], strides = [1, 1]} : vector<8x512xf32> to vector<8x128xf32>
    %238 = math.tanh %237 : vector<8x128xf32>
    %239 = vector.extract_strided_slice %236 {offsets = [0, 0], sizes = [8, 128], strides = [1, 1]} : vector<8x384xf32> to vector<8x128xf32>
    %240 = vector.extract_strided_slice %236 {offsets = [0, 128], sizes = [8, 128], strides = [1, 1]} : vector<8x384xf32> to vector<8x128xf32>
    %241 = vector.extract_strided_slice %236 {offsets = [0, 256], sizes = [8, 128], strides = [1, 1]} : vector<8x384xf32> to vector<8x128xf32>
    %242 = arith.mulf %240, %196 : vector<8x128xf32>
    %243 = arith.mulf %239, %238 : vector<8x128xf32>
    %244 = arith.addf %242, %243 : vector<8x128xf32>
    %245 = math.tanh %244 : vector<8x128xf32>
    %246 = arith.mulf %241, %245 : vector<8x128xf32>
    %247 = arith.truncf %246 : vector<8x128xf32> to vector<8x128xbf16>
    %c4_63 = arith.constant 4 : index
    %c0_64 = arith.constant 0 : index
    %c0_65 = arith.constant 0 : index
    %248 = vector.load %arg10[%c4_63, %c0_64, %c0_65] : memref<16x8x128xbf16, #tpu.memory_space<vmem>>, vector<1x8x128xbf16>
    %249 = vector.shape_cast %248 : vector<1x8x128xbf16> to vector<8x128xbf16>
    %250 = vector.shape_cast %247 : vector<8x128xbf16> to vector<1x8x128xbf16>
    tpu.vector_store %arg10[%c4_63, %c0_64, %c0_65], %250 {strides = array<i32>} : memref<16x8x128xbf16, #tpu.memory_space<vmem>>, vector<1x8x128xbf16>,
    %251 = arith.truncf %225 : vector<8x128xf32> to vector<8x128xbf16>
    %cst_66 = arith.constant dense<0.000000e+00> : vector<8x512xf32>
    %252 = tpu.matmul %251, %3, %cst_66 {dimension_numbers = #tpu.dot_dimension_numbers<[1], [0], [0], [1], [0, 0, 1, 1], [], []>} : vector<8x128xbf16>, vector<128x512xbf16>, vector<8x512xf32> -> vector<8x512xf32>
    %253 = arith.truncf %246 : vector<8x128xf32> to vector<8x128xbf16>
    %cst_67 = arith.constant dense<0.000000e+00> : vector<8x512xf32>
    %254 = tpu.matmul %253, %5, %cst_67 {dimension_numbers = #tpu.dot_dimension_numbers<[1], [0], [0], [1], [0, 0, 1, 1], [], []>} : vector<8x128xbf16>, vector<128x512xbf16>, vector<8x512xf32> -> vector<8x512xf32>
    %c5 = arith.constant 5 : index
    %c0_68 = arith.constant 0 : index
    %c0_69 = arith.constant 0 : index
    %255 = vector.load %arg1[%c5, %c0_68, %c0_69] : memref<16x8x512xf32, #tpu.memory_space<vmem>>, vector<1x8x512xf32>
    %256 = vector.shape_cast %255 : vector<1x8x512xf32> to vector<8x512xf32>
    %257 = arith.addf %256, %252 : vector<8x512xf32>
    %258 = vector.extract_strided_slice %257 {offsets = [0, 0], sizes = [8, 384], strides = [1, 1]} : vector<8x512xf32> to vector<8x384xf32>
    %259 = arith.negf %258 : vector<8x384xf32>
    %260 = math.exp %259 : vector<8x384xf32>
    %cst_70 = arith.constant 1.000000e+00 : f32
    %261 = vector.broadcast %cst_70 : f32 to vector<8x384xf32>
    %262 = arith.addf %261, %260 : vector<8x384xf32>
    %263 = arith.divf %261, %262 : vector<8x384xf32>
    %264 = vector.extract_strided_slice %257 {offsets = [0, 384], sizes = [8, 128], strides = [1, 1]} : vector<8x512xf32> to vector<8x128xf32>
    %265 = math.tanh %264 : vector<8x128xf32>
    %266 = vector.extract_strided_slice %263 {offsets = [0, 0], sizes = [8, 128], strides = [1, 1]} : vector<8x384xf32> to vector<8x128xf32>
    %267 = vector.extract_strided_slice %263 {offsets = [0, 128], sizes = [8, 128], strides = [1, 1]} : vector<8x384xf32> to vector<8x128xf32>
    %268 = vector.extract_strided_slice %263 {offsets = [0, 256], sizes = [8, 128], strides = [1, 1]} : vector<8x384xf32> to vector<8x128xf32>
    %269 = arith.mulf %267, %223 : vector<8x128xf32>
    %270 = arith.mulf %266, %265 : vector<8x128xf32>
    %271 = arith.addf %269, %270 : vector<8x128xf32>
    %272 = math.tanh %271 : vector<8x128xf32>
    %273 = arith.mulf %268, %272 : vector<8x128xf32>
    %274 = arith.truncf %273 : vector<8x128xf32> to vector<8x128xbf16>
    %cst_71 = arith.constant dense<0.000000e+00> : vector<8x512xf32>
    %275 = tpu.matmul %274, %4, %cst_71 {dimension_numbers = #tpu.dot_dimension_numbers<[1], [0], [0], [1], [0, 0, 1, 1], [], []>} : vector<8x128xbf16>, vector<128x512xbf16>, vector<8x512xf32> -> vector<8x512xf32>
    %276 = arith.addf %254, %275 : vector<8x512xf32>
    %277 = vector.broadcast %6 : vector<1x512xf32> to vector<8x512xf32>
    %278 = arith.addf %276, %277 : vector<8x512xf32>
    %279 = vector.extract_strided_slice %278 {offsets = [0, 0], sizes = [8, 384], strides = [1, 1]} : vector<8x512xf32> to vector<8x384xf32>
    %280 = arith.negf %279 : vector<8x384xf32>
    %281 = math.exp %280 : vector<8x384xf32>
    %cst_72 = arith.constant 1.000000e+00 : f32
    %282 = vector.broadcast %cst_72 : f32 to vector<8x384xf32>
    %283 = arith.addf %282, %281 : vector<8x384xf32>
    %284 = arith.divf %282, %283 : vector<8x384xf32>
    %285 = vector.extract_strided_slice %278 {offsets = [0, 384], sizes = [8, 128], strides = [1, 1]} : vector<8x512xf32> to vector<8x128xf32>
    %286 = math.tanh %285 : vector<8x128xf32>
    %287 = vector.extract_strided_slice %284 {offsets = [0, 0], sizes = [8, 128], strides = [1, 1]} : vector<8x384xf32> to vector<8x128xf32>
    %288 = vector.extract_strided_slice %284 {offsets = [0, 128], sizes = [8, 128], strides = [1, 1]} : vector<8x384xf32> to vector<8x128xf32>
    %289 = vector.extract_strided_slice %284 {offsets = [0, 256], sizes = [8, 128], strides = [1, 1]} : vector<8x384xf32> to vector<8x128xf32>
    %290 = arith.mulf %288, %244 : vector<8x128xf32>
    %291 = arith.mulf %287, %286 : vector<8x128xf32>
    %292 = arith.addf %290, %291 : vector<8x128xf32>
    %293 = math.tanh %292 : vector<8x128xf32>
    %294 = arith.mulf %289, %293 : vector<8x128xf32>
    %295 = arith.truncf %294 : vector<8x128xf32> to vector<8x128xbf16>
    %c5_73 = arith.constant 5 : index
    %c0_74 = arith.constant 0 : index
    %c0_75 = arith.constant 0 : index
    %296 = vector.load %arg10[%c5_73, %c0_74, %c0_75] : memref<16x8x128xbf16, #tpu.memory_space<vmem>>, vector<1x8x128xbf16>
    %297 = vector.shape_cast %296 : vector<1x8x128xbf16> to vector<8x128xbf16>
    %298 = vector.shape_cast %295 : vector<8x128xbf16> to vector<1x8x128xbf16>
    tpu.vector_store %arg10[%c5_73, %c0_74, %c0_75], %298 {strides = array<i32>} : memref<16x8x128xbf16, #tpu.memory_space<vmem>>, vector<1x8x128xbf16>,
    %299 = arith.truncf %273 : vector<8x128xf32> to vector<8x128xbf16>
    %cst_76 = arith.constant dense<0.000000e+00> : vector<8x512xf32>
    %300 = tpu.matmul %299, %3, %cst_76 {dimension_numbers = #tpu.dot_dimension_numbers<[1], [0], [0], [1], [0, 0, 1, 1], [], []>} : vector<8x128xbf16>, vector<128x512xbf16>, vector<8x512xf32> -> vector<8x512xf32>
    %301 = arith.truncf %294 : vector<8x128xf32> to vector<8x128xbf16>
    %cst_77 = arith.constant dense<0.000000e+00> : vector<8x512xf32>
    %302 = tpu.matmul %301, %5, %cst_77 {dimension_numbers = #tpu.dot_dimension_numbers<[1], [0], [0], [1], [0, 0, 1, 1], [], []>} : vector<8x128xbf16>, vector<128x512xbf16>, vector<8x512xf32> -> vector<8x512xf32>
    %c6 = arith.constant 6 : index
    %c0_78 = arith.constant 0 : index
    %c0_79 = arith.constant 0 : index
    %303 = vector.load %arg1[%c6, %c0_78, %c0_79] : memref<16x8x512xf32, #tpu.memory_space<vmem>>, vector<1x8x512xf32>
    %304 = vector.shape_cast %303 : vector<1x8x512xf32> to vector<8x512xf32>
    %305 = arith.addf %304, %300 : vector<8x512xf32>
    %306 = vector.extract_strided_slice %305 {offsets = [0, 0], sizes = [8, 384], strides = [1, 1]} : vector<8x512xf32> to vector<8x384xf32>
    %307 = arith.negf %306 : vector<8x384xf32>
    %308 = math.exp %307 : vector<8x384xf32>
    %cst_80 = arith.constant 1.000000e+00 : f32
    %309 = vector.broadcast %cst_80 : f32 to vector<8x384xf32>
    %310 = arith.addf %309, %308 : vector<8x384xf32>
    %311 = arith.divf %309, %310 : vector<8x384xf32>
    %312 = vector.extract_strided_slice %305 {offsets = [0, 384], sizes = [8, 128], strides = [1, 1]} : vector<8x512xf32> to vector<8x128xf32>
    %313 = math.tanh %312 : vector<8x128xf32>
    %314 = vector.extract_strided_slice %311 {offsets = [0, 0], sizes = [8, 128], strides = [1, 1]} : vector<8x384xf32> to vector<8x128xf32>
    %315 = vector.extract_strided_slice %311 {offsets = [0, 128], sizes = [8, 128], strides = [1, 1]} : vector<8x384xf32> to vector<8x128xf32>
    %316 = vector.extract_strided_slice %311 {offsets = [0, 256], sizes = [8, 128], strides = [1, 1]} : vector<8x384xf32> to vector<8x128xf32>
    %317 = arith.mulf %315, %271 : vector<8x128xf32>
    %318 = arith.mulf %314, %313 : vector<8x128xf32>
    %319 = arith.addf %317, %318 : vector<8x128xf32>
    %320 = math.tanh %319 : vector<8x128xf32>
    %321 = arith.mulf %316, %320 : vector<8x128xf32>
    %322 = arith.truncf %321 : vector<8x128xf32> to vector<8x128xbf16>
    %cst_81 = arith.constant dense<0.000000e+00> : vector<8x512xf32>
    %323 = tpu.matmul %322, %4, %cst_81 {dimension_numbers = #tpu.dot_dimension_numbers<[1], [0], [0], [1], [0, 0, 1, 1], [], []>} : vector<8x128xbf16>, vector<128x512xbf16>, vector<8x512xf32> -> vector<8x512xf32>
    %324 = arith.addf %302, %323 : vector<8x512xf32>
    %325 = vector.broadcast %6 : vector<1x512xf32> to vector<8x512xf32>
    %326 = arith.addf %324, %325 : vector<8x512xf32>
    %327 = vector.extract_strided_slice %326 {offsets = [0, 0], sizes = [8, 384], strides = [1, 1]} : vector<8x512xf32> to vector<8x384xf32>
    %328 = arith.negf %327 : vector<8x384xf32>
    %329 = math.exp %328 : vector<8x384xf32>
    %cst_82 = arith.constant 1.000000e+00 : f32
    %330 = vector.broadcast %cst_82 : f32 to vector<8x384xf32>
    %331 = arith.addf %330, %329 : vector<8x384xf32>
    %332 = arith.divf %330, %331 : vector<8x384xf32>
    %333 = vector.extract_strided_slice %326 {offsets = [0, 384], sizes = [8, 128], strides = [1, 1]} : vector<8x512xf32> to vector<8x128xf32>
    %334 = math.tanh %333 : vector<8x128xf32>
    %335 = vector.extract_strided_slice %332 {offsets = [0, 0], sizes = [8, 128], strides = [1, 1]} : vector<8x384xf32> to vector<8x128xf32>
    %336 = vector.extract_strided_slice %332 {offsets = [0, 128], sizes = [8, 128], strides = [1, 1]} : vector<8x384xf32> to vector<8x128xf32>
    %337 = vector.extract_strided_slice %332 {offsets = [0, 256], sizes = [8, 128], strides = [1, 1]} : vector<8x384xf32> to vector<8x128xf32>
    %338 = arith.mulf %336, %292 : vector<8x128xf32>
    %339 = arith.mulf %335, %334 : vector<8x128xf32>
    %340 = arith.addf %338, %339 : vector<8x128xf32>
    %341 = math.tanh %340 : vector<8x128xf32>
    %342 = arith.mulf %337, %341 : vector<8x128xf32>
    %343 = arith.truncf %342 : vector<8x128xf32> to vector<8x128xbf16>
    %c6_83 = arith.constant 6 : index
    %c0_84 = arith.constant 0 : index
    %c0_85 = arith.constant 0 : index
    %344 = vector.load %arg10[%c6_83, %c0_84, %c0_85] : memref<16x8x128xbf16, #tpu.memory_space<vmem>>, vector<1x8x128xbf16>
    %345 = vector.shape_cast %344 : vector<1x8x128xbf16> to vector<8x128xbf16>
    %346 = vector.shape_cast %343 : vector<8x128xbf16> to vector<1x8x128xbf16>
    tpu.vector_store %arg10[%c6_83, %c0_84, %c0_85], %346 {strides = array<i32>} : memref<16x8x128xbf16, #tpu.memory_space<vmem>>, vector<1x8x128xbf16>,
    %347 = arith.truncf %321 : vector<8x128xf32> to vector<8x128xbf16>
    %cst_86 = arith.constant dense<0.000000e+00> : vector<8x512xf32>
    %348 = tpu.matmul %347, %3, %cst_86 {dimension_numbers = #tpu.dot_dimension_numbers<[1], [0], [0], [1], [0, 0, 1, 1], [], []>} : vector<8x128xbf16>, vector<128x512xbf16>, vector<8x512xf32> -> vector<8x512xf32>
    %349 = arith.truncf %342 : vector<8x128xf32> to vector<8x128xbf16>
    %cst_87 = arith.constant dense<0.000000e+00> : vector<8x512xf32>
    %350 = tpu.matmul %349, %5, %cst_87 {dimension_numbers = #tpu.dot_dimension_numbers<[1], [0], [0], [1], [0, 0, 1, 1], [], []>} : vector<8x128xbf16>, vector<128x512xbf16>, vector<8x512xf32> -> vector<8x512xf32>
    %c7 = arith.constant 7 : index
    %c0_88 = arith.constant 0 : index
    %c0_89 = arith.constant 0 : index
    %351 = vector.load %arg1[%c7, %c0_88, %c0_89] : memref<16x8x512xf32, #tpu.memory_space<vmem>>, vector<1x8x512xf32>
    %352 = vector.shape_cast %351 : vector<1x8x512xf32> to vector<8x512xf32>
    %353 = arith.addf %352, %348 : vector<8x512xf32>
    %354 = vector.extract_strided_slice %353 {offsets = [0, 0], sizes = [8, 384], strides = [1, 1]} : vector<8x512xf32> to vector<8x384xf32>
    %355 = arith.negf %354 : vector<8x384xf32>
    %356 = math.exp %355 : vector<8x384xf32>
    %cst_90 = arith.constant 1.000000e+00 : f32
    %357 = vector.broadcast %cst_90 : f32 to vector<8x384xf32>
    %358 = arith.addf %357, %356 : vector<8x384xf32>
    %359 = arith.divf %357, %358 : vector<8x384xf32>
    %360 = vector.extract_strided_slice %353 {offsets = [0, 384], sizes = [8, 128], strides = [1, 1]} : vector<8x512xf32> to vector<8x128xf32>
    %361 = math.tanh %360 : vector<8x128xf32>
    %362 = vector.extract_strided_slice %359 {offsets = [0, 0], sizes = [8, 128], strides = [1, 1]} : vector<8x384xf32> to vector<8x128xf32>
    %363 = vector.extract_strided_slice %359 {offsets = [0, 128], sizes = [8, 128], strides = [1, 1]} : vector<8x384xf32> to vector<8x128xf32>
    %364 = vector.extract_strided_slice %359 {offsets = [0, 256], sizes = [8, 128], strides = [1, 1]} : vector<8x384xf32> to vector<8x128xf32>
    %365 = arith.mulf %363, %319 : vector<8x128xf32>
    %366 = arith.mulf %362, %361 : vector<8x128xf32>
    %367 = arith.addf %365, %366 : vector<8x128xf32>
    %368 = math.tanh %367 : vector<8x128xf32>
    %369 = arith.mulf %364, %368 : vector<8x128xf32>
    %370 = arith.truncf %369 : vector<8x128xf32> to vector<8x128xbf16>
    %cst_91 = arith.constant dense<0.000000e+00> : vector<8x512xf32>
    %371 = tpu.matmul %370, %4, %cst_91 {dimension_numbers = #tpu.dot_dimension_numbers<[1], [0], [0], [1], [0, 0, 1, 1], [], []>} : vector<8x128xbf16>, vector<128x512xbf16>, vector<8x512xf32> -> vector<8x512xf32>
    %372 = arith.addf %350, %371 : vector<8x512xf32>
    %373 = vector.broadcast %6 : vector<1x512xf32> to vector<8x512xf32>
    %374 = arith.addf %372, %373 : vector<8x512xf32>
    %375 = vector.extract_strided_slice %374 {offsets = [0, 0], sizes = [8, 384], strides = [1, 1]} : vector<8x512xf32> to vector<8x384xf32>
    %376 = arith.negf %375 : vector<8x384xf32>
    %377 = math.exp %376 : vector<8x384xf32>
    %cst_92 = arith.constant 1.000000e+00 : f32
    %378 = vector.broadcast %cst_92 : f32 to vector<8x384xf32>
    %379 = arith.addf %378, %377 : vector<8x384xf32>
    %380 = arith.divf %378, %379 : vector<8x384xf32>
    %381 = vector.extract_strided_slice %374 {offsets = [0, 384], sizes = [8, 128], strides = [1, 1]} : vector<8x512xf32> to vector<8x128xf32>
    %382 = math.tanh %381 : vector<8x128xf32>
    %383 = vector.extract_strided_slice %380 {offsets = [0, 0], sizes = [8, 128], strides = [1, 1]} : vector<8x384xf32> to vector<8x128xf32>
    %384 = vector.extract_strided_slice %380 {offsets = [0, 128], sizes = [8, 128], strides = [1, 1]} : vector<8x384xf32> to vector<8x128xf32>
    %385 = vector.extract_strided_slice %380 {offsets = [0, 256], sizes = [8, 128], strides = [1, 1]} : vector<8x384xf32> to vector<8x128xf32>
    %386 = arith.mulf %384, %340 : vector<8x128xf32>
    %387 = arith.mulf %383, %382 : vector<8x128xf32>
    %388 = arith.addf %386, %387 : vector<8x128xf32>
    %389 = math.tanh %388 : vector<8x128xf32>
    %390 = arith.mulf %385, %389 : vector<8x128xf32>
    %391 = arith.truncf %390 : vector<8x128xf32> to vector<8x128xbf16>
    %c7_93 = arith.constant 7 : index
    %c0_94 = arith.constant 0 : index
    %c0_95 = arith.constant 0 : index
    %392 = vector.load %arg10[%c7_93, %c0_94, %c0_95] : memref<16x8x128xbf16, #tpu.memory_space<vmem>>, vector<1x8x128xbf16>
    %393 = vector.shape_cast %392 : vector<1x8x128xbf16> to vector<8x128xbf16>
    %394 = vector.shape_cast %391 : vector<8x128xbf16> to vector<1x8x128xbf16>
    tpu.vector_store %arg10[%c7_93, %c0_94, %c0_95], %394 {strides = array<i32>} : memref<16x8x128xbf16, #tpu.memory_space<vmem>>, vector<1x8x128xbf16>,
    %395 = arith.truncf %369 : vector<8x128xf32> to vector<8x128xbf16>
    %cst_96 = arith.constant dense<0.000000e+00> : vector<8x512xf32>
    %396 = tpu.matmul %395, %3, %cst_96 {dimension_numbers = #tpu.dot_dimension_numbers<[1], [0], [0], [1], [0, 0, 1, 1], [], []>} : vector<8x128xbf16>, vector<128x512xbf16>, vector<8x512xf32> -> vector<8x512xf32>
    %397 = arith.truncf %390 : vector<8x128xf32> to vector<8x128xbf16>
    %cst_97 = arith.constant dense<0.000000e+00> : vector<8x512xf32>
    %398 = tpu.matmul %397, %5, %cst_97 {dimension_numbers = #tpu.dot_dimension_numbers<[1], [0], [0], [1], [0, 0, 1, 1], [], []>} : vector<8x128xbf16>, vector<128x512xbf16>, vector<8x512xf32> -> vector<8x512xf32>
    %c8 = arith.constant 8 : index
    %c0_98 = arith.constant 0 : index
    %c0_99 = arith.constant 0 : index
    %399 = vector.load %arg1[%c8, %c0_98, %c0_99] : memref<16x8x512xf32, #tpu.memory_space<vmem>>, vector<1x8x512xf32>
    %400 = vector.shape_cast %399 : vector<1x8x512xf32> to vector<8x512xf32>
    %401 = arith.addf %400, %396 : vector<8x512xf32>
    %402 = vector.extract_strided_slice %401 {offsets = [0, 0], sizes = [8, 384], strides = [1, 1]} : vector<8x512xf32> to vector<8x384xf32>
    %403 = arith.negf %402 : vector<8x384xf32>
    %404 = math.exp %403 : vector<8x384xf32>
    %cst_100 = arith.constant 1.000000e+00 : f32
    %405 = vector.broadcast %cst_100 : f32 to vector<8x384xf32>
    %406 = arith.addf %405, %404 : vector<8x384xf32>
    %407 = arith.divf %405, %406 : vector<8x384xf32>
    %408 = vector.extract_strided_slice %401 {offsets = [0, 384], sizes = [8, 128], strides = [1, 1]} : vector<8x512xf32> to vector<8x128xf32>
    %409 = math.tanh %408 : vector<8x128xf32>
    %410 = vector.extract_strided_slice %407 {offsets = [0, 0], sizes = [8, 128], strides = [1, 1]} : vector<8x384xf32> to vector<8x128xf32>
    %411 = vector.extract_strided_slice %407 {offsets = [0, 128], sizes = [8, 128], strides = [1, 1]} : vector<8x384xf32> to vector<8x128xf32>
    %412 = vector.extract_strided_slice %407 {offsets = [0, 256], sizes = [8, 128], strides = [1, 1]} : vector<8x384xf32> to vector<8x128xf32>
    %413 = arith.mulf %411, %367 : vector<8x128xf32>
    %414 = arith.mulf %410, %409 : vector<8x128xf32>
    %415 = arith.addf %413, %414 : vector<8x128xf32>
    %416 = math.tanh %415 : vector<8x128xf32>
    %417 = arith.mulf %412, %416 : vector<8x128xf32>
    %418 = arith.truncf %417 : vector<8x128xf32> to vector<8x128xbf16>
    %cst_101 = arith.constant dense<0.000000e+00> : vector<8x512xf32>
    %419 = tpu.matmul %418, %4, %cst_101 {dimension_numbers = #tpu.dot_dimension_numbers<[1], [0], [0], [1], [0, 0, 1, 1], [], []>} : vector<8x128xbf16>, vector<128x512xbf16>, vector<8x512xf32> -> vector<8x512xf32>
    %420 = arith.addf %398, %419 : vector<8x512xf32>
    %421 = vector.broadcast %6 : vector<1x512xf32> to vector<8x512xf32>
    %422 = arith.addf %420, %421 : vector<8x512xf32>
    %423 = vector.extract_strided_slice %422 {offsets = [0, 0], sizes = [8, 384], strides = [1, 1]} : vector<8x512xf32> to vector<8x384xf32>
    %424 = arith.negf %423 : vector<8x384xf32>
    %425 = math.exp %424 : vector<8x384xf32>
    %cst_102 = arith.constant 1.000000e+00 : f32
    %426 = vector.broadcast %cst_102 : f32 to vector<8x384xf32>
    %427 = arith.addf %426, %425 : vector<8x384xf32>
    %428 = arith.divf %426, %427 : vector<8x384xf32>
    %429 = vector.extract_strided_slice %422 {offsets = [0, 384], sizes = [8, 128], strides = [1, 1]} : vector<8x512xf32> to vector<8x128xf32>
    %430 = math.tanh %429 : vector<8x128xf32>
    %431 = vector.extract_strided_slice %428 {offsets = [0, 0], sizes = [8, 128], strides = [1, 1]} : vector<8x384xf32> to vector<8x128xf32>
    %432 = vector.extract_strided_slice %428 {offsets = [0, 128], sizes = [8, 128], strides = [1, 1]} : vector<8x384xf32> to vector<8x128xf32>
    %433 = vector.extract_strided_slice %428 {offsets = [0, 256], sizes = [8, 128], strides = [1, 1]} : vector<8x384xf32> to vector<8x128xf32>
    %434 = arith.mulf %432, %388 : vector<8x128xf32>
    %435 = arith.mulf %431, %430 : vector<8x128xf32>
    %436 = arith.addf %434, %435 : vector<8x128xf32>
    %437 = math.tanh %436 : vector<8x128xf32>
    %438 = arith.mulf %433, %437 : vector<8x128xf32>
    %439 = arith.truncf %438 : vector<8x128xf32> to vector<8x128xbf16>
    %c8_103 = arith.constant 8 : index
    %c0_104 = arith.constant 0 : index
    %c0_105 = arith.constant 0 : index
    %440 = vector.load %arg10[%c8_103, %c0_104, %c0_105] : memref<16x8x128xbf16, #tpu.memory_space<vmem>>, vector<1x8x128xbf16>
    %441 = vector.shape_cast %440 : vector<1x8x128xbf16> to vector<8x128xbf16>
    %442 = vector.shape_cast %439 : vector<8x128xbf16> to vector<1x8x128xbf16>
    tpu.vector_store %arg10[%c8_103, %c0_104, %c0_105], %442 {strides = array<i32>} : memref<16x8x128xbf16, #tpu.memory_space<vmem>>, vector<1x8x128xbf16>,
    %443 = arith.truncf %417 : vector<8x128xf32> to vector<8x128xbf16>
    %cst_106 = arith.constant dense<0.000000e+00> : vector<8x512xf32>
    %444 = tpu.matmul %443, %3, %cst_106 {dimension_numbers = #tpu.dot_dimension_numbers<[1], [0], [0], [1], [0, 0, 1, 1], [], []>} : vector<8x128xbf16>, vector<128x512xbf16>, vector<8x512xf32> -> vector<8x512xf32>
    %445 = arith.truncf %438 : vector<8x128xf32> to vector<8x128xbf16>
    %cst_107 = arith.constant dense<0.000000e+00> : vector<8x512xf32>
    %446 = tpu.matmul %445, %5, %cst_107 {dimension_numbers = #tpu.dot_dimension_numbers<[1], [0], [0], [1], [0, 0, 1, 1], [], []>} : vector<8x128xbf16>, vector<128x512xbf16>, vector<8x512xf32> -> vector<8x512xf32>
    %c9 = arith.constant 9 : index
    %c0_108 = arith.constant 0 : index
    %c0_109 = arith.constant 0 : index
    %447 = vector.load %arg1[%c9, %c0_108, %c0_109] : memref<16x8x512xf32, #tpu.memory_space<vmem>>, vector<1x8x512xf32>
    %448 = vector.shape_cast %447 : vector<1x8x512xf32> to vector<8x512xf32>
    %449 = arith.addf %448, %444 : vector<8x512xf32>
    %450 = vector.extract_strided_slice %449 {offsets = [0, 0], sizes = [8, 384], strides = [1, 1]} : vector<8x512xf32> to vector<8x384xf32>
    %451 = arith.negf %450 : vector<8x384xf32>
    %452 = math.exp %451 : vector<8x384xf32>
    %cst_110 = arith.constant 1.000000e+00 : f32
    %453 = vector.broadcast %cst_110 : f32 to vector<8x384xf32>
    %454 = arith.addf %453, %452 : vector<8x384xf32>
    %455 = arith.divf %453, %454 : vector<8x384xf32>
    %456 = vector.extract_strided_slice %449 {offsets = [0, 384], sizes = [8, 128], strides = [1, 1]} : vector<8x512xf32> to vector<8x128xf32>
    %457 = math.tanh %456 : vector<8x128xf32>
    %458 = vector.extract_strided_slice %455 {offsets = [0, 0], sizes = [8, 128], strides = [1, 1]} : vector<8x384xf32> to vector<8x128xf32>
    %459 = vector.extract_strided_slice %455 {offsets = [0, 128], sizes = [8, 128], strides = [1, 1]} : vector<8x384xf32> to vector<8x128xf32>
    %460 = vector.extract_strided_slice %455 {offsets = [0, 256], sizes = [8, 128], strides = [1, 1]} : vector<8x384xf32> to vector<8x128xf32>
    %461 = arith.mulf %459, %415 : vector<8x128xf32>
    %462 = arith.mulf %458, %457 : vector<8x128xf32>
    %463 = arith.addf %461, %462 : vector<8x128xf32>
    %464 = math.tanh %463 : vector<8x128xf32>
    %465 = arith.mulf %460, %464 : vector<8x128xf32>
    %466 = arith.truncf %465 : vector<8x128xf32> to vector<8x128xbf16>
    %cst_111 = arith.constant dense<0.000000e+00> : vector<8x512xf32>
    %467 = tpu.matmul %466, %4, %cst_111 {dimension_numbers = #tpu.dot_dimension_numbers<[1], [0], [0], [1], [0, 0, 1, 1], [], []>} : vector<8x128xbf16>, vector<128x512xbf16>, vector<8x512xf32> -> vector<8x512xf32>
    %468 = arith.addf %446, %467 : vector<8x512xf32>
    %469 = vector.broadcast %6 : vector<1x512xf32> to vector<8x512xf32>
    %470 = arith.addf %468, %469 : vector<8x512xf32>
    %471 = vector.extract_strided_slice %470 {offsets = [0, 0], sizes = [8, 384], strides = [1, 1]} : vector<8x512xf32> to vector<8x384xf32>
    %472 = arith.negf %471 : vector<8x384xf32>
    %473 = math.exp %472 : vector<8x384xf32>
    %cst_112 = arith.constant 1.000000e+00 : f32
    %474 = vector.broadcast %cst_112 : f32 to vector<8x384xf32>
    %475 = arith.addf %474, %473 : vector<8x384xf32>
    %476 = arith.divf %474, %475 : vector<8x384xf32>
    %477 = vector.extract_strided_slice %470 {offsets = [0, 384], sizes = [8, 128], strides = [1, 1]} : vector<8x512xf32> to vector<8x128xf32>
    %478 = math.tanh %477 : vector<8x128xf32>
    %479 = vector.extract_strided_slice %476 {offsets = [0, 0], sizes = [8, 128], strides = [1, 1]} : vector<8x384xf32> to vector<8x128xf32>
    %480 = vector.extract_strided_slice %476 {offsets = [0, 128], sizes = [8, 128], strides = [1, 1]} : vector<8x384xf32> to vector<8x128xf32>
    %481 = vector.extract_strided_slice %476 {offsets = [0, 256], sizes = [8, 128], strides = [1, 1]} : vector<8x384xf32> to vector<8x128xf32>
    %482 = arith.mulf %480, %436 : vector<8x128xf32>
    %483 = arith.mulf %479, %478 : vector<8x128xf32>
    %484 = arith.addf %482, %483 : vector<8x128xf32>
    %485 = math.tanh %484 : vector<8x128xf32>
    %486 = arith.mulf %481, %485 : vector<8x128xf32>
    %487 = arith.truncf %486 : vector<8x128xf32> to vector<8x128xbf16>
    %c9_113 = arith.constant 9 : index
    %c0_114 = arith.constant 0 : index
    %c0_115 = arith.constant 0 : index
    %488 = vector.load %arg10[%c9_113, %c0_114, %c0_115] : memref<16x8x128xbf16, #tpu.memory_space<vmem>>, vector<1x8x128xbf16>
    %489 = vector.shape_cast %488 : vector<1x8x128xbf16> to vector<8x128xbf16>
    %490 = vector.shape_cast %487 : vector<8x128xbf16> to vector<1x8x128xbf16>
    tpu.vector_store %arg10[%c9_113, %c0_114, %c0_115], %490 {strides = array<i32>} : memref<16x8x128xbf16, #tpu.memory_space<vmem>>, vector<1x8x128xbf16>,
    %491 = arith.truncf %465 : vector<8x128xf32> to vector<8x128xbf16>
    %cst_116 = arith.constant dense<0.000000e+00> : vector<8x512xf32>
    %492 = tpu.matmul %491, %3, %cst_116 {dimension_numbers = #tpu.dot_dimension_numbers<[1], [0], [0], [1], [0, 0, 1, 1], [], []>} : vector<8x128xbf16>, vector<128x512xbf16>, vector<8x512xf32> -> vector<8x512xf32>
    %493 = arith.truncf %486 : vector<8x128xf32> to vector<8x128xbf16>
    %cst_117 = arith.constant dense<0.000000e+00> : vector<8x512xf32>
    %494 = tpu.matmul %493, %5, %cst_117 {dimension_numbers = #tpu.dot_dimension_numbers<[1], [0], [0], [1], [0, 0, 1, 1], [], []>} : vector<8x128xbf16>, vector<128x512xbf16>, vector<8x512xf32> -> vector<8x512xf32>
    %c10 = arith.constant 10 : index
    %c0_118 = arith.constant 0 : index
    %c0_119 = arith.constant 0 : index
    %495 = vector.load %arg1[%c10, %c0_118, %c0_119] : memref<16x8x512xf32, #tpu.memory_space<vmem>>, vector<1x8x512xf32>
    %496 = vector.shape_cast %495 : vector<1x8x512xf32> to vector<8x512xf32>
    %497 = arith.addf %496, %492 : vector<8x512xf32>
    %498 = vector.extract_strided_slice %497 {offsets = [0, 0], sizes = [8, 384], strides = [1, 1]} : vector<8x512xf32> to vector<8x384xf32>
    %499 = arith.negf %498 : vector<8x384xf32>
    %500 = math.exp %499 : vector<8x384xf32>
    %cst_120 = arith.constant 1.000000e+00 : f32
    %501 = vector.broadcast %cst_120 : f32 to vector<8x384xf32>
    %502 = arith.addf %501, %500 : vector<8x384xf32>
    %503 = arith.divf %501, %502 : vector<8x384xf32>
    %504 = vector.extract_strided_slice %497 {offsets = [0, 384], sizes = [8, 128], strides = [1, 1]} : vector<8x512xf32> to vector<8x128xf32>
    %505 = math.tanh %504 : vector<8x128xf32>
    %506 = vector.extract_strided_slice %503 {offsets = [0, 0], sizes = [8, 128], strides = [1, 1]} : vector<8x384xf32> to vector<8x128xf32>
    %507 = vector.extract_strided_slice %503 {offsets = [0, 128], sizes = [8, 128], strides = [1, 1]} : vector<8x384xf32> to vector<8x128xf32>
    %508 = vector.extract_strided_slice %503 {offsets = [0, 256], sizes = [8, 128], strides = [1, 1]} : vector<8x384xf32> to vector<8x128xf32>
    %509 = arith.mulf %507, %463 : vector<8x128xf32>
    %510 = arith.mulf %506, %505 : vector<8x128xf32>
    %511 = arith.addf %509, %510 : vector<8x128xf32>
    %512 = math.tanh %511 : vector<8x128xf32>
    %513 = arith.mulf %508, %512 : vector<8x128xf32>
    %514 = arith.truncf %513 : vector<8x128xf32> to vector<8x128xbf16>
    %cst_121 = arith.constant dense<0.000000e+00> : vector<8x512xf32>
    %515 = tpu.matmul %514, %4, %cst_121 {dimension_numbers = #tpu.dot_dimension_numbers<[1], [0], [0], [1], [0, 0, 1, 1], [], []>} : vector<8x128xbf16>, vector<128x512xbf16>, vector<8x512xf32> -> vector<8x512xf32>
    %516 = arith.addf %494, %515 : vector<8x512xf32>
    %517 = vector.broadcast %6 : vector<1x512xf32> to vector<8x512xf32>
    %518 = arith.addf %516, %517 : vector<8x512xf32>
    %519 = vector.extract_strided_slice %518 {offsets = [0, 0], sizes = [8, 384], strides = [1, 1]} : vector<8x512xf32> to vector<8x384xf32>
    %520 = arith.negf %519 : vector<8x384xf32>
    %521 = math.exp %520 : vector<8x384xf32>
    %cst_122 = arith.constant 1.000000e+00 : f32
    %522 = vector.broadcast %cst_122 : f32 to vector<8x384xf32>
    %523 = arith.addf %522, %521 : vector<8x384xf32>
    %524 = arith.divf %522, %523 : vector<8x384xf32>
    %525 = vector.extract_strided_slice %518 {offsets = [0, 384], sizes = [8, 128], strides = [1, 1]} : vector<8x512xf32> to vector<8x128xf32>
    %526 = math.tanh %525 : vector<8x128xf32>
    %527 = vector.extract_strided_slice %524 {offsets = [0, 0], sizes = [8, 128], strides = [1, 1]} : vector<8x384xf32> to vector<8x128xf32>
    %528 = vector.extract_strided_slice %524 {offsets = [0, 128], sizes = [8, 128], strides = [1, 1]} : vector<8x384xf32> to vector<8x128xf32>
    %529 = vector.extract_strided_slice %524 {offsets = [0, 256], sizes = [8, 128], strides = [1, 1]} : vector<8x384xf32> to vector<8x128xf32>
    %530 = arith.mulf %528, %484 : vector<8x128xf32>
    %531 = arith.mulf %527, %526 : vector<8x128xf32>
    %532 = arith.addf %530, %531 : vector<8x128xf32>
    %533 = math.tanh %532 : vector<8x128xf32>
    %534 = arith.mulf %529, %533 : vector<8x128xf32>
    %535 = arith.truncf %534 : vector<8x128xf32> to vector<8x128xbf16>
    %c10_123 = arith.constant 10 : index
    %c0_124 = arith.constant 0 : index
    %c0_125 = arith.constant 0 : index
    %536 = vector.load %arg10[%c10_123, %c0_124, %c0_125] : memref<16x8x128xbf16, #tpu.memory_space<vmem>>, vector<1x8x128xbf16>
    %537 = vector.shape_cast %536 : vector<1x8x128xbf16> to vector<8x128xbf16>
    %538 = vector.shape_cast %535 : vector<8x128xbf16> to vector<1x8x128xbf16>
    tpu.vector_store %arg10[%c10_123, %c0_124, %c0_125], %538 {strides = array<i32>} : memref<16x8x128xbf16, #tpu.memory_space<vmem>>, vector<1x8x128xbf16>,
    %539 = arith.truncf %513 : vector<8x128xf32> to vector<8x128xbf16>
    %cst_126 = arith.constant dense<0.000000e+00> : vector<8x512xf32>
    %540 = tpu.matmul %539, %3, %cst_126 {dimension_numbers = #tpu.dot_dimension_numbers<[1], [0], [0], [1], [0, 0, 1, 1], [], []>} : vector<8x128xbf16>, vector<128x512xbf16>, vector<8x512xf32> -> vector<8x512xf32>
    %541 = arith.truncf %534 : vector<8x128xf32> to vector<8x128xbf16>
    %cst_127 = arith.constant dense<0.000000e+00> : vector<8x512xf32>
    %542 = tpu.matmul %541, %5, %cst_127 {dimension_numbers = #tpu.dot_dimension_numbers<[1], [0], [0], [1], [0, 0, 1, 1], [], []>} : vector<8x128xbf16>, vector<128x512xbf16>, vector<8x512xf32> -> vector<8x512xf32>
    %c11 = arith.constant 11 : index
    %c0_128 = arith.constant 0 : index
    %c0_129 = arith.constant 0 : index
    %543 = vector.load %arg1[%c11, %c0_128, %c0_129] : memref<16x8x512xf32, #tpu.memory_space<vmem>>, vector<1x8x512xf32>
    %544 = vector.shape_cast %543 : vector<1x8x512xf32> to vector<8x512xf32>
    %545 = arith.addf %544, %540 : vector<8x512xf32>
    %546 = vector.extract_strided_slice %545 {offsets = [0, 0], sizes = [8, 384], strides = [1, 1]} : vector<8x512xf32> to vector<8x384xf32>
    %547 = arith.negf %546 : vector<8x384xf32>
    %548 = math.exp %547 : vector<8x384xf32>
    %cst_130 = arith.constant 1.000000e+00 : f32
    %549 = vector.broadcast %cst_130 : f32 to vector<8x384xf32>
    %550 = arith.addf %549, %548 : vector<8x384xf32>
    %551 = arith.divf %549, %550 : vector<8x384xf32>
    %552 = vector.extract_strided_slice %545 {offsets = [0, 384], sizes = [8, 128], strides = [1, 1]} : vector<8x512xf32> to vector<8x128xf32>
    %553 = math.tanh %552 : vector<8x128xf32>
    %554 = vector.extract_strided_slice %551 {offsets = [0, 0], sizes = [8, 128], strides = [1, 1]} : vector<8x384xf32> to vector<8x128xf32>
    %555 = vector.extract_strided_slice %551 {offsets = [0, 128], sizes = [8, 128], strides = [1, 1]} : vector<8x384xf32> to vector<8x128xf32>
    %556 = vector.extract_strided_slice %551 {offsets = [0, 256], sizes = [8, 128], strides = [1, 1]} : vector<8x384xf32> to vector<8x128xf32>
    %557 = arith.mulf %555, %511 : vector<8x128xf32>
    %558 = arith.mulf %554, %553 : vector<8x128xf32>
    %559 = arith.addf %557, %558 : vector<8x128xf32>
    %560 = math.tanh %559 : vector<8x128xf32>
    %561 = arith.mulf %556, %560 : vector<8x128xf32>
    %562 = arith.truncf %561 : vector<8x128xf32> to vector<8x128xbf16>
    %cst_131 = arith.constant dense<0.000000e+00> : vector<8x512xf32>
    %563 = tpu.matmul %562, %4, %cst_131 {dimension_numbers = #tpu.dot_dimension_numbers<[1], [0], [0], [1], [0, 0, 1, 1], [], []>} : vector<8x128xbf16>, vector<128x512xbf16>, vector<8x512xf32> -> vector<8x512xf32>
    %564 = arith.addf %542, %563 : vector<8x512xf32>
    %565 = vector.broadcast %6 : vector<1x512xf32> to vector<8x512xf32>
    %566 = arith.addf %564, %565 : vector<8x512xf32>
    %567 = vector.extract_strided_slice %566 {offsets = [0, 0], sizes = [8, 384], strides = [1, 1]} : vector<8x512xf32> to vector<8x384xf32>
    %568 = arith.negf %567 : vector<8x384xf32>
    %569 = math.exp %568 : vector<8x384xf32>
    %cst_132 = arith.constant 1.000000e+00 : f32
    %570 = vector.broadcast %cst_132 : f32 to vector<8x384xf32>
    %571 = arith.addf %570, %569 : vector<8x384xf32>
    %572 = arith.divf %570, %571 : vector<8x384xf32>
    %573 = vector.extract_strided_slice %566 {offsets = [0, 384], sizes = [8, 128], strides = [1, 1]} : vector<8x512xf32> to vector<8x128xf32>
    %574 = math.tanh %573 : vector<8x128xf32>
    %575 = vector.extract_strided_slice %572 {offsets = [0, 0], sizes = [8, 128], strides = [1, 1]} : vector<8x384xf32> to vector<8x128xf32>
    %576 = vector.extract_strided_slice %572 {offsets = [0, 128], sizes = [8, 128], strides = [1, 1]} : vector<8x384xf32> to vector<8x128xf32>
    %577 = vector.extract_strided_slice %572 {offsets = [0, 256], sizes = [8, 128], strides = [1, 1]} : vector<8x384xf32> to vector<8x128xf32>
    %578 = arith.mulf %576, %532 : vector<8x128xf32>
    %579 = arith.mulf %575, %574 : vector<8x128xf32>
    %580 = arith.addf %578, %579 : vector<8x128xf32>
    %581 = math.tanh %580 : vector<8x128xf32>
    %582 = arith.mulf %577, %581 : vector<8x128xf32>
    %583 = arith.truncf %582 : vector<8x128xf32> to vector<8x128xbf16>
    %c11_133 = arith.constant 11 : index
    %c0_134 = arith.constant 0 : index
    %c0_135 = arith.constant 0 : index
    %584 = vector.load %arg10[%c11_133, %c0_134, %c0_135] : memref<16x8x128xbf16, #tpu.memory_space<vmem>>, vector<1x8x128xbf16>
    %585 = vector.shape_cast %584 : vector<1x8x128xbf16> to vector<8x128xbf16>
    %586 = vector.shape_cast %583 : vector<8x128xbf16> to vector<1x8x128xbf16>
    tpu.vector_store %arg10[%c11_133, %c0_134, %c0_135], %586 {strides = array<i32>} : memref<16x8x128xbf16, #tpu.memory_space<vmem>>, vector<1x8x128xbf16>,
    %587 = arith.truncf %561 : vector<8x128xf32> to vector<8x128xbf16>
    %cst_136 = arith.constant dense<0.000000e+00> : vector<8x512xf32>
    %588 = tpu.matmul %587, %3, %cst_136 {dimension_numbers = #tpu.dot_dimension_numbers<[1], [0], [0], [1], [0, 0, 1, 1], [], []>} : vector<8x128xbf16>, vector<128x512xbf16>, vector<8x512xf32> -> vector<8x512xf32>
    %589 = arith.truncf %582 : vector<8x128xf32> to vector<8x128xbf16>
    %cst_137 = arith.constant dense<0.000000e+00> : vector<8x512xf32>
    %590 = tpu.matmul %589, %5, %cst_137 {dimension_numbers = #tpu.dot_dimension_numbers<[1], [0], [0], [1], [0, 0, 1, 1], [], []>} : vector<8x128xbf16>, vector<128x512xbf16>, vector<8x512xf32> -> vector<8x512xf32>
    %c12 = arith.constant 12 : index
    %c0_138 = arith.constant 0 : index
    %c0_139 = arith.constant 0 : index
    %591 = vector.load %arg1[%c12, %c0_138, %c0_139] : memref<16x8x512xf32, #tpu.memory_space<vmem>>, vector<1x8x512xf32>
    %592 = vector.shape_cast %591 : vector<1x8x512xf32> to vector<8x512xf32>
    %593 = arith.addf %592, %588 : vector<8x512xf32>
    %594 = vector.extract_strided_slice %593 {offsets = [0, 0], sizes = [8, 384], strides = [1, 1]} : vector<8x512xf32> to vector<8x384xf32>
    %595 = arith.negf %594 : vector<8x384xf32>
    %596 = math.exp %595 : vector<8x384xf32>
    %cst_140 = arith.constant 1.000000e+00 : f32
    %597 = vector.broadcast %cst_140 : f32 to vector<8x384xf32>
    %598 = arith.addf %597, %596 : vector<8x384xf32>
    %599 = arith.divf %597, %598 : vector<8x384xf32>
    %600 = vector.extract_strided_slice %593 {offsets = [0, 384], sizes = [8, 128], strides = [1, 1]} : vector<8x512xf32> to vector<8x128xf32>
    %601 = math.tanh %600 : vector<8x128xf32>
    %602 = vector.extract_strided_slice %599 {offsets = [0, 0], sizes = [8, 128], strides = [1, 1]} : vector<8x384xf32> to vector<8x128xf32>
    %603 = vector.extract_strided_slice %599 {offsets = [0, 128], sizes = [8, 128], strides = [1, 1]} : vector<8x384xf32> to vector<8x128xf32>
    %604 = vector.extract_strided_slice %599 {offsets = [0, 256], sizes = [8, 128], strides = [1, 1]} : vector<8x384xf32> to vector<8x128xf32>
    %605 = arith.mulf %603, %559 : vector<8x128xf32>
    %606 = arith.mulf %602, %601 : vector<8x128xf32>
    %607 = arith.addf %605, %606 : vector<8x128xf32>
    %608 = math.tanh %607 : vector<8x128xf32>
    %609 = arith.mulf %604, %608 : vector<8x128xf32>
    %610 = arith.truncf %609 : vector<8x128xf32> to vector<8x128xbf16>
    %cst_141 = arith.constant dense<0.000000e+00> : vector<8x512xf32>
    %611 = tpu.matmul %610, %4, %cst_141 {dimension_numbers = #tpu.dot_dimension_numbers<[1], [0], [0], [1], [0, 0, 1, 1], [], []>} : vector<8x128xbf16>, vector<128x512xbf16>, vector<8x512xf32> -> vector<8x512xf32>
    %612 = arith.addf %590, %611 : vector<8x512xf32>
    %613 = vector.broadcast %6 : vector<1x512xf32> to vector<8x512xf32>
    %614 = arith.addf %612, %613 : vector<8x512xf32>
    %615 = vector.extract_strided_slice %614 {offsets = [0, 0], sizes = [8, 384], strides = [1, 1]} : vector<8x512xf32> to vector<8x384xf32>
    %616 = arith.negf %615 : vector<8x384xf32>
    %617 = math.exp %616 : vector<8x384xf32>
    %cst_142 = arith.constant 1.000000e+00 : f32
    %618 = vector.broadcast %cst_142 : f32 to vector<8x384xf32>
    %619 = arith.addf %618, %617 : vector<8x384xf32>
    %620 = arith.divf %618, %619 : vector<8x384xf32>
    %621 = vector.extract_strided_slice %614 {offsets = [0, 384], sizes = [8, 128], strides = [1, 1]} : vector<8x512xf32> to vector<8x128xf32>
    %622 = math.tanh %621 : vector<8x128xf32>
    %623 = vector.extract_strided_slice %620 {offsets = [0, 0], sizes = [8, 128], strides = [1, 1]} : vector<8x384xf32> to vector<8x128xf32>
    %624 = vector.extract_strided_slice %620 {offsets = [0, 128], sizes = [8, 128], strides = [1, 1]} : vector<8x384xf32> to vector<8x128xf32>
    %625 = vector.extract_strided_slice %620 {offsets = [0, 256], sizes = [8, 128], strides = [1, 1]} : vector<8x384xf32> to vector<8x128xf32>
    %626 = arith.mulf %624, %580 : vector<8x128xf32>
    %627 = arith.mulf %623, %622 : vector<8x128xf32>
    %628 = arith.addf %626, %627 : vector<8x128xf32>
    %629 = math.tanh %628 : vector<8x128xf32>
    %630 = arith.mulf %625, %629 : vector<8x128xf32>
    %631 = arith.truncf %630 : vector<8x128xf32> to vector<8x128xbf16>
    %c12_143 = arith.constant 12 : index
    %c0_144 = arith.constant 0 : index
    %c0_145 = arith.constant 0 : index
    %632 = vector.load %arg10[%c12_143, %c0_144, %c0_145] : memref<16x8x128xbf16, #tpu.memory_space<vmem>>, vector<1x8x128xbf16>
    %633 = vector.shape_cast %632 : vector<1x8x128xbf16> to vector<8x128xbf16>
    %634 = vector.shape_cast %631 : vector<8x128xbf16> to vector<1x8x128xbf16>
    tpu.vector_store %arg10[%c12_143, %c0_144, %c0_145], %634 {strides = array<i32>} : memref<16x8x128xbf16, #tpu.memory_space<vmem>>, vector<1x8x128xbf16>,
    %635 = arith.truncf %609 : vector<8x128xf32> to vector<8x128xbf16>
    %cst_146 = arith.constant dense<0.000000e+00> : vector<8x512xf32>
    %636 = tpu.matmul %635, %3, %cst_146 {dimension_numbers = #tpu.dot_dimension_numbers<[1], [0], [0], [1], [0, 0, 1, 1], [], []>} : vector<8x128xbf16>, vector<128x512xbf16>, vector<8x512xf32> -> vector<8x512xf32>
    %637 = arith.truncf %630 : vector<8x128xf32> to vector<8x128xbf16>
    %cst_147 = arith.constant dense<0.000000e+00> : vector<8x512xf32>
    %638 = tpu.matmul %637, %5, %cst_147 {dimension_numbers = #tpu.dot_dimension_numbers<[1], [0], [0], [1], [0, 0, 1, 1], [], []>} : vector<8x128xbf16>, vector<128x512xbf16>, vector<8x512xf32> -> vector<8x512xf32>
    %c13 = arith.constant 13 : index
    %c0_148 = arith.constant 0 : index
    %c0_149 = arith.constant 0 : index
    %639 = vector.load %arg1[%c13, %c0_148, %c0_149] : memref<16x8x512xf32, #tpu.memory_space<vmem>>, vector<1x8x512xf32>
    %640 = vector.shape_cast %639 : vector<1x8x512xf32> to vector<8x512xf32>
    %641 = arith.addf %640, %636 : vector<8x512xf32>
    %642 = vector.extract_strided_slice %641 {offsets = [0, 0], sizes = [8, 384], strides = [1, 1]} : vector<8x512xf32> to vector<8x384xf32>
    %643 = arith.negf %642 : vector<8x384xf32>
    %644 = math.exp %643 : vector<8x384xf32>
    %cst_150 = arith.constant 1.000000e+00 : f32
    %645 = vector.broadcast %cst_150 : f32 to vector<8x384xf32>
    %646 = arith.addf %645, %644 : vector<8x384xf32>
    %647 = arith.divf %645, %646 : vector<8x384xf32>
    %648 = vector.extract_strided_slice %641 {offsets = [0, 384], sizes = [8, 128], strides = [1, 1]} : vector<8x512xf32> to vector<8x128xf32>
    %649 = math.tanh %648 : vector<8x128xf32>
    %650 = vector.extract_strided_slice %647 {offsets = [0, 0], sizes = [8, 128], strides = [1, 1]} : vector<8x384xf32> to vector<8x128xf32>
    %651 = vector.extract_strided_slice %647 {offsets = [0, 128], sizes = [8, 128], strides = [1, 1]} : vector<8x384xf32> to vector<8x128xf32>
    %652 = vector.extract_strided_slice %647 {offsets = [0, 256], sizes = [8, 128], strides = [1, 1]} : vector<8x384xf32> to vector<8x128xf32>
    %653 = arith.mulf %651, %607 : vector<8x128xf32>
    %654 = arith.mulf %650, %649 : vector<8x128xf32>
    %655 = arith.addf %653, %654 : vector<8x128xf32>
    %656 = math.tanh %655 : vector<8x128xf32>
    %657 = arith.mulf %652, %656 : vector<8x128xf32>
    %658 = arith.truncf %657 : vector<8x128xf32> to vector<8x128xbf16>
    %cst_151 = arith.constant dense<0.000000e+00> : vector<8x512xf32>
    %659 = tpu.matmul %658, %4, %cst_151 {dimension_numbers = #tpu.dot_dimension_numbers<[1], [0], [0], [1], [0, 0, 1, 1], [], []>} : vector<8x128xbf16>, vector<128x512xbf16>, vector<8x512xf32> -> vector<8x512xf32>
    %660 = arith.addf %638, %659 : vector<8x512xf32>
    %661 = vector.broadcast %6 : vector<1x512xf32> to vector<8x512xf32>
    %662 = arith.addf %660, %661 : vector<8x512xf32>
    %663 = vector.extract_strided_slice %662 {offsets = [0, 0], sizes = [8, 384], strides = [1, 1]} : vector<8x512xf32> to vector<8x384xf32>
    %664 = arith.negf %663 : vector<8x384xf32>
    %665 = math.exp %664 : vector<8x384xf32>
    %cst_152 = arith.constant 1.000000e+00 : f32
    %666 = vector.broadcast %cst_152 : f32 to vector<8x384xf32>
    %667 = arith.addf %666, %665 : vector<8x384xf32>
    %668 = arith.divf %666, %667 : vector<8x384xf32>
    %669 = vector.extract_strided_slice %662 {offsets = [0, 384], sizes = [8, 128], strides = [1, 1]} : vector<8x512xf32> to vector<8x128xf32>
    %670 = math.tanh %669 : vector<8x128xf32>
    %671 = vector.extract_strided_slice %668 {offsets = [0, 0], sizes = [8, 128], strides = [1, 1]} : vector<8x384xf32> to vector<8x128xf32>
    %672 = vector.extract_strided_slice %668 {offsets = [0, 128], sizes = [8, 128], strides = [1, 1]} : vector<8x384xf32> to vector<8x128xf32>
    %673 = vector.extract_strided_slice %668 {offsets = [0, 256], sizes = [8, 128], strides = [1, 1]} : vector<8x384xf32> to vector<8x128xf32>
    %674 = arith.mulf %672, %628 : vector<8x128xf32>
    %675 = arith.mulf %671, %670 : vector<8x128xf32>
    %676 = arith.addf %674, %675 : vector<8x128xf32>
    %677 = math.tanh %676 : vector<8x128xf32>
    %678 = arith.mulf %673, %677 : vector<8x128xf32>
    %679 = arith.truncf %678 : vector<8x128xf32> to vector<8x128xbf16>
    %c13_153 = arith.constant 13 : index
    %c0_154 = arith.constant 0 : index
    %c0_155 = arith.constant 0 : index
    %680 = vector.load %arg10[%c13_153, %c0_154, %c0_155] : memref<16x8x128xbf16, #tpu.memory_space<vmem>>, vector<1x8x128xbf16>
    %681 = vector.shape_cast %680 : vector<1x8x128xbf16> to vector<8x128xbf16>
    %682 = vector.shape_cast %679 : vector<8x128xbf16> to vector<1x8x128xbf16>
    tpu.vector_store %arg10[%c13_153, %c0_154, %c0_155], %682 {strides = array<i32>} : memref<16x8x128xbf16, #tpu.memory_space<vmem>>, vector<1x8x128xbf16>,
    %683 = arith.truncf %657 : vector<8x128xf32> to vector<8x128xbf16>
    %cst_156 = arith.constant dense<0.000000e+00> : vector<8x512xf32>
    %684 = tpu.matmul %683, %3, %cst_156 {dimension_numbers = #tpu.dot_dimension_numbers<[1], [0], [0], [1], [0, 0, 1, 1], [], []>} : vector<8x128xbf16>, vector<128x512xbf16>, vector<8x512xf32> -> vector<8x512xf32>
    %685 = arith.truncf %678 : vector<8x128xf32> to vector<8x128xbf16>
    %cst_157 = arith.constant dense<0.000000e+00> : vector<8x512xf32>
    %686 = tpu.matmul %685, %5, %cst_157 {dimension_numbers = #tpu.dot_dimension_numbers<[1], [0], [0], [1], [0, 0, 1, 1], [], []>} : vector<8x128xbf16>, vector<128x512xbf16>, vector<8x512xf32> -> vector<8x512xf32>
    %c14 = arith.constant 14 : index
    %c0_158 = arith.constant 0 : index
    %c0_159 = arith.constant 0 : index
    %687 = vector.load %arg1[%c14, %c0_158, %c0_159] : memref<16x8x512xf32, #tpu.memory_space<vmem>>, vector<1x8x512xf32>
    %688 = vector.shape_cast %687 : vector<1x8x512xf32> to vector<8x512xf32>
    %689 = arith.addf %688, %684 : vector<8x512xf32>
    %690 = vector.extract_strided_slice %689 {offsets = [0, 0], sizes = [8, 384], strides = [1, 1]} : vector<8x512xf32> to vector<8x384xf32>
    %691 = arith.negf %690 : vector<8x384xf32>
    %692 = math.exp %691 : vector<8x384xf32>
    %cst_160 = arith.constant 1.000000e+00 : f32
    %693 = vector.broadcast %cst_160 : f32 to vector<8x384xf32>
    %694 = arith.addf %693, %692 : vector<8x384xf32>
    %695 = arith.divf %693, %694 : vector<8x384xf32>
    %696 = vector.extract_strided_slice %689 {offsets = [0, 384], sizes = [8, 128], strides = [1, 1]} : vector<8x512xf32> to vector<8x128xf32>
    %697 = math.tanh %696 : vector<8x128xf32>
    %698 = vector.extract_strided_slice %695 {offsets = [0, 0], sizes = [8, 128], strides = [1, 1]} : vector<8x384xf32> to vector<8x128xf32>
    %699 = vector.extract_strided_slice %695 {offsets = [0, 128], sizes = [8, 128], strides = [1, 1]} : vector<8x384xf32> to vector<8x128xf32>
    %700 = vector.extract_strided_slice %695 {offsets = [0, 256], sizes = [8, 128], strides = [1, 1]} : vector<8x384xf32> to vector<8x128xf32>
    %701 = arith.mulf %699, %655 : vector<8x128xf32>
    %702 = arith.mulf %698, %697 : vector<8x128xf32>
    %703 = arith.addf %701, %702 : vector<8x128xf32>
    %704 = math.tanh %703 : vector<8x128xf32>
    %705 = arith.mulf %700, %704 : vector<8x128xf32>
    %706 = arith.truncf %705 : vector<8x128xf32> to vector<8x128xbf16>
    %cst_161 = arith.constant dense<0.000000e+00> : vector<8x512xf32>
    %707 = tpu.matmul %706, %4, %cst_161 {dimension_numbers = #tpu.dot_dimension_numbers<[1], [0], [0], [1], [0, 0, 1, 1], [], []>} : vector<8x128xbf16>, vector<128x512xbf16>, vector<8x512xf32> -> vector<8x512xf32>
    %708 = arith.addf %686, %707 : vector<8x512xf32>
    %709 = vector.broadcast %6 : vector<1x512xf32> to vector<8x512xf32>
    %710 = arith.addf %708, %709 : vector<8x512xf32>
    %711 = vector.extract_strided_slice %710 {offsets = [0, 0], sizes = [8, 384], strides = [1, 1]} : vector<8x512xf32> to vector<8x384xf32>
    %712 = arith.negf %711 : vector<8x384xf32>
    %713 = math.exp %712 : vector<8x384xf32>
    %cst_162 = arith.constant 1.000000e+00 : f32
    %714 = vector.broadcast %cst_162 : f32 to vector<8x384xf32>
    %715 = arith.addf %714, %713 : vector<8x384xf32>
    %716 = arith.divf %714, %715 : vector<8x384xf32>
    %717 = vector.extract_strided_slice %710 {offsets = [0, 384], sizes = [8, 128], strides = [1, 1]} : vector<8x512xf32> to vector<8x128xf32>
    %718 = math.tanh %717 : vector<8x128xf32>
    %719 = vector.extract_strided_slice %716 {offsets = [0, 0], sizes = [8, 128], strides = [1, 1]} : vector<8x384xf32> to vector<8x128xf32>
    %720 = vector.extract_strided_slice %716 {offsets = [0, 128], sizes = [8, 128], strides = [1, 1]} : vector<8x384xf32> to vector<8x128xf32>
    %721 = vector.extract_strided_slice %716 {offsets = [0, 256], sizes = [8, 128], strides = [1, 1]} : vector<8x384xf32> to vector<8x128xf32>
    %722 = arith.mulf %720, %676 : vector<8x128xf32>
    %723 = arith.mulf %719, %718 : vector<8x128xf32>
    %724 = arith.addf %722, %723 : vector<8x128xf32>
    %725 = math.tanh %724 : vector<8x128xf32>
    %726 = arith.mulf %721, %725 : vector<8x128xf32>
    %727 = arith.truncf %726 : vector<8x128xf32> to vector<8x128xbf16>
    %c14_163 = arith.constant 14 : index
    %c0_164 = arith.constant 0 : index
    %c0_165 = arith.constant 0 : index
    %728 = vector.load %arg10[%c14_163, %c0_164, %c0_165] : memref<16x8x128xbf16, #tpu.memory_space<vmem>>, vector<1x8x128xbf16>
    %729 = vector.shape_cast %728 : vector<1x8x128xbf16> to vector<8x128xbf16>
    %730 = vector.shape_cast %727 : vector<8x128xbf16> to vector<1x8x128xbf16>
    tpu.vector_store %arg10[%c14_163, %c0_164, %c0_165], %730 {strides = array<i32>} : memref<16x8x128xbf16, #tpu.memory_space<vmem>>, vector<1x8x128xbf16>,
    %731 = arith.truncf %705 : vector<8x128xf32> to vector<8x128xbf16>
    %cst_166 = arith.constant dense<0.000000e+00> : vector<8x512xf32>
    %732 = tpu.matmul %731, %3, %cst_166 {dimension_numbers = #tpu.dot_dimension_numbers<[1], [0], [0], [1], [0, 0, 1, 1], [], []>} : vector<8x128xbf16>, vector<128x512xbf16>, vector<8x512xf32> -> vector<8x512xf32>
    %733 = arith.truncf %726 : vector<8x128xf32> to vector<8x128xbf16>
    %cst_167 = arith.constant dense<0.000000e+00> : vector<8x512xf32>
    %734 = tpu.matmul %733, %5, %cst_167 {dimension_numbers = #tpu.dot_dimension_numbers<[1], [0], [0], [1], [0, 0, 1, 1], [], []>} : vector<8x128xbf16>, vector<128x512xbf16>, vector<8x512xf32> -> vector<8x512xf32>
    %c15 = arith.constant 15 : index
    %c0_168 = arith.constant 0 : index
    %c0_169 = arith.constant 0 : index
    %735 = vector.load %arg1[%c15, %c0_168, %c0_169] : memref<16x8x512xf32, #tpu.memory_space<vmem>>, vector<1x8x512xf32>
    %736 = vector.shape_cast %735 : vector<1x8x512xf32> to vector<8x512xf32>
    %737 = arith.addf %736, %732 : vector<8x512xf32>
    %738 = vector.extract_strided_slice %737 {offsets = [0, 0], sizes = [8, 384], strides = [1, 1]} : vector<8x512xf32> to vector<8x384xf32>
    %739 = arith.negf %738 : vector<8x384xf32>
    %740 = math.exp %739 : vector<8x384xf32>
    %cst_170 = arith.constant 1.000000e+00 : f32
    %741 = vector.broadcast %cst_170 : f32 to vector<8x384xf32>
    %742 = arith.addf %741, %740 : vector<8x384xf32>
    %743 = arith.divf %741, %742 : vector<8x384xf32>
    %744 = vector.extract_strided_slice %737 {offsets = [0, 384], sizes = [8, 128], strides = [1, 1]} : vector<8x512xf32> to vector<8x128xf32>
    %745 = math.tanh %744 : vector<8x128xf32>
    %746 = vector.extract_strided_slice %743 {offsets = [0, 0], sizes = [8, 128], strides = [1, 1]} : vector<8x384xf32> to vector<8x128xf32>
    %747 = vector.extract_strided_slice %743 {offsets = [0, 128], sizes = [8, 128], strides = [1, 1]} : vector<8x384xf32> to vector<8x128xf32>
    %748 = vector.extract_strided_slice %743 {offsets = [0, 256], sizes = [8, 128], strides = [1, 1]} : vector<8x384xf32> to vector<8x128xf32>
    %749 = arith.mulf %747, %703 : vector<8x128xf32>
    %750 = arith.mulf %746, %745 : vector<8x128xf32>
    %751 = arith.addf %749, %750 : vector<8x128xf32>
    %752 = math.tanh %751 : vector<8x128xf32>
    %753 = arith.mulf %748, %752 : vector<8x128xf32>
    %754 = arith.truncf %753 : vector<8x128xf32> to vector<8x128xbf16>
    %cst_171 = arith.constant dense<0.000000e+00> : vector<8x512xf32>
    %755 = tpu.matmul %754, %4, %cst_171 {dimension_numbers = #tpu.dot_dimension_numbers<[1], [0], [0], [1], [0, 0, 1, 1], [], []>} : vector<8x128xbf16>, vector<128x512xbf16>, vector<8x512xf32> -> vector<8x512xf32>
    %756 = arith.addf %734, %755 : vector<8x512xf32>
    %757 = vector.broadcast %6 : vector<1x512xf32> to vector<8x512xf32>
    %758 = arith.addf %756, %757 : vector<8x512xf32>
    %759 = vector.extract_strided_slice %758 {offsets = [0, 0], sizes = [8, 384], strides = [1, 1]} : vector<8x512xf32> to vector<8x384xf32>
    %760 = arith.negf %759 : vector<8x384xf32>
    %761 = math.exp %760 : vector<8x384xf32>
    %cst_172 = arith.constant 1.000000e+00 : f32
    %762 = vector.broadcast %cst_172 : f32 to vector<8x384xf32>
    %763 = arith.addf %762, %761 : vector<8x384xf32>
    %764 = arith.divf %762, %763 : vector<8x384xf32>
    %765 = vector.extract_strided_slice %758 {offsets = [0, 384], sizes = [8, 128], strides = [1, 1]} : vector<8x512xf32> to vector<8x128xf32>
    %766 = math.tanh %765 : vector<8x128xf32>
    %767 = vector.extract_strided_slice %764 {offsets = [0, 0], sizes = [8, 128], strides = [1, 1]} : vector<8x384xf32> to vector<8x128xf32>
    %768 = vector.extract_strided_slice %764 {offsets = [0, 128], sizes = [8, 128], strides = [1, 1]} : vector<8x384xf32> to vector<8x128xf32>
    %769 = vector.extract_strided_slice %764 {offsets = [0, 256], sizes = [8, 128], strides = [1, 1]} : vector<8x384xf32> to vector<8x128xf32>
    %770 = arith.mulf %768, %724 : vector<8x128xf32>
    %771 = arith.mulf %767, %766 : vector<8x128xf32>
    %772 = arith.addf %770, %771 : vector<8x128xf32>
    %773 = math.tanh %772 : vector<8x128xf32>
    %774 = arith.mulf %769, %773 : vector<8x128xf32>
    %775 = arith.truncf %774 : vector<8x128xf32> to vector<8x128xbf16>
    %c15_173 = arith.constant 15 : index
    %c0_174 = arith.constant 0 : index
    %c0_175 = arith.constant 0 : index
    %776 = vector.load %arg10[%c15_173, %c0_174, %c0_175] : memref<16x8x128xbf16, #tpu.memory_space<vmem>>, vector<1x8x128xbf16>
    %777 = vector.shape_cast %776 : vector<1x8x128xbf16> to vector<8x128xbf16>
    %778 = vector.shape_cast %775 : vector<8x128xbf16> to vector<1x8x128xbf16>
    tpu.vector_store %arg10[%c15_173, %c0_174, %c0_175], %778 {strides = array<i32>} : memref<16x8x128xbf16, #tpu.memory_space<vmem>>, vector<1x8x128xbf16>,
    %c0_176 = arith.constant 0 : index
    %c0_177 = arith.constant 0 : index
    %779 = vector.load %arg15[%c0_176, %c0_177] : memref<8x128xf32, #tpu.memory_space<vmem>>, vector<8x128xf32>
    tpu.vector_store %arg15[%c0_176, %c0_177], %753 {strides = array<i32>} : memref<8x128xf32, #tpu.memory_space<vmem>>, vector<8x128xf32>,
    %c0_178 = arith.constant 0 : index
    %c0_179 = arith.constant 0 : index
    %780 = vector.load %arg16[%c0_178, %c0_179] : memref<8x128xf32, #tpu.memory_space<vmem>>, vector<8x128xf32>
    tpu.vector_store %arg16[%c0_178, %c0_179], %751 {strides = array<i32>} : memref<8x128xf32, #tpu.memory_space<vmem>>, vector<8x128xf32>,
    %c0_180 = arith.constant 0 : index
    %c0_181 = arith.constant 0 : index
    %781 = vector.load %arg17[%c0_180, %c0_181] : memref<8x128xf32, #tpu.memory_space<vmem>>, vector<8x128xf32>
    tpu.vector_store %arg17[%c0_180, %c0_181], %774 {strides = array<i32>} : memref<8x128xf32, #tpu.memory_space<vmem>>, vector<8x128xf32>,
    %c0_182 = arith.constant 0 : index
    %c0_183 = arith.constant 0 : index
    %782 = vector.load %arg18[%c0_182, %c0_183] : memref<8x128xf32, #tpu.memory_space<vmem>>, vector<8x128xf32>
    tpu.vector_store %arg18[%c0_182, %c0_183], %772 {strides = array<i32>} : memref<8x128xf32, #tpu.memory_space<vmem>>, vector<8x128xf32>,
    %c0_i32_184 = arith.constant 0 : i32
    %783 = arith.cmpi eq, %arg0, %c0_i32_184 : i32
    %784 = arith.extui %783 : i1 to i32
    %c0_i32_185 = arith.constant 0 : i32
    %785 = arith.cmpi ne, %784, %c0_i32_185 : i32
    scf.if %785 {
      %c0_186 = arith.constant 0 : index
      %c0_187 = arith.constant 0 : index
      %786 = vector.load %arg11[%c0_186, %c0_187] : memref<8x128xf32, #tpu.memory_space<vmem>>, vector<8x128xf32>
      tpu.vector_store %arg11[%c0_186, %c0_187], %753 {strides = array<i32>} : memref<8x128xf32, #tpu.memory_space<vmem>>, vector<8x128xf32>,
      %c0_188 = arith.constant 0 : index
      %c0_189 = arith.constant 0 : index
      %787 = vector.load %arg12[%c0_188, %c0_189] : memref<8x128xf32, #tpu.memory_space<vmem>>, vector<8x128xf32>
      tpu.vector_store %arg12[%c0_188, %c0_189], %751 {strides = array<i32>} : memref<8x128xf32, #tpu.memory_space<vmem>>, vector<8x128xf32>,
      %c0_190 = arith.constant 0 : index
      %c0_191 = arith.constant 0 : index
      %788 = vector.load %arg13[%c0_190, %c0_191] : memref<8x128xf32, #tpu.memory_space<vmem>>, vector<8x128xf32>
      tpu.vector_store %arg13[%c0_190, %c0_191], %774 {strides = array<i32>} : memref<8x128xf32, #tpu.memory_space<vmem>>, vector<8x128xf32>,
      %c0_192 = arith.constant 0 : index
      %c0_193 = arith.constant 0 : index
      %789 = vector.load %arg14[%c0_192, %c0_193] : memref<8x128xf32, #tpu.memory_space<vmem>>, vector<8x128xf32>
      tpu.vector_store %arg14[%c0_192, %c0_193], %772 {strides = array<i32>} : memref<8x128xf32, #tpu.memory_space<vmem>>, vector<8x128xf32>,
    } else {
    }
    return
  }
  func.func @transform_0(%arg0: i32) -> (i32, i32, i32) {
    %c0_i32 = arith.constant 0 : i32
    %c0_i32_0 = arith.constant 0 : i32
    %c0_i32_1 = arith.constant 0 : i32
    return %arg0, %c0_i32, %c0_i32_0 : i32, i32, i32
  }
  func.func @transform_1(%arg0: i32) -> (i32, i32) {
    %c0_i32 = arith.constant 0 : i32
    %c0_i32_0 = arith.constant 0 : i32
    %c0_i32_1 = arith.constant 0 : i32
    return %c0_i32, %c0_i32_0 : i32, i32
  }
  func.func @transform_2(%arg0: i32) -> (i32, i32) {
    %c0_i32 = arith.constant 0 : i32
    %c0_i32_0 = arith.constant 0 : i32
    %c0_i32_1 = arith.constant 0 : i32
    return %c0_i32, %c0_i32_0 : i32, i32
  }
  func.func @transform_3(%arg0: i32) -> (i32, i32) {
    %c0_i32 = arith.constant 0 : i32
    %c0_i32_0 = arith.constant 0 : i32
    %c0_i32_1 = arith.constant 0 : i32
    return %c0_i32, %c0_i32_0 : i32, i32
  }
  func.func @transform_4(%arg0: i32) -> (i32, i32) {
    %c0_i32 = arith.constant 0 : i32
    %c0_i32_0 = arith.constant 0 : i32
    %c0_i32_1 = arith.constant 0 : i32
    return %c0_i32, %c0_i32_0 : i32, i32
  }
  func.func @transform_5(%arg0: i32) -> (i32, i32) {
    %c0_i32 = arith.constant 0 : i32
    %c0_i32_0 = arith.constant 0 : i32
    %c0_i32_1 = arith.constant 0 : i32
    return %c0_i32, %c0_i32_0 : i32, i32
  }
  func.func @transform_6(%arg0: i32) -> (i32, i32) {
    %c0_i32 = arith.constant 0 : i32
    %c0_i32_0 = arith.constant 0 : i32
    %c0_i32_1 = arith.constant 0 : i32
    return %c0_i32, %c0_i32_0 : i32, i32
  }
  func.func @transform_7(%arg0: i32) -> (i32, i32) {
    %c0_i32 = arith.constant 0 : i32
    %c0_i32_0 = arith.constant 0 : i32
    %c0_i32_1 = arith.constant 0 : i32
    return %c0_i32, %c0_i32_0 : i32, i32
  }
  func.func @transform_8(%arg0: i32) -> (i32, i32) {
    %c0_i32 = arith.constant 0 : i32
    %c0_i32_0 = arith.constant 0 : i32
    %c0_i32_1 = arith.constant 0 : i32
    return %c0_i32, %c0_i32_0 : i32, i32
  }
  func.func @transform_9(%arg0: i32) -> (i32, i32, i32) {
    %c0_i32 = arith.constant 0 : i32
    %c0_i32_0 = arith.constant 0 : i32
    %c0_i32_1 = arith.constant 0 : i32
    return %arg0, %c0_i32, %c0_i32_0 : i32, i32, i32
  }
  func.func @transform_10(%arg0: i32) -> (i32, i32) {
    %c0_i32 = arith.constant 0 : i32
    %c0_i32_0 = arith.constant 0 : i32
    %c0_i32_1 = arith.constant 0 : i32
    return %c0_i32, %c0_i32_0 : i32, i32
  }
  func.func @transform_11(%arg0: i32) -> (i32, i32) {
    %c0_i32 = arith.constant 0 : i32
    %c0_i32_0 = arith.constant 0 : i32
    %c0_i32_1 = arith.constant 0 : i32
    return %c0_i32, %c0_i32_0 : i32, i32
  }
  func.func @transform_12(%arg0: i32) -> (i32, i32) {
    %c0_i32 = arith.constant 0 : i32
    %c0_i32_0 = arith.constant 0 : i32
    %c0_i32_1 = arith.constant 0 : i32
    return %c0_i32, %c0_i32_0 : i32, i32
  }
  func.func @transform_13(%arg0: i32) -> (i32, i32) {
    %c0_i32 = arith.constant 0 : i32
    %c0_i32_0 = arith.constant 0 : i32
    %c0_i32_1 = arith.constant 0 : i32
    return %c0_i32, %c0_i32_0 : i32, i32
  }
}

</mosaic_0001>

<llo_original>
// kernel: rnn_forward.3
$region0: #{rnn_forward.3}
  #allocation0 [shape = 'u32[]', space=smem, size = 0x4, offset = 0x4, fixed_abs, tag = 'smem constant byte address 0x4 - core index']
  #allocation1 [shape = 'u32[144,128]{1,0:T(1,128)}', space=vmem, size = 0x12000, scoped, tag = 'internal scratch']
  %s0 = inlined_call_operand.vmem [shape: bf16[128,128], index: 0, kind: input, shape index: {}]
  %s1 = inlined_call_operand.vmem [shape: bf16[128,128], index: 1, kind: input, shape index: {}]
  %s2 = inlined_call_operand.vmem [shape: f32[1,128], index: 2, kind: input, shape index: {}]
  %s3 = inlined_call_operand.vmem [shape: f32[128,128], index: 3, kind: output, shape index: {}]
  %s4 = sld [smem:[#allocation0]]
  $region22: #{rnn_forward.3} parent=0
    _
  %s6 = ssub.s32 1, %s4
  %s7 = scalar_select 0, %s6, %s4
  // Predicated region
  $region2: #{rnn_forward.3} parent=0 // pred_check
    _
  $region3: #{rnn_forward.3} parent=0 // pred_check_branch
    %9 = sbr.rel (0) target = $region5
  $region4: #{rnn_forward.3} parent=0 // pred_region
    _
  $region5: #{rnn_forward.3} parent=0 // pred_fallthru
    _
  // Predicated region
  $region6: #{rnn_forward.3} parent=0 // pred_check
    _
  $region7: #{rnn_forward.3} parent=0 // pred_check_branch
    %11 = sbr.rel (0) target = $region9
  $region8: #{rnn_forward.3} parent=0 // pred_region
    _
  $region9: #{rnn_forward.3} parent=0 // pred_fallthru
    _
  // Predicated region
  $region10: #{rnn_forward.3} parent=0 // pred_check
    _
  $region11: #{rnn_forward.3} parent=0 // pred_check_branch
    %13 = sbr.rel (0) target = $region13
  $region12: #{rnn_forward.3} parent=0 // pred_region
    _
  $region13: #{rnn_forward.3} parent=0 // pred_fallthru
    _
  %v15 = vld [vmem:[%s0] sm:$0xf]
  %v16 = vld [vmem:[%s0 + $0x4] sm:$0xf]
  %v17 = vld [vmem:[%s0 + $0x8] sm:$0xf]
  %v18 = vld [vmem:[%s0 + $0xc] sm:$0xf]
  %v19 = vld [vmem:[%s0 + $0x10] sm:$0xf]
  %v20 = vld [vmem:[%s0 + $0x14] sm:$0xf]
  %v21 = vld [vmem:[%s0 + $0x18] sm:$0xf]
  %v22 = vld [vmem:[%s0 + $0x1c] sm:$0xf]
  %v23 = vld [vmem:[%s0 + $0x20] sm:$0xf]
  %v24 = vld [vmem:[%s0 + $0x24] sm:$0xf]
  %v25 = vld [vmem:[%s0 + $0x28] sm:$0xf]
  %v26 = vld [vmem:[%s0 + $0x2c] sm:$0xf]
  %v27 = vld [vmem:[%s0 + $0x30] sm:$0xf]
  %v28 = vld [vmem:[%s0 + $0x34] sm:$0xf]
  %v29 = vld [vmem:[%s0 + $0x38] sm:$0xf]
  %v30 = vld [vmem:[%s0 + $0x3c] sm:$0xf]
  %v31 = vld [vmem:[%s1] sm:$0xf]
  %v32 = vld [vmem:[%s1 + $0x4] sm:$0xf]
  %v33 = vld [vmem:[%s1 + $0x8] sm:$0xf]
  %v34 = vld [vmem:[%s1 + $0xc] sm:$0xf]
  %v35 = vld [vmem:[%s1 + $0x10] sm:$0xf]
  %v36 = vld [vmem:[%s1 + $0x14] sm:$0xf]
  %v37 = vld [vmem:[%s1 + $0x18] sm:$0xf]
  %v38 = vld [vmem:[%s1 + $0x1c] sm:$0xf]
  %v39 = vld [vmem:[%s1 + $0x20] sm:$0xf]
  %v40 = vld [vmem:[%s1 + $0x24] sm:$0xf]
  %v41 = vld [vmem:[%s1 + $0x28] sm:$0xf]
  %v42 = vld [vmem:[%s1 + $0x2c] sm:$0xf]
  %v43 = vld [vmem:[%s1 + $0x30] sm:$0xf]
  %v44 = vld [vmem:[%s1 + $0x34] sm:$0xf]
  %v45 = vld [vmem:[%s1 + $0x38] sm:$0xf]
  %v46 = vld [vmem:[%s1 + $0x3c] sm:$0xf]
  %v47 = vld [vmem:[%s2] sm:$0x1]
  %v49 = vlaneseq
  %v50 = vshrl.u32 %v49, 7
  %v51 = vsub.s32 0, %v50
  %v52 = vrot.slane %v47, %v51
  %v70 = vunpack.c.l.b16 %v15
  %v71 = vunpack.c.l.b16 %v16
  %v72 = vunpack.c.l.b16 %v17
  %v73 = vunpack.c.l.b16 %v18
  %v74 = vunpack.c.l.b16 %v19
  %v75 = vunpack.c.l.b16 %v20
  %v76 = vunpack.c.l.b16 %v21
  %v77 = vunpack.c.l.b16 %v22
  %v78 = vunpack.c.l.b16 %v23
  %v79 = vunpack.c.l.b16 %v24
  %v80 = vunpack.c.l.b16 %v25
  %v81 = vunpack.c.l.b16 %v26
  %v82 = vunpack.c.l.b16 %v27
  %v83 = vunpack.c.l.b16 %v28
  %v84 = vunpack.c.l.b16 %v29
  %v85 = vunpack.c.l.b16 %v30
  %v86 = vpack.c.b16 %v71, %v70
  %v87 = vpack.c.b16 %v73, %v72
  %v88 = vpack.c.b16 %v75, %v74
  %v89 = vpack.c.b16 %v77, %v76
  %v90 = vpack.c.b16 %v79, %v78
  %v91 = vpack.c.b16 %v81, %v80
  %v92 = vpack.c.b16 %v83, %v82
  %v93 = vpack.c.b16 %v85, %v84
  %v118 = vunpack.c.l.b16 %v31
  %v119 = vunpack.c.l.b16 %v32
  %v120 = vunpack.c.l.b16 %v33
  %v121 = vunpack.c.l.b16 %v34
  %v122 = vunpack.c.l.b16 %v35
  %v123 = vunpack.c.l.b16 %v36
  %v124 = vunpack.c.l.b16 %v37
  %v125 = vunpack.c.l.b16 %v38
  %v126 = vunpack.c.l.b16 %v39
  %v127 = vunpack.c.l.b16 %v40
  %v128 = vunpack.c.l.b16 %v41
  %v129 = vunpack.c.l.b16 %v42
  %v130 = vunpack.c.l.b16 %v43
  %v131 = vunpack.c.l.b16 %v44
  %v132 = vunpack.c.l.b16 %v45
  %v133 = vunpack.c.l.b16 %v46
  %v134 = vpack.c.b16 %v119, %v118
  %v135 = vpack.c.b16 %v121, %v120
  %v136 = vpack.c.b16 %v123, %v122
  %v137 = vpack.c.b16 %v125, %v124
  %v138 = vpack.c.b16 %v127, %v126
  %v139 = vpack.c.b16 %v129, %v128
  %v140 = vpack.c.b16 %v131, %v130
  %v141 = vpack.c.b16 %v133, %v132
  %150 = vmatprep.subr.bf16.mxu0 0
  %151 = vmatpush1.bf16.msra.mxu0 %v134
  %152 = vmatprep.subr.bf16.mxu0 0
  %153 = vmatpush1.bf16.msra.mxu0 %v135
  %154 = vmatprep.subr.bf16.mxu0 0
  %155 = vmatpush1.bf16.msra.mxu0 %v136
  %156 = vmatprep.subr.bf16.mxu0 0
  %157 = vmatpush1.bf16.msra.mxu0 %v137
  %158 = vmatprep.subr.bf16.mxu0 0
  %159 = vmatpush1.bf16.msra.mxu0 %v138
  %160 = vmatprep.subr.bf16.mxu0 0
  %161 = vmatpush1.bf16.msra.mxu0 %v139
  %162 = vmatprep.subr.bf16.mxu0 0
  %163 = vmatpush1.bf16.msra.mxu0 %v140
  %164 = vmatprep.subr.bf16.mxu0 0
  %165 = vmatpush1.bf16.msra.mxu0 %v141
  %166 = vmatprep.subr.bf16.mxu0 0
  %167 = vmatpush1.bf16.msra.mxu0 0
  %168 = vmatprep.subr.bf16.mxu0 0
  %169 = vmatpush1.bf16.msra.mxu0 0
  %170 = vmatprep.subr.bf16.mxu0 0
  %171 = vmatpush1.bf16.msra.mxu0 0
  %172 = vmatprep.subr.bf16.mxu0 0
  %173 = vmatpush1.bf16.msra.mxu0 0
  %174 = vmatprep.subr.bf16.mxu0 0
  %175 = vmatpush1.bf16.msra.mxu0 0
  %176 = vmatprep.subr.bf16.mxu0 0
  %177 = vmatpush1.bf16.msra.mxu0 0
  %178 = vmatprep.subr.bf16.mxu0 0
  %179 = vmatpush1.bf16.msra.mxu0 0
  %180 = vmatprep.subr.bf16.mxu0 0
  %181 = vmatpush1.bf16.msra.mxu0 0
  %182 = vmatprep.mubr.bf16.mxu0 0
  %183 = vmatmul.mubr.bf16.gmra.mrb[0].mxu0 %v86
  %v184 = vpop.f32.mrb[0].mxu0
  %v185 = vadd.f32 %v52, %v184
  %v186 = vpop.f32.mrb[0].mxu0
  %v187 = vpop.f32.mrb[0].mxu0
  %v188 = vadd.f32 %v52, %v187
  %v189 = vpop.f32.mrb[0].mxu0
  %190 = vmatprep.mubr.bf16.mxu0 0
  %191 = vmatmul.mubr.bf16.gmra.mrb[0].mxu0 %v87
  %v192 = vpop.f32.mrb[0].mxu0
  %v193 = vadd.f32 %v52, %v192
  %v194 = vpop.f32.mrb[0].mxu0
  %v195 = vpop.f32.mrb[0].mxu0
  %v196 = vadd.f32 %v52, %v195
  %v197 = vpop.f32.mrb[0].mxu0
  %198 = vmatprep.mubr.bf16.mxu0 0
  %199 = vmatmul.mubr.bf16.gmra.mrb[0].mxu0 %v88
  %v200 = vpop.f32.mrb[0].mxu0
  %v201 = vadd.f32 %v52, %v200
  %v202 = vpop.f32.mrb[0].mxu0
  %v203 = vpop.f32.mrb[0].mxu0
  %v204 = vadd.f32 %v52, %v203
  %v205 = vpop.f32.mrb[0].mxu0
  %206 = vmatprep.mubr.bf16.mxu0 0
  %207 = vmatmul.mubr.bf16.gmra.mrb[0].mxu0 %v89
  %v208 = vpop.f32.mrb[0].mxu0
  %v209 = vadd.f32 %v52, %v208
  %v210 = vpop.f32.mrb[0].mxu0
  %v211 = vpop.f32.mrb[0].mxu0
  %v212 = vadd.f32 %v52, %v211
  %v213 = vpop.f32.mrb[0].mxu0
  %214 = vmatprep.mubr.bf16.mxu0 0
  %215 = vmatmul.mubr.bf16.gmra.mrb[0].mxu0 %v90
  %v216 = vpop.f32.mrb[0].mxu0
  %v217 = vadd.f32 %v52, %v216
  %v218 = vpop.f32.mrb[0].mxu0
  %v219 = vpop.f32.mrb[0].mxu0
  %v220 = vadd.f32 %v52, %v219
  %v221 = vpop.f32.mrb[0].mxu0
  %222 = vmatprep.mubr.bf16.mxu0 0
  %223 = vmatmul.mubr.bf16.gmra.mrb[0].mxu0 %v91
  %v224 = vpop.f32.mrb[0].mxu0
  %v225 = vadd.f32 %v52, %v224
  %v226 = vpop.f32.mrb[0].mxu0
  %v227 = vpop.f32.mrb[0].mxu0
  %v228 = vadd.f32 %v52, %v227
  %v229 = vpop.f32.mrb[0].mxu0
  %230 = vmatprep.mubr.bf16.mxu0 0
  %231 = vmatmul.mubr.bf16.gmra.mrb[0].mxu0 %v92
  %v232 = vpop.f32.mrb[0].mxu0
  %v233 = vadd.f32 %v52, %v232
  %v234 = vpop.f32.mrb[0].mxu0
  %v235 = vpop.f32.mrb[0].mxu0
  %v236 = vadd.f32 %v52, %v235
  %v237 = vpop.f32.mrb[0].mxu0
  %238 = vmatprep.mubr.bf16.mxu0 0
  %239 = vmatmul.mubr.bf16.gmra.mrb[0].mxu0 %v93
  %v240 = vpop.f32.mrb[0].mxu0
  %v241 = vadd.f32 %v52, %v240
  %v242 = vpop.f32.mrb[0].mxu0
  %v243 = vpop.f32.mrb[0].mxu0
  %v244 = vadd.f32 %v52, %v243
  %v245 = vpop.f32.mrb[0].mxu0
  %246 = vdwg.mxu0
  %247 = vst [vmem:[%s3] sm:$0xff] %v185
  %248 = vst [vmem:[%s3 + $0x8] sm:$0xff] %v188
  %249 = vst [vmem:[%s3 + $0x10] sm:$0xff] %v193
  %250 = vst [vmem:[%s3 + $0x18] sm:$0xff] %v196
  %251 = vst [vmem:[%s3 + $0x20] sm:$0xff] %v201
  %252 = vst [vmem:[%s3 + $0x28] sm:$0xff] %v204
  %253 = vst [vmem:[%s3 + $0x30] sm:$0xff] %v209
  %254 = vst [vmem:[%s3 + $0x38] sm:$0xff] %v212
  %255 = vst [vmem:[%s3 + $0x40] sm:$0xff] %v217
  %256 = vst [vmem:[%s3 + $0x48] sm:$0xff] %v220
  %257 = vst [vmem:[%s3 + $0x50] sm:$0xff] %v225
  %258 = vst [vmem:[%s3 + $0x58] sm:$0xff] %v228
  %259 = vst [vmem:[%s3 + $0x60] sm:$0xff] %v233
  %260 = vst [vmem:[%s3 + $0x68] sm:$0xff] %v236
  %261 = vst [vmem:[%s3 + $0x70] sm:$0xff] %v241
  %262 = vst [vmem:[%s3 + $0x78] sm:$0xff] %v244
  // Predicated region
  $region14: #{rnn_forward.3} parent=0 // pred_check
    _
  $region15: #{rnn_forward.3} parent=0 // pred_check_branch
    %264 = sbr.rel (0) target = $region17
  $region16: #{rnn_forward.3} parent=0 // pred_region
    _
  $region17: #{rnn_forward.3} parent=0 // pred_fallthru
    _
  // Predicated region
  $region18: #{rnn_forward.3} parent=0 // pred_check
    _
  $region19: #{rnn_forward.3} parent=0 // pred_check_branch
    %266 = sbr.rel (0) target = $region21
  $region20: #{rnn_forward.3} parent=0 // pred_region
    _
  $region21: #{rnn_forward.3} parent=0 // pred_fallthru
    _

// kernel: rnn_forward.2
$region0: #{rnn_forward.2}
  #allocation0 [shape = 'u32[]', space=smem, size = 0x4, offset = 0x4, fixed_abs, tag = 'smem constant byte address 0x4 - core index']
  #allocation1 [shape = 'u32[144,128]{1,0:T(1,128)}', space=vmem, size = 0x12000, scoped, tag = 'internal scratch']
  #allocation2 [shape = 'f32[8,128]{1,0:T(8,128)}', space=vmem, size = 0x1000, scoped, tag = 'scratch operand']
  #allocation3 [shape = 'f32[8,128]{1,0:T(8,128)}', space=vmem, size = 0x1000, scoped, tag = 'scratch operand']
  #allocation4 [shape = 'f32[8,128]{1,0:T(8,128)}', space=vmem, size = 0x1000, scoped, tag = 'scratch operand']
  #allocation5 [shape = 'f32[8,128]{1,0:T(8,128)}', space=vmem, size = 0x1000, scoped, tag = 'scratch operand']
  %s0 = inlined_call_operand.vmem [shape: f32[16,8,512], index: 0, kind: input, shape index: {}]
  %s1 = inlined_call_operand.vmem [shape: bf16[128,512], index: 1, kind: input, shape index: {}]
  %s2 = inlined_call_operand.vmem [shape: bf16[128,512], index: 2, kind: input, shape index: {}]
  %s3 = inlined_call_operand.vmem [shape: bf16[128,512], index: 3, kind: input, shape index: {}]
  %s4 = inlined_call_operand.vmem [shape: f32[1,512], index: 4, kind: input, shape index: {}]
  %s5 = inlined_call_operand.vmem [shape: f32[8,128], index: 5, kind: input, shape index: {}]
  %s6 = inlined_call_operand.vmem [shape: f32[8,128], index: 6, kind: input, shape index: {}]
  %s7 = inlined_call_operand.vmem [shape: f32[8,128], index: 7, kind: input, shape index: {}]
  %s8 = inlined_call_operand.vmem [shape: f32[8,128], index: 8, kind: input, shape index: {}]
  %s9 = inlined_call_operand.vmem [shape: bf16[16,8,128], index: 9, kind: output, shape index: {0}]
  %s10 = inlined_call_operand.vmem [shape: f32[8,128], index: 10, kind: output, shape index: {1}]
  %s11 = inlined_call_operand.vmem [shape: f32[8,128], index: 11, kind: output, shape index: {2}]
  %s12 = inlined_call_operand.vmem [shape: f32[8,128], index: 12, kind: output, shape index: {3}]
  %s13 = inlined_call_operand.vmem [shape: f32[8,128], index: 13, kind: output, shape index: {4}]
  %14 = xla_tuple %s9, %s10, %s11, %s12, %s13
  %s15 = sld [smem:[#allocation0]]
  $region86: #{rnn_forward.2} parent=0
    _
  %s17 = ssub.s32 1, %s15
  %s18 = scalar_select 0, %s17, %s15
  // Predicated region
  $region2: #{rnn_forward.2} parent=0 // pred_check
    _
  $region3: #{rnn_forward.2} parent=0 // pred_check_branch
    %20 = sbr.rel (0) target = $region5
  $region4: #{rnn_forward.2} parent=0 // pred_region
    _
  $region5: #{rnn_forward.2} parent=0 // pred_fallthru
    _
  // Predicated region
  $region6: #{rnn_forward.2} parent=0 // pred_check
    _
  $region7: #{rnn_forward.2} parent=0 // pred_check_branch
    %22 = sbr.rel (0) target = $region9
  $region8: #{rnn_forward.2} parent=0 // pred_region
    _
  $region9: #{rnn_forward.2} parent=0 // pred_fallthru
    _
  // Predicated region
  $region10: #{rnn_forward.2} parent=0 // pred_check
    _
  $region11: #{rnn_forward.2} parent=0 // pred_check_branch
    %24 = sbr.rel (0) target = $region13
  $region12: #{rnn_forward.2} parent=0 // pred_region
    _
  $region13: #{rnn_forward.2} parent=0 // pred_fallthru
    _
  // Predicated region
  $region14: #{rnn_forward.2} parent=0 // pred_check
    _
  $region15: #{rnn_forward.2} parent=0 // pred_check_branch
    %26 = sbr.rel (0) target = $region17
  $region16: #{rnn_forward.2} parent=0 // pred_region
    _
  $region17: #{rnn_forward.2} parent=0 // pred_fallthru
    _
  // Predicated region
  $region18: #{rnn_forward.2} parent=0 // pred_check
    _
  $region19: #{rnn_forward.2} parent=0 // pred_check_branch
    %28 = sbr.rel (0) target = $region21
  $region20: #{rnn_forward.2} parent=0 // pred_region
    _
  $region21: #{rnn_forward.2} parent=0 // pred_fallthru
    _
  // Predicated region
  $region22: #{rnn_forward.2} parent=0 // pred_check
    _
  $region23: #{rnn_forward.2} parent=0 // pred_check_branch
    %30 = sbr.rel (0) target = $region25
  $region24: #{rnn_forward.2} parent=0 // pred_region
    _
  $region25: #{rnn_forward.2} parent=0 // pred_fallthru
    _
  // Predicated region
  $region26: #{rnn_forward.2} parent=0 // pred_check
    _
  $region27: #{rnn_forward.2} parent=0 // pred_check_branch
    %32 = sbr.rel (0) target = $region29
  $region28: #{rnn_forward.2} parent=0 // pred_region
    _
  $region29: #{rnn_forward.2} parent=0 // pred_fallthru
    _
  // Predicated region
  $region30: #{rnn_forward.2} parent=0 // pred_check
    _
  $region31: #{rnn_forward.2} parent=0 // pred_check_branch
    %34 = sbr.rel (0) target = $region33
  $region32: #{rnn_forward.2} parent=0 // pred_region
    _
  $region33: #{rnn_forward.2} parent=0 // pred_fallthru
    _
  // Predicated region
  $region34: #{rnn_forward.2} parent=0 // pred_check
    _
  $region35: #{rnn_forward.2} parent=0 // pred_check_branch
    %36 = sbr.rel (0) target = $region37
  $region36: #{rnn_forward.2} parent=0 // pred_region
    _
  $region37: #{rnn_forward.2} parent=0 // pred_fallthru
    _
  %p38 = scmp.eq.s32.totalorder 0, 0
  // Predicated region
  $region38: #{rnn_forward.2} parent=0 // pred_check
    %p39 = pneg %p38
  $region39: #{rnn_forward.2} parent=0 // pred_check_branch
    %41 = sbr.rel (%p39) target = $region41
  $region40: #{rnn_forward.2} parent=0 // pred_region
    %v42 = vld [vmem:[%s5] sm:$0xff]
    %43 = vst [vmem:[#allocation2] sm:$0xff] %v42
    %v44 = vld [vmem:[%s6] sm:$0xff]
    %45 = vst [vmem:[#allocation3] sm:$0xff] %v44
    %v46 = vld [vmem:[%s7] sm:$0xff]
    %47 = vst [vmem:[#allocation4] sm:$0xff] %v46
    %v48 = vld [vmem:[%s8] sm:$0xff]
    %49 = vst [vmem:[#allocation5] sm:$0xff] %v48
  $region41: #{rnn_forward.2} parent=0 // pred_fallthru
    _
  %v50 = vld [vmem:[%s1] sm:$0xff]
  %v51 = vld [vmem:[%s1 + $0x8] sm:$0xff]
  %v52 = vld [vmem:[%s1 + $0x10] sm:$0xff]
  %v53 = vld [vmem:[%s1 + $0x18] sm:$0xff]
  %v54 = vld [vmem:[%s1 + $0x20] sm:$0xff]
  %v55 = vld [vmem:[%s1 + $0x28] sm:$0xff]
  %v56 = vld [vmem:[%s1 + $0x30] sm:$0xff]
  %v57 = vld [vmem:[%s1 + $0x38] sm:$0xff]
  %v58 = vld [vmem:[%s1 + $0x40] sm:$0xff]
  %v59 = vld [vmem:[%s1 + $0x48] sm:$0xff]
  %v60 = vld [vmem:[%s1 + $0x50] sm:$0xff]
  %v61 = vld [vmem:[%s1 + $0x58] sm:$0xff]
  %v62 = vld [vmem:[%s1 + $0x60] sm:$0xff]
  %v63 = vld [vmem:[%s1 + $0x68] sm:$0xff]
  %v64 = vld [vmem:[%s1 + $0x70] sm:$0xff]
  %v65 = vld [vmem:[%s1 + $0x78] sm:$0xff]
  %v66 = vld [vmem:[%s1 + $0x80] sm:$0xff]
  %v67 = vld [vmem:[%s1 + $0x88] sm:$0xff]
  %v68 = vld [vmem:[%s1 + $0x90] sm:$0xff]
  %v69 = vld [vmem:[%s1 + $0x98] sm:$0xff]
  %v70 = vld [vmem:[%s1 + $0xa0] sm:$0xff]
  %v71 = vld [vmem:[%s1 + $0xa8] sm:$0xff]
  %v72 = vld [vmem:[%s1 + $0xb0] sm:$0xff]
  %v73 = vld [vmem:[%s1 + $0xb8] sm:$0xff]
  %v74 = vld [vmem:[%s1 + $0xc0] sm:$0xff]
  %v75 = vld [vmem:[%s1 + $0xc8] sm:$0xff]
  %v76 = vld [vmem:[%s1 + $0xd0] sm:$0xff]
  %v77 = vld [vmem:[%s1 + $0xd8] sm:$0xff]
  %v78 = vld [vmem:[%s1 + $0xe0] sm:$0xff]
  %v79 = vld [vmem:[%s1 + $0xe8] sm:$0xff]
  %v80 = vld [vmem:[%s1 + $0xf0] sm:$0xff]
  %v81 = vld [vmem:[%s1 + $0xf8] sm:$0xff]
  %v82 = vld [vmem:[%s2] sm:$0xff]
  %v83 = vld [vmem:[%s2 + $0x8] sm:$0xff]
  %v84 = vld [vmem:[%s2 + $0x10] sm:$0xff]
  %v85 = vld [vmem:[%s2 + $0x18] sm:$0xff]
  %v86 = vld [vmem:[%s2 + $0x20] sm:$0xff]
  %v87 = vld [vmem:[%s2 + $0x28] sm:$0xff]
  %v88 = vld [vmem:[%s2 + $0x30] sm:$0xff]
  %v89 = vld [vmem:[%s2 + $0x38] sm:$0xff]
  %v90 = vld [vmem:[%s2 + $0x40] sm:$0xff]
  %v91 = vld [vmem:[%s2 + $0x48] sm:$0xff]
  %v92 = vld [vmem:[%s2 + $0x50] sm:$0xff]
  %v93 = vld [vmem:[%s2 + $0x58] sm:$0xff]
  %v94 = vld [vmem:[%s2 + $0x60] sm:$0xff]
  %v95 = vld [vmem:[%s2 + $0x68] sm:$0xff]
  %v96 = vld [vmem:[%s2 + $0x70] sm:$0xff]
  %v97 = vld [vmem:[%s2 + $0x78] sm:$0xff]
  %v98 = vld [vmem:[%s2 + $0x80] sm:$0xff]
  %v99 = vld [vmem:[%s2 + $0x88] sm:$0xff]
  %v100 = vld [vmem:[%s2 + $0x90] sm:$0xff]
  %v101 = vld [vmem:[%s2 + $0x98] sm:$0xff]
  %v102 = vld [vmem:[%s2 + $0xa0] sm:$0xff]
  %v103 = vld [vmem:[%s2 + $0xa8] sm:$0xff]
  %v104 = vld [vmem:[%s2 + $0xb0] sm:$0xff]
  %v105 = vld [vmem:[%s2 + $0xb8] sm:$0xff]
  %v106 = vld [vmem:[%s2 + $0xc0] sm:$0xff]
  %v107 = vld [vmem:[%s2 + $0xc8] sm:$0xff]
  %v108 = vld [vmem:[%s2 + $0xd0] sm:$0xff]
  %v109 = vld [vmem:[%s2 + $0xd8] sm:$0xff]
  %v110 = vld [vmem:[%s2 + $0xe0] sm:$0xff]
  %v111 = vld [vmem:[%s2 + $0xe8] sm:$0xff]
  %v112 = vld [vmem:[%s2 + $0xf0] sm:$0xff]
  %v113 = vld [vmem:[%s2 + $0xf8] sm:$0xff]
  %v114 = vld [vmem:[%s3] sm:$0xff]
  %v115 = vld [vmem:[%s3 + $0x8] sm:$0xff]
  %v116 = vld [vmem:[%s3 + $0x10] sm:$0xff]
  %v117 = vld [vmem:[%s3 + $0x18] sm:$0xff]
  %v118 = vld [vmem:[%s3 + $0x20] sm:$0xff]
  %v119 = vld [vmem:[%s3 + $0x28] sm:$0xff]
  %v120 = vld [vmem:[%s3 + $0x30] sm:$0xff]
  %v121 = vld [vmem:[%s3 + $0x38] sm:$0xff]
  %v122 = vld [vmem:[%s3 + $0x40] sm:$0xff]
  %v123 = vld [vmem:[%s3 + $0x48] sm:$0xff]
  %v124 = vld [vmem:[%s3 + $0x50] sm:$0xff]
  %v125 = vld [vmem:[%s3 + $0x58] sm:$0xff]
  %v126 = vld [vmem:[%s3 + $0x60] sm:$0xff]
  %v127 = vld [vmem:[%s3 + $0x68] sm:$0xff]
  %v128 = vld [vmem:[%s3 + $0x70] sm:$0xff]
  %v129 = vld [vmem:[%s3 + $0x78] sm:$0xff]
  %v130 = vld [vmem:[%s3 + $0x80] sm:$0xff]
  %v131 = vld [vmem:[%s3 + $0x88] sm:$0xff]
  %v132 = vld [vmem:[%s3 + $0x90] sm:$0xff]
  %v133 = vld [vmem:[%s3 + $0x98] sm:$0xff]
  %v134 = vld [vmem:[%s3 + $0xa0] sm:$0xff]
  %v135 = vld [vmem:[%s3 + $0xa8] sm:$0xff]
  %v136 = vld [vmem:[%s3 + $0xb0] sm:$0xff]
  %v137 = vld [vmem:[%s3 + $0xb8] sm:$0xff]
  %v138 = vld [vmem:[%s3 + $0xc0] sm:$0xff]
  %v139 = vld [vmem:[%s3 + $0xc8] sm:$0xff]
  %v140 = vld [vmem:[%s3 + $0xd0] sm:$0xff]
  %v141 = vld [vmem:[%s3 + $0xd8] sm:$0xff]
  %v142 = vld [vmem:[%s3 + $0xe0] sm:$0xff]
  %v143 = vld [vmem:[%s3 + $0xe8] sm:$0xff]
  %v144 = vld [vmem:[%s3 + $0xf0] sm:$0xff]
  %v145 = vld [vmem:[%s3 + $0xf8] sm:$0xff]
  %v146 = vld [vmem:[%s4] sm:$0xf]
  %v147 = vld [vmem:[#allocation2] sm:$0xff]
  %v148 = vld [vmem:[#allocation3] sm:$0xff]
  %v149 = vld [vmem:[#allocation4] sm:$0xff]
  %v150 = vld [vmem:[#allocation5] sm:$0xff]
  %v151 = vpack.c.bf16 %v147, %v147
  %v184 = vunpack.c.l.b16 %v50
  %v185 = vunpack.c.h.b16 %v50
  %v186 = vunpack.c.l.b16 %v51
  %v187 = vunpack.c.h.b16 %v51
  %v188 = vunpack.c.l.b16 %v52
  %v189 = vunpack.c.h.b16 %v52
  %v190 = vunpack.c.l.b16 %v53
  %v191 = vunpack.c.h.b16 %v53
  %v192 = vunpack.c.l.b16 %v54
  %v193 = vunpack.c.h.b16 %v54
  %v194 = vunpack.c.l.b16 %v55
  %v195 = vunpack.c.h.b16 %v55
  %v196 = vunpack.c.l.b16 %v56
  %v197 = vunpack.c.h.b16 %v56
  %v198 = vunpack.c.l.b16 %v57
  %v199 = vunpack.c.h.b16 %v57
  %v200 = vunpack.c.l.b16 %v58
  %v201 = vunpack.c.h.b16 %v58
  %v202 = vunpack.c.l.b16 %v59
  %v203 = vunpack.c.h.b16 %v59
  %v204 = vunpack.c.l.b16 %v60
  %v205 = vunpack.c.h.b16 %v60
  %v206 = vunpack.c.l.b16 %v61
  %v207 = vunpack.c.h.b16 %v61
  %v208 = vunpack.c.l.b16 %v62
  %v209 = vunpack.c.h.b16 %v62
  %v210 = vunpack.c.l.b16 %v63
  %v211 = vunpack.c.h.b16 %v63
  %v212 = vunpack.c.l.b16 %v64
  %v213 = vunpack.c.h.b16 %v64
  %v214 = vunpack.c.l.b16 %v65
  %v215 = vunpack.c.h.b16 %v65
  %v216 = vunpack.c.l.b16 %v66
  %v217 = vunpack.c.h.b16 %v66
  %v218 = vunpack.c.l.b16 %v67
  %v219 = vunpack.c.h.b16 %v67
  %v220 = vunpack.c.l.b16 %v68
  %v221 = vunpack.c.h.b16 %v68
  %v222 = vunpack.c.l.b16 %v69
  %v223 = vunpack.c.h.b16 %v69
  %v224 = vunpack.c.l.b16 %v70
  %v225 = vunpack.c.h.b16 %v70
  %v226 = vunpack.c.l.b16 %v71
  %v227 = vunpack.c.h.b16 %v71
  %v228 = vunpack.c.l.b16 %v72
  %v229 = vunpack.c.h.b16 %v72
  %v230 = vunpack.c.l.b16 %v73
  %v231 = vunpack.c.h.b16 %v73
  %v232 = vunpack.c.l.b16 %v74
  %v233 = vunpack.c.h.b16 %v74
  %v234 = vunpack.c.l.b16 %v75
  %v235 = vunpack.c.h.b16 %v75
  %v236 = vunpack.c.l.b16 %v76
  %v237 = vunpack.c.h.b16 %v76
  %v238 = vunpack.c.l.b16 %v77
  %v239 = vunpack.c.h.b16 %v77
  %v240 = vunpack.c.l.b16 %v78
  %v241 = vunpack.c.h.b16 %v78
  %v242 = vunpack.c.l.b16 %v79
  %v243 = vunpack.c.h.b16 %v79
  %v244 = vunpack.c.l.b16 %v80
  %v245 = vunpack.c.h.b16 %v80
  %v246 = vunpack.c.l.b16 %v81
  %v247 = vunpack.c.h.b16 %v81
  %v248 = vpack.c.b16 %v188, %v184
  %v249 = vpack.c.b16 %v189, %v185
  %v250 = vpack.c.b16 %v190, %v186
  %v251 = vpack.c.b16 %v191, %v187
  %v252 = vpack.c.b16 %v196, %v192
  %v253 = vpack.c.b16 %v197, %v193
  %v254 = vpack.c.b16 %v198, %v194
  %v255 = vpack.c.b16 %v199, %v195
  %v256 = vpack.c.b16 %v204, %v200
  %v257 = vpack.c.b16 %v205, %v201
  %v258 = vpack.c.b16 %v206, %v202
  %v259 = vpack.c.b16 %v207, %v203
  %v260 = vpack.c.b16 %v212, %v208
  %v261 = vpack.c.b16 %v213, %v209
  %v262 = vpack.c.b16 %v214, %v210
  %v263 = vpack.c.b16 %v215, %v211
  %v264 = vpack.c.b16 %v220, %v216
  %v265 = vpack.c.b16 %v221, %v217
  %v266 = vpack.c.b16 %v222, %v218
  %v267 = vpack.c.b16 %v223, %v219
  %v268 = vpack.c.b16 %v228, %v224
  %v269 = vpack.c.b16 %v229, %v225
  %v270 = vpack.c.b16 %v230, %v226
  %v271 = vpack.c.b16 %v231, %v227
  %v272 = vpack.c.b16 %v236, %v232
  %v273 = vpack.c.b16 %v237, %v233
  %v274 = vpack.c.b16 %v238, %v234
  %v275 = vpack.c.b16 %v239, %v235
  %v276 = vpack.c.b16 %v244, %v240
  %v277 = vpack.c.b16 %v245, %v241
  %v278 = vpack.c.b16 %v246, %v242
  %v279 = vpack.c.b16 %v247, %v243
  %312 = vmatprep.subr.bf16.mxu0 %v249
  %313 = vmatpush1.bf16.msra.mxu0 %v248
  %314 = vmatprep.subr.bf16.mxu0 %v253
  %315 = vmatpush1.bf16.msra.mxu0 %v252
  %316 = vmatprep.subr.bf16.mxu0 %v257
  %317 = vmatpush1.bf16.msra.mxu0 %v256
  %318 = vmatprep.subr.bf16.mxu0 %v261
  %319 = vmatpush1.bf16.msra.mxu0 %v260
  %320 = vmatprep.subr.bf16.mxu0 %v265
  %321 = vmatpush1.bf16.msra.mxu0 %v264
  %322 = vmatprep.subr.bf16.mxu0 %v269
  %323 = vmatpush1.bf16.msra.mxu0 %v268
  %324 = vmatprep.subr.bf16.mxu0 %v273
  %325 = vmatpush1.bf16.msra.mxu0 %v272
  %326 = vmatprep.subr.bf16.mxu0 %v277
  %327 = vmatpush1.bf16.msra.mxu0 %v276
  %328 = vmatprep.subr.bf16.mxu0 0
  %329 = vmatpush1.bf16.msra.mxu0 0
  %330 = vmatprep.subr.bf16.mxu0 0
  %331 = vmatpush1.bf16.msra.mxu0 0
  %332 = vmatprep.subr.bf16.mxu0 0
  %333 = vmatpush1.bf16.msra.mxu0 0
  %334 = vmatprep.subr.bf16.mxu0 0
  %335 = vmatpush1.bf16.msra.mxu0 0
  %336 = vmatprep.subr.bf16.mxu0 0
  %337 = vmatpush1.bf16.msra.mxu0 0
  %338 = vmatprep.subr.bf16.mxu0 0
  %339 = vmatpush1.bf16.msra.mxu0 0
  %340 = vmatprep.subr.bf16.mxu0 0
  %341 = vmatpush1.bf16.msra.mxu0 0
  %342 = vmatprep.subr.bf16.mxu0 0
  %343 = vmatpush1.bf16.msra.mxu0 0
  %344 = vmatprep.mubr.bf16.mxu0 0
  %345 = vmatmul.mubr.bf16.gmra.mrb[0].mxu0 %v151
  %v346 = vpop.f32.mrb[0].mxu0
  %v347 = vadd.f32 0.0, %v346
  %v348 = vpop.f32.mrb[0].mxu0
  %v349 = vadd.f32 0.0, %v348
  %v350 = vpop.f32.mrb[0].mxu0
  %v351 = vpop.f32.mrb[0].mxu0
  %352 = vdwg.mxu0
  %353 = vmatprep.subr.bf16.mxu0 %v251
  %354 = vmatpush1.bf16.msra.mxu0 %v250
  %355 = vmatprep.subr.bf16.mxu0 %v255
  %356 = vmatpush1.bf16.msra.mxu0 %v254
  %357 = vmatprep.subr.bf16.mxu0 %v259
  %358 = vmatpush1.bf16.msra.mxu0 %v258
  %359 = vmatprep.subr.bf16.mxu0 %v263
  %360 = vmatpush1.bf16.msra.mxu0 %v262
  %361 = vmatprep.subr.bf16.mxu0 %v267
  %362 = vmatpush1.bf16.msra.mxu0 %v266
  %363 = vmatprep.subr.bf16.mxu0 %v271
  %364 = vmatpush1.bf16.msra.mxu0 %v270
  %365 = vmatprep.subr.bf16.mxu0 %v275
  %366 = vmatpush1.bf16.msra.mxu0 %v274
  %367 = vmatprep.subr.bf16.mxu0 %v279
  %368 = vmatpush1.bf16.msra.mxu0 %v278
  %369 = vmatprep.subr.bf16.mxu0 0
  %370 = vmatpush1.bf16.msra.mxu0 0
  %371 = vmatprep.subr.bf16.mxu0 0
  %372 = vmatpush1.bf16.msra.mxu0 0
  %373 = vmatprep.subr.bf16.mxu0 0
  %374 = vmatpush1.bf16.msra.mxu0 0
  %375 = vmatprep.subr.bf16.mxu0 0
  %376 = vmatpush1.bf16.msra.mxu0 0
  %377 = vmatprep.subr.bf16.mxu0 0
  %378 = vmatpush1.bf16.msra.mxu0 0
  %379 = vmatprep.subr.bf16.mxu0 0
  %380 = vmatpush1.bf16.msra.mxu0 0
  %381 = vmatprep.subr.bf16.mxu0 0
  %382 = vmatpush1.bf16.msra.mxu0 0
  %383 = vmatprep.subr.bf16.mxu0 0
  %384 = vmatpush1.bf16.msra.mxu0 0
  %385 = vmatprep.mubr.bf16.mxu0 0
  %386 = vmatmul.mubr.bf16.gmra.mrb[0].mxu0 %v151
  %v387 = vpop.f32.mrb[0].mxu0
  %v388 = vadd.f32 0.0, %v387
  %v389 = vpop.f32.mrb[0].mxu0
  %v390 = vadd.f32 0.0, %v389
  %v391 = vpop.f32.mrb[0].mxu0
  %v392 = vpop.f32.mrb[0].mxu0
  %393 = vdwg.mxu0
  %v394 = vpack.c.bf16 %v149, %v149
  %v395 = vld [vmem:[%s0] sm:$0xff]
  %v396 = vld [vmem:[%s0 + $0x8] sm:$0xff]
  %v397 = vld [vmem:[%s0 + $0x10] sm:$0xff]
  %v398 = vld [vmem:[%s0 + $0x18] sm:$0xff]
  %v399 = vadd.f32 %v395, %v347
  %v400 = vadd.f32 %v396, %v349
  %v401 = vadd.f32 %v397, %v388
  %v402 = vadd.f32 %v398, %v390
  %v403 = vxor.u32 %v399, 2147483648
  %v404 = vxor.u32 %v400, 2147483648
  %v405 = vxor.u32 %v401, 2147483648
  %v406 = vmul.f32 %v403, 1.442695
  %v407 = vpow.pop %v406
  %v408 = vmul.f32 %v404, 1.442695
  %v409 = vpow.pop %v408
  %v410 = vmul.f32 %v405, 1.442695
  %v411 = vpow.pop %v410
  %v412 = vadd.f32 %v407, 1.0
  %v413 = vadd.f32 %v409, 1.0
  %v414 = vadd.f32 %v411, 1.0
  %v415 = vrcp.pop %v412
  %v416 = vmul.f32 1.0, %v415
  %v417 = vrcp.pop %v413
  %v418 = vmul.f32 1.0, %v417
  %v419 = vrcp.pop %v414
  %v420 = vmul.f32 1.0, %v419
  %v421 = vtanh.pop %v402
  %v422 = vmul.f32 %v418, %v148
  %v423 = vmul.f32 %v416, %v421
  %v424 = vadd.f32 %v422, %v423
  %v425 = vtanh.pop %v424
  %v426 = vmul.f32 %v420, %v425
  %v427 = vpack.c.bf16 %v426, %v426
  %v460 = vunpack.c.l.b16 %v82
  %v461 = vunpack.c.h.b16 %v82
  %v462 = vunpack.c.l.b16 %v83
  %v463 = vunpack.c.h.b16 %v83
  %v464 = vunpack.c.l.b16 %v84
  %v465 = vunpack.c.h.b16 %v84
  %v466 = vunpack.c.l.b16 %v85
  %v467 = vunpack.c.h.b16 %v85
  %v468 = vunpack.c.l.b16 %v86
  %v469 = vunpack.c.h.b16 %v86
  %v470 = vunpack.c.l.b16 %v87
  %v471 = vunpack.c.h.b16 %v87
  %v472 = vunpack.c.l.b16 %v88
  %v473 = vunpack.c.h.b16 %v88
  %v474 = vunpack.c.l.b16 %v89
  %v475 = vunpack.c.h.b16 %v89
  %v476 = vunpack.c.l.b16 %v90
  %v477 = vunpack.c.h.b16 %v90
  %v478 = vunpack.c.l.b16 %v91
  %v479 = vunpack.c.h.b16 %v91
  %v480 = vunpack.c.l.b16 %v92
  %v481 = vunpack.c.h.b16 %v92
  %v482 = vunpack.c.l.b16 %v93
  %v483 = vunpack.c.h.b16 %v93
  %v484 = vunpack.c.l.b16 %v94
  %v485 = vunpack.c.h.b16 %v94
  %v486 = vunpack.c.l.b16 %v95
  %v487 = vunpack.c.h.b16 %v95
  %v488 = vunpack.c.l.b16 %v96
  %v489 = vunpack.c.h.b16 %v96
  %v490 = vunpack.c.l.b16 %v97
  %v491 = vunpack.c.h.b16 %v97
  %v492 = vunpack.c.l.b16 %v98
  %v493 = vunpack.c.h.b16 %v98
  %v494 = vunpack.c.l.b16 %v99
  %v495 = vunpack.c.h.b16 %v99
  %v496 = vunpack.c.l.b16 %v100
  %v497 = vunpack.c.h.b16 %v100
  %v498 = vunpack.c.l.b16 %v101
  %v499 = vunpack.c.h.b16 %v101
  %v500 = vunpack.c.l.b16 %v102
  %v501 = vunpack.c.h.b16 %v102
  %v502 = vunpack.c.l.b16 %v103
  %v503 = vunpack.c.h.b16 %v103
  %v504 = vunpack.c.l.b16 %v104
  %v505 = vunpack.c.h.b16 %v104
  %v506 = vunpack.c.l.b16 %v105
  %v507 = vunpack.c.h.b16 %v105
  %v508 = vunpack.c.l.b16 %v106
  %v509 = vunpack.c.h.b16 %v106
  %v510 = vunpack.c.l.b16 %v107
  %v511 = vunpack.c.h.b16 %v107
  %v512 = vunpack.c.l.b16 %v108
  %v513 = vunpack.c.h.b16 %v108
  %v514 = vunpack.c.l.b16 %v109
  %v515 = vunpack.c.h.b16 %v109
  %v516 = vunpack.c.l.b16 %v110
  %v517 = vunpack.c.h.b16 %v110
  %v518 = vunpack.c.l.b16 %v111
  %v519 = vunpack.c.h.b16 %v111
  %v520 = vunpack.c.l.b16 %v112
  %v521 = vunpack.c.h.b16 %v112
  %v522 = vunpack.c.l.b16 %v113
  %v523 = vunpack.c.h.b16 %v113
  %v524 = vpack.c.b16 %v464, %v460
  %v525 = vpack.c.b16 %v465, %v461
  %v526 = vpack.c.b16 %v466, %v462
  %v527 = vpack.c.b16 %v467, %v463
  %v528 = vpack.c.b16 %v472, %v468
  %v529 = vpack.c.b16 %v473, %v469
  %v530 = vpack.c.b16 %v474, %v470
  %v531 = vpack.c.b16 %v475, %v471
  %v532 = vpack.c.b16 %v480, %v476
  %v533 = vpack.c.b16 %v481, %v477
  %v534 = vpack.c.b16 %v482, %v478
  %v535 = vpack.c.b16 %v483, %v479
  %v536 = vpack.c.b16 %v488, %v484
  %v537 = vpack.c.b16 %v489, %v485
  %v538 = vpack.c.b16 %v490, %v486
  %v539 = vpack.c.b16 %v491, %v487
  %v540 = vpack.c.b16 %v496, %v492
  %v541 = vpack.c.b16 %v497, %v493
  %v542 = vpack.c.b16 %v498, %v494
  %v543 = vpack.c.b16 %v499, %v495
  %v544 = vpack.c.b16 %v504, %v500
  %v545 = vpack.c.b16 %v505, %v501
  %v546 = vpack.c.b16 %v506, %v502
  %v547 = vpack.c.b16 %v507, %v503
  %v548 = vpack.c.b16 %v512, %v508
  %v549 = vpack.c.b16 %v513, %v509
  %v550 = vpack.c.b16 %v514, %v510
  %v551 = vpack.c.b16 %v515, %v511
  %v552 = vpack.c.b16 %v520, %v516
  %v553 = vpack.c.b16 %v521, %v517
  %v554 = vpack.c.b16 %v522, %v518
  %v555 = vpack.c.b16 %v523, %v519
  %588 = vmatprep.subr.bf16.mxu0 %v525
  %589 = vmatpush1.bf16.msra.mxu0 %v524
  %590 = vmatprep.subr.bf16.mxu0 %v529
  %591 = vmatpush1.bf16.msra.mxu0 %v528
  %592 = vmatprep.subr.bf16.mxu0 %v533
  %593 = vmatpush1.bf16.msra.mxu0 %v532
  %594 = vmatprep.subr.bf16.mxu0 %v537
  %595 = vmatpush1.bf16.msra.mxu0 %v536
  %596 = vmatprep.subr.bf16.mxu0 %v541
  %597 = vmatpush1.bf16.msra.mxu0 %v540
  %598 = vmatprep.subr.bf16.mxu0 %v545
  %599 = vmatpush1.bf16.msra.mxu0 %v544
  %600 = vmatprep.subr.bf16.mxu0 %v549
  %601 = vmatpush1.bf16.msra.mxu0 %v548
  %602 = vmatprep.subr.bf16.mxu0 %v553
  %603 = vmatpush1.bf16.msra.mxu0 %v552
  %604 = vmatprep.subr.bf16.mxu0 0
  %605 = vmatpush1.bf16.msra.mxu0 0
  %606 = vmatprep.subr.bf16.mxu0 0
  %607 = vmatpush1.bf16.msra.mxu0 0
  %608 = vmatprep.subr.bf16.mxu0 0
  %609 = vmatpush1.bf16.msra.mxu0 0
  %610 = vmatprep.subr.bf16.mxu0 0
  %611 = vmatpush1.bf16.msra.mxu0 0
  %612 = vmatprep.subr.bf16.mxu0 0
  %613 = vmatpush1.bf16.msra.mxu0 0
  %614 = vmatprep.subr.bf16.mxu0 0
  %615 = vmatpush1.bf16.msra.mxu0 0
  %616 = vmatprep.subr.bf16.mxu0 0
  %617 = vmatpush1.bf16.msra.mxu0 0
  %618 = vmatprep.subr.bf16.mxu0 0
  %619 = vmatpush1.bf16.msra.mxu0 0
  %620 = vmatprep.mubr.bf16.mxu0 0
  %621 = vmatmul.mubr.bf16.gmra.mrb[0].mxu0 %v427
  %v622 = vpop.f32.mrb[0].mxu0
  %v623 = vadd.f32 0.0, %v622
  %v624 = vpop.f32.mrb[0].mxu0
  %v625 = vadd.f32 0.0, %v624
  %v626 = vpop.f32.mrb[0].mxu0
  %v627 = vpop.f32.mrb[0].mxu0
  %628 = vdwg.mxu0
  %629 = vmatprep.subr.bf16.mxu0 %v527
  %630 = vmatpush1.bf16.msra.mxu0 %v526
  %631 = vmatprep.subr.bf16.mxu0 %v531
  %632 = vmatpush1.bf16.msra.mxu0 %v530
  %633 = vmatprep.subr.bf16.mxu0 %v535
  %634 = vmatpush1.bf16.msra.mxu0 %v534
  %635 = vmatprep.subr.bf16.mxu0 %v539
  %636 = vmatpush1.bf16.msra.mxu0 %v538
  %637 = vmatprep.subr.bf16.mxu0 %v543
  %638 = vmatpush1.bf16.msra.mxu0 %v542
  %639 = vmatprep.subr.bf16.mxu0 %v547
  %640 = vmatpush1.bf16.msra.mxu0 %v546
  %641 = vmatprep.subr.bf16.mxu0 %v551
  %642 = vmatpush1.bf16.msra.mxu0 %v550
  %643 = vmatprep.subr.bf16.mxu0 %v555
  %644 = vmatpush1.bf16.msra.mxu0 %v554
  %645 = vmatprep.subr.bf16.mxu0 0
  %646 = vmatpush1.bf16.msra.mxu0 0
  %647 = vmatprep.subr.bf16.mxu0 0
  %648 = vmatpush1.bf16.msra.mxu0 0
  %649 = vmatprep.subr.bf16.mxu0 0
  %650 = vmatpush1.bf16.msra.mxu0 0
  %651 = vmatprep.subr.bf16.mxu0 0
  %652 = vmatpush1.bf16.msra.mxu0 0
  %653 = vmatprep.subr.bf16.mxu0 0
  %654 = vmatpush1.bf16.msra.mxu0 0
  %655 = vmatprep.subr.bf16.mxu0 0
  %656 = vmatpush1.bf16.msra.mxu0 0
  %657 = vmatprep.subr.bf16.mxu0 0
  %658 = vmatpush1.bf16.msra.mxu0 0
  %659 = vmatprep.subr.bf16.mxu0 0
  %660 = vmatpush1.bf16.msra.mxu0 0
  %661 = vmatprep.mubr.bf16.mxu0 0
  %662 = vmatmul.mubr.bf16.gmra.mrb[0].mxu0 %v427
  %v663 = vpop.f32.mrb[0].mxu0
  %v664 = vadd.f32 0.0, %v663
  %v665 = vpop.f32.mrb[0].mxu0
  %v666 = vadd.f32 0.0, %v665
  %v667 = vpop.f32.mrb[0].mxu0
  %v668 = vpop.f32.mrb[0].mxu0
  %669 = vdwg.mxu0
  %v702 = vunpack.c.l.b16 %v114
  %v703 = vunpack.c.h.b16 %v114
  %v704 = vunpack.c.l.b16 %v115
  %v705 = vunpack.c.h.b16 %v115
  %v706 = vunpack.c.l.b16 %v116
  %v707 = vunpack.c.h.b16 %v116
  %v708 = vunpack.c.l.b16 %v117
  %v709 = vunpack.c.h.b16 %v117
  %v710 = vunpack.c.l.b16 %v118
  %v711 = vunpack.c.h.b16 %v118
  %v712 = vunpack.c.l.b16 %v119
  %v713 = vunpack.c.h.b16 %v119
  %v714 = vunpack.c.l.b16 %v120
  %v715 = vunpack.c.h.b16 %v120
  %v716 = vunpack.c.l.b16 %v121
  %v717 = vunpack.c.h.b16 %v121
  %v718 = vunpack.c.l.b16 %v122
  %v719 = vunpack.c.h.b16 %v122
  %v720 = vunpack.c.l.b16 %v123
  %v721 = vunpack.c.h.b16 %v123
  %v722 = vunpack.c.l.b16 %v124
  %v723 = vunpack.c.h.b16 %v124
  %v724 = vunpack.c.l.b16 %v125
  %v725 = vunpack.c.h.b16 %v125
  %v726 = vunpack.c.l.b16 %v126
  %v727 = vunpack.c.h.b16 %v126
  %v728 = vunpack.c.l.b16 %v127
  %v729 = vunpack.c.h.b16 %v127
  %v730 = vunpack.c.l.b16 %v128
  %v731 = vunpack.c.h.b16 %v128
  %v732 = vunpack.c.l.b16 %v129
  %v733 = vunpack.c.h.b16 %v129
  %v734 = vunpack.c.l.b16 %v130
  %v735 = vunpack.c.h.b16 %v130
  %v736 = vunpack.c.l.b16 %v131
  %v737 = vunpack.c.h.b16 %v131
  %v738 = vunpack.c.l.b16 %v132
  %v739 = vunpack.c.h.b16 %v132
  %v740 = vunpack.c.l.b16 %v133
  %v741 = vunpack.c.h.b16 %v133
  %v742 = vunpack.c.l.b16 %v134
  %v743 = vunpack.c.h.b16 %v134
  %v744 = vunpack.c.l.b16 %v135
  %v745 = vunpack.c.h.b16 %v135
  %v746 = vunpack.c.l.b16 %v136
  %v747 = vunpack.c.h.b16 %v136
  %v748 = vunpack.c.l.b16 %v137
  %v749 = vunpack.c.h.b16 %v137
  %v750 = vunpack.c.l.b16 %v138
  %v751 = vunpack.c.h.b16 %v138
  %v752 = vunpack.c.l.b16 %v139
  %v753 = vunpack.c.h.b16 %v139
  %v754 = vunpack.c.l.b16 %v140
  %v755 = vunpack.c.h.b16 %v140
  %v756 = vunpack.c.l.b16 %v141
  %v757 = vunpack.c.h.b16 %v141
  %v758 = vunpack.c.l.b16 %v142
  %v759 = vunpack.c.h.b16 %v142
  %v760 = vunpack.c.l.b16 %v143
  %v761 = vunpack.c.h.b16 %v143
  %v762 = vunpack.c.l.b16 %v144
  %v763 = vunpack.c.h.b16 %v144
  %v764 = vunpack.c.l.b16 %v145
  %v765 = vunpack.c.h.b16 %v145
  %v766 = vpack.c.b16 %v706, %v702
  %v767 = vpack.c.b16 %v707, %v703
  %v768 = vpack.c.b16 %v708, %v704
  %v769 = vpack.c.b16 %v709, %v705
  %v770 = vpack.c.b16 %v714, %v710
  %v771 = vpack.c.b16 %v715, %v711
  %v772 = vpack.c.b16 %v716, %v712
  %v773 = vpack.c.b16 %v717, %v713
  %v774 = vpack.c.b16 %v722, %v718
  %v775 = vpack.c.b16 %v723, %v719
  %v776 = vpack.c.b16 %v724, %v720
  %v777 = vpack.c.b16 %v725, %v721
  %v778 = vpack.c.b16 %v730, %v726
  %v779 = vpack.c.b16 %v731, %v727
  %v780 = vpack.c.b16 %v732, %v728
  %v781 = vpack.c.b16 %v733, %v729
  %v782 = vpack.c.b16 %v738, %v734
  %v783 = vpack.c.b16 %v739, %v735
  %v784 = vpack.c.b16 %v740, %v736
  %v785 = vpack.c.b16 %v741, %v737
  %v786 = vpack.c.b16 %v746, %v742
  %v787 = vpack.c.b16 %v747, %v743
  %v788 = vpack.c.b16 %v748, %v744
  %v789 = vpack.c.b16 %v749, %v745
  %v790 = vpack.c.b16 %v754, %v750
  %v791 = vpack.c.b16 %v755, %v751
  %v792 = vpack.c.b16 %v756, %v752
  %v793 = vpack.c.b16 %v757, %v753
  %v794 = vpack.c.b16 %v762, %v758
  %v795 = vpack.c.b16 %v763, %v759
  %v796 = vpack.c.b16 %v764, %v760
  %v797 = vpack.c.b16 %v765, %v761
  %830 = vmatprep.subr.bf16.mxu0 %v767
  %831 = vmatpush1.bf16.msra.mxu0 %v766
  %832 = vmatprep.subr.bf16.mxu0 %v771
  %833 = vmatpush1.bf16.msra.mxu0 %v770
  %834 = vmatprep.subr.bf16.mxu0 %v775
  %835 = vmatpush1.bf16.msra.mxu0 %v774
  %836 = vmatprep.subr.bf16.mxu0 %v779
  %837 = vmatpush1.bf16.msra.mxu0 %v778
  %838 = vmatprep.subr.bf16.mxu0 %v783
  %839 = vmatpush1.bf16.msra.mxu0 %v782
  %840 = vmatprep.subr.bf16.mxu0 %v787
  %841 = vmatpush1.bf16.msra.mxu0 %v786
  %842 = vmatprep.subr.bf16.mxu0 %v791
  %843 = vmatpush1.bf16.msra.mxu0 %v790
  %844 = vmatprep.subr.bf16.mxu0 %v795
  %845 = vmatpush1.bf16.msra.mxu0 %v794
  %846 = vmatprep.subr.bf16.mxu0 0
  %847 = vmatpush1.bf16.msra.mxu0 0
  %848 = vmatprep.subr.bf16.mxu0 0
  %849 = vmatpush1.bf16.msra.mxu0 0
  %850 = vmatprep.subr.bf16.mxu0 0
  %851 = vmatpush1.bf16.msra.mxu0 0
  %852 = vmatprep.subr.bf16.mxu0 0
  %853 = vmatpush1.bf16.msra.mxu0 0
  %854 = vmatprep.subr.bf16.mxu0 0
  %855 = vmatpush1.bf16.msra.mxu0 0
  %856 = vmatprep.subr.bf16.mxu0 0
  %857 = vmatpush1.bf16.msra.mxu0 0
  %858 = vmatprep.subr.bf16.mxu0 0
  %859 = vmatpush1.bf16.msra.mxu0 0
  %860 = vmatprep.subr.bf16.mxu0 0
  %861 = vmatpush1.bf16.msra.mxu0 0
  %862 = vmatprep.mubr.bf16.mxu0 0
  %863 = vmatmul.mubr.bf16.gmra.mrb[0].mxu0 %v394
  %v864 = vpop.f32.mrb[0].mxu0
  %v865 = vadd.f32 %v623, %v864
  %v866 = vpop.f32.mrb[0].mxu0
  %v867 = vadd.f32 %v625, %v866
  %v868 = vpop.f32.mrb[0].mxu0
  %v869 = vpop.f32.mrb[0].mxu0
  %870 = vdwg.mxu0
  %871 = vmatprep.subr.bf16.mxu0 %v769
  %872 = vmatpush1.bf16.msra.mxu0 %v768
  %873 = vmatprep.subr.bf16.mxu0 %v773
  %874 = vmatpush1.bf16.msra.mxu0 %v772
  %875 = vmatprep.subr.bf16.mxu0 %v777
  %876 = vmatpush1.bf16.msra.mxu0 %v776
  %877 = vmatprep.subr.bf16.mxu0 %v781
  %878 = vmatpush1.bf16.msra.mxu0 %v780
  %879 = vmatprep.subr.bf16.mxu0 %v785
  %880 = vmatpush1.bf16.msra.mxu0 %v784
  %881 = vmatprep.subr.bf16.mxu0 %v789
  %882 = vmatpush1.bf16.msra.mxu0 %v788
  %883 = vmatprep.subr.bf16.mxu0 %v793
  %884 = vmatpush1.bf16.msra.mxu0 %v792
  %885 = vmatprep.subr.bf16.mxu0 %v797
  %886 = vmatpush1.bf16.msra.mxu0 %v796
  %887 = vmatprep.subr.bf16.mxu0 0
  %888 = vmatpush1.bf16.msra.mxu0 0
  %889 = vmatprep.subr.bf16.mxu0 0
  %890 = vmatpush1.bf16.msra.mxu0 0
  %891 = vmatprep.subr.bf16.mxu0 0
  %892 = vmatpush1.bf16.msra.mxu0 0
  %893 = vmatprep.subr.bf16.mxu0 0
  %894 = vmatpush1.bf16.msra.mxu0 0
  %895 = vmatprep.subr.bf16.mxu0 0
  %896 = vmatpush1.bf16.msra.mxu0 0
  %897 = vmatprep.subr.bf16.mxu0 0
  %898 = vmatpush1.bf16.msra.mxu0 0
  %899 = vmatprep.subr.bf16.mxu0 0
  %900 = vmatpush1.bf16.msra.mxu0 0
  %901 = vmatprep.subr.bf16.mxu0 0
  %902 = vmatpush1.bf16.msra.mxu0 0
  %903 = vmatprep.mubr.bf16.mxu0 0
  %904 = vmatmul.mubr.bf16.gmra.mrb[0].mxu0 %v394
  %v905 = vpop.f32.mrb[0].mxu0
  %v906 = vadd.f32 %v664, %v905
  %v907 = vpop.f32.mrb[0].mxu0
  %v908 = vadd.f32 %v666, %v907
  %v909 = vpop.f32.mrb[0].mxu0
  %v910 = vpop.f32.mrb[0].mxu0
  %911 = vdwg.mxu0
  %v913 = vlaneseq
  %v914 = vshrl.u32 %v913, 7
  %v915 = vsub.s32 0, %v914
  %v916 = vrot.slane %v146, %v915
  %v917 = vlaneseq
  %v918 = vshrl.u32 %v917, 7
  %v919 = vsub.s32 1, %v918
  %v920 = vrot.slane %v146, %v919
  %v921 = vlaneseq
  %v922 = vshrl.u32 %v921, 7
  %v923 = vsub.s32 2, %v922
  %v924 = vrot.slane %v146, %v923
  %v925 = vlaneseq
  %v926 = vshrl.u32 %v925, 7
  %v927 = vsub.s32 3, %v926
  %v928 = vrot.slane %v146, %v927
  %v933 = vadd.f32 %v865, %v916
  %v934 = vadd.f32 %v867, %v920
  %v935 = vadd.f32 %v906, %v924
  %v936 = vadd.f32 %v908, %v928
  %v937 = vxor.u32 %v933, 2147483648
  %v938 = vxor.u32 %v934, 2147483648
  %v939 = vxor.u32 %v935, 2147483648
  %v940 = vmul.f32 %v937, 1.442695
  %v941 = vpow.pop %v940
  %v942 = vmul.f32 %v938, 1.442695
  %v943 = vpow.pop %v942
  %v944 = vmul.f32 %v939, 1.442695
  %v945 = vpow.pop %v944
  %v946 = vadd.f32 %v941, 1.0
  %v947 = vadd.f32 %v943, 1.0
  %v948 = vadd.f32 %v945, 1.0
  %v949 = vrcp.pop %v946
  %v950 = vmul.f32 1.0, %v949
  %v951 = vrcp.pop %v947
  %v952 = vmul.f32 1.0, %v951
  %v953 = vrcp.pop %v948
  %v954 = vmul.f32 1.0, %v953
  %v955 = vtanh.pop %v936
  %v956 = vmul.f32 %v952, %v150
  %v957 = vmul.f32 %v950, %v955
  %v958 = vadd.f32 %v956, %v957
  %v959 = vtanh.pop %v958
  %v960 = vmul.f32 %v954, %v959
  %v961 = vpack.c.bf16 %v960, %v960
  %962 = vst [vmem:[%s9] sm:$0xf] %v961
  %963 = vmatprep.subr.bf16.mxu0 %v249
  %964 = vmatpush1.bf16.msra.mxu0 %v248
  %965 = vmatprep.subr.bf16.mxu0 %v253
  %966 = vmatpush1.bf16.msra.mxu0 %v252
  %967 = vmatprep.subr.bf16.mxu0 %v257
  %968 = vmatpush1.bf16.msra.mxu0 %v256
  %969 = vmatprep.subr.bf16.mxu0 %v261
  %970 = vmatpush1.bf16.msra.mxu0 %v260
  %971 = vmatprep.subr.bf16.mxu0 %v265
  %972 = vmatpush1.bf16.msra.mxu0 %v264
  %973 = vmatprep.subr.bf16.mxu0 %v269
  %974 = vmatpush1.bf16.msra.mxu0 %v268
  %975 = vmatprep.subr.bf16.mxu0 %v273
  %976 = vmatpush1.bf16.msra.mxu0 %v272
  %977 = vmatprep.subr.bf16.mxu0 %v277
  %978 = vmatpush1.bf16.msra.mxu0 %v276
  %979 = vmatprep.subr.bf16.mxu0 0
  %980 = vmatpush1.bf16.msra.mxu0 0
  %981 = vmatprep.subr.bf16.mxu0 0
  %982 = vmatpush1.bf16.msra.mxu0 0
  %983 = vmatprep.subr.bf16.mxu0 0
  %984 = vmatpush1.bf16.msra.mxu0 0
  %985 = vmatprep.subr.bf16.mxu0 0
  %986 = vmatpush1.bf16.msra.mxu0 0
  %987 = vmatprep.subr.bf16.mxu0 0
  %988 = vmatpush1.bf16.msra.mxu0 0
  %989 = vmatprep.subr.bf16.mxu0 0
  %990 = vmatpush1.bf16.msra.mxu0 0
  %991 = vmatprep.subr.bf16.mxu0 0
  %992 = vmatpush1.bf16.msra.mxu0 0
  %993 = vmatprep.subr.bf16.mxu0 0
  %994 = vmatpush1.bf16.msra.mxu0 0
  %995 = vmatprep.mubr.bf16.mxu0 0
  %996 = vmatmul.mubr.bf16.gmra.mrb[0].mxu0 %v427
  %v997 = vpop.f32.mrb[0].mxu0
  %v998 = vadd.f32 0.0, %v997
  %v999 = vpop.f32.mrb[0].mxu0
  %v1000 = vadd.f32 0.0, %v999
  %v1001 = vpop.f32.mrb[0].mxu0
  %v1002 = vpop.f32.mrb[0].mxu0
  %1003 = vdwg.mxu0
  %1004 = vmatprep.subr.bf16.mxu0 %v251
  %1005 = vmatpush1.bf16.msra.mxu0 %v250
  %1006 = vmatprep.subr.bf16.mxu0 %v255
  %1007 = vmatpush1.bf16.msra.mxu0 %v254
  %1008 = vmatprep.subr.bf16.mxu0 %v259
  %1009 = vmatpush1.bf16.msra.mxu0 %v258
  %1010 = vmatprep.subr.bf16.mxu0 %v263
  %1011 = vmatpush1.bf16.msra.mxu0 %v262
  %1012 = vmatprep.subr.bf16.mxu0 %v267
  %1013 = vmatpush1.bf16.msra.mxu0 %v266
  %1014 = vmatprep.subr.bf16.mxu0 %v271
  %1015 = vmatpush1.bf16.msra.mxu0 %v270
  %1016 = vmatprep.subr.bf16.mxu0 %v275
  %1017 = vmatpush1.bf16.msra.mxu0 %v274
  %1018 = vmatprep.subr.bf16.mxu0 %v279
  %1019 = vmatpush1.bf16.msra.mxu0 %v278
  %1020 = vmatprep.subr.bf16.mxu0 0
  %1021 = vmatpush1.bf16.msra.mxu0 0
  %1022 = vmatprep.subr.bf16.mxu0 0
  %1023 = vmatpush1.bf16.msra.mxu0 0
  %1024 = vmatprep.subr.bf16.mxu0 0
  %1025 = vmatpush1.bf16.msra.mxu0 0
  %1026 = vmatprep.subr.bf16.mxu0 0
  %1027 = vmatpush1.bf16.msra.mxu0 0
  %1028 = vmatprep.subr.bf16.mxu0 0
  %1029 = vmatpush1.bf16.msra.mxu0 0
  %1030 = vmatprep.subr.bf16.mxu0 0
  %1031 = vmatpush1.bf16.msra.mxu0 0
  %1032 = vmatprep.subr.bf16.mxu0 0
  %1033 = vmatpush1.bf16.msra.mxu0 0
  %1034 = vmatprep.subr.bf16.mxu0 0
  %1035 = vmatpush1.bf16.msra.mxu0 0
  %1036 = vmatprep.mubr.bf16.mxu0 0
  %1037 = vmatmul.mubr.bf16.gmra.mrb[0].mxu0 %v427
  %v1038 = vpop.f32.mrb[0].mxu0
  %v1039 = vadd.f32 0.0, %v1038
  %v1040 = vpop.f32.mrb[0].mxu0
  %v1041 = vadd.f32 0.0, %v1040
  %v1042 = vpop.f32.mrb[0].mxu0
  %v1043 = vpop.f32.mrb[0].mxu0
  %1044 = vdwg.mxu0
  %s1045 = scalar_lea.vmem %s0, 32
  %v1046 = vld [vmem:[%s1045] sm:$0xff]
  %v1047 = vld [vmem:[%s1045 + $0x8] sm:$0xff]
  %v1048 = vld [vmem:[%s1045 + $0x10] sm:$0xff]
  %v1049 = vld [vmem:[%s1045 + $0x18] sm:$0xff]
  %v1050 = vadd.f32 %v1046, %v998
  %v1051 = vadd.f32 %v1047, %v1000
  %v1052 = vadd.f32 %v1048, %v1039
  %v1053 = vadd.f32 %v1049, %v1041
  %v1054 = vxor.u32 %v1050, 2147483648
  %v1055 = vxor.u32 %v1051, 2147483648
  %v1056 = vxor.u32 %v1052, 2147483648
  %v1057 = vmul.f32 %v1054, 1.442695
  %v1058 = vpow.pop %v1057
  %v1059 = vmul.f32 %v1055, 1.442695
  %v1060 = vpow.pop %v1059
  %v1061 = vmul.f32 %v1056, 1.442695
  %v1062 = vpow.pop %v1061
  %v1063 = vadd.f32 %v1058, 1.0
  %v1064 = vadd.f32 %v1060, 1.0
  %v1065 = vadd.f32 %v1062, 1.0
  %v1066 = vrcp.pop %v1063
  %v1067 = vmul.f32 1.0, %v1066
  %v1068 = vrcp.pop %v1064
  %v1069 = vmul.f32 1.0, %v1068
  %v1070 = vrcp.pop %v1065
  %v1071 = vmul.f32 1.0, %v1070
  %v1072 = vtanh.pop %v1053
  %v1073 = vmul.f32 %v1069, %v424
  %v1074 = vmul.f32 %v1067, %v1072
  %v1075 = vadd.f32 %v1073, %v1074
  %v1076 = vtanh.pop %v1075
  %v1077 = vmul.f32 %v1071, %v1076
  %v1078 = vpack.c.bf16 %v1077, %v1077
  %1079 = vmatprep.subr.bf16.mxu0 %v525
  %1080 = vmatpush1.bf16.msra.mxu0 %v524
  %1081 = vmatprep.subr.bf16.mxu0 %v529
  %1082 = vmatpush1.bf16.msra.mxu0 %v528
  %1083 = vmatprep.subr.bf16.mxu0 %v533
  %1084 = vmatpush1.bf16.msra.mxu0 %v532
  %1085 = vmatprep.subr.bf16.mxu0 %v537
  %1086 = vmatpush1.bf16.msra.mxu0 %v536
  %1087 = vmatprep.subr.bf16.mxu0 %v541
  %1088 = vmatpush1.bf16.msra.mxu0 %v540
  %1089 = vmatprep.subr.bf16.mxu0 %v545
  %1090 = vmatpush1.bf16.msra.mxu0 %v544
  %1091 = vmatprep.subr.bf16.mxu0 %v549
  %1092 = vmatpush1.bf16.msra.mxu0 %v548
  %1093 = vmatprep.subr.bf16.mxu0 %v553
  %1094 = vmatpush1.bf16.msra.mxu0 %v552
  %1095 = vmatprep.subr.bf16.mxu0 0
  %1096 = vmatpush1.bf16.msra.mxu0 0
  %1097 = vmatprep.subr.bf16.mxu0 0
  %1098 = vmatpush1.bf16.msra.mxu0 0
  %1099 = vmatprep.subr.bf16.mxu0 0
  %1100 = vmatpush1.bf16.msra.mxu0 0
  %1101 = vmatprep.subr.bf16.mxu0 0
  %1102 = vmatpush1.bf16.msra.mxu0 0
  %1103 = vmatprep.subr.bf16.mxu0 0
  %1104 = vmatpush1.bf16.msra.mxu0 0
  %1105 = vmatprep.subr.bf16.mxu0 0
  %1106 = vmatpush1.bf16.msra.mxu0 0
  %1107 = vmatprep.subr.bf16.mxu0 0
  %1108 = vmatpush1.bf16.msra.mxu0 0
  %1109 = vmatprep.subr.bf16.mxu0 0
  %1110 = vmatpush1.bf16.msra.mxu0 0
  %1111 = vmatprep.mubr.bf16.mxu0 0
  %1112 = vmatmul.mubr.bf16.gmra.mrb[0].mxu0 %v1078
  %v1113 = vpop.f32.mrb[0].mxu0
  %v1114 = vadd.f32 0.0, %v1113
  %v1115 = vpop.f32.mrb[0].mxu0
  %v1116 = vadd.f32 0.0, %v1115
  %v1117 = vpop.f32.mrb[0].mxu0
  %v1118 = vpop.f32.mrb[0].mxu0
  %1119 = vdwg.mxu0
  %1120 = vmatprep.subr.bf16.mxu0 %v527
  %1121 = vmatpush1.bf16.msra.mxu0 %v526
  %1122 = vmatprep.subr.bf16.mxu0 %v531
  %1123 = vmatpush1.bf16.msra.mxu0 %v530
  %1124 = vmatprep.subr.bf16.mxu0 %v535
  %1125 = vmatpush1.bf16.msra.mxu0 %v534
  %1126 = vmatprep.subr.bf16.mxu0 %v539
  %1127 = vmatpush1.bf16.msra.mxu0 %v538
  %1128 = vmatprep.subr.bf16.mxu0 %v543
  %1129 = vmatpush1.bf16.msra.mxu0 %v542
  %1130 = vmatprep.subr.bf16.mxu0 %v547
  %1131 = vmatpush1.bf16.msra.mxu0 %v546
  %1132 = vmatprep.subr.bf16.mxu0 %v551
  %1133 = vmatpush1.bf16.msra.mxu0 %v550
  %1134 = vmatprep.subr.bf16.mxu0 %v555
  %1135 = vmatpush1.bf16.msra.mxu0 %v554
  %1136 = vmatprep.subr.bf16.mxu0 0
  %1137 = vmatpush1.bf16.msra.mxu0 0
  %1138 = vmatprep.subr.bf16.mxu0 0
  %1139 = vmatpush1.bf16.msra.mxu0 0
  %1140 = vmatprep.subr.bf16.mxu0 0
  %1141 = vmatpush1.bf16.msra.mxu0 0
  %1142 = vmatprep.subr.bf16.mxu0 0
  %1143 = vmatpush1.bf16.msra.mxu0 0
  %1144 = vmatprep.subr.bf16.mxu0 0
  %1145 = vmatpush1.bf16.msra.mxu0 0
  %1146 = vmatprep.subr.bf16.mxu0 0
  %1147 = vmatpush1.bf16.msra.mxu0 0
  %1148 = vmatprep.subr.bf16.mxu0 0
  %1149 = vmatpush1.bf16.msra.mxu0 0
  %1150 = vmatprep.subr.bf16.mxu0 0
  %1151 = vmatpush1.bf16.msra.mxu0 0
  %1152 = vmatprep.mubr.bf16.mxu0 0
  %1153 = vmatmul.mubr.bf16.gmra.mrb[0].mxu0 %v1078
  %v1154 = vpop.f32.mrb[0].mxu0
  %v1155 = vadd.f32 0.0, %v1154
  %v1156 = vpop.f32.mrb[0].mxu0
  %v1157 = vadd.f32 0.0, %v1156
  %v1158 = vpop.f32.mrb[0].mxu0
  %v1159 = vpop.f32.mrb[0].mxu0
  %1160 = vdwg.mxu0
  %1161 = vmatprep.subr.bf16.mxu0 %v767
  %1162 = vmatpush1.bf16.msra.mxu0 %v766
  %1163 = vmatprep.subr.bf16.mxu0 %v771
  %1164 = vmatpush1.bf16.msra.mxu0 %v770
  %1165 = vmatprep.subr.bf16.mxu0 %v775
  %1166 = vmatpush1.bf16.msra.mxu0 %v774
  %1167 = vmatprep.subr.bf16.mxu0 %v779
  %1168 = vmatpush1.bf16.msra.mxu0 %v778
  %1169 = vmatprep.subr.bf16.mxu0 %v783
  %1170 = vmatpush1.bf16.msra.mxu0 %v782
  %1171 = vmatprep.subr.bf16.mxu0 %v787
  %1172 = vmatpush1.bf16.msra.mxu0 %v786
  %1173 = vmatprep.subr.bf16.mxu0 %v791
  %1174 = vmatpush1.bf16.msra.mxu0 %v790
  %1175 = vmatprep.subr.bf16.mxu0 %v795
  %1176 = vmatpush1.bf16.msra.mxu0 %v794
  %1177 = vmatprep.subr.bf16.mxu0 0
  %1178 = vmatpush1.bf16.msra.mxu0 0
  %1179 = vmatprep.subr.bf16.mxu0 0
  %1180 = vmatpush1.bf16.msra.mxu0 0
  %1181 = vmatprep.subr.bf16.mxu0 0
  %1182 = vmatpush1.bf16.msra.mxu0 0
  %1183 = vmatprep.subr.bf16.mxu0 0
  %1184 = vmatpush1.bf16.msra.mxu0 0
  %1185 = vmatprep.subr.bf16.mxu0 0
  %1186 = vmatpush1.bf16.msra.mxu0 0
  %1187 = vmatprep.subr.bf16.mxu0 0
  %1188 = vmatpush1.bf16.msra.mxu0 0
  %1189 = vmatprep.subr.bf16.mxu0 0
  %1190 = vmatpush1.bf16.msra.mxu0 0
  %1191 = vmatprep.subr.bf16.mxu0 0
  %1192 = vmatpush1.bf16.msra.mxu0 0
  %1193 = vmatprep.mubr.bf16.mxu0 0
  %1194 = vmatmul.mubr.bf16.gmra.mrb[0].mxu0 %v961
  %v1195 = vpop.f32.mrb[0].mxu0
  %v1196 = vadd.f32 %v1114, %v1195
  %v1197 = vpop.f32.mrb[0].mxu0
  %v1198 = vadd.f32 %v1116, %v1197
  %v1199 = vpop.f32.mrb[0].mxu0
  %v1200 = vpop.f32.mrb[0].mxu0
  %1201 = vdwg.mxu0
  %1202 = vmatprep.subr.bf16.mxu0 %v769
  %1203 = vmatpush1.bf16.msra.mxu0 %v768
  %1204 = vmatprep.subr.bf16.mxu0 %v773
  %1205 = vmatpush1.bf16.msra.mxu0 %v772
  %1206 = vmatprep.subr.bf16.mxu0 %v777
  %1207 = vmatpush1.bf16.msra.mxu0 %v776
  %1208 = vmatprep.subr.bf16.mxu0 %v781
  %1209 = vmatpush1.bf16.msra.mxu0 %v780
  %1210 = vmatprep.subr.bf16.mxu0 %v785
  %1211 = vmatpush1.bf16.msra.mxu0 %v784
  %1212 = vmatprep.subr.bf16.mxu0 %v789
  %1213 = vmatpush1.bf16.msra.mxu0 %v788
  %1214 = vmatprep.subr.bf16.mxu0 %v793
  %1215 = vmatpush1.bf16.msra.mxu0 %v792
  %1216 = vmatprep.subr.bf16.mxu0 %v797
  %1217 = vmatpush1.bf16.msra.mxu0 %v796
  %1218 = vmatprep.subr.bf16.mxu0 0
  %1219 = vmatpush1.bf16.msra.mxu0 0
  %1220 = vmatprep.subr.bf16.mxu0 0
  %1221 = vmatpush1.bf16.msra.mxu0 0
  %1222 = vmatprep.subr.bf16.mxu0 0
  %1223 = vmatpush1.bf16.msra.mxu0 0
  %1224 = vmatprep.subr.bf16.mxu0 0
  %1225 = vmatpush1.bf16.msra.mxu0 0
  %1226 = vmatprep.subr.bf16.mxu0 0
  %1227 = vmatpush1.bf16.msra.mxu0 0
  %1228 = vmatprep.subr.bf16.mxu0 0
  %1229 = vmatpush1.bf16.msra.mxu0 0
  %1230 = vmatprep.subr.bf16.mxu0 0
  %1231 = vmatpush1.bf16.msra.mxu0 0
  %1232 = vmatprep.subr.bf16.mxu0 0
  %1233 = vmatpush1.bf16.msra.mxu0 0
  %1234 = vmatprep.mubr.bf16.mxu0 0
  %1235 = vmatmul.mubr.bf16.gmra.mrb[0].mxu0 %v961
  %v1236 = vpop.f32.mrb[0].mxu0
  %v1237 = vadd.f32 %v1155, %v1236
  %v1238 = vpop.f32.mrb[0].mxu0
  %v1239 = vadd.f32 %v1157, %v1238
  %v1240 = vpop.f32.mrb[0].mxu0
  %v1241 = vpop.f32.mrb[0].mxu0
  %1242 = vdwg.mxu0
  %v1243 = vadd.f32 %v1196, %v916
  %v1244 = vadd.f32 %v1198, %v920
  %v1245 = vadd.f32 %v1237, %v924
  %v1246 = vadd.f32 %v1239, %v928
  %v1247 = vxor.u32 %v1243, 2147483648
  %v1248 = vxor.u32 %v1244, 2147483648
  %v1249 = vxor.u32 %v1245, 2147483648
  %v1250 = vmul.f32 %v1247, 1.442695
  %v1251 = vpow.pop %v1250
  %v1252 = vmul.f32 %v1248, 1.442695
  %v1253 = vpow.pop %v1252
  %v1254 = vmul.f32 %v1249, 1.442695
  %v1255 = vpow.pop %v1254
  %v1256 = vadd.f32 %v1251, 1.0
  %v1257 = vadd.f32 %v1253, 1.0
  %v1258 = vadd.f32 %v1255, 1.0
  %v1259 = vrcp.pop %v1256
  %v1260 = vmul.f32 1.0, %v1259
  %v1261 = vrcp.pop %v1257
  %v1262 = vmul.f32 1.0, %v1261
  %v1263 = vrcp.pop %v1258
  %v1264 = vmul.f32 1.0, %v1263
  %v1265 = vtanh.pop %v1246
  %v1266 = vmul.f32 %v1262, %v958
  %v1267 = vmul.f32 %v1260, %v1265
  %v1268 = vadd.f32 %v1266, %v1267
  %v1269 = vtanh.pop %v1268
  %v1270 = vmul.f32 %v1264, %v1269
  %v1271 = vpack.c.bf16 %v1270, %v1270
  %s1272 = scalar_lea.vmem %s9, 4
  %1273 = vst [vmem:[%s1272] sm:$0xf] %v1271
  %1274 = vmatprep.subr.bf16.mxu0 %v249
  %1275 = vmatpush1.bf16.msra.mxu0 %v248
  %1276 = vmatprep.subr.bf16.mxu0 %v253
  %1277 = vmatpush1.bf16.msra.mxu0 %v252
  %1278 = vmatprep.subr.bf16.mxu0 %v257
  %1279 = vmatpush1.bf16.msra.mxu0 %v256
  %1280 = vmatprep.subr.bf16.mxu0 %v261
  %1281 = vmatpush1.bf16.msra.mxu0 %v260
  %1282 = vmatprep.subr.bf16.mxu0 %v265
  %1283 = vmatpush1.bf16.msra.mxu0 %v264
  %1284 = vmatprep.subr.bf16.mxu0 %v269
  %1285 = vmatpush1.bf16.msra.mxu0 %v268
  %1286 = vmatprep.subr.bf16.mxu0 %v273
  %1287 = vmatpush1.bf16.msra.mxu0 %v272
  %1288 = vmatprep.subr.bf16.mxu0 %v277
  %1289 = vmatpush1.bf16.msra.mxu0 %v276
  %1290 = vmatprep.subr.bf16.mxu0 0
  %1291 = vmatpush1.bf16.msra.mxu0 0
  %1292 = vmatprep.subr.bf16.mxu0 0
  %1293 = vmatpush1.bf16.msra.mxu0 0
  %1294 = vmatprep.subr.bf16.mxu0 0
  %1295 = vmatpush1.bf16.msra.mxu0 0
  %1296 = vmatprep.subr.bf16.mxu0 0
  %1297 = vmatpush1.bf16.msra.mxu0 0
  %1298 = vmatprep.subr.bf16.mxu0 0
  %1299 = vmatpush1.bf16.msra.mxu0 0
  %1300 = vmatprep.subr.bf16.mxu0 0
  %1301 = vmatpush1.bf16.msra.mxu0 0
  %1302 = vmatprep.subr.bf16.mxu0 0
  %1303 = vmatpush1.bf16.msra.mxu0 0
  %1304 = vmatprep.subr.bf16.mxu0 0
  %1305 = vmatpush1.bf16.msra.mxu0 0
  %1306 = vmatprep.mubr.bf16.mxu0 0
  %1307 = vmatmul.mubr.bf16.gmra.mrb[0].mxu0 %v1078
  %v1308 = vpop.f32.mrb[0].mxu0
  %v1309 = vadd.f32 0.0, %v1308
  %v1310 = vpop.f32.mrb[0].mxu0
  %v1311 = vadd.f32 0.0, %v1310
  %v1312 = vpop.f32.mrb[0].mxu0
  %v1313 = vpop.f32.mrb[0].mxu0
  %1314 = vdwg.mxu0
  %1315 = vmatprep.subr.bf16.mxu0 %v251
  %1316 = vmatpush1.bf16.msra.mxu0 %v250
  %1317 = vmatprep.subr.bf16.mxu0 %v255
  %1318 = vmatpush1.bf16.msra.mxu0 %v254
  %1319 = vmatprep.subr.bf16.mxu0 %v259
  %1320 = vmatpush1.bf16.msra.mxu0 %v258
  %1321 = vmatprep.subr.bf16.mxu0 %v263
  %1322 = vmatpush1.bf16.msra.mxu0 %v262
  %1323 = vmatprep.subr.bf16.mxu0 %v267
  %1324 = vmatpush1.bf16.msra.mxu0 %v266
  %1325 = vmatprep.subr.bf16.mxu0 %v271
  %1326 = vmatpush1.bf16.msra.mxu0 %v270
  %1327 = vmatprep.subr.bf16.mxu0 %v275
  %1328 = vmatpush1.bf16.msra.mxu0 %v274
  %1329 = vmatprep.subr.bf16.mxu0 %v279
  %1330 = vmatpush1.bf16.msra.mxu0 %v278
  %1331 = vmatprep.subr.bf16.mxu0 0
  %1332 = vmatpush1.bf16.msra.mxu0 0
  %1333 = vmatprep.subr.bf16.mxu0 0
  %1334 = vmatpush1.bf16.msra.mxu0 0
  %1335 = vmatprep.subr.bf16.mxu0 0
  %1336 = vmatpush1.bf16.msra.mxu0 0
  %1337 = vmatprep.subr.bf16.mxu0 0
  %1338 = vmatpush1.bf16.msra.mxu0 0
  %1339 = vmatprep.subr.bf16.mxu0 0
  %1340 = vmatpush1.bf16.msra.mxu0 0
  %1341 = vmatprep.subr.bf16.mxu0 0
  %1342 = vmatpush1.bf16.msra.mxu0 0
  %1343 = vmatprep.subr.bf16.mxu0 0
  %1344 = vmatpush1.bf16.msra.mxu0 0
  %1345 = vmatprep.subr.bf16.mxu0 0
  %1346 = vmatpush1.bf16.msra.mxu0 0
  %1347 = vmatprep.mubr.bf16.mxu0 0
  %1348 = vmatmul.mubr.bf16.gmra.mrb[0].mxu0 %v1078
  %v1349 = vpop.f32.mrb[0].mxu0
  %v1350 = vadd.f32 0.0, %v1349
  %v1351 = vpop.f32.mrb[0].mxu0
  %v1352 = vadd.f32 0.0, %v1351
  %v1353 = vpop.f32.mrb[0].mxu0
  %v1354 = vpop.f32.mrb[0].mxu0
  %1355 = vdwg.mxu0
  %s1356 = scalar_lea.vmem %s0, 64
  %v1357 = vld [vmem:[%s1356] sm:$0xff]
  %v1358 = vld [vmem:[%s1356 + $0x8] sm:$0xff]
  %v1359 = vld [vmem:[%s1356 + $0x10] sm:$0xff]
  %v1360 = vld [vmem:[%s1356 + $0x18] sm:$0xff]
  %v1361 = vadd.f32 %v1357, %v1309
  %v1362 = vadd.f32 %v1358, %v1311
  %v1363 = vadd.f32 %v1359, %v1350
  %v1364 = vadd.f32 %v1360, %v1352
  %v1365 = vxor.u32 %v1361, 2147483648
  %v1366 = vxor.u32 %v1362, 2147483648
  %v1367 = vxor.u32 %v1363, 2147483648
  %v1368 = vmul.f32 %v1365, 1.442695
  %v1369 = vpow.pop %v1368
  %v1370 = vmul.f32 %v1366, 1.442695
  %v1371 = vpow.pop %v1370
  %v1372 = vmul.f32 %v1367, 1.442695
  %v1373 = vpow.pop %v1372
  %v1374 = vadd.f32 %v1369, 1.0
  %v1375 = vadd.f32 %v1371, 1.0
  %v1376 = vadd.f32 %v1373, 1.0
  %v1377 = vrcp.pop %v1374
  %v1378 = vmul.f32 1.0, %v1377
  %v1379 = vrcp.pop %v1375
  %v1380 = vmul.f32 1.0, %v1379
  %v1381 = vrcp.pop %v1376
  %v1382 = vmul.f32 1.0, %v1381
  %v1383 = vtanh.pop %v1364
  %v1384 = vmul.f32 %v1380, %v1075
  %v1385 = vmul.f32 %v1378, %v1383
  %v1386 = vadd.f32 %v1384, %v1385
  %v1387 = vtanh.pop %v1386
  %v1388 = vmul.f32 %v1382, %v1387
  %v1389 = vpack.c.bf16 %v1388, %v1388
  %1390 = vmatprep.subr.bf16.mxu0 %v525
  %1391 = vmatpush1.bf16.msra.mxu0 %v524
  %1392 = vmatprep.subr.bf16.mxu0 %v529
  %1393 = vmatpush1.bf16.msra.mxu0 %v528
  %1394 = vmatprep.subr.bf16.mxu0 %v533
  %1395 = vmatpush1.bf16.msra.mxu0 %v532
  %1396 = vmatprep.subr.bf16.mxu0 %v537
  %1397 = vmatpush1.bf16.msra.mxu0 %v536
  %1398 = vmatprep.subr.bf16.mxu0 %v541
  %1399 = vmatpush1.bf16.msra.mxu0 %v540
  %1400 = vmatprep.subr.bf16.mxu0 %v545
  %1401 = vmatpush1.bf16.msra.mxu0 %v544
  %1402 = vmatprep.subr.bf16.mxu0 %v549
  %1403 = vmatpush1.bf16.msra.mxu0 %v548
  %1404 = vmatprep.subr.bf16.mxu0 %v553
  %1405 = vmatpush1.bf16.msra.mxu0 %v552
  %1406 = vmatprep.subr.bf16.mxu0 0
  %1407 = vmatpush1.bf16.msra.mxu0 0
  %1408 = vmatprep.subr.bf16.mxu0 0
  %1409 = vmatpush1.bf16.msra.mxu0 0
  %1410 = vmatprep.subr.bf16.mxu0 0
  %1411 = vmatpush1.bf16.msra.mxu0 0
  %1412 = vmatprep.subr.bf16.mxu0 0
  %1413 = vmatpush1.bf16.msra.mxu0 0
  %1414 = vmatprep.subr.bf16.mxu0 0
  %1415 = vmatpush1.bf16.msra.mxu0 0
  %1416 = vmatprep.subr.bf16.mxu0 0
  %1417 = vmatpush1.bf16.msra.mxu0 0
  %1418 = vmatprep.subr.bf16.mxu0 0
  %1419 = vmatpush1.bf16.msra.mxu0 0
  %1420 = vmatprep.subr.bf16.mxu0 0
  %1421 = vmatpush1.bf16.msra.mxu0 0
  %1422 = vmatprep.mubr.bf16.mxu0 0
  %1423 = vmatmul.mubr.bf16.gmra.mrb[0].mxu0 %v1389
  %v1424 = vpop.f32.mrb[0].mxu0
  %v1425 = vadd.f32 0.0, %v1424
  %v1426 = vpop.f32.mrb[0].mxu0
  %v1427 = vadd.f32 0.0, %v1426
  %v1428 = vpop.f32.mrb[0].mxu0
  %v1429 = vpop.f32.mrb[0].mxu0
  %1430 = vdwg.mxu0
  %1431 = vmatprep.subr.bf16.mxu0 %v527
  %1432 = vmatpush1.bf16.msra.mxu0 %v526
  %1433 = vmatprep.subr.bf16.mxu0 %v531
  %1434 = vmatpush1.bf16.msra.mxu0 %v530
  %1435 = vmatprep.subr.bf16.mxu0 %v535
  %1436 = vmatpush1.bf16.msra.mxu0 %v534
  %1437 = vmatprep.subr.bf16.mxu0 %v539
  %1438 = vmatpush1.bf16.msra.mxu0 %v538
  %1439 = vmatprep.subr.bf16.mxu0 %v543
  %1440 = vmatpush1.bf16.msra.mxu0 %v542
  %1441 = vmatprep.subr.bf16.mxu0 %v547
  %1442 = vmatpush1.bf16.msra.mxu0 %v546
  %1443 = vmatprep.subr.bf16.mxu0 %v551
  %1444 = vmatpush1.bf16.msra.mxu0 %v550
  %1445 = vmatprep.subr.bf16.mxu0 %v555
  %1446 = vmatpush1.bf16.msra.mxu0 %v554
  %1447 = vmatprep.subr.bf16.mxu0 0
  %1448 = vmatpush1.bf16.msra.mxu0 0
  %1449 = vmatprep.subr.bf16.mxu0 0
  %1450 = vmatpush1.bf16.msra.mxu0 0
  %1451 = vmatprep.subr.bf16.mxu0 0
  %1452 = vmatpush1.bf16.msra.mxu0 0
  %1453 = vmatprep.subr.bf16.mxu0 0
  %1454 = vmatpush1.bf16.msra.mxu0 0
  %1455 = vmatprep.subr.bf16.mxu0 0
  %1456 = vmatpush1.bf16.msra.mxu0 0
  %1457 = vmatprep.subr.bf16.mxu0 0
  %1458 = vmatpush1.bf16.msra.mxu0 0
  %1459 = vmatprep.subr.bf16.mxu0 0
  %1460 = vmatpush1.bf16.msra.mxu0 0
  %1461 = vmatprep.subr.bf16.mxu0 0
  %1462 = vmatpush1.bf16.msra.mxu0 0
  %1463 = vmatprep.mubr.bf16.mxu0 0
  %1464 = vmatmul.mubr.bf16.gmra.mrb[0].mxu0 %v1389
  %v1465 = vpop.f32.mrb[0].mxu0
  %v1466 = vadd.f32 0.0, %v1465
  %v1467 = vpop.f32.mrb[0].mxu0
  %v1468 = vadd.f32 0.0, %v1467
  %v1469 = vpop.f32.mrb[0].mxu0
  %v1470 = vpop.f32.mrb[0].mxu0
  %1471 = vdwg.mxu0
  %1472 = vmatprep.subr.bf16.mxu0 %v767
  %1473 = vmatpush1.bf16.msra.mxu0 %v766
  %1474 = vmatprep.subr.bf16.mxu0 %v771
  %1475 = vmatpush1.bf16.msra.mxu0 %v770
  %1476 = vmatprep.subr.bf16.mxu0 %v775
  %1477 = vmatpush1.bf16.msra.mxu0 %v774
  %1478 = vmatprep.subr.bf16.mxu0 %v779
  %1479 = vmatpush1.bf16.msra.mxu0 %v778
  %1480 = vmatprep.subr.bf16.mxu0 %v783
  %1481 = vmatpush1.bf16.msra.mxu0 %v782
  %1482 = vmatprep.subr.bf16.mxu0 %v787
  %1483 = vmatpush1.bf16.msra.mxu0 %v786
  %1484 = vmatprep.subr.bf16.mxu0 %v791
  %1485 = vmatpush1.bf16.msra.mxu0 %v790
  %1486 = vmatprep.subr.bf16.mxu0 %v795
  %1487 = vmatpush1.bf16.msra.mxu0 %v794
  %1488 = vmatprep.subr.bf16.mxu0 0
  %1489 = vmatpush1.bf16.msra.mxu0 0
  %1490 = vmatprep.subr.bf16.mxu0 0
  %1491 = vmatpush1.bf16.msra.mxu0 0
  %1492 = vmatprep.subr.bf16.mxu0 0
  %1493 = vmatpush1.bf16.msra.mxu0 0
  %1494 = vmatprep.subr.bf16.mxu0 0
  %1495 = vmatpush1.bf16.msra.mxu0 0
  %1496 = vmatprep.subr.bf16.mxu0 0
  %1497 = vmatpush1.bf16.msra.mxu0 0
  %1498 = vmatprep.subr.bf16.mxu0 0
  %1499 = vmatpush1.bf16.msra.mxu0 0
  %1500 = vmatprep.subr.bf16.mxu0 0
  %1501 = vmatpush1.bf16.msra.mxu0 0
  %1502 = vmatprep.subr.bf16.mxu0 0
  %1503 = vmatpush1.bf16.msra.mxu0 0
  %1504 = vmatprep.mubr.bf16.mxu0 0
  %1505 = vmatmul.mubr.bf16.gmra.mrb[0].mxu0 %v1271
  %v1506 = vpop.f32.mrb[0].mxu0
  %v1507 = vadd.f32 %v1425, %v1506
  %v1508 = vpop.f32.mrb[0].mxu0
  %v1509 = vadd.f32 %v1427, %v1508
  %v1510 = vpop.f32.mrb[0].mxu0
  %v1511 = vpop.f32.mrb[0].mxu0
  %1512 = vdwg.mxu0
  %1513 = vmatprep.subr.bf16.mxu0 %v769
  %1514 = vmatpush1.bf16.msra.mxu0 %v768
  %1515 = vmatprep.subr.bf16.mxu0 %v773
  %1516 = vmatpush1.bf16.msra.mxu0 %v772
  %1517 = vmatprep.subr.bf16.mxu0 %v777
  %1518 = vmatpush1.bf16.msra.mxu0 %v776
  %1519 = vmatprep.subr.bf16.mxu0 %v781
  %1520 = vmatpush1.bf16.msra.mxu0 %v780
  %1521 = vmatprep.subr.bf16.mxu0 %v785
  %1522 = vmatpush1.bf16.msra.mxu0 %v784
  %1523 = vmatprep.subr.bf16.mxu0 %v789
  %1524 = vmatpush1.bf16.msra.mxu0 %v788
  %1525 = vmatprep.subr.bf16.mxu0 %v793
  %1526 = vmatpush1.bf16.msra.mxu0 %v792
  %1527 = vmatprep.subr.bf16.mxu0 %v797
  %1528 = vmatpush1.bf16.msra.mxu0 %v796
  %1529 = vmatprep.subr.bf16.mxu0 0
  %1530 = vmatpush1.bf16.msra.mxu0 0
  %1531 = vmatprep.subr.bf16.mxu0 0
  %1532 = vmatpush1.bf16.msra.mxu0 0
  %1533 = vmatprep.subr.bf16.mxu0 0
  %1534 = vmatpush1.bf16.msra.mxu0 0
  %1535 = vmatprep.subr.bf16.mxu0 0
  %1536 = vmatpush1.bf16.msra.mxu0 0
  %1537 = vmatprep.subr.bf16.mxu0 0
  %1538 = vmatpush1.bf16.msra.mxu0 0
  %1539 = vmatprep.subr.bf16.mxu0 0
  %1540 = vmatpush1.bf16.msra.mxu0 0
  %1541 = vmatprep.subr.bf16.mxu0 0
  %1542 = vmatpush1.bf16.msra.mxu0 0
  %1543 = vmatprep.subr.bf16.mxu0 0
  %1544 = vmatpush1.bf16.msra.mxu0 0
  %1545 = vmatprep.mubr.bf16.mxu0 0
  %1546 = vmatmul.mubr.bf16.gmra.mrb[0].mxu0 %v1271
  %v1547 = vpop.f32.mrb[0].mxu0
  %v1548 = vadd.f32 %v1466, %v1547
  %v1549 = vpop.f32.mrb[0].mxu0
  %v1550 = vadd.f32 %v1468, %v1549
  %v1551 = vpop.f32.mrb[0].mxu0
  %v1552 = vpop.f32.mrb[0].mxu0
  %1553 = vdwg.mxu0
  %v1554 = vadd.f32 %v1507, %v916
  %v1555 = vadd.f32 %v1509, %v920
  %v1556 = vadd.f32 %v1548, %v924
  %v1557 = vadd.f32 %v1550, %v928
  %v1558 = vxor.u32 %v1554, 2147483648
  %v1559 = vxor.u32 %v1555, 2147483648
  %v1560 = vxor.u32 %v1556, 2147483648
  %v1561 = vmul.f32 %v1558, 1.442695
  %v1562 = vpow.pop %v1561
  %v1563 = vmul.f32 %v1559, 1.442695
  %v1564 = vpow.pop %v1563
  %v1565 = vmul.f32 %v1560, 1.442695
  %v1566 = vpow.pop %v1565
  %v1567 = vadd.f32 %v1562, 1.0
  %v1568 = vadd.f32 %v1564, 1.0
  %v1569 = vadd.f32 %v1566, 1.0
  %v1570 = vrcp.pop %v1567
  %v1571 = vmul.f32 1.0, %v1570
  %v1572 = vrcp.pop %v1568
  %v1573 = vmul.f32 1.0, %v1572
  %v1574 = vrcp.pop %v1569
  %v1575 = vmul.f32 1.0, %v1574
  %v1576 = vtanh.pop %v1557
  %v1577 = vmul.f32 %v1573, %v1268
  %v1578 = vmul.f32 %v1571, %v1576
  %v1579 = vadd.f32 %v1577, %v1578
  %v1580 = vtanh.pop %v1579
  %v1581 = vmul.f32 %v1575, %v1580
  %v1582 = vpack.c.bf16 %v1581, %v1581
  %s1583 = scalar_lea.vmem %s9, 8
  %1584 = vst [vmem:[%s1583] sm:$0xf] %v1582
  %1585 = vmatprep.subr.bf16.mxu0 %v249
  %1586 = vmatpush1.bf16.msra.mxu0 %v248
  %1587 = vmatprep.subr.bf16.mxu0 %v253
  %1588 = vmatpush1.bf16.msra.mxu0 %v252
  %1589 = vmatprep.subr.bf16.mxu0 %v257
  %1590 = vmatpush1.bf16.msra.mxu0 %v256
  %1591 = vmatprep.subr.bf16.mxu0 %v261
  %1592 = vmatpush1.bf16.msra.mxu0 %v260
  %1593 = vmatprep.subr.bf16.mxu0 %v265
  %1594 = vmatpush1.bf16.msra.mxu0 %v264
  %1595 = vmatprep.subr.bf16.mxu0 %v269
  %1596 = vmatpush1.bf16.msra.mxu0 %v268
  %1597 = vmatprep.subr.bf16.mxu0 %v273
  %1598 = vmatpush1.bf16.msra.mxu0 %v272
  %1599 = vmatprep.subr.bf16.mxu0 %v277
  %1600 = vmatpush1.bf16.msra.mxu0 %v276
  %1601 = vmatprep.subr.bf16.mxu0 0
  %1602 = vmatpush1.bf16.msra.mxu0 0
  %1603 = vmatprep.subr.bf16.mxu0 0
  %1604 = vmatpush1.bf16.msra.mxu0 0
  %1605 = vmatprep.subr.bf16.mxu0 0
  %1606 = vmatpush1.bf16.msra.mxu0 0
  %1607 = vmatprep.subr.bf16.mxu0 0
  %1608 = vmatpush1.bf16.msra.mxu0 0
  %1609 = vmatprep.subr.bf16.mxu0 0
  %1610 = vmatpush1.bf16.msra.mxu0 0
  %1611 = vmatprep.subr.bf16.mxu0 0
  %1612 = vmatpush1.bf16.msra.mxu0 0
  %1613 = vmatprep.subr.bf16.mxu0 0
  %1614 = vmatpush1.bf16.msra.mxu0 0
  %1615 = vmatprep.subr.bf16.mxu0 0
  %1616 = vmatpush1.bf16.msra.mxu0 0
  %1617 = vmatprep.mubr.bf16.mxu0 0
  %1618 = vmatmul.mubr.bf16.gmra.mrb[0].mxu0 %v1389
  %v1619 = vpop.f32.mrb[0].mxu0
  %v1620 = vadd.f32 0.0, %v1619
  %v1621 = vpop.f32.mrb[0].mxu0
  %v1622 = vadd.f32 0.0, %v1621
  %v1623 = vpop.f32.mrb[0].mxu0
  %v1624 = vpop.f32.mrb[0].mxu0
  %1625 = vdwg.mxu0
  %1626 = vmatprep.subr.bf16.mxu0 %v251
  %1627 = vmatpush1.bf16.msra.mxu0 %v250
  %1628 = vmatprep.subr.bf16.mxu0 %v255
  %1629 = vmatpush1.bf16.msra.mxu0 %v254
  %1630 = vmatprep.subr.bf16.mxu0 %v259
  %1631 = vmatpush1.bf16.msra.mxu0 %v258
  %1632 = vmatprep.subr.bf16.mxu0 %v263
  %1633 = vmatpush1.bf16.msra.mxu0 %v262
  %1634 = vmatprep.subr.bf16.mxu0 %v267
  %1635 = vmatpush1.bf16.msra.mxu0 %v266
  %1636 = vmatprep.subr.bf16.mxu0 %v271
  %1637 = vmatpush1.bf16.msra.mxu0 %v270
  %1638 = vmatprep.subr.bf16.mxu0 %v275
  %1639 = vmatpush1.bf16.msra.mxu0 %v274
  %1640 = vmatprep.subr.bf16.mxu0 %v279
  %1641 = vmatpush1.bf16.msra.mxu0 %v278
  %1642 = vmatprep.subr.bf16.mxu0 0
  %1643 = vmatpush1.bf16.msra.mxu0 0
  %1644 = vmatprep.subr.bf16.mxu0 0
  %1645 = vmatpush1.bf16.msra.mxu0 0
  %1646 = vmatprep.subr.bf16.mxu0 0
  %1647 = vmatpush1.bf16.msra.mxu0 0
  %1648 = vmatprep.subr.bf16.mxu0 0
  %1649 = vmatpush1.bf16.msra.mxu0 0
  %1650 = vmatprep.subr.bf16.mxu0 0
  %1651 = vmatpush1.bf16.msra.mxu0 0
  %1652 = vmatprep.subr.bf16.mxu0 0
  %1653 = vmatpush1.bf16.msra.mxu0 0
  %1654 = vmatprep.subr.bf16.mxu0 0
  %1655 = vmatpush1.bf16.msra.mxu0 0
  %1656 = vmatprep.subr.bf16.mxu0 0
  %1657 = vmatpush1.bf16.msra.mxu0 0
  %1658 = vmatprep.mubr.bf16.mxu0 0
  %1659 = vmatmul.mubr.bf16.gmra.mrb[0].mxu0 %v1389
  %v1660 = vpop.f32.mrb[0].mxu0
  %v1661 = vadd.f32 0.0, %v1660
  %v1662 = vpop.f32.mrb[0].mxu0
  %v1663 = vadd.f32 0.0, %v1662
  %v1664 = vpop.f32.mrb[0].mxu0
  %v1665 = vpop.f32.mrb[0].mxu0
  %1666 = vdwg.mxu0
  %s1667 = scalar_lea.vmem %s0, 96
  %v1668 = vld [vmem:[%s1667] sm:$0xff]
  %v1669 = vld [vmem:[%s1667 + $0x8] sm:$0xff]
  %v1670 = vld [vmem:[%s1667 + $0x10] sm:$0xff]
  %v1671 = vld [vmem:[%s1667 + $0x18] sm:$0xff]
  %v1672 = vadd.f32 %v1668, %v1620
  %v1673 = vadd.f32 %v1669, %v1622
  %v1674 = vadd.f32 %v1670, %v1661
  %v1675 = vadd.f32 %v1671, %v1663
  %v1676 = vxor.u32 %v1672, 2147483648
  %v1677 = vxor.u32 %v1673, 2147483648
  %v1678 = vxor.u32 %v1674, 2147483648
  %v1679 = vmul.f32 %v1676, 1.442695
  %v1680 = vpow.pop %v1679
  %v1681 = vmul.f32 %v1677, 1.442695
  %v1682 = vpow.pop %v1681
  %v1683 = vmul.f32 %v1678, 1.442695
  %v1684 = vpow.pop %v1683
  %v1685 = vadd.f32 %v1680, 1.0
  %v1686 = vadd.f32 %v1682, 1.0
  %v1687 = vadd.f32 %v1684, 1.0
  %v1688 = vrcp.pop %v1685
  %v1689 = vmul.f32 1.0, %v1688
  %v1690 = vrcp.pop %v1686
  %v1691 = vmul.f32 1.0, %v1690
  %v1692 = vrcp.pop %v1687
  %v1693 = vmul.f32 1.0, %v1692
  %v1694 = vtanh.pop %v1675
  %v1695 = vmul.f32 %v1691, %v1386
  %v1696 = vmul.f32 %v1689, %v1694
  %v1697 = vadd.f32 %v1695, %v1696
  %v1698 = vtanh.pop %v1697
  %v1699 = vmul.f32 %v1693, %v1698
  %v1700 = vpack.c.bf16 %v1699, %v1699
  %1701 = vmatprep.subr.bf16.mxu0 %v525
  %1702 = vmatpush1.bf16.msra.mxu0 %v524
  %1703 = vmatprep.subr.bf16.mxu0 %v529
  %1704 = vmatpush1.bf16.msra.mxu0 %v528
  %1705 = vmatprep.subr.bf16.mxu0 %v533
  %1706 = vmatpush1.bf16.msra.mxu0 %v532
  %1707 = vmatprep.subr.bf16.mxu0 %v537
  %1708 = vmatpush1.bf16.msra.mxu0 %v536
  %1709 = vmatprep.subr.bf16.mxu0 %v541
  %1710 = vmatpush1.bf16.msra.mxu0 %v540
  %1711 = vmatprep.subr.bf16.mxu0 %v545
  %1712 = vmatpush1.bf16.msra.mxu0 %v544
  %1713 = vmatprep.subr.bf16.mxu0 %v549
  %1714 = vmatpush1.bf16.msra.mxu0 %v548
  %1715 = vmatprep.subr.bf16.mxu0 %v553
  %1716 = vmatpush1.bf16.msra.mxu0 %v552
  %1717 = vmatprep.subr.bf16.mxu0 0
  %1718 = vmatpush1.bf16.msra.mxu0 0
  %1719 = vmatprep.subr.bf16.mxu0 0
  %1720 = vmatpush1.bf16.msra.mxu0 0
  %1721 = vmatprep.subr.bf16.mxu0 0
  %1722 = vmatpush1.bf16.msra.mxu0 0
  %1723 = vmatprep.subr.bf16.mxu0 0
  %1724 = vmatpush1.bf16.msra.mxu0 0
  %1725 = vmatprep.subr.bf16.mxu0 0
  %1726 = vmatpush1.bf16.msra.mxu0 0
  %1727 = vmatprep.subr.bf16.mxu0 0
  %1728 = vmatpush1.bf16.msra.mxu0 0
  %1729 = vmatprep.subr.bf16.mxu0 0
  %1730 = vmatpush1.bf16.msra.mxu0 0
  %1731 = vmatprep.subr.bf16.mxu0 0
  %1732 = vmatpush1.bf16.msra.mxu0 0
  %1733 = vmatprep.mubr.bf16.mxu0 0
  %1734 = vmatmul.mubr.bf16.gmra.mrb[0].mxu0 %v1700
  %v1735 = vpop.f32.mrb[0].mxu0
  %v1736 = vadd.f32 0.0, %v1735
  %v1737 = vpop.f32.mrb[0].mxu0
  %v1738 = vadd.f32 0.0, %v1737
  %v1739 = vpop.f32.mrb[0].mxu0
  %v1740 = vpop.f32.mrb[0].mxu0
  %1741 = vdwg.mxu0
  %1742 = vmatprep.subr.bf16.mxu0 %v527
  %1743 = vmatpush1.bf16.msra.mxu0 %v526
  %1744 = vmatprep.subr.bf16.mxu0 %v531
  %1745 = vmatpush1.bf16.msra.mxu0 %v530
  %1746 = vmatprep.subr.bf16.mxu0 %v535
  %1747 = vmatpush1.bf16.msra.mxu0 %v534
  %1748 = vmatprep.subr.bf16.mxu0 %v539
  %1749 = vmatpush1.bf16.msra.mxu0 %v538
  %1750 = vmatprep.subr.bf16.mxu0 %v543
  %1751 = vmatpush1.bf16.msra.mxu0 %v542
  %1752 = vmatprep.subr.bf16.mxu0 %v547
  %1753 = vmatpush1.bf16.msra.mxu0 %v546
  %1754 = vmatprep.subr.bf16.mxu0 %v551
  %1755 = vmatpush1.bf16.msra.mxu0 %v550
  %1756 = vmatprep.subr.bf16.mxu0 %v555
  %1757 = vmatpush1.bf16.msra.mxu0 %v554
  %1758 = vmatprep.subr.bf16.mxu0 0
  %1759 = vmatpush1.bf16.msra.mxu0 0
  %1760 = vmatprep.subr.bf16.mxu0 0
  %1761 = vmatpush1.bf16.msra.mxu0 0
  %1762 = vmatprep.subr.bf16.mxu0 0
  %1763 = vmatpush1.bf16.msra.mxu0 0
  %1764 = vmatprep.subr.bf16.mxu0 0
  %1765 = vmatpush1.bf16.msra.mxu0 0
  %1766 = vmatprep.subr.bf16.mxu0 0
  %1767 = vmatpush1.bf16.msra.mxu0 0
  %1768 = vmatprep.subr.bf16.mxu0 0
  %1769 = vmatpush1.bf16.msra.mxu0 0
  %1770 = vmatprep.subr.bf16.mxu0 0
  %1771 = vmatpush1.bf16.msra.mxu0 0
  %1772 = vmatprep.subr.bf16.mxu0 0
  %1773 = vmatpush1.bf16.msra.mxu0 0
  %1774 = vmatprep.mubr.bf16.mxu0 0
  %1775 = vmatmul.mubr.bf16.gmra.mrb[0].mxu0 %v1700
  %v1776 = vpop.f32.mrb[0].mxu0
  %v1777 = vadd.f32 0.0, %v1776
  %v1778 = vpop.f32.mrb[0].mxu0
  %v1779 = vadd.f32 0.0, %v1778
  %v1780 = vpop.f32.mrb[0].mxu0
  %v1781 = vpop.f32.mrb[0].mxu0
  %1782 = vdwg.mxu0
  %1783 = vmatprep.subr.bf16.mxu0 %v767
  %1784 = vmatpush1.bf16.msra.mxu0 %v766
  %1785 = vmatprep.subr.bf16.mxu0 %v771
  %1786 = vmatpush1.bf16.msra.mxu0 %v770
  %1787 = vmatprep.subr.bf16.mxu0 %v775
  %1788 = vmatpush1.bf16.msra.mxu0 %v774
  %1789 = vmatprep.subr.bf16.mxu0 %v779
  %1790 = vmatpush1.bf16.msra.mxu0 %v778
  %1791 = vmatprep.subr.bf16.mxu0 %v783
  %1792 = vmatpush1.bf16.msra.mxu0 %v782
  %1793 = vmatprep.subr.bf16.mxu0 %v787
  %1794 = vmatpush1.bf16.msra.mxu0 %v786
  %1795 = vmatprep.subr.bf16.mxu0 %v791
  %1796 = vmatpush1.bf16.msra.mxu0 %v790
  %1797 = vmatprep.subr.bf16.mxu0 %v795
  %1798 = vmatpush1.bf16.msra.mxu0 %v794
  %1799 = vmatprep.subr.bf16.mxu0 0
  %1800 = vmatpush1.bf16.msra.mxu0 0
  %1801 = vmatprep.subr.bf16.mxu0 0
  %1802 = vmatpush1.bf16.msra.mxu0 0
  %1803 = vmatprep.subr.bf16.mxu0 0
  %1804 = vmatpush1.bf16.msra.mxu0 0
  %1805 = vmatprep.subr.bf16.mxu0 0
  %1806 = vmatpush1.bf16.msra.mxu0 0
  %1807 = vmatprep.subr.bf16.mxu0 0
  %1808 = vmatpush1.bf16.msra.mxu0 0
  %1809 = vmatprep.subr.bf16.mxu0 0
  %1810 = vmatpush1.bf16.msra.mxu0 0
  %1811 = vmatprep.subr.bf16.mxu0 0
  %1812 = vmatpush1.bf16.msra.mxu0 0
  %1813 = vmatprep.subr.bf16.mxu0 0
  %1814 = vmatpush1.bf16.msra.mxu0 0
  %1815 = vmatprep.mubr.bf16.mxu0 0
  %1816 = vmatmul.mubr.bf16.gmra.mrb[0].mxu0 %v1582
  %v1817 = vpop.f32.mrb[0].mxu0
  %v1818 = vadd.f32 %v1736, %v1817
  %v1819 = vpop.f32.mrb[0].mxu0
  %v1820 = vadd.f32 %v1738, %v1819
  %v1821 = vpop.f32.mrb[0].mxu0
  %v1822 = vpop.f32.mrb[0].mxu0
  %1823 = vdwg.mxu0
  %1824 = vmatprep.subr.bf16.mxu0 %v769
  %1825 = vmatpush1.bf16.msra.mxu0 %v768
  %1826 = vmatprep.subr.bf16.mxu0 %v773
  %1827 = vmatpush1.bf16.msra.mxu0 %v772
  %1828 = vmatprep.subr.bf16.mxu0 %v777
  %1829 = vmatpush1.bf16.msra.mxu0 %v776
  %1830 = vmatprep.subr.bf16.mxu0 %v781
  %1831 = vmatpush1.bf16.msra.mxu0 %v780
  %1832 = vmatprep.subr.bf16.mxu0 %v785
  %1833 = vmatpush1.bf16.msra.mxu0 %v784
  %1834 = vmatprep.subr.bf16.mxu0 %v789
  %1835 = vmatpush1.bf16.msra.mxu0 %v788
  %1836 = vmatprep.subr.bf16.mxu0 %v793
  %1837 = vmatpush1.bf16.msra.mxu0 %v792
  %1838 = vmatprep.subr.bf16.mxu0 %v797
  %1839 = vmatpush1.bf16.msra.mxu0 %v796
  %1840 = vmatprep.subr.bf16.mxu0 0
  %1841 = vmatpush1.bf16.msra.mxu0 0
  %1842 = vmatprep.subr.bf16.mxu0 0
  %1843 = vmatpush1.bf16.msra.mxu0 0
  %1844 = vmatprep.subr.bf16.mxu0 0
  %1845 = vmatpush1.bf16.msra.mxu0 0
  %1846 = vmatprep.subr.bf16.mxu0 0
  %1847 = vmatpush1.bf16.msra.mxu0 0
  %1848 = vmatprep.subr.bf16.mxu0 0
  %1849 = vmatpush1.bf16.msra.mxu0 0
  %1850 = vmatprep.subr.bf16.mxu0 0
  %1851 = vmatpush1.bf16.msra.mxu0 0
  %1852 = vmatprep.subr.bf16.mxu0 0
  %1853 = vmatpush1.bf16.msra.mxu0 0
  %1854 = vmatprep.subr.bf16.mxu0 0
  %1855 = vmatpush1.bf16.msra.mxu0 0
  %1856 = vmatprep.mubr.bf16.mxu0 0
  %1857 = vmatmul.mubr.bf16.gmra.mrb[0].mxu0 %v1582
  %v1858 = vpop.f32.mrb[0].mxu0
  %v1859 = vadd.f32 %v1777, %v1858
  %v1860 = vpop.f32.mrb[0].mxu0
  %v1861 = vadd.f32 %v1779, %v1860
  %v1862 = vpop.f32.mrb[0].mxu0
  %v1863 = vpop.f32.mrb[0].mxu0
  %1864 = vdwg.mxu0
  %v1865 = vadd.f32 %v1818, %v916
  %v1866 = vadd.f32 %v1820, %v920
  %v1867 = vadd.f32 %v1859, %v924
  %v1868 = vadd.f32 %v1861, %v928
  %v1869 = vxor.u32 %v1865, 2147483648
  %v1870 = vxor.u32 %v1866, 2147483648
  %v1871 = vxor.u32 %v1867, 2147483648
  %v1872 = vmul.f32 %v1869, 1.442695
  %v1873 = vpow.pop %v1872
  %v1874 = vmul.f32 %v1870, 1.442695
  %v1875 = vpow.pop %v1874
  %v1876 = vmul.f32 %v1871, 1.442695
  %v1877 = vpow.pop %v1876
  %v1878 = vadd.f32 %v1873, 1.0
  %v1879 = vadd.f32 %v1875, 1.0
  %v1880 = vadd.f32 %v1877, 1.0
  %v1881 = vrcp.pop %v1878
  %v1882 = vmul.f32 1.0, %v1881
  %v1883 = vrcp.pop %v1879
  %v1884 = vmul.f32 1.0, %v1883
  %v1885 = vrcp.pop %v1880
  %v1886 = vmul.f32 1.0, %v1885
  %v1887 = vtanh.pop %v1868
  %v1888 = vmul.f32 %v1884, %v1579
  %v1889 = vmul.f32 %v1882, %v1887
  %v1890 = vadd.f32 %v1888, %v1889
  %v1891 = vtanh.pop %v1890
  %v1892 = vmul.f32 %v1886, %v1891
  %v1893 = vpack.c.bf16 %v1892, %v1892
  %s1894 = scalar_lea.vmem %s9, 12
  %1895 = vst [vmem:[%s1894] sm:$0xf] %v1893
  %1896 = vmatprep.subr.bf16.mxu0 %v249
  %1897 = vmatpush1.bf16.msra.mxu0 %v248
  %1898 = vmatprep.subr.bf16.mxu0 %v253
  %1899 = vmatpush1.bf16.msra.mxu0 %v252
  %1900 = vmatprep.subr.bf16.mxu0 %v257
  %1901 = vmatpush1.bf16.msra.mxu0 %v256
  %1902 = vmatprep.subr.bf16.mxu0 %v261
  %1903 = vmatpush1.bf16.msra.mxu0 %v260
  %1904 = vmatprep.subr.bf16.mxu0 %v265
  %1905 = vmatpush1.bf16.msra.mxu0 %v264
  %1906 = vmatprep.subr.bf16.mxu0 %v269
  %1907 = vmatpush1.bf16.msra.mxu0 %v268
  %1908 = vmatprep.subr.bf16.mxu0 %v273
  %1909 = vmatpush1.bf16.msra.mxu0 %v272
  %1910 = vmatprep.subr.bf16.mxu0 %v277
  %1911 = vmatpush1.bf16.msra.mxu0 %v276
  %1912 = vmatprep.subr.bf16.mxu0 0
  %1913 = vmatpush1.bf16.msra.mxu0 0
  %1914 = vmatprep.subr.bf16.mxu0 0
  %1915 = vmatpush1.bf16.msra.mxu0 0
  %1916 = vmatprep.subr.bf16.mxu0 0
  %1917 = vmatpush1.bf16.msra.mxu0 0
  %1918 = vmatprep.subr.bf16.mxu0 0
  %1919 = vmatpush1.bf16.msra.mxu0 0
  %1920 = vmatprep.subr.bf16.mxu0 0
  %1921 = vmatpush1.bf16.msra.mxu0 0
  %1922 = vmatprep.subr.bf16.mxu0 0
  %1923 = vmatpush1.bf16.msra.mxu0 0
  %1924 = vmatprep.subr.bf16.mxu0 0
  %1925 = vmatpush1.bf16.msra.mxu0 0
  %1926 = vmatprep.subr.bf16.mxu0 0
  %1927 = vmatpush1.bf16.msra.mxu0 0
  %1928 = vmatprep.mubr.bf16.mxu0 0
  %1929 = vmatmul.mubr.bf16.gmra.mrb[0].mxu0 %v1700
  %v1930 = vpop.f32.mrb[0].mxu0
  %v1931 = vadd.f32 0.0, %v1930
  %v1932 = vpop.f32.mrb[0].mxu0
  %v1933 = vadd.f32 0.0, %v1932
  %v1934 = vpop.f32.mrb[0].mxu0
  %v1935 = vpop.f32.mrb[0].mxu0
  %1936 = vdwg.mxu0
  %1937 = vmatprep.subr.bf16.mxu0 %v251
  %1938 = vmatpush1.bf16.msra.mxu0 %v250
  %1939 = vmatprep.subr.bf16.mxu0 %v255
  %1940 = vmatpush1.bf16.msra.mxu0 %v254
  %1941 = vmatprep.subr.bf16.mxu0 %v259
  %1942 = vmatpush1.bf16.msra.mxu0 %v258
  %1943 = vmatprep.subr.bf16.mxu0 %v263
  %1944 = vmatpush1.bf16.msra.mxu0 %v262
  %1945 = vmatprep.subr.bf16.mxu0 %v267
  %1946 = vmatpush1.bf16.msra.mxu0 %v266
  %1947 = vmatprep.subr.bf16.mxu0 %v271
  %1948 = vmatpush1.bf16.msra.mxu0 %v270
  %1949 = vmatprep.subr.bf16.mxu0 %v275
  %1950 = vmatpush1.bf16.msra.mxu0 %v274
  %1951 = vmatprep.subr.bf16.mxu0 %v279
  %1952 = vmatpush1.bf16.msra.mxu0 %v278
  %1953 = vmatprep.subr.bf16.mxu0 0
  %1954 = vmatpush1.bf16.msra.mxu0 0
  %1955 = vmatprep.subr.bf16.mxu0 0
  %1956 = vmatpush1.bf16.msra.mxu0 0
  %1957 = vmatprep.subr.bf16.mxu0 0
  %1958 = vmatpush1.bf16.msra.mxu0 0
  %1959 = vmatprep.subr.bf16.mxu0 0
  %1960 = vmatpush1.bf16.msra.mxu0 0
  %1961 = vmatprep.subr.bf16.mxu0 0
  %1962 = vmatpush1.bf16.msra.mxu0 0
  %1963 = vmatprep.subr.bf16.mxu0 0
  %1964 = vmatpush1.bf16.msra.mxu0 0
  %1965 = vmatprep.subr.bf16.mxu0 0
  %1966 = vmatpush1.bf16.msra.mxu0 0
  %1967 = vmatprep.subr.bf16.mxu0 0
  %1968 = vmatpush1.bf16.msra.mxu0 0
  %1969 = vmatprep.mubr.bf16.mxu0 0
  %1970 = vmatmul.mubr.bf16.gmra.mrb[0].mxu0 %v1700
  %v1971 = vpop.f32.mrb[0].mxu0
  %v1972 = vadd.f32 0.0, %v1971
  %v1973 = vpop.f32.mrb[0].mxu0
  %v1974 = vadd.f32 0.0, %v1973
  %v1975 = vpop.f32.mrb[0].mxu0
  %v1976 = vpop.f32.mrb[0].mxu0
  %1977 = vdwg.mxu0
  %s1978 = scalar_lea.vmem %s0, 128
  %v1979 = vld [vmem:[%s1978] sm:$0xff]
  %v1980 = vld [vmem:[%s1978 + $0x8] sm:$0xff]
  %v1981 = vld [vmem:[%s1978 + $0x10] sm:$0xff]
  %v1982 = vld [vmem:[%s1978 + $0x18] sm:$0xff]
  %v1983 = vadd.f32 %v1979, %v1931
  %v1984 = vadd.f32 %v1980, %v1933
  %v1985 = vadd.f32 %v1981, %v1972
  %v1986 = vadd.f32 %v1982, %v1974
  %v1987 = vxor.u32 %v1983, 2147483648
  %v1988 = vxor.u32 %v1984, 2147483648
  %v1989 = vxor.u32 %v1985, 2147483648
  %v1990 = vmul.f32 %v1987, 1.442695
  %v1991 = vpow.pop %v1990
  %v1992 = vmul.f32 %v1988, 1.442695
  %v1993 = vpow.pop %v1992
  %v1994 = vmul.f32 %v1989, 1.442695
  %v1995 = vpow.pop %v1994
  %v1996 = vadd.f32 %v1991, 1.0
  %v1997 = vadd.f32 %v1993, 1.0
  %v1998 = vadd.f32 %v1995, 1.0
  %v1999 = vrcp.pop %v1996
  %v2000 = vmul.f32 1.0, %v1999
  %v2001 = vrcp.pop %v1997
  %v2002 = vmul.f32 1.0, %v2001
  %v2003 = vrcp.pop %v1998
  %v2004 = vmul.f32 1.0, %v2003
  %v2005 = vtanh.pop %v1986
  %v2006 = vmul.f32 %v2002, %v1697
  %v2007 = vmul.f32 %v2000, %v2005
  %v2008 = vadd.f32 %v2006, %v2007
  %v2009 = vtanh.pop %v2008
  %v2010 = vmul.f32 %v2004, %v2009
  %v2011 = vpack.c.bf16 %v2010, %v2010
  %2012 = vmatprep.subr.bf16.mxu0 %v525
  %2013 = vmatpush1.bf16.msra.mxu0 %v524
  %2014 = vmatprep.subr.bf16.mxu0 %v529
  %2015 = vmatpush1.bf16.msra.mxu0 %v528
  %2016 = vmatprep.subr.bf16.mxu0 %v533
  %2017 = vmatpush1.bf16.msra.mxu0 %v532
  %2018 = vmatprep.subr.bf16.mxu0 %v537
  %2019 = vmatpush1.bf16.msra.mxu0 %v536
  %2020 = vmatprep.subr.bf16.mxu0 %v541
  %2021 = vmatpush1.bf16.msra.mxu0 %v540
  %2022 = vmatprep.subr.bf16.mxu0 %v545
  %2023 = vmatpush1.bf16.msra.mxu0 %v544
  %2024 = vmatprep.subr.bf16.mxu0 %v549
  %2025 = vmatpush1.bf16.msra.mxu0 %v548
  %2026 = vmatprep.subr.bf16.mxu0 %v553
  %2027 = vmatpush1.bf16.msra.mxu0 %v552
  %2028 = vmatprep.subr.bf16.mxu0 0
  %2029 = vmatpush1.bf16.msra.mxu0 0
  %2030 = vmatprep.subr.bf16.mxu0 0
  %2031 = vmatpush1.bf16.msra.mxu0 0
  %2032 = vmatprep.subr.bf16.mxu0 0
  %2033 = vmatpush1.bf16.msra.mxu0 0
  %2034 = vmatprep.subr.bf16.mxu0 0
  %2035 = vmatpush1.bf16.msra.mxu0 0
  %2036 = vmatprep.subr.bf16.mxu0 0
  %2037 = vmatpush1.bf16.msra.mxu0 0
  %2038 = vmatprep.subr.bf16.mxu0 0
  %2039 = vmatpush1.bf16.msra.mxu0 0
  %2040 = vmatprep.subr.bf16.mxu0 0
  %2041 = vmatpush1.bf16.msra.mxu0 0
  %2042 = vmatprep.subr.bf16.mxu0 0
  %2043 = vmatpush1.bf16.msra.mxu0 0
  %2044 = vmatprep.mubr.bf16.mxu0 0
  %2045 = vmatmul.mubr.bf16.gmra.mrb[0].mxu0 %v2011
  %v2046 = vpop.f32.mrb[0].mxu0
  %v2047 = vadd.f32 0.0, %v2046
  %v2048 = vpop.f32.mrb[0].mxu0
  %v2049 = vadd.f32 0.0, %v2048
  %v2050 = vpop.f32.mrb[0].mxu0
  %v2051 = vpop.f32.mrb[0].mxu0
  %2052 = vdwg.mxu0
  %2053 = vmatprep.subr.bf16.mxu0 %v527
  %2054 = vmatpush1.bf16.msra.mxu0 %v526
  %2055 = vmatprep.subr.bf16.mxu0 %v531
  %2056 = vmatpush1.bf16.msra.mxu0 %v530
  %2057 = vmatprep.subr.bf16.mxu0 %v535
  %2058 = vmatpush1.bf16.msra.mxu0 %v534
  %2059 = vmatprep.subr.bf16.mxu0 %v539
  %2060 = vmatpush1.bf16.msra.mxu0 %v538
  %2061 = vmatprep.subr.bf16.mxu0 %v543
  %2062 = vmatpush1.bf16.msra.mxu0 %v542
  %2063 = vmatprep.subr.bf16.mxu0 %v547
  %2064 = vmatpush1.bf16.msra.mxu0 %v546
  %2065 = vmatprep.subr.bf16.mxu0 %v551
  %2066 = vmatpush1.bf16.msra.mxu0 %v550
  %2067 = vmatprep.subr.bf16.mxu0 %v555
  %2068 = vmatpush1.bf16.msra.mxu0 %v554
  %2069 = vmatprep.subr.bf16.mxu0 0
  %2070 = vmatpush1.bf16.msra.mxu0 0
  %2071 = vmatprep.subr.bf16.mxu0 0
  %2072 = vmatpush1.bf16.msra.mxu0 0
  %2073 = vmatprep.subr.bf16.mxu0 0
  %2074 = vmatpush1.bf16.msra.mxu0 0
  %2075 = vmatprep.subr.bf16.mxu0 0
  %2076 = vmatpush1.bf16.msra.mxu0 0
  %2077 = vmatprep.subr.bf16.mxu0 0
  %2078 = vmatpush1.bf16.msra.mxu0 0
  %2079 = vmatprep.subr.bf16.mxu0 0
  %2080 = vmatpush1.bf16.msra.mxu0 0
  %2081 = vmatprep.subr.bf16.mxu0 0
  %2082 = vmatpush1.bf16.msra.mxu0 0
  %2083 = vmatprep.subr.bf16.mxu0 0
  %2084 = vmatpush1.bf16.msra.mxu0 0
  %2085 = vmatprep.mubr.bf16.mxu0 0
  %2086 = vmatmul.mubr.bf16.gmra.mrb[0].mxu0 %v2011
  %v2087 = vpop.f32.mrb[0].mxu0
  %v2088 = vadd.f32 0.0, %v2087
  %v2089 = vpop.f32.mrb[0].mxu0
  %v2090 = vadd.f32 0.0, %v2089
  %v2091 = vpop.f32.mrb[0].mxu0
  %v2092 = vpop.f32.mrb[0].mxu0
  %2093 = vdwg.mxu0
  %2094 = vmatprep.subr.bf16.mxu0 %v767
  %2095 = vmatpush1.bf16.msra.mxu0 %v766
  %2096 = vmatprep.subr.bf16.mxu0 %v771
  %2097 = vmatpush1.bf16.msra.mxu0 %v770
  %2098 = vmatprep.subr.bf16.mxu0 %v775
  %2099 = vmatpush1.bf16.msra.mxu0 %v774
  %2100 = vmatprep.subr.bf16.mxu0 %v779
  %2101 = vmatpush1.bf16.msra.mxu0 %v778
  %2102 = vmatprep.subr.bf16.mxu0 %v783
  %2103 = vmatpush1.bf16.msra.mxu0 %v782
  %2104 = vmatprep.subr.bf16.mxu0 %v787
  %2105 = vmatpush1.bf16.msra.mxu0 %v786
  %2106 = vmatprep.subr.bf16.mxu0 %v791
  %2107 = vmatpush1.bf16.msra.mxu0 %v790
  %2108 = vmatprep.subr.bf16.mxu0 %v795
  %2109 = vmatpush1.bf16.msra.mxu0 %v794
  %2110 = vmatprep.subr.bf16.mxu0 0
  %2111 = vmatpush1.bf16.msra.mxu0 0
  %2112 = vmatprep.subr.bf16.mxu0 0
  %2113 = vmatpush1.bf16.msra.mxu0 0
  %2114 = vmatprep.subr.bf16.mxu0 0
  %2115 = vmatpush1.bf16.msra.mxu0 0
  %2116 = vmatprep.subr.bf16.mxu0 0
  %2117 = vmatpush1.bf16.msra.mxu0 0
  %2118 = vmatprep.subr.bf16.mxu0 0
  %2119 = vmatpush1.bf16.msra.mxu0 0
  %2120 = vmatprep.subr.bf16.mxu0 0
  %2121 = vmatpush1.bf16.msra.mxu0 0
  %2122 = vmatprep.subr.bf16.mxu0 0
  %2123 = vmatpush1.bf16.msra.mxu0 0
  %2124 = vmatprep.subr.bf16.mxu0 0
  %2125 = vmatpush1.bf16.msra.mxu0 0
  %2126 = vmatprep.mubr.bf16.mxu0 0
  %2127 = vmatmul.mubr.bf16.gmra.mrb[0].mxu0 %v1893
  %v2128 = vpop.f32.mrb[0].mxu0
  %v2129 = vadd.f32 %v2047, %v2128
  %v2130 = vpop.f32.mrb[0].mxu0
  %v2131 = vadd.f32 %v2049, %v2130
  %v2132 = vpop.f32.mrb[0].mxu0
  %v2133 = vpop.f32.mrb[0].mxu0
  %2134 = vdwg.mxu0
  %2135 = vmatprep.subr.bf16.mxu0 %v769
  %2136 = vmatpush1.bf16.msra.mxu0 %v768
  %2137 = vmatprep.subr.bf16.mxu0 %v773
  %2138 = vmatpush1.bf16.msra.mxu0 %v772
  %2139 = vmatprep.subr.bf16.mxu0 %v777
  %2140 = vmatpush1.bf16.msra.mxu0 %v776
  %2141 = vmatprep.subr.bf16.mxu0 %v781
  %2142 = vmatpush1.bf16.msra.mxu0 %v780
  %2143 = vmatprep.subr.bf16.mxu0 %v785
  %2144 = vmatpush1.bf16.msra.mxu0 %v784
  %2145 = vmatprep.subr.bf16.mxu0 %v789
  %2146 = vmatpush1.bf16.msra.mxu0 %v788
  %2147 = vmatprep.subr.bf16.mxu0 %v793
  %2148 = vmatpush1.bf16.msra.mxu0 %v792
  %2149 = vmatprep.subr.bf16.mxu0 %v797
  %2150 = vmatpush1.bf16.msra.mxu0 %v796
  %2151 = vmatprep.subr.bf16.mxu0 0
  %2152 = vmatpush1.bf16.msra.mxu0 0
  %2153 = vmatprep.subr.bf16.mxu0 0
  %2154 = vmatpush1.bf16.msra.mxu0 0
  %2155 = vmatprep.subr.bf16.mxu0 0
  %2156 = vmatpush1.bf16.msra.mxu0 0
  %2157 = vmatprep.subr.bf16.mxu0 0
  %2158 = vmatpush1.bf16.msra.mxu0 0
  %2159 = vmatprep.subr.bf16.mxu0 0
  %2160 = vmatpush1.bf16.msra.mxu0 0
  %2161 = vmatprep.subr.bf16.mxu0 0
  %2162 = vmatpush1.bf16.msra.mxu0 0
  %2163 = vmatprep.subr.bf16.mxu0 0
  %2164 = vmatpush1.bf16.msra.mxu0 0
  %2165 = vmatprep.subr.bf16.mxu0 0
  %2166 = vmatpush1.bf16.msra.mxu0 0
  %2167 = vmatprep.mubr.bf16.mxu0 0
  %2168 = vmatmul.mubr.bf16.gmra.mrb[0].mxu0 %v1893
  %v2169 = vpop.f32.mrb[0].mxu0
  %v2170 = vadd.f32 %v2088, %v2169
  %v2171 = vpop.f32.mrb[0].mxu0
  %v2172 = vadd.f32 %v2090, %v2171
  %v2173 = vpop.f32.mrb[0].mxu0
  %v2174 = vpop.f32.mrb[0].mxu0
  %2175 = vdwg.mxu0
  %v2176 = vadd.f32 %v2129, %v916
  %v2177 = vadd.f32 %v2131, %v920
  %v2178 = vadd.f32 %v2170, %v924
  %v2179 = vadd.f32 %v2172, %v928
  %v2180 = vxor.u32 %v2176, 2147483648
  %v2181 = vxor.u32 %v2177, 2147483648
  %v2182 = vxor.u32 %v2178, 2147483648
  %v2183 = vmul.f32 %v2180, 1.442695
  %v2184 = vpow.pop %v2183
  %v2185 = vmul.f32 %v2181, 1.442695
  %v2186 = vpow.pop %v2185
  %v2187 = vmul.f32 %v2182, 1.442695
  %v2188 = vpow.pop %v2187
  %v2189 = vadd.f32 %v2184, 1.0
  %v2190 = vadd.f32 %v2186, 1.0
  %v2191 = vadd.f32 %v2188, 1.0
  %v2192 = vrcp.pop %v2189
  %v2193 = vmul.f32 1.0, %v2192
  %v2194 = vrcp.pop %v2190
  %v2195 = vmul.f32 1.0, %v2194
  %v2196 = vrcp.pop %v2191
  %v2197 = vmul.f32 1.0, %v2196
  %v2198 = vtanh.pop %v2179
  %v2199 = vmul.f32 %v2195, %v1890
  %v2200 = vmul.f32 %v2193, %v2198
  %v2201 = vadd.f32 %v2199, %v2200
  %v2202 = vtanh.pop %v2201
  %v2203 = vmul.f32 %v2197, %v2202
  %v2204 = vpack.c.bf16 %v2203, %v2203
  %s2205 = scalar_lea.vmem %s9, 16
  %2206 = vst [vmem:[%s2205] sm:$0xf] %v2204
  %2207 = vmatprep.subr.bf16.mxu0 %v249
  %2208 = vmatpush1.bf16.msra.mxu0 %v248
  %2209 = vmatprep.subr.bf16.mxu0 %v253
  %2210 = vmatpush1.bf16.msra.mxu0 %v252
  %2211 = vmatprep.subr.bf16.mxu0 %v257
  %2212 = vmatpush1.bf16.msra.mxu0 %v256
  %2213 = vmatprep.subr.bf16.mxu0 %v261
  %2214 = vmatpush1.bf16.msra.mxu0 %v260
  %2215 = vmatprep.subr.bf16.mxu0 %v265
  %2216 = vmatpush1.bf16.msra.mxu0 %v264
  %2217 = vmatprep.subr.bf16.mxu0 %v269
  %2218 = vmatpush1.bf16.msra.mxu0 %v268
  %2219 = vmatprep.subr.bf16.mxu0 %v273
  %2220 = vmatpush1.bf16.msra.mxu0 %v272
  %2221 = vmatprep.subr.bf16.mxu0 %v277
  %2222 = vmatpush1.bf16.msra.mxu0 %v276
  %2223 = vmatprep.subr.bf16.mxu0 0
  %2224 = vmatpush1.bf16.msra.mxu0 0
  %2225 = vmatprep.subr.bf16.mxu0 0
  %2226 = vmatpush1.bf16.msra.mxu0 0
  %2227 = vmatprep.subr.bf16.mxu0 0
  %2228 = vmatpush1.bf16.msra.mxu0 0
  %2229 = vmatprep.subr.bf16.mxu0 0
  %2230 = vmatpush1.bf16.msra.mxu0 0
  %2231 = vmatprep.subr.bf16.mxu0 0
  %2232 = vmatpush1.bf16.msra.mxu0 0
  %2233 = vmatprep.subr.bf16.mxu0 0
  %2234 = vmatpush1.bf16.msra.mxu0 0
  %2235 = vmatprep.subr.bf16.mxu0 0
  %2236 = vmatpush1.bf16.msra.mxu0 0
  %2237 = vmatprep.subr.bf16.mxu0 0
  %2238 = vmatpush1.bf16.msra.mxu0 0
  %2239 = vmatprep.mubr.bf16.mxu0 0
  %2240 = vmatmul.mubr.bf16.gmra.mrb[0].mxu0 %v2011
  %v2241 = vpop.f32.mrb[0].mxu0
  %v2242 = vadd.f32 0.0, %v2241
  %v2243 = vpop.f32.mrb[0].mxu0
  %v2244 = vadd.f32 0.0, %v2243
  %v2245 = vpop.f32.mrb[0].mxu0
  %v2246 = vpop.f32.mrb[0].mxu0
  %2247 = vdwg.mxu0
  %2248 = vmatprep.subr.bf16.mxu0 %v251
  %2249 = vmatpush1.bf16.msra.mxu0 %v250
  %2250 = vmatprep.subr.bf16.mxu0 %v255
  %2251 = vmatpush1.bf16.msra.mxu0 %v254
  %2252 = vmatprep.subr.bf16.mxu0 %v259
  %2253 = vmatpush1.bf16.msra.mxu0 %v258
  %2254 = vmatprep.subr.bf16.mxu0 %v263
  %2255 = vmatpush1.bf16.msra.mxu0 %v262
  %2256 = vmatprep.subr.bf16.mxu0 %v267
  %2257 = vmatpush1.bf16.msra.mxu0 %v266
  %2258 = vmatprep.subr.bf16.mxu0 %v271
  %2259 = vmatpush1.bf16.msra.mxu0 %v270
  %2260 = vmatprep.subr.bf16.mxu0 %v275
  %2261 = vmatpush1.bf16.msra.mxu0 %v274
  %2262 = vmatprep.subr.bf16.mxu0 %v279
  %2263 = vmatpush1.bf16.msra.mxu0 %v278
  %2264 = vmatprep.subr.bf16.mxu0 0
  %2265 = vmatpush1.bf16.msra.mxu0 0
  %2266 = vmatprep.subr.bf16.mxu0 0
  %2267 = vmatpush1.bf16.msra.mxu0 0
  %2268 = vmatprep.subr.bf16.mxu0 0
  %2269 = vmatpush1.bf16.msra.mxu0 0
  %2270 = vmatprep.subr.bf16.mxu0 0
  %2271 = vmatpush1.bf16.msra.mxu0 0
  %2272 = vmatprep.subr.bf16.mxu0 0
  %2273 = vmatpush1.bf16.msra.mxu0 0
  %2274 = vmatprep.subr.bf16.mxu0 0
  %2275 = vmatpush1.bf16.msra.mxu0 0
  %2276 = vmatprep.subr.bf16.mxu0 0
  %2277 = vmatpush1.bf16.msra.mxu0 0
  %2278 = vmatprep.subr.bf16.mxu0 0
  %2279 = vmatpush1.bf16.msra.mxu0 0
  %2280 = vmatprep.mubr.bf16.mxu0 0
  %2281 = vmatmul.mubr.bf16.gmra.mrb[0].mxu0 %v2011
  %v2282 = vpop.f32.mrb[0].mxu0
  %v2283 = vadd.f32 0.0, %v2282
  %v2284 = vpop.f32.mrb[0].mxu0
  %v2285 = vadd.f32 0.0, %v2284
  %v2286 = vpop.f32.mrb[0].mxu0
  %v2287 = vpop.f32.mrb[0].mxu0
  %2288 = vdwg.mxu0
  %s2289 = scalar_lea.vmem %s0, 160
  %v2290 = vld [vmem:[%s2289] sm:$0xff]
  %v2291 = vld [vmem:[%s2289 + $0x8] sm:$0xff]
  %v2292 = vld [vmem:[%s2289 + $0x10] sm:$0xff]
  %v2293 = vld [vmem:[%s2289 + $0x18] sm:$0xff]
  %v2294 = vadd.f32 %v2290, %v2242
  %v2295 = vadd.f32 %v2291, %v2244
  %v2296 = vadd.f32 %v2292, %v2283
  %v2297 = vadd.f32 %v2293, %v2285
  %v2298 = vxor.u32 %v2294, 2147483648
  %v2299 = vxor.u32 %v2295, 2147483648
  %v2300 = vxor.u32 %v2296, 2147483648
  %v2301 = vmul.f32 %v2298, 1.442695
  %v2302 = vpow.pop %v2301
  %v2303 = vmul.f32 %v2299, 1.442695
  %v2304 = vpow.pop %v2303
  %v2305 = vmul.f32 %v2300, 1.442695
  %v2306 = vpow.pop %v2305
  %v2307 = vadd.f32 %v2302, 1.0
  %v2308 = vadd.f32 %v2304, 1.0
  %v2309 = vadd.f32 %v2306, 1.0
  %v2310 = vrcp.pop %v2307
  %v2311 = vmul.f32 1.0, %v2310
  %v2312 = vrcp.pop %v2308
  %v2313 = vmul.f32 1.0, %v2312
  %v2314 = vrcp.pop %v2309
  %v2315 = vmul.f32 1.0, %v2314
  %v2316 = vtanh.pop %v2297
  %v2317 = vmul.f32 %v2313, %v2008
  %v2318 = vmul.f32 %v2311, %v2316
  %v2319 = vadd.f32 %v2317, %v2318
  %v2320 = vtanh.pop %v2319
  %v2321 = vmul.f32 %v2315, %v2320
  %v2322 = vpack.c.bf16 %v2321, %v2321
  %2323 = vmatprep.subr.bf16.mxu0 %v525
  %2324 = vmatpush1.bf16.msra.mxu0 %v524
  %2325 = vmatprep.subr.bf16.mxu0 %v529
  %2326 = vmatpush1.bf16.msra.mxu0 %v528
  %2327 = vmatprep.subr.bf16.mxu0 %v533
  %2328 = vmatpush1.bf16.msra.mxu0 %v532
  %2329 = vmatprep.subr.bf16.mxu0 %v537
  %2330 = vmatpush1.bf16.msra.mxu0 %v536
  %2331 = vmatprep.subr.bf16.mxu0 %v541
  %2332 = vmatpush1.bf16.msra.mxu0 %v540
  %2333 = vmatprep.subr.bf16.mxu0 %v545
  %2334 = vmatpush1.bf16.msra.mxu0 %v544
  %2335 = vmatprep.subr.bf16.mxu0 %v549
  %2336 = vmatpush1.bf16.msra.mxu0 %v548
  %2337 = vmatprep.subr.bf16.mxu0 %v553
  %2338 = vmatpush1.bf16.msra.mxu0 %v552
  %2339 = vmatprep.subr.bf16.mxu0 0
  %2340 = vmatpush1.bf16.msra.mxu0 0
  %2341 = vmatprep.subr.bf16.mxu0 0
  %2342 = vmatpush1.bf16.msra.mxu0 0
  %2343 = vmatprep.subr.bf16.mxu0 0
  %2344 = vmatpush1.bf16.msra.mxu0 0
  %2345 = vmatprep.subr.bf16.mxu0 0
  %2346 = vmatpush1.bf16.msra.mxu0 0
  %2347 = vmatprep.subr.bf16.mxu0 0
  %2348 = vmatpush1.bf16.msra.mxu0 0
  %2349 = vmatprep.subr.bf16.mxu0 0
  %2350 = vmatpush1.bf16.msra.mxu0 0
  %2351 = vmatprep.subr.bf16.mxu0 0
  %2352 = vmatpush1.bf16.msra.mxu0 0
  %2353 = vmatprep.subr.bf16.mxu0 0
  %2354 = vmatpush1.bf16.msra.mxu0 0
  %2355 = vmatprep.mubr.bf16.mxu0 0
  %2356 = vmatmul.mubr.bf16.gmra.mrb[0].mxu0 %v2322
  %v2357 = vpop.f32.mrb[0].mxu0
  %v2358 = vadd.f32 0.0, %v2357
  %v2359 = vpop.f32.mrb[0].mxu0
  %v2360 = vadd.f32 0.0, %v2359
  %v2361 = vpop.f32.mrb[0].mxu0
  %v2362 = vpop.f32.mrb[0].mxu0
  %2363 = vdwg.mxu0
  %2364 = vmatprep.subr.bf16.mxu0 %v527
  %2365 = vmatpush1.bf16.msra.mxu0 %v526
  %2366 = vmatprep.subr.bf16.mxu0 %v531
  %2367 = vmatpush1.bf16.msra.mxu0 %v530
  %2368 = vmatprep.subr.bf16.mxu0 %v535
  %2369 = vmatpush1.bf16.msra.mxu0 %v534
  %2370 = vmatprep.subr.bf16.mxu0 %v539
  %2371 = vmatpush1.bf16.msra.mxu0 %v538
  %2372 = vmatprep.subr.bf16.mxu0 %v543
  %2373 = vmatpush1.bf16.msra.mxu0 %v542
  %2374 = vmatprep.subr.bf16.mxu0 %v547
  %2375 = vmatpush1.bf16.msra.mxu0 %v546
  %2376 = vmatprep.subr.bf16.mxu0 %v551
  %2377 = vmatpush1.bf16.msra.mxu0 %v550
  %2378 = vmatprep.subr.bf16.mxu0 %v555
  %2379 = vmatpush1.bf16.msra.mxu0 %v554
  %2380 = vmatprep.subr.bf16.mxu0 0
  %2381 = vmatpush1.bf16.msra.mxu0 0
  %2382 = vmatprep.subr.bf16.mxu0 0
  %2383 = vmatpush1.bf16.msra.mxu0 0
  %2384 = vmatprep.subr.bf16.mxu0 0
  %2385 = vmatpush1.bf16.msra.mxu0 0
  %2386 = vmatprep.subr.bf16.mxu0 0
  %2387 = vmatpush1.bf16.msra.mxu0 0
  %2388 = vmatprep.subr.bf16.mxu0 0
  %2389 = vmatpush1.bf16.msra.mxu0 0
  %2390 = vmatprep.subr.bf16.mxu0 0
  %2391 = vmatpush1.bf16.msra.mxu0 0
  %2392 = vmatprep.subr.bf16.mxu0 0
  %2393 = vmatpush1.bf16.msra.mxu0 0
  %2394 = vmatprep.subr.bf16.mxu0 0
  %2395 = vmatpush1.bf16.msra.mxu0 0
  %2396 = vmatprep.mubr.bf16.mxu0 0
  %2397 = vmatmul.mubr.bf16.gmra.mrb[0].mxu0 %v2322
  %v2398 = vpop.f32.mrb[0].mxu0
  %v2399 = vadd.f32 0.0, %v2398
  %v2400 = vpop.f32.mrb[0].mxu0
  %v2401 = vadd.f32 0.0, %v2400
  %v2402 = vpop.f32.mrb[0].mxu0
  %v2403 = vpop.f32.mrb[0].mxu0
  %2404 = vdwg.mxu0
  %2405 = vmatprep.subr.bf16.mxu0 %v767
  %2406 = vmatpush1.bf16.msra.mxu0 %v766
  %2407 = vmatprep.subr.bf16.mxu0 %v771
  %2408 = vmatpush1.bf16.msra.mxu0 %v770
  %2409 = vmatprep.subr.bf16.mxu0 %v775
  %2410 = vmatpush1.bf16.msra.mxu0 %v774
  %2411 = vmatprep.subr.bf16.mxu0 %v779
  %2412 = vmatpush1.bf16.msra.mxu0 %v778
  %2413 = vmatprep.subr.bf16.mxu0 %v783
  %2414 = vmatpush1.bf16.msra.mxu0 %v782
  %2415 = vmatprep.subr.bf16.mxu0 %v787
  %2416 = vmatpush1.bf16.msra.mxu0 %v786
  %2417 = vmatprep.subr.bf16.mxu0 %v791
  %2418 = vmatpush1.bf16.msra.mxu0 %v790
  %2419 = vmatprep.subr.bf16.mxu0 %v795
  %2420 = vmatpush1.bf16.msra.mxu0 %v794
  %2421 = vmatprep.subr.bf16.mxu0 0
  %2422 = vmatpush1.bf16.msra.mxu0 0
  %2423 = vmatprep.subr.bf16.mxu0 0
  %2424 = vmatpush1.bf16.msra.mxu0 0
  %2425 = vmatprep.subr.bf16.mxu0 0
  %2426 = vmatpush1.bf16.msra.mxu0 0
  %2427 = vmatprep.subr.bf16.mxu0 0
  %2428 = vmatpush1.bf16.msra.mxu0 0
  %2429 = vmatprep.subr.bf16.mxu0 0
  %2430 = vmatpush1.bf16.msra.mxu0 0
  %2431 = vmatprep.subr.bf16.mxu0 0
  %2432 = vmatpush1.bf16.msra.mxu0 0
  %2433 = vmatprep.subr.bf16.mxu0 0
  %2434 = vmatpush1.bf16.msra.mxu0 0
  %2435 = vmatprep.subr.bf16.mxu0 0
  %2436 = vmatpush1.bf16.msra.mxu0 0
  %2437 = vmatprep.mubr.bf16.mxu0 0
  %2438 = vmatmul.mubr.bf16.gmra.mrb[0].mxu0 %v2204
  %v2439 = vpop.f32.mrb[0].mxu0
  %v2440 = vadd.f32 %v2358, %v2439
  %v2441 = vpop.f32.mrb[0].mxu0
  %v2442 = vadd.f32 %v2360, %v2441
  %v2443 = vpop.f32.mrb[0].mxu0
  %v2444 = vpop.f32.mrb[0].mxu0
  %2445 = vdwg.mxu0
  %2446 = vmatprep.subr.bf16.mxu0 %v769
  %2447 = vmatpush1.bf16.msra.mxu0 %v768
  %2448 = vmatprep.subr.bf16.mxu0 %v773
  %2449 = vmatpush1.bf16.msra.mxu0 %v772
  %2450 = vmatprep.subr.bf16.mxu0 %v777
  %2451 = vmatpush1.bf16.msra.mxu0 %v776
  %2452 = vmatprep.subr.bf16.mxu0 %v781
  %2453 = vmatpush1.bf16.msra.mxu0 %v780
  %2454 = vmatprep.subr.bf16.mxu0 %v785
  %2455 = vmatpush1.bf16.msra.mxu0 %v784
  %2456 = vmatprep.subr.bf16.mxu0 %v789
  %2457 = vmatpush1.bf16.msra.mxu0 %v788
  %2458 = vmatprep.subr.bf16.mxu0 %v793
  %2459 = vmatpush1.bf16.msra.mxu0 %v792
  %2460 = vmatprep.subr.bf16.mxu0 %v797
  %2461 = vmatpush1.bf16.msra.mxu0 %v796
  %2462 = vmatprep.subr.bf16.mxu0 0
  %2463 = vmatpush1.bf16.msra.mxu0 0
  %2464 = vmatprep.subr.bf16.mxu0 0
  %2465 = vmatpush1.bf16.msra.mxu0 0
  %2466 = vmatprep.subr.bf16.mxu0 0
  %2467 = vmatpush1.bf16.msra.mxu0 0
  %2468 = vmatprep.subr.bf16.mxu0 0
  %2469 = vmatpush1.bf16.msra.mxu0 0
  %2470 = vmatprep.subr.bf16.mxu0 0
  %2471 = vmatpush1.bf16.msra.mxu0 0
  %2472 = vmatprep.subr.bf16.mxu0 0
  %2473 = vmatpush1.bf16.msra.mxu0 0
  %2474 = vmatprep.subr.bf16.mxu0 0
  %2475 = vmatpush1.bf16.msra.mxu0 0
  %2476 = vmatprep.subr.bf16.mxu0 0
  %2477 = vmatpush1.bf16.msra.mxu0 0
  %2478 = vmatprep.mubr.bf16.mxu0 0
  %2479 = vmatmul.mubr.bf16.gmra.mrb[0].mxu0 %v2204
  %v2480 = vpop.f32.mrb[0].mxu0
  %v2481 = vadd.f32 %v2399, %v2480
  %v2482 = vpop.f32.mrb[0].mxu0
  %v2483 = vadd.f32 %v2401, %v2482
  %v2484 = vpop.f32.mrb[0].mxu0
  %v2485 = vpop.f32.mrb[0].mxu0
  %2486 = vdwg.mxu0
  %v2487 = vadd.f32 %v2440, %v916
  %v2488 = vadd.f32 %v2442, %v920
  %v2489 = vadd.f32 %v2481, %v924
  %v2490 = vadd.f32 %v2483, %v928
  %v2491 = vxor.u32 %v2487, 2147483648
  %v2492 = vxor.u32 %v2488, 2147483648
  %v2493 = vxor.u32 %v2489, 2147483648
  %v2494 = vmul.f32 %v2491, 1.442695
  %v2495 = vpow.pop %v2494
  %v2496 = vmul.f32 %v2492, 1.442695
  %v2497 = vpow.pop %v2496
  %v2498 = vmul.f32 %v2493, 1.442695
  %v2499 = vpow.pop %v2498
  %v2500 = vadd.f32 %v2495, 1.0
  %v2501 = vadd.f32 %v2497, 1.0
  %v2502 = vadd.f32 %v2499, 1.0
  %v2503 = vrcp.pop %v2500
  %v2504 = vmul.f32 1.0, %v2503
  %v2505 = vrcp.pop %v2501
  %v2506 = vmul.f32 1.0, %v2505
  %v2507 = vrcp.pop %v2502
  %v2508 = vmul.f32 1.0, %v2507
  %v2509 = vtanh.pop %v2490
  %v2510 = vmul.f32 %v2506, %v2201
  %v2511 = vmul.f32 %v2504, %v2509
  %v2512 = vadd.f32 %v2510, %v2511
  %v2513 = vtanh.pop %v2512
  %v2514 = vmul.f32 %v2508, %v2513
  %v2515 = vpack.c.bf16 %v2514, %v2514
  %s2516 = scalar_lea.vmem %s9, 20
  %2517 = vst [vmem:[%s2516] sm:$0xf] %v2515
  %2518 = vmatprep.subr.bf16.mxu0 %v249
  %2519 = vmatpush1.bf16.msra.mxu0 %v248
  %2520 = vmatprep.subr.bf16.mxu0 %v253
  %2521 = vmatpush1.bf16.msra.mxu0 %v252
  %2522 = vmatprep.subr.bf16.mxu0 %v257
  %2523 = vmatpush1.bf16.msra.mxu0 %v256
  %2524 = vmatprep.subr.bf16.mxu0 %v261
  %2525 = vmatpush1.bf16.msra.mxu0 %v260
  %2526 = vmatprep.subr.bf16.mxu0 %v265
  %2527 = vmatpush1.bf16.msra.mxu0 %v264
  %2528 = vmatprep.subr.bf16.mxu0 %v269
  %2529 = vmatpush1.bf16.msra.mxu0 %v268
  %2530 = vmatprep.subr.bf16.mxu0 %v273
  %2531 = vmatpush1.bf16.msra.mxu0 %v272
  %2532 = vmatprep.subr.bf16.mxu0 %v277
  %2533 = vmatpush1.bf16.msra.mxu0 %v276
  %2534 = vmatprep.subr.bf16.mxu0 0
  %2535 = vmatpush1.bf16.msra.mxu0 0
  %2536 = vmatprep.subr.bf16.mxu0 0
  %2537 = vmatpush1.bf16.msra.mxu0 0
  %2538 = vmatprep.subr.bf16.mxu0 0
  %2539 = vmatpush1.bf16.msra.mxu0 0
  %2540 = vmatprep.subr.bf16.mxu0 0
  %2541 = vmatpush1.bf16.msra.mxu0 0
  %2542 = vmatprep.subr.bf16.mxu0 0
  %2543 = vmatpush1.bf16.msra.mxu0 0
  %2544 = vmatprep.subr.bf16.mxu0 0
  %2545 = vmatpush1.bf16.msra.mxu0 0
  %2546 = vmatprep.subr.bf16.mxu0 0
  %2547 = vmatpush1.bf16.msra.mxu0 0
  %2548 = vmatprep.subr.bf16.mxu0 0
  %2549 = vmatpush1.bf16.msra.mxu0 0
  %2550 = vmatprep.mubr.bf16.mxu0 0
  %2551 = vmatmul.mubr.bf16.gmra.mrb[0].mxu0 %v2322
  %v2552 = vpop.f32.mrb[0].mxu0
  %v2553 = vadd.f32 0.0, %v2552
  %v2554 = vpop.f32.mrb[0].mxu0
  %v2555 = vadd.f32 0.0, %v2554
  %v2556 = vpop.f32.mrb[0].mxu0
  %v2557 = vpop.f32.mrb[0].mxu0
  %2558 = vdwg.mxu0
  %2559 = vmatprep.subr.bf16.mxu0 %v251
  %2560 = vmatpush1.bf16.msra.mxu0 %v250
  %2561 = vmatprep.subr.bf16.mxu0 %v255
  %2562 = vmatpush1.bf16.msra.mxu0 %v254
  %2563 = vmatprep.subr.bf16.mxu0 %v259
  %2564 = vmatpush1.bf16.msra.mxu0 %v258
  %2565 = vmatprep.subr.bf16.mxu0 %v263
  %2566 = vmatpush1.bf16.msra.mxu0 %v262
  %2567 = vmatprep.subr.bf16.mxu0 %v267
  %2568 = vmatpush1.bf16.msra.mxu0 %v266
  %2569 = vmatprep.subr.bf16.mxu0 %v271
  %2570 = vmatpush1.bf16.msra.mxu0 %v270
  %2571 = vmatprep.subr.bf16.mxu0 %v275
  %2572 = vmatpush1.bf16.msra.mxu0 %v274
  %2573 = vmatprep.subr.bf16.mxu0 %v279
  %2574 = vmatpush1.bf16.msra.mxu0 %v278
  %2575 = vmatprep.subr.bf16.mxu0 0
  %2576 = vmatpush1.bf16.msra.mxu0 0
  %2577 = vmatprep.subr.bf16.mxu0 0
  %2578 = vmatpush1.bf16.msra.mxu0 0
  %2579 = vmatprep.subr.bf16.mxu0 0
  %2580 = vmatpush1.bf16.msra.mxu0 0
  %2581 = vmatprep.subr.bf16.mxu0 0
  %2582 = vmatpush1.bf16.msra.mxu0 0
  %2583 = vmatprep.subr.bf16.mxu0 0
  %2584 = vmatpush1.bf16.msra.mxu0 0
  %2585 = vmatprep.subr.bf16.mxu0 0
  %2586 = vmatpush1.bf16.msra.mxu0 0
  %2587 = vmatprep.subr.bf16.mxu0 0
  %2588 = vmatpush1.bf16.msra.mxu0 0
  %2589 = vmatprep.subr.bf16.mxu0 0
  %2590 = vmatpush1.bf16.msra.mxu0 0
  %2591 = vmatprep.mubr.bf16.mxu0 0
  %2592 = vmatmul.mubr.bf16.gmra.mrb[0].mxu0 %v2322
  %v2593 = vpop.f32.mrb[0].mxu0
  %v2594 = vadd.f32 0.0, %v2593
  %v2595 = vpop.f32.mrb[0].mxu0
  %v2596 = vadd.f32 0.0, %v2595
  %v2597 = vpop.f32.mrb[0].mxu0
  %v2598 = vpop.f32.mrb[0].mxu0
  %2599 = vdwg.mxu0
  %s2600 = scalar_lea.vmem %s0, 192
  %v2601 = vld [vmem:[%s2600] sm:$0xff]
  %v2602 = vld [vmem:[%s2600 + $0x8] sm:$0xff]
  %v2603 = vld [vmem:[%s2600 + $0x10] sm:$0xff]
  %v2604 = vld [vmem:[%s2600 + $0x18] sm:$0xff]
  %v2605 = vadd.f32 %v2601, %v2553
  %v2606 = vadd.f32 %v2602, %v2555
  %v2607 = vadd.f32 %v2603, %v2594
  %v2608 = vadd.f32 %v2604, %v2596
  %v2609 = vxor.u32 %v2605, 2147483648
  %v2610 = vxor.u32 %v2606, 2147483648
  %v2611 = vxor.u32 %v2607, 2147483648
  %v2612 = vmul.f32 %v2609, 1.442695
  %v2613 = vpow.pop %v2612
  %v2614 = vmul.f32 %v2610, 1.442695
  %v2615 = vpow.pop %v2614
  %v2616 = vmul.f32 %v2611, 1.442695
  %v2617 = vpow.pop %v2616
  %v2618 = vadd.f32 %v2613, 1.0
  %v2619 = vadd.f32 %v2615, 1.0
  %v2620 = vadd.f32 %v2617, 1.0
  %v2621 = vrcp.pop %v2618
  %v2622 = vmul.f32 1.0, %v2621
  %v2623 = vrcp.pop %v2619
  %v2624 = vmul.f32 1.0, %v2623
  %v2625 = vrcp.pop %v2620
  %v2626 = vmul.f32 1.0, %v2625
  %v2627 = vtanh.pop %v2608
  %v2628 = vmul.f32 %v2624, %v2319
  %v2629 = vmul.f32 %v2622, %v2627
  %v2630 = vadd.f32 %v2628, %v2629
  %v2631 = vtanh.pop %v2630
  %v2632 = vmul.f32 %v2626, %v2631
  %v2633 = vpack.c.bf16 %v2632, %v2632
  %2634 = vmatprep.subr.bf16.mxu0 %v525
  %2635 = vmatpush1.bf16.msra.mxu0 %v524
  %2636 = vmatprep.subr.bf16.mxu0 %v529
  %2637 = vmatpush1.bf16.msra.mxu0 %v528
  %2638 = vmatprep.subr.bf16.mxu0 %v533
  %2639 = vmatpush1.bf16.msra.mxu0 %v532
  %2640 = vmatprep.subr.bf16.mxu0 %v537
  %2641 = vmatpush1.bf16.msra.mxu0 %v536
  %2642 = vmatprep.subr.bf16.mxu0 %v541
  %2643 = vmatpush1.bf16.msra.mxu0 %v540
  %2644 = vmatprep.subr.bf16.mxu0 %v545
  %2645 = vmatpush1.bf16.msra.mxu0 %v544
  %2646 = vmatprep.subr.bf16.mxu0 %v549
  %2647 = vmatpush1.bf16.msra.mxu0 %v548
  %2648 = vmatprep.subr.bf16.mxu0 %v553
  %2649 = vmatpush1.bf16.msra.mxu0 %v552
  %2650 = vmatprep.subr.bf16.mxu0 0
  %2651 = vmatpush1.bf16.msra.mxu0 0
  %2652 = vmatprep.subr.bf16.mxu0 0
  %2653 = vmatpush1.bf16.msra.mxu0 0
  %2654 = vmatprep.subr.bf16.mxu0 0
  %2655 = vmatpush1.bf16.msra.mxu0 0
  %2656 = vmatprep.subr.bf16.mxu0 0
  %2657 = vmatpush1.bf16.msra.mxu0 0
  %2658 = vmatprep.subr.bf16.mxu0 0
  %2659 = vmatpush1.bf16.msra.mxu0 0
  %2660 = vmatprep.subr.bf16.mxu0 0
  %2661 = vmatpush1.bf16.msra.mxu0 0
  %2662 = vmatprep.subr.bf16.mxu0 0
  %2663 = vmatpush1.bf16.msra.mxu0 0
  %2664 = vmatprep.subr.bf16.mxu0 0
  %2665 = vmatpush1.bf16.msra.mxu0 0
  %2666 = vmatprep.mubr.bf16.mxu0 0
  %2667 = vmatmul.mubr.bf16.gmra.mrb[0].mxu0 %v2633
  %v2668 = vpop.f32.mrb[0].mxu0
  %v2669 = vadd.f32 0.0, %v2668
  %v2670 = vpop.f32.mrb[0].mxu0
  %v2671 = vadd.f32 0.0, %v2670
  %v2672 = vpop.f32.mrb[0].mxu0
  %v2673 = vpop.f32.mrb[0].mxu0
  %2674 = vdwg.mxu0
  %2675 = vmatprep.subr.bf16.mxu0 %v527
  %2676 = vmatpush1.bf16.msra.mxu0 %v526
  %2677 = vmatprep.subr.bf16.mxu0 %v531
  %2678 = vmatpush1.bf16.msra.mxu0 %v530
  %2679 = vmatprep.subr.bf16.mxu0 %v535
  %2680 = vmatpush1.bf16.msra.mxu0 %v534
  %2681 = vmatprep.subr.bf16.mxu0 %v539
  %2682 = vmatpush1.bf16.msra.mxu0 %v538
  %2683 = vmatprep.subr.bf16.mxu0 %v543
  %2684 = vmatpush1.bf16.msra.mxu0 %v542
  %2685 = vmatprep.subr.bf16.mxu0 %v547
  %2686 = vmatpush1.bf16.msra.mxu0 %v546
  %2687 = vmatprep.subr.bf16.mxu0 %v551
  %2688 = vmatpush1.bf16.msra.mxu0 %v550
  %2689 = vmatprep.subr.bf16.mxu0 %v555
  %2690 = vmatpush1.bf16.msra.mxu0 %v554
  %2691 = vmatprep.subr.bf16.mxu0 0
  %2692 = vmatpush1.bf16.msra.mxu0 0
  %2693 = vmatprep.subr.bf16.mxu0 0
  %2694 = vmatpush1.bf16.msra.mxu0 0
  %2695 = vmatprep.subr.bf16.mxu0 0
  %2696 = vmatpush1.bf16.msra.mxu0 0
  %2697 = vmatprep.subr.bf16.mxu0 0
  %2698 = vmatpush1.bf16.msra.mxu0 0
  %2699 = vmatprep.subr.bf16.mxu0 0
  %2700 = vmatpush1.bf16.msra.mxu0 0
  %2701 = vmatprep.subr.bf16.mxu0 0
  %2702 = vmatpush1.bf16.msra.mxu0 0
  %2703 = vmatprep.subr.bf16.mxu0 0
  %2704 = vmatpush1.bf16.msra.mxu0 0
  %2705 = vmatprep.subr.bf16.mxu0 0
  %2706 = vmatpush1.bf16.msra.mxu0 0
  %2707 = vmatprep.mubr.bf16.mxu0 0
  %2708 = vmatmul.mubr.bf16.gmra.mrb[0].mxu0 %v2633
  %v2709 = vpop.f32.mrb[0].mxu0
  %v2710 = vadd.f32 0.0, %v2709
  %v2711 = vpop.f32.mrb[0].mxu0
  %v2712 = vadd.f32 0.0, %v2711
  %v2713 = vpop.f32.mrb[0].mxu0
  %v2714 = vpop.f32.mrb[0].mxu0
  %2715 = vdwg.mxu0
  %2716 = vmatprep.subr.bf16.mxu0 %v767
  %2717 = vmatpush1.bf16.msra.mxu0 %v766
  %2718 = vmatprep.subr.bf16.mxu0 %v771
  %2719 = vmatpush1.bf16.msra.mxu0 %v770
  %2720 = vmatprep.subr.bf16.mxu0 %v775
  %2721 = vmatpush1.bf16.msra.mxu0 %v774
  %2722 = vmatprep.subr.bf16.mxu0 %v779
  %2723 = vmatpush1.bf16.msra.mxu0 %v778
  %2724 = vmatprep.subr.bf16.mxu0 %v783
  %2725 = vmatpush1.bf16.msra.mxu0 %v782
  %2726 = vmatprep.subr.bf16.mxu0 %v787
  %2727 = vmatpush1.bf16.msra.mxu0 %v786
  %2728 = vmatprep.subr.bf16.mxu0 %v791
  %2729 = vmatpush1.bf16.msra.mxu0 %v790
  %2730 = vmatprep.subr.bf16.mxu0 %v795
  %2731 = vmatpush1.bf16.msra.mxu0 %v794
  %2732 = vmatprep.subr.bf16.mxu0 0
  %2733 = vmatpush1.bf16.msra.mxu0 0
  %2734 = vmatprep.subr.bf16.mxu0 0
  %2735 = vmatpush1.bf16.msra.mxu0 0
  %2736 = vmatprep.subr.bf16.mxu0 0
  %2737 = vmatpush1.bf16.msra.mxu0 0
  %2738 = vmatprep.subr.bf16.mxu0 0
  %2739 = vmatpush1.bf16.msra.mxu0 0
  %2740 = vmatprep.subr.bf16.mxu0 0
  %2741 = vmatpush1.bf16.msra.mxu0 0
  %2742 = vmatprep.subr.bf16.mxu0 0
  %2743 = vmatpush1.bf16.msra.mxu0 0
  %2744 = vmatprep.subr.bf16.mxu0 0
  %2745 = vmatpush1.bf16.msra.mxu0 0
  %2746 = vmatprep.subr.bf16.mxu0 0
  %2747 = vmatpush1.bf16.msra.mxu0 0
  %2748 = vmatprep.mubr.bf16.mxu0 0
  %2749 = vmatmul.mubr.bf16.gmra.mrb[0].mxu0 %v2515
  %v2750 = vpop.f32.mrb[0].mxu0
  %v2751 = vadd.f32 %v2669, %v2750
  %v2752 = vpop.f32.mrb[0].mxu0
  %v2753 = vadd.f32 %v2671, %v2752
  %v2754 = vpop.f32.mrb[0].mxu0
  %v2755 = vpop.f32.mrb[0].mxu0
  %2756 = vdwg.mxu0
  %2757 = vmatprep.subr.bf16.mxu0 %v769
  %2758 = vmatpush1.bf16.msra.mxu0 %v768
  %2759 = vmatprep.subr.bf16.mxu0 %v773
  %2760 = vmatpush1.bf16.msra.mxu0 %v772
  %2761 = vmatprep.subr.bf16.mxu0 %v777
  %2762 = vmatpush1.bf16.msra.mxu0 %v776
  %2763 = vmatprep.subr.bf16.mxu0 %v781
  %2764 = vmatpush1.bf16.msra.mxu0 %v780
  %2765 = vmatprep.subr.bf16.mxu0 %v785
  %2766 = vmatpush1.bf16.msra.mxu0 %v784
  %2767 = vmatprep.subr.bf16.mxu0 %v789
  %2768 = vmatpush1.bf16.msra.mxu0 %v788
  %2769 = vmatprep.subr.bf16.mxu0 %v793
  %2770 = vmatpush1.bf16.msra.mxu0 %v792
  %2771 = vmatprep.subr.bf16.mxu0 %v797
  %2772 = vmatpush1.bf16.msra.mxu0 %v796
  %2773 = vmatprep.subr.bf16.mxu0 0
  %2774 = vmatpush1.bf16.msra.mxu0 0
  %2775 = vmatprep.subr.bf16.mxu0 0
  %2776 = vmatpush1.bf16.msra.mxu0 0
  %2777 = vmatprep.subr.bf16.mxu0 0
  %2778 = vmatpush1.bf16.msra.mxu0 0
  %2779 = vmatprep.subr.bf16.mxu0 0
  %2780 = vmatpush1.bf16.msra.mxu0 0
  %2781 = vmatprep.subr.bf16.mxu0 0
  %2782 = vmatpush1.bf16.msra.mxu0 0
  %2783 = vmatprep.subr.bf16.mxu0 0
  %2784 = vmatpush1.bf16.msra.mxu0 0
  %2785 = vmatprep.subr.bf16.mxu0 0
  %2786 = vmatpush1.bf16.msra.mxu0 0
  %2787 = vmatprep.subr.bf16.mxu0 0
  %2788 = vmatpush1.bf16.msra.mxu0 0
  %2789 = vmatprep.mubr.bf16.mxu0 0
  %2790 = vmatmul.mubr.bf16.gmra.mrb[0].mxu0 %v2515
  %v2791 = vpop.f32.mrb[0].mxu0
  %v2792 = vadd.f32 %v2710, %v2791
  %v2793 = vpop.f32.mrb[0].mxu0
  %v2794 = vadd.f32 %v2712, %v2793
  %v2795 = vpop.f32.mrb[0].mxu0
  %v2796 = vpop.f32.mrb[0].mxu0
  %2797 = vdwg.mxu0
  %v2798 = vadd.f32 %v2751, %v916
  %v2799 = vadd.f32 %v2753, %v920
  %v2800 = vadd.f32 %v2792, %v924
  %v2801 = vadd.f32 %v2794, %v928
  %v2802 = vxor.u32 %v2798, 2147483648
  %v2803 = vxor.u32 %v2799, 2147483648
  %v2804 = vxor.u32 %v2800, 2147483648
  %v2805 = vmul.f32 %v2802, 1.442695
  %v2806 = vpow.pop %v2805
  %v2807 = vmul.f32 %v2803, 1.442695
  %v2808 = vpow.pop %v2807
  %v2809 = vmul.f32 %v2804, 1.442695
  %v2810 = vpow.pop %v2809
  %v2811 = vadd.f32 %v2806, 1.0
  %v2812 = vadd.f32 %v2808, 1.0
  %v2813 = vadd.f32 %v2810, 1.0
  %v2814 = vrcp.pop %v2811
  %v2815 = vmul.f32 1.0, %v2814
  %v2816 = vrcp.pop %v2812
  %v2817 = vmul.f32 1.0, %v2816
  %v2818 = vrcp.pop %v2813
  %v2819 = vmul.f32 1.0, %v2818
  %v2820 = vtanh.pop %v2801
  %v2821 = vmul.f32 %v2817, %v2512
  %v2822 = vmul.f32 %v2815, %v2820
  %v2823 = vadd.f32 %v2821, %v2822
  %v2824 = vtanh.pop %v2823
  %v2825 = vmul.f32 %v2819, %v2824
  %v2826 = vpack.c.bf16 %v2825, %v2825
  %s2827 = scalar_lea.vmem %s9, 24
  %2828 = vst [vmem:[%s2827] sm:$0xf] %v2826
  %2829 = vmatprep.subr.bf16.mxu0 %v249
  %2830 = vmatpush1.bf16.msra.mxu0 %v248
  %2831 = vmatprep.subr.bf16.mxu0 %v253
  %2832 = vmatpush1.bf16.msra.mxu0 %v252
  %2833 = vmatprep.subr.bf16.mxu0 %v257
  %2834 = vmatpush1.bf16.msra.mxu0 %v256
  %2835 = vmatprep.subr.bf16.mxu0 %v261
  %2836 = vmatpush1.bf16.msra.mxu0 %v260
  %2837 = vmatprep.subr.bf16.mxu0 %v265
  %2838 = vmatpush1.bf16.msra.mxu0 %v264
  %2839 = vmatprep.subr.bf16.mxu0 %v269
  %2840 = vmatpush1.bf16.msra.mxu0 %v268
  %2841 = vmatprep.subr.bf16.mxu0 %v273
  %2842 = vmatpush1.bf16.msra.mxu0 %v272
  %2843 = vmatprep.subr.bf16.mxu0 %v277
  %2844 = vmatpush1.bf16.msra.mxu0 %v276
  %2845 = vmatprep.subr.bf16.mxu0 0
  %2846 = vmatpush1.bf16.msra.mxu0 0
  %2847 = vmatprep.subr.bf16.mxu0 0
  %2848 = vmatpush1.bf16.msra.mxu0 0
  %2849 = vmatprep.subr.bf16.mxu0 0
  %2850 = vmatpush1.bf16.msra.mxu0 0
  %2851 = vmatprep.subr.bf16.mxu0 0
  %2852 = vmatpush1.bf16.msra.mxu0 0
  %2853 = vmatprep.subr.bf16.mxu0 0
  %2854 = vmatpush1.bf16.msra.mxu0 0
  %2855 = vmatprep.subr.bf16.mxu0 0
  %2856 = vmatpush1.bf16.msra.mxu0 0
  %2857 = vmatprep.subr.bf16.mxu0 0
  %2858 = vmatpush1.bf16.msra.mxu0 0
  %2859 = vmatprep.subr.bf16.mxu0 0
  %2860 = vmatpush1.bf16.msra.mxu0 0
  %2861 = vmatprep.mubr.bf16.mxu0 0
  %2862 = vmatmul.mubr.bf16.gmra.mrb[0].mxu0 %v2633
  %v2863 = vpop.f32.mrb[0].mxu0
  %v2864 = vadd.f32 0.0, %v2863
  %v2865 = vpop.f32.mrb[0].mxu0
  %v2866 = vadd.f32 0.0, %v2865
  %v2867 = vpop.f32.mrb[0].mxu0
  %v2868 = vpop.f32.mrb[0].mxu0
  %2869 = vdwg.mxu0
  %2870 = vmatprep.subr.bf16.mxu0 %v251
  %2871 = vmatpush1.bf16.msra.mxu0 %v250
  %2872 = vmatprep.subr.bf16.mxu0 %v255
  %2873 = vmatpush1.bf16.msra.mxu0 %v254
  %2874 = vmatprep.subr.bf16.mxu0 %v259
  %2875 = vmatpush1.bf16.msra.mxu0 %v258
  %2876 = vmatprep.subr.bf16.mxu0 %v263
  %2877 = vmatpush1.bf16.msra.mxu0 %v262
  %2878 = vmatprep.subr.bf16.mxu0 %v267
  %2879 = vmatpush1.bf16.msra.mxu0 %v266
  %2880 = vmatprep.subr.bf16.mxu0 %v271
  %2881 = vmatpush1.bf16.msra.mxu0 %v270
  %2882 = vmatprep.subr.bf16.mxu0 %v275
  %2883 = vmatpush1.bf16.msra.mxu0 %v274
  %2884 = vmatprep.subr.bf16.mxu0 %v279
  %2885 = vmatpush1.bf16.msra.mxu0 %v278
  %2886 = vmatprep.subr.bf16.mxu0 0
  %2887 = vmatpush1.bf16.msra.mxu0 0
  %2888 = vmatprep.subr.bf16.mxu0 0
  %2889 = vmatpush1.bf16.msra.mxu0 0
  %2890 = vmatprep.subr.bf16.mxu0 0
  %2891 = vmatpush1.bf16.msra.mxu0 0
  %2892 = vmatprep.subr.bf16.mxu0 0
  %2893 = vmatpush1.bf16.msra.mxu0 0
  %2894 = vmatprep.subr.bf16.mxu0 0
  %2895 = vmatpush1.bf16.msra.mxu0 0
  %2896 = vmatprep.subr.bf16.mxu0 0
  %2897 = vmatpush1.bf16.msra.mxu0 0
  %2898 = vmatprep.subr.bf16.mxu0 0
  %2899 = vmatpush1.bf16.msra.mxu0 0
  %2900 = vmatprep.subr.bf16.mxu0 0
  %2901 = vmatpush1.bf16.msra.mxu0 0
  %2902 = vmatprep.mubr.bf16.mxu0 0
  %2903 = vmatmul.mubr.bf16.gmra.mrb[0].mxu0 %v2633
  %v2904 = vpop.f32.mrb[0].mxu0
  %v2905 = vadd.f32 0.0, %v2904
  %v2906 = vpop.f32.mrb[0].mxu0
  %v2907 = vadd.f32 0.0, %v2906
  %v2908 = vpop.f32.mrb[0].mxu0
  %v2909 = vpop.f32.mrb[0].mxu0
  %2910 = vdwg.mxu0
  %s2911 = scalar_lea.vmem %s0, 224
  %v2912 = vld [vmem:[%s2911] sm:$0xff]
  %v2913 = vld [vmem:[%s2911 + $0x8] sm:$0xff]
  %v2914 = vld [vmem:[%s2911 + $0x10] sm:$0xff]
  %v2915 = vld [vmem:[%s2911 + $0x18] sm:$0xff]
  %v2916 = vadd.f32 %v2912, %v2864
  %v2917 = vadd.f32 %v2913, %v2866
  %v2918 = vadd.f32 %v2914, %v2905
  %v2919 = vadd.f32 %v2915, %v2907
  %v2920 = vxor.u32 %v2916, 2147483648
  %v2921 = vxor.u32 %v2917, 2147483648
  %v2922 = vxor.u32 %v2918, 2147483648
  %v2923 = vmul.f32 %v2920, 1.442695
  %v2924 = vpow.pop %v2923
  %v2925 = vmul.f32 %v2921, 1.442695
  %v2926 = vpow.pop %v2925
  %v2927 = vmul.f32 %v2922, 1.442695
  %v2928 = vpow.pop %v2927
  %v2929 = vadd.f32 %v2924, 1.0
  %v2930 = vadd.f32 %v2926, 1.0
  %v2931 = vadd.f32 %v2928, 1.0
  %v2932 = vrcp.pop %v2929
  %v2933 = vmul.f32 1.0, %v2932
  %v2934 = vrcp.pop %v2930
  %v2935 = vmul.f32 1.0, %v2934
  %v2936 = vrcp.pop %v2931
  %v2937 = vmul.f32 1.0, %v2936
  %v2938 = vtanh.pop %v2919
  %v2939 = vmul.f32 %v2935, %v2630
  %v2940 = vmul.f32 %v2933, %v2938
  %v2941 = vadd.f32 %v2939, %v2940
  %v2942 = vtanh.pop %v2941
  %v2943 = vmul.f32 %v2937, %v2942
  %v2944 = vpack.c.bf16 %v2943, %v2943
  %2945 = vmatprep.subr.bf16.mxu0 %v525
  %2946 = vmatpush1.bf16.msra.mxu0 %v524
  %2947 = vmatprep.subr.bf16.mxu0 %v529
  %2948 = vmatpush1.bf16.msra.mxu0 %v528
  %2949 = vmatprep.subr.bf16.mxu0 %v533
  %2950 = vmatpush1.bf16.msra.mxu0 %v532
  %2951 = vmatprep.subr.bf16.mxu0 %v537
  %2952 = vmatpush1.bf16.msra.mxu0 %v536
  %2953 = vmatprep.subr.bf16.mxu0 %v541
  %2954 = vmatpush1.bf16.msra.mxu0 %v540
  %2955 = vmatprep.subr.bf16.mxu0 %v545
  %2956 = vmatpush1.bf16.msra.mxu0 %v544
  %2957 = vmatprep.subr.bf16.mxu0 %v549
  %2958 = vmatpush1.bf16.msra.mxu0 %v548
  %2959 = vmatprep.subr.bf16.mxu0 %v553
  %2960 = vmatpush1.bf16.msra.mxu0 %v552
  %2961 = vmatprep.subr.bf16.mxu0 0
  %2962 = vmatpush1.bf16.msra.mxu0 0
  %2963 = vmatprep.subr.bf16.mxu0 0
  %2964 = vmatpush1.bf16.msra.mxu0 0
  %2965 = vmatprep.subr.bf16.mxu0 0
  %2966 = vmatpush1.bf16.msra.mxu0 0
  %2967 = vmatprep.subr.bf16.mxu0 0
  %2968 = vmatpush1.bf16.msra.mxu0 0
  %2969 = vmatprep.subr.bf16.mxu0 0
  %2970 = vmatpush1.bf16.msra.mxu0 0
  %2971 = vmatprep.subr.bf16.mxu0 0
  %2972 = vmatpush1.bf16.msra.mxu0 0
  %2973 = vmatprep.subr.bf16.mxu0 0
  %2974 = vmatpush1.bf16.msra.mxu0 0
  %2975 = vmatprep.subr.bf16.mxu0 0
  %2976 = vmatpush1.bf16.msra.mxu0 0
  %2977 = vmatprep.mubr.bf16.mxu0 0
  %2978 = vmatmul.mubr.bf16.gmra.mrb[0].mxu0 %v2944
  %v2979 = vpop.f32.mrb[0].mxu0
  %v2980 = vadd.f32 0.0, %v2979
  %v2981 = vpop.f32.mrb[0].mxu0
  %v2982 = vadd.f32 0.0, %v2981
  %v2983 = vpop.f32.mrb[0].mxu0
  %v2984 = vpop.f32.mrb[0].mxu0
  %2985 = vdwg.mxu0
  %2986 = vmatprep.subr.bf16.mxu0 %v527
  %2987 = vmatpush1.bf16.msra.mxu0 %v526
  %2988 = vmatprep.subr.bf16.mxu0 %v531
  %2989 = vmatpush1.bf16.msra.mxu0 %v530
  %2990 = vmatprep.subr.bf16.mxu0 %v535
  %2991 = vmatpush1.bf16.msra.mxu0 %v534
  %2992 = vmatprep.subr.bf16.mxu0 %v539
  %2993 = vmatpush1.bf16.msra.mxu0 %v538
  %2994 = vmatprep.subr.bf16.mxu0 %v543
  %2995 = vmatpush1.bf16.msra.mxu0 %v542
  %2996 = vmatprep.subr.bf16.mxu0 %v547
  %2997 = vmatpush1.bf16.msra.mxu0 %v546
  %2998 = vmatprep.subr.bf16.mxu0 %v551
  %2999 = vmatpush1.bf16.msra.mxu0 %v550
  %3000 = vmatprep.subr.bf16.mxu0 %v555
  %3001 = vmatpush1.bf16.msra.mxu0 %v554
  %3002 = vmatprep.subr.bf16.mxu0 0
  %3003 = vmatpush1.bf16.msra.mxu0 0
  %3004 = vmatprep.subr.bf16.mxu0 0
  %3005 = vmatpush1.bf16.msra.mxu0 0
  %3006 = vmatprep.subr.bf16.mxu0 0
  %3007 = vmatpush1.bf16.msra.mxu0 0
  %3008 = vmatprep.subr.bf16.mxu0 0
  %3009 = vmatpush1.bf16.msra.mxu0 0
  %3010 = vmatprep.subr.bf16.mxu0 0
  %3011 = vmatpush1.bf16.msra.mxu0 0
  %3012 = vmatprep.subr.bf16.mxu0 0
  %3013 = vmatpush1.bf16.msra.mxu0 0
  %3014 = vmatprep.subr.bf16.mxu0 0
  %3015 = vmatpush1.bf16.msra.mxu0 0
  %3016 = vmatprep.subr.bf16.mxu0 0
  %3017 = vmatpush1.bf16.msra.mxu0 0
  %3018 = vmatprep.mubr.bf16.mxu0 0
  %3019 = vmatmul.mubr.bf16.gmra.mrb[0].mxu0 %v2944
  %v3020 = vpop.f32.mrb[0].mxu0
  %v3021 = vadd.f32 0.0, %v3020
  %v3022 = vpop.f32.mrb[0].mxu0
  %v3023 = vadd.f32 0.0, %v3022
  %v3024 = vpop.f32.mrb[0].mxu0
  %v3025 = vpop.f32.mrb[0].mxu0
  %3026 = vdwg.mxu0
  %3027 = vmatprep.subr.bf16.mxu0 %v767
  %3028 = vmatpush1.bf16.msra.mxu0 %v766
  %3029 = vmatprep.subr.bf16.mxu0 %v771
  %3030 = vmatpush1.bf16.msra.mxu0 %v770
  %3031 = vmatprep.subr.bf16.mxu0 %v775
  %3032 = vmatpush1.bf16.msra.mxu0 %v774
  %3033 = vmatprep.subr.bf16.mxu0 %v779
  %3034 = vmatpush1.bf16.msra.mxu0 %v778
  %3035 = vmatprep.subr.bf16.mxu0 %v783
  %3036 = vmatpush1.bf16.msra.mxu0 %v782
  %3037 = vmatprep.subr.bf16.mxu0 %v787
  %3038 = vmatpush1.bf16.msra.mxu0 %v786
  %3039 = vmatprep.subr.bf16.mxu0 %v791
  %3040 = vmatpush1.bf16.msra.mxu0 %v790
  %3041 = vmatprep.subr.bf16.mxu0 %v795
  %3042 = vmatpush1.bf16.msra.mxu0 %v794
  %3043 = vmatprep.subr.bf16.mxu0 0
  %3044 = vmatpush1.bf16.msra.mxu0 0
  %3045 = vmatprep.subr.bf16.mxu0 0
  %3046 = vmatpush1.bf16.msra.mxu0 0
  %3047 = vmatprep.subr.bf16.mxu0 0
  %3048 = vmatpush1.bf16.msra.mxu0 0
  %3049 = vmatprep.subr.bf16.mxu0 0
  %3050 = vmatpush1.bf16.msra.mxu0 0
  %3051 = vmatprep.subr.bf16.mxu0 0
  %3052 = vmatpush1.bf16.msra.mxu0 0
  %3053 = vmatprep.subr.bf16.mxu0 0
  %3054 = vmatpush1.bf16.msra.mxu0 0
  %3055 = vmatprep.subr.bf16.mxu0 0
  %3056 = vmatpush1.bf16.msra.mxu0 0
  %3057 = vmatprep.subr.bf16.mxu0 0
  %3058 = vmatpush1.bf16.msra.mxu0 0
  %3059 = vmatprep.mubr.bf16.mxu0 0
  %3060 = vmatmul.mubr.bf16.gmra.mrb[0].mxu0 %v2826
  %v3061 = vpop.f32.mrb[0].mxu0
  %v3062 = vadd.f32 %v2980, %v3061
  %v3063 = vpop.f32.mrb[0].mxu0
  %v3064 = vadd.f32 %v2982, %v3063
  %v3065 = vpop.f32.mrb[0].mxu0
  %v3066 = vpop.f32.mrb[0].mxu0
  %3067 = vdwg.mxu0
  %3068 = vmatprep.subr.bf16.mxu0 %v769
  %3069 = vmatpush1.bf16.msra.mxu0 %v768
  %3070 = vmatprep.subr.bf16.mxu0 %v773
  %3071 = vmatpush1.bf16.msra.mxu0 %v772
  %3072 = vmatprep.subr.bf16.mxu0 %v777
  %3073 = vmatpush1.bf16.msra.mxu0 %v776
  %3074 = vmatprep.subr.bf16.mxu0 %v781
  %3075 = vmatpush1.bf16.msra.mxu0 %v780
  %3076 = vmatprep.subr.bf16.mxu0 %v785
  %3077 = vmatpush1.bf16.msra.mxu0 %v784
  %3078 = vmatprep.subr.bf16.mxu0 %v789
  %3079 = vmatpush1.bf16.msra.mxu0 %v788
  %3080 = vmatprep.subr.bf16.mxu0 %v793
  %3081 = vmatpush1.bf16.msra.mxu0 %v792
  %3082 = vmatprep.subr.bf16.mxu0 %v797
  %3083 = vmatpush1.bf16.msra.mxu0 %v796
  %3084 = vmatprep.subr.bf16.mxu0 0
  %3085 = vmatpush1.bf16.msra.mxu0 0
  %3086 = vmatprep.subr.bf16.mxu0 0
  %3087 = vmatpush1.bf16.msra.mxu0 0
  %3088 = vmatprep.subr.bf16.mxu0 0
  %3089 = vmatpush1.bf16.msra.mxu0 0
  %3090 = vmatprep.subr.bf16.mxu0 0
  %3091 = vmatpush1.bf16.msra.mxu0 0
  %3092 = vmatprep.subr.bf16.mxu0 0
  %3093 = vmatpush1.bf16.msra.mxu0 0
  %3094 = vmatprep.subr.bf16.mxu0 0
  %3095 = vmatpush1.bf16.msra.mxu0 0
  %3096 = vmatprep.subr.bf16.mxu0 0
  %3097 = vmatpush1.bf16.msra.mxu0 0
  %3098 = vmatprep.subr.bf16.mxu0 0
  %3099 = vmatpush1.bf16.msra.mxu0 0
  %3100 = vmatprep.mubr.bf16.mxu0 0
  %3101 = vmatmul.mubr.bf16.gmra.mrb[0].mxu0 %v2826
  %v3102 = vpop.f32.mrb[0].mxu0
  %v3103 = vadd.f32 %v3021, %v3102
  %v3104 = vpop.f32.mrb[0].mxu0
  %v3105 = vadd.f32 %v3023, %v3104
  %v3106 = vpop.f32.mrb[0].mxu0
  %v3107 = vpop.f32.mrb[0].mxu0
  %3108 = vdwg.mxu0
  %v3109 = vadd.f32 %v3062, %v916
  %v3110 = vadd.f32 %v3064, %v920
  %v3111 = vadd.f32 %v3103, %v924
  %v3112 = vadd.f32 %v3105, %v928
  %v3113 = vxor.u32 %v3109, 2147483648
  %v3114 = vxor.u32 %v3110, 2147483648
  %v3115 = vxor.u32 %v3111, 2147483648
  %v3116 = vmul.f32 %v3113, 1.442695
  %v3117 = vpow.pop %v3116
  %v3118 = vmul.f32 %v3114, 1.442695
  %v3119 = vpow.pop %v3118
  %v3120 = vmul.f32 %v3115, 1.442695
  %v3121 = vpow.pop %v3120
  %v3122 = vadd.f32 %v3117, 1.0
  %v3123 = vadd.f32 %v3119, 1.0
  %v3124 = vadd.f32 %v3121, 1.0
  %v3125 = vrcp.pop %v3122
  %v3126 = vmul.f32 1.0, %v3125
  %v3127 = vrcp.pop %v3123
  %v3128 = vmul.f32 1.0, %v3127
  %v3129 = vrcp.pop %v3124
  %v3130 = vmul.f32 1.0, %v3129
  %v3131 = vtanh.pop %v3112
  %v3132 = vmul.f32 %v3128, %v2823
  %v3133 = vmul.f32 %v3126, %v3131
  %v3134 = vadd.f32 %v3132, %v3133
  %v3135 = vtanh.pop %v3134
  %v3136 = vmul.f32 %v3130, %v3135
  %v3137 = vpack.c.bf16 %v3136, %v3136
  %s3138 = scalar_lea.vmem %s9, 28
  %3139 = vst [vmem:[%s3138] sm:$0xf] %v3137
  %3140 = vmatprep.subr.bf16.mxu0 %v249
  %3141 = vmatpush1.bf16.msra.mxu0 %v248
  %3142 = vmatprep.subr.bf16.mxu0 %v253
  %3143 = vmatpush1.bf16.msra.mxu0 %v252
  %3144 = vmatprep.subr.bf16.mxu0 %v257
  %3145 = vmatpush1.bf16.msra.mxu0 %v256
  %3146 = vmatprep.subr.bf16.mxu0 %v261
  %3147 = vmatpush1.bf16.msra.mxu0 %v260
  %3148 = vmatprep.subr.bf16.mxu0 %v265
  %3149 = vmatpush1.bf16.msra.mxu0 %v264
  %3150 = vmatprep.subr.bf16.mxu0 %v269
  %3151 = vmatpush1.bf16.msra.mxu0 %v268
  %3152 = vmatprep.subr.bf16.mxu0 %v273
  %3153 = vmatpush1.bf16.msra.mxu0 %v272
  %3154 = vmatprep.subr.bf16.mxu0 %v277
  %3155 = vmatpush1.bf16.msra.mxu0 %v276
  %3156 = vmatprep.subr.bf16.mxu0 0
  %3157 = vmatpush1.bf16.msra.mxu0 0
  %3158 = vmatprep.subr.bf16.mxu0 0
  %3159 = vmatpush1.bf16.msra.mxu0 0
  %3160 = vmatprep.subr.bf16.mxu0 0
  %3161 = vmatpush1.bf16.msra.mxu0 0
  %3162 = vmatprep.subr.bf16.mxu0 0
  %3163 = vmatpush1.bf16.msra.mxu0 0
  %3164 = vmatprep.subr.bf16.mxu0 0
  %3165 = vmatpush1.bf16.msra.mxu0 0
  %3166 = vmatprep.subr.bf16.mxu0 0
  %3167 = vmatpush1.bf16.msra.mxu0 0
  %3168 = vmatprep.subr.bf16.mxu0 0
  %3169 = vmatpush1.bf16.msra.mxu0 0
  %3170 = vmatprep.subr.bf16.mxu0 0
  %3171 = vmatpush1.bf16.msra.mxu0 0
  %3172 = vmatprep.mubr.bf16.mxu0 0
  %3173 = vmatmul.mubr.bf16.gmra.mrb[0].mxu0 %v2944
  %v3174 = vpop.f32.mrb[0].mxu0
  %v3175 = vadd.f32 0.0, %v3174
  %v3176 = vpop.f32.mrb[0].mxu0
  %v3177 = vadd.f32 0.0, %v3176
  %v3178 = vpop.f32.mrb[0].mxu0
  %v3179 = vpop.f32.mrb[0].mxu0
  %3180 = vdwg.mxu0
  %3181 = vmatprep.subr.bf16.mxu0 %v251
  %3182 = vmatpush1.bf16.msra.mxu0 %v250
  %3183 = vmatprep.subr.bf16.mxu0 %v255
  %3184 = vmatpush1.bf16.msra.mxu0 %v254
  %3185 = vmatprep.subr.bf16.mxu0 %v259
  %3186 = vmatpush1.bf16.msra.mxu0 %v258
  %3187 = vmatprep.subr.bf16.mxu0 %v263
  %3188 = vmatpush1.bf16.msra.mxu0 %v262
  %3189 = vmatprep.subr.bf16.mxu0 %v267
  %3190 = vmatpush1.bf16.msra.mxu0 %v266
  %3191 = vmatprep.subr.bf16.mxu0 %v271
  %3192 = vmatpush1.bf16.msra.mxu0 %v270
  %3193 = vmatprep.subr.bf16.mxu0 %v275
  %3194 = vmatpush1.bf16.msra.mxu0 %v274
  %3195 = vmatprep.subr.bf16.mxu0 %v279
  %3196 = vmatpush1.bf16.msra.mxu0 %v278
  %3197 = vmatprep.subr.bf16.mxu0 0
  %3198 = vmatpush1.bf16.msra.mxu0 0
  %3199 = vmatprep.subr.bf16.mxu0 0
  %3200 = vmatpush1.bf16.msra.mxu0 0
  %3201 = vmatprep.subr.bf16.mxu0 0
  %3202 = vmatpush1.bf16.msra.mxu0 0
  %3203 = vmatprep.subr.bf16.mxu0 0
  %3204 = vmatpush1.bf16.msra.mxu0 0
  %3205 = vmatprep.subr.bf16.mxu0 0
  %3206 = vmatpush1.bf16.msra.mxu0 0
  %3207 = vmatprep.subr.bf16.mxu0 0
  %3208 = vmatpush1.bf16.msra.mxu0 0
  %3209 = vmatprep.subr.bf16.mxu0 0
  %3210 = vmatpush1.bf16.msra.mxu0 0
  %3211 = vmatprep.subr.bf16.mxu0 0
  %3212 = vmatpush1.bf16.msra.mxu0 0
  %3213 = vmatprep.mubr.bf16.mxu0 0
  %3214 = vmatmul.mubr.bf16.gmra.mrb[0].mxu0 %v2944
  %v3215 = vpop.f32.mrb[0].mxu0
  %v3216 = vadd.f32 0.0, %v3215
  %v3217 = vpop.f32.mrb[0].mxu0
  %v3218 = vadd.f32 0.0, %v3217
  %v3219 = vpop.f32.mrb[0].mxu0
  %v3220 = vpop.f32.mrb[0].mxu0
  %3221 = vdwg.mxu0
  %s3222 = scalar_lea.vmem %s0, 256
  %v3223 = vld [vmem:[%s3222] sm:$0xff]
  %v3224 = vld [vmem:[%s3222 + $0x8] sm:$0xff]
  %v3225 = vld [vmem:[%s3222 + $0x10] sm:$0xff]
  %v3226 = vld [vmem:[%s3222 + $0x18] sm:$0xff]
  %v3227 = vadd.f32 %v3223, %v3175
  %v3228 = vadd.f32 %v3224, %v3177
  %v3229 = vadd.f32 %v3225, %v3216
  %v3230 = vadd.f32 %v3226, %v3218
  %v3231 = vxor.u32 %v3227, 2147483648
  %v3232 = vxor.u32 %v3228, 2147483648
  %v3233 = vxor.u32 %v3229, 2147483648
  %v3234 = vmul.f32 %v3231, 1.442695
  %v3235 = vpow.pop %v3234
  %v3236 = vmul.f32 %v3232, 1.442695
  %v3237 = vpow.pop %v3236
  %v3238 = vmul.f32 %v3233, 1.442695
  %v3239 = vpow.pop %v3238
  %v3240 = vadd.f32 %v3235, 1.0
  %v3241 = vadd.f32 %v3237, 1.0
  %v3242 = vadd.f32 %v3239, 1.0
  %v3243 = vrcp.pop %v3240
  %v3244 = vmul.f32 1.0, %v3243
  %v3245 = vrcp.pop %v3241
  %v3246 = vmul.f32 1.0, %v3245
  %v3247 = vrcp.pop %v3242
  %v3248 = vmul.f32 1.0, %v3247
  %v3249 = vtanh.pop %v3230
  %v3250 = vmul.f32 %v3246, %v2941
  %v3251 = vmul.f32 %v3244, %v3249
  %v3252 = vadd.f32 %v3250, %v3251
  %v3253 = vtanh.pop %v3252
  %v3254 = vmul.f32 %v3248, %v3253
  %v3255 = vpack.c.bf16 %v3254, %v3254
  %3256 = vmatprep.subr.bf16.mxu0 %v525
  %3257 = vmatpush1.bf16.msra.mxu0 %v524
  %3258 = vmatprep.subr.bf16.mxu0 %v529
  %3259 = vmatpush1.bf16.msra.mxu0 %v528
  %3260 = vmatprep.subr.bf16.mxu0 %v533
  %3261 = vmatpush1.bf16.msra.mxu0 %v532
  %3262 = vmatprep.subr.bf16.mxu0 %v537
  %3263 = vmatpush1.bf16.msra.mxu0 %v536
  %3264 = vmatprep.subr.bf16.mxu0 %v541
  %3265 = vmatpush1.bf16.msra.mxu0 %v540
  %3266 = vmatprep.subr.bf16.mxu0 %v545
  %3267 = vmatpush1.bf16.msra.mxu0 %v544
  %3268 = vmatprep.subr.bf16.mxu0 %v549
  %3269 = vmatpush1.bf16.msra.mxu0 %v548
  %3270 = vmatprep.subr.bf16.mxu0 %v553
  %3271 = vmatpush1.bf16.msra.mxu0 %v552
  %3272 = vmatprep.subr.bf16.mxu0 0
  %3273 = vmatpush1.bf16.msra.mxu0 0
  %3274 = vmatprep.subr.bf16.mxu0 0
  %3275 = vmatpush1.bf16.msra.mxu0 0
  %3276 = vmatprep.subr.bf16.mxu0 0
  %3277 = vmatpush1.bf16.msra.mxu0 0
  %3278 = vmatprep.subr.bf16.mxu0 0
  %3279 = vmatpush1.bf16.msra.mxu0 0
  %3280 = vmatprep.subr.bf16.mxu0 0
  %3281 = vmatpush1.bf16.msra.mxu0 0
  %3282 = vmatprep.subr.bf16.mxu0 0
  %3283 = vmatpush1.bf16.msra.mxu0 0
  %3284 = vmatprep.subr.bf16.mxu0 0
  %3285 = vmatpush1.bf16.msra.mxu0 0
  %3286 = vmatprep.subr.bf16.mxu0 0
  %3287 = vmatpush1.bf16.msra.mxu0 0
  %3288 = vmatprep.mubr.bf16.mxu0 0
  %3289 = vmatmul.mubr.bf16.gmra.mrb[0].mxu0 %v3255
  %v3290 = vpop.f32.mrb[0].mxu0
  %v3291 = vadd.f32 0.0, %v3290
  %v3292 = vpop.f32.mrb[0].mxu0
  %v3293 = vadd.f32 0.0, %v3292
  %v3294 = vpop.f32.mrb[0].mxu0
  %v3295 = vpop.f32.mrb[0].mxu0
  %3296 = vdwg.mxu0
  %3297 = vmatprep.subr.bf16.mxu0 %v527
  %3298 = vmatpush1.bf16.msra.mxu0 %v526
  %3299 = vmatprep.subr.bf16.mxu0 %v531
  %3300 = vmatpush1.bf16.msra.mxu0 %v530
  %3301 = vmatprep.subr.bf16.mxu0 %v535
  %3302 = vmatpush1.bf16.msra.mxu0 %v534
  %3303 = vmatprep.subr.bf16.mxu0 %v539
  %3304 = vmatpush1.bf16.msra.mxu0 %v538
  %3305 = vmatprep.subr.bf16.mxu0 %v543
  %3306 = vmatpush1.bf16.msra.mxu0 %v542
  %3307 = vmatprep.subr.bf16.mxu0 %v547
  %3308 = vmatpush1.bf16.msra.mxu0 %v546
  %3309 = vmatprep.subr.bf16.mxu0 %v551
  %3310 = vmatpush1.bf16.msra.mxu0 %v550
  %3311 = vmatprep.subr.bf16.mxu0 %v555
  %3312 = vmatpush1.bf16.msra.mxu0 %v554
  %3313 = vmatprep.subr.bf16.mxu0 0
  %3314 = vmatpush1.bf16.msra.mxu0 0
  %3315 = vmatprep.subr.bf16.mxu0 0
  %3316 = vmatpush1.bf16.msra.mxu0 0
  %3317 = vmatprep.subr.bf16.mxu0 0
  %3318 = vmatpush1.bf16.msra.mxu0 0
  %3319 = vmatprep.subr.bf16.mxu0 0
  %3320 = vmatpush1.bf16.msra.mxu0 0
  %3321 = vmatprep.subr.bf16.mxu0 0
  %3322 = vmatpush1.bf16.msra.mxu0 0
  %3323 = vmatprep.subr.bf16.mxu0 0
  %3324 = vmatpush1.bf16.msra.mxu0 0
  %3325 = vmatprep.subr.bf16.mxu0 0
  %3326 = vmatpush1.bf16.msra.mxu0 0
  %3327 = vmatprep.subr.bf16.mxu0 0
  %3328 = vmatpush1.bf16.msra.mxu0 0
  %3329 = vmatprep.mubr.bf16.mxu0 0
  %3330 = vmatmul.mubr.bf16.gmra.mrb[0].mxu0 %v3255
  %v3331 = vpop.f32.mrb[0].mxu0
  %v3332 = vadd.f32 0.0, %v3331
  %v3333 = vpop.f32.mrb[0].mxu0
  %v3334 = vadd.f32 0.0, %v3333
  %v3335 = vpop.f32.mrb[0].mxu0
  %v3336 = vpop.f32.mrb[0].mxu0
  %3337 = vdwg.mxu0
  %3338 = vmatprep.subr.bf16.mxu0 %v767
  %3339 = vmatpush1.bf16.msra.mxu0 %v766
  %3340 = vmatprep.subr.bf16.mxu0 %v771
  %3341 = vmatpush1.bf16.msra.mxu0 %v770
  %3342 = vmatprep.subr.bf16.mxu0 %v775
  %3343 = vmatpush1.bf16.msra.mxu0 %v774
  %3344 = vmatprep.subr.bf16.mxu0 %v779
  %3345 = vmatpush1.bf16.msra.mxu0 %v778
  %3346 = vmatprep.subr.bf16.mxu0 %v783
  %3347 = vmatpush1.bf16.msra.mxu0 %v782
  %3348 = vmatprep.subr.bf16.mxu0 %v787
  %3349 = vmatpush1.bf16.msra.mxu0 %v786
  %3350 = vmatprep.subr.bf16.mxu0 %v791
  %3351 = vmatpush1.bf16.msra.mxu0 %v790
  %3352 = vmatprep.subr.bf16.mxu0 %v795
  %3353 = vmatpush1.bf16.msra.mxu0 %v794
  %3354 = vmatprep.subr.bf16.mxu0 0
  %3355 = vmatpush1.bf16.msra.mxu0 0
  %3356 = vmatprep.subr.bf16.mxu0 0
  %3357 = vmatpush1.bf16.msra.mxu0 0
  %3358 = vmatprep.subr.bf16.mxu0 0
  %3359 = vmatpush1.bf16.msra.mxu0 0
  %3360 = vmatprep.subr.bf16.mxu0 0
  %3361 = vmatpush1.bf16.msra.mxu0 0
  %3362 = vmatprep.subr.bf16.mxu0 0
  %3363 = vmatpush1.bf16.msra.mxu0 0
  %3364 = vmatprep.subr.bf16.mxu0 0
  %3365 = vmatpush1.bf16.msra.mxu0 0
  %3366 = vmatprep.subr.bf16.mxu0 0
  %3367 = vmatpush1.bf16.msra.mxu0 0
  %3368 = vmatprep.subr.bf16.mxu0 0
  %3369 = vmatpush1.bf16.msra.mxu0 0
  %3370 = vmatprep.mubr.bf16.mxu0 0
  %3371 = vmatmul.mubr.bf16.gmra.mrb[0].mxu0 %v3137
  %v3372 = vpop.f32.mrb[0].mxu0
  %v3373 = vadd.f32 %v3291, %v3372
  %v3374 = vpop.f32.mrb[0].mxu0
  %v3375 = vadd.f32 %v3293, %v3374
  %v3376 = vpop.f32.mrb[0].mxu0
  %v3377 = vpop.f32.mrb[0].mxu0
  %3378 = vdwg.mxu0
  %3379 = vmatprep.subr.bf16.mxu0 %v769
  %3380 = vmatpush1.bf16.msra.mxu0 %v768
  %3381 = vmatprep.subr.bf16.mxu0 %v773
  %3382 = vmatpush1.bf16.msra.mxu0 %v772
  %3383 = vmatprep.subr.bf16.mxu0 %v777
  %3384 = vmatpush1.bf16.msra.mxu0 %v776
  %3385 = vmatprep.subr.bf16.mxu0 %v781
  %3386 = vmatpush1.bf16.msra.mxu0 %v780
  %3387 = vmatprep.subr.bf16.mxu0 %v785
  %3388 = vmatpush1.bf16.msra.mxu0 %v784
  %3389 = vmatprep.subr.bf16.mxu0 %v789
  %3390 = vmatpush1.bf16.msra.mxu0 %v788
  %3391 = vmatprep.subr.bf16.mxu0 %v793
  %3392 = vmatpush1.bf16.msra.mxu0 %v792
  %3393 = vmatprep.subr.bf16.mxu0 %v797
  %3394 = vmatpush1.bf16.msra.mxu0 %v796
  %3395 = vmatprep.subr.bf16.mxu0 0
  %3396 = vmatpush1.bf16.msra.mxu0 0
  %3397 = vmatprep.subr.bf16.mxu0 0
  %3398 = vmatpush1.bf16.msra.mxu0 0
  %3399 = vmatprep.subr.bf16.mxu0 0
  %3400 = vmatpush1.bf16.msra.mxu0 0
  %3401 = vmatprep.subr.bf16.mxu0 0
  %3402 = vmatpush1.bf16.msra.mxu0 0
  %3403 = vmatprep.subr.bf16.mxu0 0
  %3404 = vmatpush1.bf16.msra.mxu0 0
  %3405 = vmatprep.subr.bf16.mxu0 0
  %3406 = vmatpush1.bf16.msra.mxu0 0
  %3407 = vmatprep.subr.bf16.mxu0 0
  %3408 = vmatpush1.bf16.msra.mxu0 0
  %3409 = vmatprep.subr.bf16.mxu0 0
  %3410 = vmatpush1.bf16.msra.mxu0 0
  %3411 = vmatprep.mubr.bf16.mxu0 0
  %3412 = vmatmul.mubr.bf16.gmra.mrb[0].mxu0 %v3137
  %v3413 = vpop.f32.mrb[0].mxu0
  %v3414 = vadd.f32 %v3332, %v3413
  %v3415 = vpop.f32.mrb[0].mxu0
  %v3416 = vadd.f32 %v3334, %v3415
  %v3417 = vpop.f32.mrb[0].mxu0
  %v3418 = vpop.f32.mrb[0].mxu0
  %3419 = vdwg.mxu0
  %v3420 = vadd.f32 %v3373, %v916
  %v3421 = vadd.f32 %v3375, %v920
  %v3422 = vadd.f32 %v3414, %v924
  %v3423 = vadd.f32 %v3416, %v928
  %v3424 = vxor.u32 %v3420, 2147483648
  %v3425 = vxor.u32 %v3421, 2147483648
  %v3426 = vxor.u32 %v3422, 2147483648
  %v3427 = vmul.f32 %v3424, 1.442695
  %v3428 = vpow.pop %v3427
  %v3429 = vmul.f32 %v3425, 1.442695
  %v3430 = vpow.pop %v3429
  %v3431 = vmul.f32 %v3426, 1.442695
  %v3432 = vpow.pop %v3431
  %v3433 = vadd.f32 %v3428, 1.0
  %v3434 = vadd.f32 %v3430, 1.0
  %v3435 = vadd.f32 %v3432, 1.0
  %v3436 = vrcp.pop %v3433
  %v3437 = vmul.f32 1.0, %v3436
  %v3438 = vrcp.pop %v3434
  %v3439 = vmul.f32 1.0, %v3438
  %v3440 = vrcp.pop %v3435
  %v3441 = vmul.f32 1.0, %v3440
  %v3442 = vtanh.pop %v3423
  %v3443 = vmul.f32 %v3439, %v3134
  %v3444 = vmul.f32 %v3437, %v3442
  %v3445 = vadd.f32 %v3443, %v3444
  %v3446 = vtanh.pop %v3445
  %v3447 = vmul.f32 %v3441, %v3446
  %v3448 = vpack.c.bf16 %v3447, %v3447
  %s3449 = scalar_lea.vmem %s9, 32
  %3450 = vst [vmem:[%s3449] sm:$0xf] %v3448
  %3451 = vmatprep.subr.bf16.mxu0 %v249
  %3452 = vmatpush1.bf16.msra.mxu0 %v248
  %3453 = vmatprep.subr.bf16.mxu0 %v253
  %3454 = vmatpush1.bf16.msra.mxu0 %v252
  %3455 = vmatprep.subr.bf16.mxu0 %v257
  %3456 = vmatpush1.bf16.msra.mxu0 %v256
  %3457 = vmatprep.subr.bf16.mxu0 %v261
  %3458 = vmatpush1.bf16.msra.mxu0 %v260
  %3459 = vmatprep.subr.bf16.mxu0 %v265
  %3460 = vmatpush1.bf16.msra.mxu0 %v264
  %3461 = vmatprep.subr.bf16.mxu0 %v269
  %3462 = vmatpush1.bf16.msra.mxu0 %v268
  %3463 = vmatprep.subr.bf16.mxu0 %v273
  %3464 = vmatpush1.bf16.msra.mxu0 %v272
  %3465 = vmatprep.subr.bf16.mxu0 %v277
  %3466 = vmatpush1.bf16.msra.mxu0 %v276
  %3467 = vmatprep.subr.bf16.mxu0 0
  %3468 = vmatpush1.bf16.msra.mxu0 0
  %3469 = vmatprep.subr.bf16.mxu0 0
  %3470 = vmatpush1.bf16.msra.mxu0 0
  %3471 = vmatprep.subr.bf16.mxu0 0
  %3472 = vmatpush1.bf16.msra.mxu0 0
  %3473 = vmatprep.subr.bf16.mxu0 0
  %3474 = vmatpush1.bf16.msra.mxu0 0
  %3475 = vmatprep.subr.bf16.mxu0 0
  %3476 = vmatpush1.bf16.msra.mxu0 0
  %3477 = vmatprep.subr.bf16.mxu0 0
  %3478 = vmatpush1.bf16.msra.mxu0 0
  %3479 = vmatprep.subr.bf16.mxu0 0
  %3480 = vmatpush1.bf16.msra.mxu0 0
  %3481 = vmatprep.subr.bf16.mxu0 0
  %3482 = vmatpush1.bf16.msra.mxu0 0
  %3483 = vmatprep.mubr.bf16.mxu0 0
  %3484 = vmatmul.mubr.bf16.gmra.mrb[0].mxu0 %v3255
  %v3485 = vpop.f32.mrb[0].mxu0
  %v3486 = vadd.f32 0.0, %v3485
  %v3487 = vpop.f32.mrb[0].mxu0
  %v3488 = vadd.f32 0.0, %v3487
  %v3489 = vpop.f32.mrb[0].mxu0
  %v3490 = vpop.f32.mrb[0].mxu0
  %3491 = vdwg.mxu0
  %3492 = vmatprep.subr.bf16.mxu0 %v251
  %3493 = vmatpush1.bf16.msra.mxu0 %v250
  %3494 = vmatprep.subr.bf16.mxu0 %v255
  %3495 = vmatpush1.bf16.msra.mxu0 %v254
  %3496 = vmatprep.subr.bf16.mxu0 %v259
  %3497 = vmatpush1.bf16.msra.mxu0 %v258
  %3498 = vmatprep.subr.bf16.mxu0 %v263
  %3499 = vmatpush1.bf16.msra.mxu0 %v262
  %3500 = vmatprep.subr.bf16.mxu0 %v267
  %3501 = vmatpush1.bf16.msra.mxu0 %v266
  %3502 = vmatprep.subr.bf16.mxu0 %v271
  %3503 = vmatpush1.bf16.msra.mxu0 %v270
  %3504 = vmatprep.subr.bf16.mxu0 %v275
  %3505 = vmatpush1.bf16.msra.mxu0 %v274
  %3506 = vmatprep.subr.bf16.mxu0 %v279
  %3507 = vmatpush1.bf16.msra.mxu0 %v278
  %3508 = vmatprep.subr.bf16.mxu0 0
  %3509 = vmatpush1.bf16.msra.mxu0 0
  %3510 = vmatprep.subr.bf16.mxu0 0
  %3511 = vmatpush1.bf16.msra.mxu0 0
  %3512 = vmatprep.subr.bf16.mxu0 0
  %3513 = vmatpush1.bf16.msra.mxu0 0
  %3514 = vmatprep.subr.bf16.mxu0 0
  %3515 = vmatpush1.bf16.msra.mxu0 0
  %3516 = vmatprep.subr.bf16.mxu0 0
  %3517 = vmatpush1.bf16.msra.mxu0 0
  %3518 = vmatprep.subr.bf16.mxu0 0
  %3519 = vmatpush1.bf16.msra.mxu0 0
  %3520 = vmatprep.subr.bf16.mxu0 0
  %3521 = vmatpush1.bf16.msra.mxu0 0
  %3522 = vmatprep.subr.bf16.mxu0 0
  %3523 = vmatpush1.bf16.msra.mxu0 0
  %3524 = vmatprep.mubr.bf16.mxu0 0
  %3525 = vmatmul.mubr.bf16.gmra.mrb[0].mxu0 %v3255
  %v3526 = vpop.f32.mrb[0].mxu0
  %v3527 = vadd.f32 0.0, %v3526
  %v3528 = vpop.f32.mrb[0].mxu0
  %v3529 = vadd.f32 0.0, %v3528
  %v3530 = vpop.f32.mrb[0].mxu0
  %v3531 = vpop.f32.mrb[0].mxu0
  %3532 = vdwg.mxu0
  %s3533 = scalar_lea.vmem %s0, 288
  %v3534 = vld [vmem:[%s3533] sm:$0xff]
  %v3535 = vld [vmem:[%s3533 + $0x8] sm:$0xff]
  %v3536 = vld [vmem:[%s3533 + $0x10] sm:$0xff]
  %v3537 = vld [vmem:[%s3533 + $0x18] sm:$0xff]
  %v3538 = vadd.f32 %v3534, %v3486
  %v3539 = vadd.f32 %v3535, %v3488
  %v3540 = vadd.f32 %v3536, %v3527
  %v3541 = vadd.f32 %v3537, %v3529
  %v3542 = vxor.u32 %v3538, 2147483648
  %v3543 = vxor.u32 %v3539, 2147483648
  %v3544 = vxor.u32 %v3540, 2147483648
  %v3545 = vmul.f32 %v3542, 1.442695
  %v3546 = vpow.pop %v3545
  %v3547 = vmul.f32 %v3543, 1.442695
  %v3548 = vpow.pop %v3547
  %v3549 = vmul.f32 %v3544, 1.442695
  %v3550 = vpow.pop %v3549
  %v3551 = vadd.f32 %v3546, 1.0
  %v3552 = vadd.f32 %v3548, 1.0
  %v3553 = vadd.f32 %v3550, 1.0
  %v3554 = vrcp.pop %v3551
  %v3555 = vmul.f32 1.0, %v3554
  %v3556 = vrcp.pop %v3552
  %v3557 = vmul.f32 1.0, %v3556
  %v3558 = vrcp.pop %v3553
  %v3559 = vmul.f32 1.0, %v3558
  %v3560 = vtanh.pop %v3541
  %v3561 = vmul.f32 %v3557, %v3252
  %v3562 = vmul.f32 %v3555, %v3560
  %v3563 = vadd.f32 %v3561, %v3562
  %v3564 = vtanh.pop %v3563
  %v3565 = vmul.f32 %v3559, %v3564
  %v3566 = vpack.c.bf16 %v3565, %v3565
  %3567 = vmatprep.subr.bf16.mxu0 %v525
  %3568 = vmatpush1.bf16.msra.mxu0 %v524
  %3569 = vmatprep.subr.bf16.mxu0 %v529
  %3570 = vmatpush1.bf16.msra.mxu0 %v528
  %3571 = vmatprep.subr.bf16.mxu0 %v533
  %3572 = vmatpush1.bf16.msra.mxu0 %v532
  %3573 = vmatprep.subr.bf16.mxu0 %v537
  %3574 = vmatpush1.bf16.msra.mxu0 %v536
  %3575 = vmatprep.subr.bf16.mxu0 %v541
  %3576 = vmatpush1.bf16.msra.mxu0 %v540
  %3577 = vmatprep.subr.bf16.mxu0 %v545
  %3578 = vmatpush1.bf16.msra.mxu0 %v544
  %3579 = vmatprep.subr.bf16.mxu0 %v549
  %3580 = vmatpush1.bf16.msra.mxu0 %v548
  %3581 = vmatprep.subr.bf16.mxu0 %v553
  %3582 = vmatpush1.bf16.msra.mxu0 %v552
  %3583 = vmatprep.subr.bf16.mxu0 0
  %3584 = vmatpush1.bf16.msra.mxu0 0
  %3585 = vmatprep.subr.bf16.mxu0 0
  %3586 = vmatpush1.bf16.msra.mxu0 0
  %3587 = vmatprep.subr.bf16.mxu0 0
  %3588 = vmatpush1.bf16.msra.mxu0 0
  %3589 = vmatprep.subr.bf16.mxu0 0
  %3590 = vmatpush1.bf16.msra.mxu0 0
  %3591 = vmatprep.subr.bf16.mxu0 0
  %3592 = vmatpush1.bf16.msra.mxu0 0
  %3593 = vmatprep.subr.bf16.mxu0 0
  %3594 = vmatpush1.bf16.msra.mxu0 0
  %3595 = vmatprep.subr.bf16.mxu0 0
  %3596 = vmatpush1.bf16.msra.mxu0 0
  %3597 = vmatprep.subr.bf16.mxu0 0
  %3598 = vmatpush1.bf16.msra.mxu0 0
  %3599 = vmatprep.mubr.bf16.mxu0 0
  %3600 = vmatmul.mubr.bf16.gmra.mrb[0].mxu0 %v3566
  %v3601 = vpop.f32.mrb[0].mxu0
  %v3602 = vadd.f32 0.0, %v3601
  %v3603 = vpop.f32.mrb[0].mxu0
  %v3604 = vadd.f32 0.0, %v3603
  %v3605 = vpop.f32.mrb[0].mxu0
  %v3606 = vpop.f32.mrb[0].mxu0
  %3607 = vdwg.mxu0
  %3608 = vmatprep.subr.bf16.mxu0 %v527
  %3609 = vmatpush1.bf16.msra.mxu0 %v526
  %3610 = vmatprep.subr.bf16.mxu0 %v531
  %3611 = vmatpush1.bf16.msra.mxu0 %v530
  %3612 = vmatprep.subr.bf16.mxu0 %v535
  %3613 = vmatpush1.bf16.msra.mxu0 %v534
  %3614 = vmatprep.subr.bf16.mxu0 %v539
  %3615 = vmatpush1.bf16.msra.mxu0 %v538
  %3616 = vmatprep.subr.bf16.mxu0 %v543
  %3617 = vmatpush1.bf16.msra.mxu0 %v542
  %3618 = vmatprep.subr.bf16.mxu0 %v547
  %3619 = vmatpush1.bf16.msra.mxu0 %v546
  %3620 = vmatprep.subr.bf16.mxu0 %v551
  %3621 = vmatpush1.bf16.msra.mxu0 %v550
  %3622 = vmatprep.subr.bf16.mxu0 %v555
  %3623 = vmatpush1.bf16.msra.mxu0 %v554
  %3624 = vmatprep.subr.bf16.mxu0 0
  %3625 = vmatpush1.bf16.msra.mxu0 0
  %3626 = vmatprep.subr.bf16.mxu0 0
  %3627 = vmatpush1.bf16.msra.mxu0 0
  %3628 = vmatprep.subr.bf16.mxu0 0
  %3629 = vmatpush1.bf16.msra.mxu0 0
  %3630 = vmatprep.subr.bf16.mxu0 0
  %3631 = vmatpush1.bf16.msra.mxu0 0
  %3632 = vmatprep.subr.bf16.mxu0 0
  %3633 = vmatpush1.bf16.msra.mxu0 0
  %3634 = vmatprep.subr.bf16.mxu0 0
  %3635 = vmatpush1.bf16.msra.mxu0 0
  %3636 = vmatprep.subr.bf16.mxu0 0
  %3637 = vmatpush1.bf16.msra.mxu0 0
  %3638 = vmatprep.subr.bf16.mxu0 0
  %3639 = vmatpush1.bf16.msra.mxu0 0
  %3640 = vmatprep.mubr.bf16.mxu0 0
  %3641 = vmatmul.mubr.bf16.gmra.mrb[0].mxu0 %v3566
  %v3642 = vpop.f32.mrb[0].mxu0
  %v3643 = vadd.f32 0.0, %v3642
  %v3644 = vpop.f32.mrb[0].mxu0
  %v3645 = vadd.f32 0.0, %v3644
  %v3646 = vpop.f32.mrb[0].mxu0
  %v3647 = vpop.f32.mrb[0].mxu0
  %3648 = vdwg.mxu0
  %3649 = vmatprep.subr.bf16.mxu0 %v767
  %3650 = vmatpush1.bf16.msra.mxu0 %v766
  %3651 = vmatprep.subr.bf16.mxu0 %v771
  %3652 = vmatpush1.bf16.msra.mxu0 %v770
  %3653 = vmatprep.subr.bf16.mxu0 %v775
  %3654 = vmatpush1.bf16.msra.mxu0 %v774
  %3655 = vmatprep.subr.bf16.mxu0 %v779
  %3656 = vmatpush1.bf16.msra.mxu0 %v778
  %3657 = vmatprep.subr.bf16.mxu0 %v783
  %3658 = vmatpush1.bf16.msra.mxu0 %v782
  %3659 = vmatprep.subr.bf16.mxu0 %v787
  %3660 = vmatpush1.bf16.msra.mxu0 %v786
  %3661 = vmatprep.subr.bf16.mxu0 %v791
  %3662 = vmatpush1.bf16.msra.mxu0 %v790
  %3663 = vmatprep.subr.bf16.mxu0 %v795
  %3664 = vmatpush1.bf16.msra.mxu0 %v794
  %3665 = vmatprep.subr.bf16.mxu0 0
  %3666 = vmatpush1.bf16.msra.mxu0 0
  %3667 = vmatprep.subr.bf16.mxu0 0
  %3668 = vmatpush1.bf16.msra.mxu0 0
  %3669 = vmatprep.subr.bf16.mxu0 0
  %3670 = vmatpush1.bf16.msra.mxu0 0
  %3671 = vmatprep.subr.bf16.mxu0 0
  %3672 = vmatpush1.bf16.msra.mxu0 0
  %3673 = vmatprep.subr.bf16.mxu0 0
  %3674 = vmatpush1.bf16.msra.mxu0 0
  %3675 = vmatprep.subr.bf16.mxu0 0
  %3676 = vmatpush1.bf16.msra.mxu0 0
  %3677 = vmatprep.subr.bf16.mxu0 0
  %3678 = vmatpush1.bf16.msra.mxu0 0
  %3679 = vmatprep.subr.bf16.mxu0 0
  %3680 = vmatpush1.bf16.msra.mxu0 0
  %3681 = vmatprep.mubr.bf16.mxu0 0
  %3682 = vmatmul.mubr.bf16.gmra.mrb[0].mxu0 %v3448
  %v3683 = vpop.f32.mrb[0].mxu0
  %v3684 = vadd.f32 %v3602, %v3683
  %v3685 = vpop.f32.mrb[0].mxu0
  %v3686 = vadd.f32 %v3604, %v3685
  %v3687 = vpop.f32.mrb[0].mxu0
  %v3688 = vpop.f32.mrb[0].mxu0
  %3689 = vdwg.mxu0
  %3690 = vmatprep.subr.bf16.mxu0 %v769
  %3691 = vmatpush1.bf16.msra.mxu0 %v768
  %3692 = vmatprep.subr.bf16.mxu0 %v773
  %3693 = vmatpush1.bf16.msra.mxu0 %v772
  %3694 = vmatprep.subr.bf16.mxu0 %v777
  %3695 = vmatpush1.bf16.msra.mxu0 %v776
  %3696 = vmatprep.subr.bf16.mxu0 %v781
  %3697 = vmatpush1.bf16.msra.mxu0 %v780
  %3698 = vmatprep.subr.bf16.mxu0 %v785
  %3699 = vmatpush1.bf16.msra.mxu0 %v784
  %3700 = vmatprep.subr.bf16.mxu0 %v789
  %3701 = vmatpush1.bf16.msra.mxu0 %v788
  %3702 = vmatprep.subr.bf16.mxu0 %v793
  %3703 = vmatpush1.bf16.msra.mxu0 %v792
  %3704 = vmatprep.subr.bf16.mxu0 %v797
  %3705 = vmatpush1.bf16.msra.mxu0 %v796
  %3706 = vmatprep.subr.bf16.mxu0 0
  %3707 = vmatpush1.bf16.msra.mxu0 0
  %3708 = vmatprep.subr.bf16.mxu0 0
  %3709 = vmatpush1.bf16.msra.mxu0 0
  %3710 = vmatprep.subr.bf16.mxu0 0
  %3711 = vmatpush1.bf16.msra.mxu0 0
  %3712 = vmatprep.subr.bf16.mxu0 0
  %3713 = vmatpush1.bf16.msra.mxu0 0
  %3714 = vmatprep.subr.bf16.mxu0 0
  %3715 = vmatpush1.bf16.msra.mxu0 0
  %3716 = vmatprep.subr.bf16.mxu0 0
  %3717 = vmatpush1.bf16.msra.mxu0 0
  %3718 = vmatprep.subr.bf16.mxu0 0
  %3719 = vmatpush1.bf16.msra.mxu0 0
  %3720 = vmatprep.subr.bf16.mxu0 0
  %3721 = vmatpush1.bf16.msra.mxu0 0
  %3722 = vmatprep.mubr.bf16.mxu0 0
  %3723 = vmatmul.mubr.bf16.gmra.mrb[0].mxu0 %v3448
  %v3724 = vpop.f32.mrb[0].mxu0
  %v3725 = vadd.f32 %v3643, %v3724
  %v3726 = vpop.f32.mrb[0].mxu0
  %v3727 = vadd.f32 %v3645, %v3726
  %v3728 = vpop.f32.mrb[0].mxu0
  %v3729 = vpop.f32.mrb[0].mxu0
  %3730 = vdwg.mxu0
  %v3731 = vadd.f32 %v3684, %v916
  %v3732 = vadd.f32 %v3686, %v920
  %v3733 = vadd.f32 %v3725, %v924
  %v3734 = vadd.f32 %v3727, %v928
  %v3735 = vxor.u32 %v3731, 2147483648
  %v3736 = vxor.u32 %v3732, 2147483648
  %v3737 = vxor.u32 %v3733, 2147483648
  %v3738 = vmul.f32 %v3735, 1.442695
  %v3739 = vpow.pop %v3738
  %v3740 = vmul.f32 %v3736, 1.442695
  %v3741 = vpow.pop %v3740
  %v3742 = vmul.f32 %v3737, 1.442695
  %v3743 = vpow.pop %v3742
  %v3744 = vadd.f32 %v3739, 1.0
  %v3745 = vadd.f32 %v3741, 1.0
  %v3746 = vadd.f32 %v3743, 1.0
  %v3747 = vrcp.pop %v3744
  %v3748 = vmul.f32 1.0, %v3747
  %v3749 = vrcp.pop %v3745
  %v3750 = vmul.f32 1.0, %v3749
  %v3751 = vrcp.pop %v3746
  %v3752 = vmul.f32 1.0, %v3751
  %v3753 = vtanh.pop %v3734
  %v3754 = vmul.f32 %v3750, %v3445
  %v3755 = vmul.f32 %v3748, %v3753
  %v3756 = vadd.f32 %v3754, %v3755
  %v3757 = vtanh.pop %v3756
  %v3758 = vmul.f32 %v3752, %v3757
  %v3759 = vpack.c.bf16 %v3758, %v3758
  %s3760 = scalar_lea.vmem %s9, 36
  %3761 = vst [vmem:[%s3760] sm:$0xf] %v3759
  %3762 = vmatprep.subr.bf16.mxu0 %v249
  %3763 = vmatpush1.bf16.msra.mxu0 %v248
  %3764 = vmatprep.subr.bf16.mxu0 %v253
  %3765 = vmatpush1.bf16.msra.mxu0 %v252
  %3766 = vmatprep.subr.bf16.mxu0 %v257
  %3767 = vmatpush1.bf16.msra.mxu0 %v256
  %3768 = vmatprep.subr.bf16.mxu0 %v261
  %3769 = vmatpush1.bf16.msra.mxu0 %v260
  %3770 = vmatprep.subr.bf16.mxu0 %v265
  %3771 = vmatpush1.bf16.msra.mxu0 %v264
  %3772 = vmatprep.subr.bf16.mxu0 %v269
  %3773 = vmatpush1.bf16.msra.mxu0 %v268
  %3774 = vmatprep.subr.bf16.mxu0 %v273
  %3775 = vmatpush1.bf16.msra.mxu0 %v272
  %3776 = vmatprep.subr.bf16.mxu0 %v277
  %3777 = vmatpush1.bf16.msra.mxu0 %v276
  %3778 = vmatprep.subr.bf16.mxu0 0
  %3779 = vmatpush1.bf16.msra.mxu0 0
  %3780 = vmatprep.subr.bf16.mxu0 0
  %3781 = vmatpush1.bf16.msra.mxu0 0
  %3782 = vmatprep.subr.bf16.mxu0 0
  %3783 = vmatpush1.bf16.msra.mxu0 0
  %3784 = vmatprep.subr.bf16.mxu0 0
  %3785 = vmatpush1.bf16.msra.mxu0 0
  %3786 = vmatprep.subr.bf16.mxu0 0
  %3787 = vmatpush1.bf16.msra.mxu0 0
  %3788 = vmatprep.subr.bf16.mxu0 0
  %3789 = vmatpush1.bf16.msra.mxu0 0
  %3790 = vmatprep.subr.bf16.mxu0 0
  %3791 = vmatpush1.bf16.msra.mxu0 0
  %3792 = vmatprep.subr.bf16.mxu0 0
  %3793 = vmatpush1.bf16.msra.mxu0 0
  %3794 = vmatprep.mubr.bf16.mxu0 0
  %3795 = vmatmul.mubr.bf16.gmra.mrb[0].mxu0 %v3566
  %v3796 = vpop.f32.mrb[0].mxu0
  %v3797 = vadd.f32 0.0, %v3796
  %v3798 = vpop.f32.mrb[0].mxu0
  %v3799 = vadd.f32 0.0, %v3798
  %v3800 = vpop.f32.mrb[0].mxu0
  %v3801 = vpop.f32.mrb[0].mxu0
  %3802 = vdwg.mxu0
  %3803 = vmatprep.subr.bf16.mxu0 %v251
  %3804 = vmatpush1.bf16.msra.mxu0 %v250
  %3805 = vmatprep.subr.bf16.mxu0 %v255
  %3806 = vmatpush1.bf16.msra.mxu0 %v254
  %3807 = vmatprep.subr.bf16.mxu0 %v259
  %3808 = vmatpush1.bf16.msra.mxu0 %v258
  %3809 = vmatprep.subr.bf16.mxu0 %v263
  %3810 = vmatpush1.bf16.msra.mxu0 %v262
  %3811 = vmatprep.subr.bf16.mxu0 %v267
  %3812 = vmatpush1.bf16.msra.mxu0 %v266
  %3813 = vmatprep.subr.bf16.mxu0 %v271
  %3814 = vmatpush1.bf16.msra.mxu0 %v270
  %3815 = vmatprep.subr.bf16.mxu0 %v275
  %3816 = vmatpush1.bf16.msra.mxu0 %v274
  %3817 = vmatprep.subr.bf16.mxu0 %v279
  %3818 = vmatpush1.bf16.msra.mxu0 %v278
  %3819 = vmatprep.subr.bf16.mxu0 0
  %3820 = vmatpush1.bf16.msra.mxu0 0
  %3821 = vmatprep.subr.bf16.mxu0 0
  %3822 = vmatpush1.bf16.msra.mxu0 0
  %3823 = vmatprep.subr.bf16.mxu0 0
  %3824 = vmatpush1.bf16.msra.mxu0 0
  %3825 = vmatprep.subr.bf16.mxu0 0
  %3826 = vmatpush1.bf16.msra.mxu0 0
  %3827 = vmatprep.subr.bf16.mxu0 0
  %3828 = vmatpush1.bf16.msra.mxu0 0
  %3829 = vmatprep.subr.bf16.mxu0 0
  %3830 = vmatpush1.bf16.msra.mxu0 0
  %3831 = vmatprep.subr.bf16.mxu0 0
  %3832 = vmatpush1.bf16.msra.mxu0 0
  %3833 = vmatprep.subr.bf16.mxu0 0
  %3834 = vmatpush1.bf16.msra.mxu0 0
  %3835 = vmatprep.mubr.bf16.mxu0 0
  %3836 = vmatmul.mubr.bf16.gmra.mrb[0].mxu0 %v3566
  %v3837 = vpop.f32.mrb[0].mxu0
  %v3838 = vadd.f32 0.0, %v3837
  %v3839 = vpop.f32.mrb[0].mxu0
  %v3840 = vadd.f32 0.0, %v3839
  %v3841 = vpop.f32.mrb[0].mxu0
  %v3842 = vpop.f32.mrb[0].mxu0
  %3843 = vdwg.mxu0
  %s3844 = scalar_lea.vmem %s0, 320
  %v3845 = vld [vmem:[%s3844] sm:$0xff]
  %v3846 = vld [vmem:[%s3844 + $0x8] sm:$0xff]
  %v3847 = vld [vmem:[%s3844 + $0x10] sm:$0xff]
  %v3848 = vld [vmem:[%s3844 + $0x18] sm:$0xff]
  %v3849 = vadd.f32 %v3845, %v3797
  %v3850 = vadd.f32 %v3846, %v3799
  %v3851 = vadd.f32 %v3847, %v3838
  %v3852 = vadd.f32 %v3848, %v3840
  %v3853 = vxor.u32 %v3849, 2147483648
  %v3854 = vxor.u32 %v3850, 2147483648
  %v3855 = vxor.u32 %v3851, 2147483648
  %v3856 = vmul.f32 %v3853, 1.442695
  %v3857 = vpow.pop %v3856
  %v3858 = vmul.f32 %v3854, 1.442695
  %v3859 = vpow.pop %v3858
  %v3860 = vmul.f32 %v3855, 1.442695
  %v3861 = vpow.pop %v3860
  %v3862 = vadd.f32 %v3857, 1.0
  %v3863 = vadd.f32 %v3859, 1.0
  %v3864 = vadd.f32 %v3861, 1.0
  %v3865 = vrcp.pop %v3862
  %v3866 = vmul.f32 1.0, %v3865
  %v3867 = vrcp.pop %v3863
  %v3868 = vmul.f32 1.0, %v3867
  %v3869 = vrcp.pop %v3864
  %v3870 = vmul.f32 1.0, %v3869
  %v3871 = vtanh.pop %v3852
  %v3872 = vmul.f32 %v3868, %v3563
  %v3873 = vmul.f32 %v3866, %v3871
  %v3874 = vadd.f32 %v3872, %v3873
  %v3875 = vtanh.pop %v3874
  %v3876 = vmul.f32 %v3870, %v3875
  %v3877 = vpack.c.bf16 %v3876, %v3876
  %3878 = vmatprep.subr.bf16.mxu0 %v525
  %3879 = vmatpush1.bf16.msra.mxu0 %v524
  %3880 = vmatprep.subr.bf16.mxu0 %v529
  %3881 = vmatpush1.bf16.msra.mxu0 %v528
  %3882 = vmatprep.subr.bf16.mxu0 %v533
  %3883 = vmatpush1.bf16.msra.mxu0 %v532
  %3884 = vmatprep.subr.bf16.mxu0 %v537
  %3885 = vmatpush1.bf16.msra.mxu0 %v536
  %3886 = vmatprep.subr.bf16.mxu0 %v541
  %3887 = vmatpush1.bf16.msra.mxu0 %v540
  %3888 = vmatprep.subr.bf16.mxu0 %v545
  %3889 = vmatpush1.bf16.msra.mxu0 %v544
  %3890 = vmatprep.subr.bf16.mxu0 %v549
  %3891 = vmatpush1.bf16.msra.mxu0 %v548
  %3892 = vmatprep.subr.bf16.mxu0 %v553
  %3893 = vmatpush1.bf16.msra.mxu0 %v552
  %3894 = vmatprep.subr.bf16.mxu0 0
  %3895 = vmatpush1.bf16.msra.mxu0 0
  %3896 = vmatprep.subr.bf16.mxu0 0
  %3897 = vmatpush1.bf16.msra.mxu0 0
  %3898 = vmatprep.subr.bf16.mxu0 0
  %3899 = vmatpush1.bf16.msra.mxu0 0
  %3900 = vmatprep.subr.bf16.mxu0 0
  %3901 = vmatpush1.bf16.msra.mxu0 0
  %3902 = vmatprep.subr.bf16.mxu0 0
  %3903 = vmatpush1.bf16.msra.mxu0 0
  %3904 = vmatprep.subr.bf16.mxu0 0
  %3905 = vmatpush1.bf16.msra.mxu0 0
  %3906 = vmatprep.subr.bf16.mxu0 0
  %3907 = vmatpush1.bf16.msra.mxu0 0
  %3908 = vmatprep.subr.bf16.mxu0 0
  %3909 = vmatpush1.bf16.msra.mxu0 0
  %3910 = vmatprep.mubr.bf16.mxu0 0
  %3911 = vmatmul.mubr.bf16.gmra.mrb[0].mxu0 %v3877
  %v3912 = vpop.f32.mrb[0].mxu0
  %v3913 = vadd.f32 0.0, %v3912
  %v3914 = vpop.f32.mrb[0].mxu0
  %v3915 = vadd.f32 0.0, %v3914
  %v3916 = vpop.f32.mrb[0].mxu0
  %v3917 = vpop.f32.mrb[0].mxu0
  %3918 = vdwg.mxu0
  %3919 = vmatprep.subr.bf16.mxu0 %v527
  %3920 = vmatpush1.bf16.msra.mxu0 %v526
  %3921 = vmatprep.subr.bf16.mxu0 %v531
  %3922 = vmatpush1.bf16.msra.mxu0 %v530
  %3923 = vmatprep.subr.bf16.mxu0 %v535
  %3924 = vmatpush1.bf16.msra.mxu0 %v534
  %3925 = vmatprep.subr.bf16.mxu0 %v539
  %3926 = vmatpush1.bf16.msra.mxu0 %v538
  %3927 = vmatprep.subr.bf16.mxu0 %v543
  %3928 = vmatpush1.bf16.msra.mxu0 %v542
  %3929 = vmatprep.subr.bf16.mxu0 %v547
  %3930 = vmatpush1.bf16.msra.mxu0 %v546
  %3931 = vmatprep.subr.bf16.mxu0 %v551
  %3932 = vmatpush1.bf16.msra.mxu0 %v550
  %3933 = vmatprep.subr.bf16.mxu0 %v555
  %3934 = vmatpush1.bf16.msra.mxu0 %v554
  %3935 = vmatprep.subr.bf16.mxu0 0
  %3936 = vmatpush1.bf16.msra.mxu0 0
  %3937 = vmatprep.subr.bf16.mxu0 0
  %3938 = vmatpush1.bf16.msra.mxu0 0
  %3939 = vmatprep.subr.bf16.mxu0 0
  %3940 = vmatpush1.bf16.msra.mxu0 0
  %3941 = vmatprep.subr.bf16.mxu0 0
  %3942 = vmatpush1.bf16.msra.mxu0 0
  %3943 = vmatprep.subr.bf16.mxu0 0
  %3944 = vmatpush1.bf16.msra.mxu0 0
  %3945 = vmatprep.subr.bf16.mxu0 0
  %3946 = vmatpush1.bf16.msra.mxu0 0
  %3947 = vmatprep.subr.bf16.mxu0 0
  %3948 = vmatpush1.bf16.msra.mxu0 0
  %3949 = vmatprep.subr.bf16.mxu0 0
  %3950 = vmatpush1.bf16.msra.mxu0 0
  %3951 = vmatprep.mubr.bf16.mxu0 0
  %3952 = vmatmul.mubr.bf16.gmra.mrb[0].mxu0 %v3877
  %v3953 = vpop.f32.mrb[0].mxu0
  %v3954 = vadd.f32 0.0, %v3953
  %v3955 = vpop.f32.mrb[0].mxu0
  %v3956 = vadd.f32 0.0, %v3955
  %v3957 = vpop.f32.mrb[0].mxu0
  %v3958 = vpop.f32.mrb[0].mxu0
  %3959 = vdwg.mxu0
  %3960 = vmatprep.subr.bf16.mxu0 %v767
  %3961 = vmatpush1.bf16.msra.mxu0 %v766
  %3962 = vmatprep.subr.bf16.mxu0 %v771
  %3963 = vmatpush1.bf16.msra.mxu0 %v770
  %3964 = vmatprep.subr.bf16.mxu0 %v775
  %3965 = vmatpush1.bf16.msra.mxu0 %v774
  %3966 = vmatprep.subr.bf16.mxu0 %v779
  %3967 = vmatpush1.bf16.msra.mxu0 %v778
  %3968 = vmatprep.subr.bf16.mxu0 %v783
  %3969 = vmatpush1.bf16.msra.mxu0 %v782
  %3970 = vmatprep.subr.bf16.mxu0 %v787
  %3971 = vmatpush1.bf16.msra.mxu0 %v786
  %3972 = vmatprep.subr.bf16.mxu0 %v791
  %3973 = vmatpush1.bf16.msra.mxu0 %v790
  %3974 = vmatprep.subr.bf16.mxu0 %v795
  %3975 = vmatpush1.bf16.msra.mxu0 %v794
  %3976 = vmatprep.subr.bf16.mxu0 0
  %3977 = vmatpush1.bf16.msra.mxu0 0
  %3978 = vmatprep.subr.bf16.mxu0 0
  %3979 = vmatpush1.bf16.msra.mxu0 0
  %3980 = vmatprep.subr.bf16.mxu0 0
  %3981 = vmatpush1.bf16.msra.mxu0 0
  %3982 = vmatprep.subr.bf16.mxu0 0
  %3983 = vmatpush1.bf16.msra.mxu0 0
  %3984 = vmatprep.subr.bf16.mxu0 0
  %3985 = vmatpush1.bf16.msra.mxu0 0
  %3986 = vmatprep.subr.bf16.mxu0 0
  %3987 = vmatpush1.bf16.msra.mxu0 0
  %3988 = vmatprep.subr.bf16.mxu0 0
  %3989 = vmatpush1.bf16.msra.mxu0 0
  %3990 = vmatprep.subr.bf16.mxu0 0
  %3991 = vmatpush1.bf16.msra.mxu0 0
  %3992 = vmatprep.mubr.bf16.mxu0 0
  %3993 = vmatmul.mubr.bf16.gmra.mrb[0].mxu0 %v3759
  %v3994 = vpop.f32.mrb[0].mxu0
  %v3995 = vadd.f32 %v3913, %v3994
  %v3996 = vpop.f32.mrb[0].mxu0
  %v3997 = vadd.f32 %v3915, %v3996
  %v3998 = vpop.f32.mrb[0].mxu0
  %v3999 = vpop.f32.mrb[0].mxu0
  %4000 = vdwg.mxu0
  %4001 = vmatprep.subr.bf16.mxu0 %v769
  %4002 = vmatpush1.bf16.msra.mxu0 %v768
  %4003 = vmatprep.subr.bf16.mxu0 %v773
  %4004 = vmatpush1.bf16.msra.mxu0 %v772
  %4005 = vmatprep.subr.bf16.mxu0 %v777
  %4006 = vmatpush1.bf16.msra.mxu0 %v776
  %4007 = vmatprep.subr.bf16.mxu0 %v781
  %4008 = vmatpush1.bf16.msra.mxu0 %v780
  %4009 = vmatprep.subr.bf16.mxu0 %v785
  %4010 = vmatpush1.bf16.msra.mxu0 %v784
  %4011 = vmatprep.subr.bf16.mxu0 %v789
  %4012 = vmatpush1.bf16.msra.mxu0 %v788
  %4013 = vmatprep.subr.bf16.mxu0 %v793
  %4014 = vmatpush1.bf16.msra.mxu0 %v792
  %4015 = vmatprep.subr.bf16.mxu0 %v797
  %4016 = vmatpush1.bf16.msra.mxu0 %v796
  %4017 = vmatprep.subr.bf16.mxu0 0
  %4018 = vmatpush1.bf16.msra.mxu0 0
  %4019 = vmatprep.subr.bf16.mxu0 0
  %4020 = vmatpush1.bf16.msra.mxu0 0
  %4021 = vmatprep.subr.bf16.mxu0 0
  %4022 = vmatpush1.bf16.msra.mxu0 0
  %4023 = vmatprep.subr.bf16.mxu0 0
  %4024 = vmatpush1.bf16.msra.mxu0 0
  %4025 = vmatprep.subr.bf16.mxu0 0
  %4026 = vmatpush1.bf16.msra.mxu0 0
  %4027 = vmatprep.subr.bf16.mxu0 0
  %4028 = vmatpush1.bf16.msra.mxu0 0
  %4029 = vmatprep.subr.bf16.mxu0 0
  %4030 = vmatpush1.bf16.msra.mxu0 0
  %4031 = vmatprep.subr.bf16.mxu0 0
  %4032 = vmatpush1.bf16.msra.mxu0 0
  %4033 = vmatprep.mubr.bf16.mxu0 0
  %4034 = vmatmul.mubr.bf16.gmra.mrb[0].mxu0 %v3759
  %v4035 = vpop.f32.mrb[0].mxu0
  %v4036 = vadd.f32 %v3954, %v4035
  %v4037 = vpop.f32.mrb[0].mxu0
  %v4038 = vadd.f32 %v3956, %v4037
  %v4039 = vpop.f32.mrb[0].mxu0
  %v4040 = vpop.f32.mrb[0].mxu0
  %4041 = vdwg.mxu0
  %v4042 = vadd.f32 %v3995, %v916
  %v4043 = vadd.f32 %v3997, %v920
  %v4044 = vadd.f32 %v4036, %v924
  %v4045 = vadd.f32 %v4038, %v928
  %v4046 = vxor.u32 %v4042, 2147483648
  %v4047 = vxor.u32 %v4043, 2147483648
  %v4048 = vxor.u32 %v4044, 2147483648
  %v4049 = vmul.f32 %v4046, 1.442695
  %v4050 = vpow.pop %v4049
  %v4051 = vmul.f32 %v4047, 1.442695
  %v4052 = vpow.pop %v4051
  %v4053 = vmul.f32 %v4048, 1.442695
  %v4054 = vpow.pop %v4053
  %v4055 = vadd.f32 %v4050, 1.0
  %v4056 = vadd.f32 %v4052, 1.0
  %v4057 = vadd.f32 %v4054, 1.0
  %v4058 = vrcp.pop %v4055
  %v4059 = vmul.f32 1.0, %v4058
  %v4060 = vrcp.pop %v4056
  %v4061 = vmul.f32 1.0, %v4060
  %v4062 = vrcp.pop %v4057
  %v4063 = vmul.f32 1.0, %v4062
  %v4064 = vtanh.pop %v4045
  %v4065 = vmul.f32 %v4061, %v3756
  %v4066 = vmul.f32 %v4059, %v4064
  %v4067 = vadd.f32 %v4065, %v4066
  %v4068 = vtanh.pop %v4067
  %v4069 = vmul.f32 %v4063, %v4068
  %v4070 = vpack.c.bf16 %v4069, %v4069
  %s4071 = scalar_lea.vmem %s9, 40
  %4072 = vst [vmem:[%s4071] sm:$0xf] %v4070
  %4073 = vmatprep.subr.bf16.mxu0 %v249
  %4074 = vmatpush1.bf16.msra.mxu0 %v248
  %4075 = vmatprep.subr.bf16.mxu0 %v253
  %4076 = vmatpush1.bf16.msra.mxu0 %v252
  %4077 = vmatprep.subr.bf16.mxu0 %v257
  %4078 = vmatpush1.bf16.msra.mxu0 %v256
  %4079 = vmatprep.subr.bf16.mxu0 %v261
  %4080 = vmatpush1.bf16.msra.mxu0 %v260
  %4081 = vmatprep.subr.bf16.mxu0 %v265
  %4082 = vmatpush1.bf16.msra.mxu0 %v264
  %4083 = vmatprep.subr.bf16.mxu0 %v269
  %4084 = vmatpush1.bf16.msra.mxu0 %v268
  %4085 = vmatprep.subr.bf16.mxu0 %v273
  %4086 = vmatpush1.bf16.msra.mxu0 %v272
  %4087 = vmatprep.subr.bf16.mxu0 %v277
  %4088 = vmatpush1.bf16.msra.mxu0 %v276
  %4089 = vmatprep.subr.bf16.mxu0 0
  %4090 = vmatpush1.bf16.msra.mxu0 0
  %4091 = vmatprep.subr.bf16.mxu0 0
  %4092 = vmatpush1.bf16.msra.mxu0 0
  %4093 = vmatprep.subr.bf16.mxu0 0
  %4094 = vmatpush1.bf16.msra.mxu0 0
  %4095 = vmatprep.subr.bf16.mxu0 0
  %4096 = vmatpush1.bf16.msra.mxu0 0
  %4097 = vmatprep.subr.bf16.mxu0 0
  %4098 = vmatpush1.bf16.msra.mxu0 0
  %4099 = vmatprep.subr.bf16.mxu0 0
  %4100 = vmatpush1.bf16.msra.mxu0 0
  %4101 = vmatprep.subr.bf16.mxu0 0
  %4102 = vmatpush1.bf16.msra.mxu0 0
  %4103 = vmatprep.subr.bf16.mxu0 0
  %4104 = vmatpush1.bf16.msra.mxu0 0
  %4105 = vmatprep.mubr.bf16.mxu0 0
  %4106 = vmatmul.mubr.bf16.gmra.mrb[0].mxu0 %v3877
  %v4107 = vpop.f32.mrb[0].mxu0
  %v4108 = vadd.f32 0.0, %v4107
  %v4109 = vpop.f32.mrb[0].mxu0
  %v4110 = vadd.f32 0.0, %v4109
  %v4111 = vpop.f32.mrb[0].mxu0
  %v4112 = vpop.f32.mrb[0].mxu0
  %4113 = vdwg.mxu0
  %4114 = vmatprep.subr.bf16.mxu0 %v251
  %4115 = vmatpush1.bf16.msra.mxu0 %v250
  %4116 = vmatprep.subr.bf16.mxu0 %v255
  %4117 = vmatpush1.bf16.msra.mxu0 %v254
  %4118 = vmatprep.subr.bf16.mxu0 %v259
  %4119 = vmatpush1.bf16.msra.mxu0 %v258
  %4120 = vmatprep.subr.bf16.mxu0 %v263
  %4121 = vmatpush1.bf16.msra.mxu0 %v262
  %4122 = vmatprep.subr.bf16.mxu0 %v267
  %4123 = vmatpush1.bf16.msra.mxu0 %v266
  %4124 = vmatprep.subr.bf16.mxu0 %v271
  %4125 = vmatpush1.bf16.msra.mxu0 %v270
  %4126 = vmatprep.subr.bf16.mxu0 %v275
  %4127 = vmatpush1.bf16.msra.mxu0 %v274
  %4128 = vmatprep.subr.bf16.mxu0 %v279
  %4129 = vmatpush1.bf16.msra.mxu0 %v278
  %4130 = vmatprep.subr.bf16.mxu0 0
  %4131 = vmatpush1.bf16.msra.mxu0 0
  %4132 = vmatprep.subr.bf16.mxu0 0
  %4133 = vmatpush1.bf16.msra.mxu0 0
  %4134 = vmatprep.subr.bf16.mxu0 0
  %4135 = vmatpush1.bf16.msra.mxu0 0
  %4136 = vmatprep.subr.bf16.mxu0 0
  %4137 = vmatpush1.bf16.msra.mxu0 0
  %4138 = vmatprep.subr.bf16.mxu0 0
  %4139 = vmatpush1.bf16.msra.mxu0 0
  %4140 = vmatprep.subr.bf16.mxu0 0
  %4141 = vmatpush1.bf16.msra.mxu0 0
  %4142 = vmatprep.subr.bf16.mxu0 0
  %4143 = vmatpush1.bf16.msra.mxu0 0
  %4144 = vmatprep.subr.bf16.mxu0 0
  %4145 = vmatpush1.bf16.msra.mxu0 0
  %4146 = vmatprep.mubr.bf16.mxu0 0
  %4147 = vmatmul.mubr.bf16.gmra.mrb[0].mxu0 %v3877
  %v4148 = vpop.f32.mrb[0].mxu0
  %v4149 = vadd.f32 0.0, %v4148
  %v4150 = vpop.f32.mrb[0].mxu0
  %v4151 = vadd.f32 0.0, %v4150
  %v4152 = vpop.f32.mrb[0].mxu0
  %v4153 = vpop.f32.mrb[0].mxu0
  %4154 = vdwg.mxu0
  %s4155 = scalar_lea.vmem %s0, 352
  %v4156 = vld [vmem:[%s4155] sm:$0xff]
  %v4157 = vld [vmem:[%s4155 + $0x8] sm:$0xff]
  %v4158 = vld [vmem:[%s4155 + $0x10] sm:$0xff]
  %v4159 = vld [vmem:[%s4155 + $0x18] sm:$0xff]
  %v4160 = vadd.f32 %v4156, %v4108
  %v4161 = vadd.f32 %v4157, %v4110
  %v4162 = vadd.f32 %v4158, %v4149
  %v4163 = vadd.f32 %v4159, %v4151
  %v4164 = vxor.u32 %v4160, 2147483648
  %v4165 = vxor.u32 %v4161, 2147483648
  %v4166 = vxor.u32 %v4162, 2147483648
  %v4167 = vmul.f32 %v4164, 1.442695
  %v4168 = vpow.pop %v4167
  %v4169 = vmul.f32 %v4165, 1.442695
  %v4170 = vpow.pop %v4169
  %v4171 = vmul.f32 %v4166, 1.442695
  %v4172 = vpow.pop %v4171
  %v4173 = vadd.f32 %v4168, 1.0
  %v4174 = vadd.f32 %v4170, 1.0
  %v4175 = vadd.f32 %v4172, 1.0
  %v4176 = vrcp.pop %v4173
  %v4177 = vmul.f32 1.0, %v4176
  %v4178 = vrcp.pop %v4174
  %v4179 = vmul.f32 1.0, %v4178
  %v4180 = vrcp.pop %v4175
  %v4181 = vmul.f32 1.0, %v4180
  %v4182 = vtanh.pop %v4163
  %v4183 = vmul.f32 %v4179, %v3874
  %v4184 = vmul.f32 %v4177, %v4182
  %v4185 = vadd.f32 %v4183, %v4184
  %v4186 = vtanh.pop %v4185
  %v4187 = vmul.f32 %v4181, %v4186
  %v4188 = vpack.c.bf16 %v4187, %v4187
  %4189 = vmatprep.subr.bf16.mxu0 %v525
  %4190 = vmatpush1.bf16.msra.mxu0 %v524
  %4191 = vmatprep.subr.bf16.mxu0 %v529
  %4192 = vmatpush1.bf16.msra.mxu0 %v528
  %4193 = vmatprep.subr.bf16.mxu0 %v533
  %4194 = vmatpush1.bf16.msra.mxu0 %v532
  %4195 = vmatprep.subr.bf16.mxu0 %v537
  %4196 = vmatpush1.bf16.msra.mxu0 %v536
  %4197 = vmatprep.subr.bf16.mxu0 %v541
  %4198 = vmatpush1.bf16.msra.mxu0 %v540
  %4199 = vmatprep.subr.bf16.mxu0 %v545
  %4200 = vmatpush1.bf16.msra.mxu0 %v544
  %4201 = vmatprep.subr.bf16.mxu0 %v549
  %4202 = vmatpush1.bf16.msra.mxu0 %v548
  %4203 = vmatprep.subr.bf16.mxu0 %v553
  %4204 = vmatpush1.bf16.msra.mxu0 %v552
  %4205 = vmatprep.subr.bf16.mxu0 0
  %4206 = vmatpush1.bf16.msra.mxu0 0
  %4207 = vmatprep.subr.bf16.mxu0 0
  %4208 = vmatpush1.bf16.msra.mxu0 0
  %4209 = vmatprep.subr.bf16.mxu0 0
  %4210 = vmatpush1.bf16.msra.mxu0 0
  %4211 = vmatprep.subr.bf16.mxu0 0
  %4212 = vmatpush1.bf16.msra.mxu0 0
  %4213 = vmatprep.subr.bf16.mxu0 0
  %4214 = vmatpush1.bf16.msra.mxu0 0
  %4215 = vmatprep.subr.bf16.mxu0 0
  %4216 = vmatpush1.bf16.msra.mxu0 0
  %4217 = vmatprep.subr.bf16.mxu0 0
  %4218 = vmatpush1.bf16.msra.mxu0 0
  %4219 = vmatprep.subr.bf16.mxu0 0
  %4220 = vmatpush1.bf16.msra.mxu0 0
  %4221 = vmatprep.mubr.bf16.mxu0 0
  %4222 = vmatmul.mubr.bf16.gmra.mrb[0].mxu0 %v4188
  %v4223 = vpop.f32.mrb[0].mxu0
  %v4224 = vadd.f32 0.0, %v4223
  %v4225 = vpop.f32.mrb[0].mxu0
  %v4226 = vadd.f32 0.0, %v4225
  %v4227 = vpop.f32.mrb[0].mxu0
  %v4228 = vpop.f32.mrb[0].mxu0
  %4229 = vdwg.mxu0
  %4230 = vmatprep.subr.bf16.mxu0 %v527
  %4231 = vmatpush1.bf16.msra.mxu0 %v526
  %4232 = vmatprep.subr.bf16.mxu0 %v531
  %4233 = vmatpush1.bf16.msra.mxu0 %v530
  %4234 = vmatprep.subr.bf16.mxu0 %v535
  %4235 = vmatpush1.bf16.msra.mxu0 %v534
  %4236 = vmatprep.subr.bf16.mxu0 %v539
  %4237 = vmatpush1.bf16.msra.mxu0 %v538
  %4238 = vmatprep.subr.bf16.mxu0 %v543
  %4239 = vmatpush1.bf16.msra.mxu0 %v542
  %4240 = vmatprep.subr.bf16.mxu0 %v547
  %4241 = vmatpush1.bf16.msra.mxu0 %v546
  %4242 = vmatprep.subr.bf16.mxu0 %v551
  %4243 = vmatpush1.bf16.msra.mxu0 %v550
  %4244 = vmatprep.subr.bf16.mxu0 %v555
  %4245 = vmatpush1.bf16.msra.mxu0 %v554
  %4246 = vmatprep.subr.bf16.mxu0 0
  %4247 = vmatpush1.bf16.msra.mxu0 0
  %4248 = vmatprep.subr.bf16.mxu0 0
  %4249 = vmatpush1.bf16.msra.mxu0 0
  %4250 = vmatprep.subr.bf16.mxu0 0
  %4251 = vmatpush1.bf16.msra.mxu0 0
  %4252 = vmatprep.subr.bf16.mxu0 0
  %4253 = vmatpush1.bf16.msra.mxu0 0
  %4254 = vmatprep.subr.bf16.mxu0 0
  %4255 = vmatpush1.bf16.msra.mxu0 0
  %4256 = vmatprep.subr.bf16.mxu0 0
  %4257 = vmatpush1.bf16.msra.mxu0 0
  %4258 = vmatprep.subr.bf16.mxu0 0
  %4259 = vmatpush1.bf16.msra.mxu0 0
  %4260 = vmatprep.subr.bf16.mxu0 0
  %4261 = vmatpush1.bf16.msra.mxu0 0
  %4262 = vmatprep.mubr.bf16.mxu0 0
  %4263 = vmatmul.mubr.bf16.gmra.mrb[0].mxu0 %v4188
  %v4264 = vpop.f32.mrb[0].mxu0
  %v4265 = vadd.f32 0.0, %v4264
  %v4266 = vpop.f32.mrb[0].mxu0
  %v4267 = vadd.f32 0.0, %v4266
  %v4268 = vpop.f32.mrb[0].mxu0
  %v4269 = vpop.f32.mrb[0].mxu0
  %4270 = vdwg.mxu0
  %4271 = vmatprep.subr.bf16.mxu0 %v767
  %4272 = vmatpush1.bf16.msra.mxu0 %v766
  %4273 = vmatprep.subr.bf16.mxu0 %v771
  %4274 = vmatpush1.bf16.msra.mxu0 %v770
  %4275 = vmatprep.subr.bf16.mxu0 %v775
  %4276 = vmatpush1.bf16.msra.mxu0 %v774
  %4277 = vmatprep.subr.bf16.mxu0 %v779
  %4278 = vmatpush1.bf16.msra.mxu0 %v778
  %4279 = vmatprep.subr.bf16.mxu0 %v783
  %4280 = vmatpush1.bf16.msra.mxu0 %v782
  %4281 = vmatprep.subr.bf16.mxu0 %v787
  %4282 = vmatpush1.bf16.msra.mxu0 %v786
  %4283 = vmatprep.subr.bf16.mxu0 %v791
  %4284 = vmatpush1.bf16.msra.mxu0 %v790
  %4285 = vmatprep.subr.bf16.mxu0 %v795
  %4286 = vmatpush1.bf16.msra.mxu0 %v794
  %4287 = vmatprep.subr.bf16.mxu0 0
  %4288 = vmatpush1.bf16.msra.mxu0 0
  %4289 = vmatprep.subr.bf16.mxu0 0
  %4290 = vmatpush1.bf16.msra.mxu0 0
  %4291 = vmatprep.subr.bf16.mxu0 0
  %4292 = vmatpush1.bf16.msra.mxu0 0
  %4293 = vmatprep.subr.bf16.mxu0 0
  %4294 = vmatpush1.bf16.msra.mxu0 0
  %4295 = vmatprep.subr.bf16.mxu0 0
  %4296 = vmatpush1.bf16.msra.mxu0 0
  %4297 = vmatprep.subr.bf16.mxu0 0
  %4298 = vmatpush1.bf16.msra.mxu0 0
  %4299 = vmatprep.subr.bf16.mxu0 0
  %4300 = vmatpush1.bf16.msra.mxu0 0
  %4301 = vmatprep.subr.bf16.mxu0 0
  %4302 = vmatpush1.bf16.msra.mxu0 0
  %4303 = vmatprep.mubr.bf16.mxu0 0
  %4304 = vmatmul.mubr.bf16.gmra.mrb[0].mxu0 %v4070
  %v4305 = vpop.f32.mrb[0].mxu0
  %v4306 = vadd.f32 %v4224, %v4305
  %v4307 = vpop.f32.mrb[0].mxu0
  %v4308 = vadd.f32 %v4226, %v4307
  %v4309 = vpop.f32.mrb[0].mxu0
  %v4310 = vpop.f32.mrb[0].mxu0
  %4311 = vdwg.mxu0
  %4312 = vmatprep.subr.bf16.mxu0 %v769
  %4313 = vmatpush1.bf16.msra.mxu0 %v768
  %4314 = vmatprep.subr.bf16.mxu0 %v773
  %4315 = vmatpush1.bf16.msra.mxu0 %v772
  %4316 = vmatprep.subr.bf16.mxu0 %v777
  %4317 = vmatpush1.bf16.msra.mxu0 %v776
  %4318 = vmatprep.subr.bf16.mxu0 %v781
  %4319 = vmatpush1.bf16.msra.mxu0 %v780
  %4320 = vmatprep.subr.bf16.mxu0 %v785
  %4321 = vmatpush1.bf16.msra.mxu0 %v784
  %4322 = vmatprep.subr.bf16.mxu0 %v789
  %4323 = vmatpush1.bf16.msra.mxu0 %v788
  %4324 = vmatprep.subr.bf16.mxu0 %v793
  %4325 = vmatpush1.bf16.msra.mxu0 %v792
  %4326 = vmatprep.subr.bf16.mxu0 %v797
  %4327 = vmatpush1.bf16.msra.mxu0 %v796
  %4328 = vmatprep.subr.bf16.mxu0 0
  %4329 = vmatpush1.bf16.msra.mxu0 0
  %4330 = vmatprep.subr.bf16.mxu0 0
  %4331 = vmatpush1.bf16.msra.mxu0 0
  %4332 = vmatprep.subr.bf16.mxu0 0
  %4333 = vmatpush1.bf16.msra.mxu0 0
  %4334 = vmatprep.subr.bf16.mxu0 0
  %4335 = vmatpush1.bf16.msra.mxu0 0
  %4336 = vmatprep.subr.bf16.mxu0 0
  %4337 = vmatpush1.bf16.msra.mxu0 0
  %4338 = vmatprep.subr.bf16.mxu0 0
  %4339 = vmatpush1.bf16.msra.mxu0 0
  %4340 = vmatprep.subr.bf16.mxu0 0
  %4341 = vmatpush1.bf16.msra.mxu0 0
  %4342 = vmatprep.subr.bf16.mxu0 0
  %4343 = vmatpush1.bf16.msra.mxu0 0
  %4344 = vmatprep.mubr.bf16.mxu0 0
  %4345 = vmatmul.mubr.bf16.gmra.mrb[0].mxu0 %v4070
  %v4346 = vpop.f32.mrb[0].mxu0
  %v4347 = vadd.f32 %v4265, %v4346
  %v4348 = vpop.f32.mrb[0].mxu0
  %v4349 = vadd.f32 %v4267, %v4348
  %v4350 = vpop.f32.mrb[0].mxu0
  %v4351 = vpop.f32.mrb[0].mxu0
  %4352 = vdwg.mxu0
  %v4353 = vadd.f32 %v4306, %v916
  %v4354 = vadd.f32 %v4308, %v920
  %v4355 = vadd.f32 %v4347, %v924
  %v4356 = vadd.f32 %v4349, %v928
  %v4357 = vxor.u32 %v4353, 2147483648
  %v4358 = vxor.u32 %v4354, 2147483648
  %v4359 = vxor.u32 %v4355, 2147483648
  %v4360 = vmul.f32 %v4357, 1.442695
  %v4361 = vpow.pop %v4360
  %v4362 = vmul.f32 %v4358, 1.442695
  %v4363 = vpow.pop %v4362
  %v4364 = vmul.f32 %v4359, 1.442695
  %v4365 = vpow.pop %v4364
  %v4366 = vadd.f32 %v4361, 1.0
  %v4367 = vadd.f32 %v4363, 1.0
  %v4368 = vadd.f32 %v4365, 1.0
  %v4369 = vrcp.pop %v4366
  %v4370 = vmul.f32 1.0, %v4369
  %v4371 = vrcp.pop %v4367
  %v4372 = vmul.f32 1.0, %v4371
  %v4373 = vrcp.pop %v4368
  %v4374 = vmul.f32 1.0, %v4373
  %v4375 = vtanh.pop %v4356
  %v4376 = vmul.f32 %v4372, %v4067
  %v4377 = vmul.f32 %v4370, %v4375
  %v4378 = vadd.f32 %v4376, %v4377
  %v4379 = vtanh.pop %v4378
  %v4380 = vmul.f32 %v4374, %v4379
  %v4381 = vpack.c.bf16 %v4380, %v4380
  %s4382 = scalar_lea.vmem %s9, 44
  %4383 = vst [vmem:[%s4382] sm:$0xf] %v4381
  %4384 = vmatprep.subr.bf16.mxu0 %v249
  %4385 = vmatpush1.bf16.msra.mxu0 %v248
  %4386 = vmatprep.subr.bf16.mxu0 %v253
  %4387 = vmatpush1.bf16.msra.mxu0 %v252
  %4388 = vmatprep.subr.bf16.mxu0 %v257
  %4389 = vmatpush1.bf16.msra.mxu0 %v256
  %4390 = vmatprep.subr.bf16.mxu0 %v261
  %4391 = vmatpush1.bf16.msra.mxu0 %v260
  %4392 = vmatprep.subr.bf16.mxu0 %v265
  %4393 = vmatpush1.bf16.msra.mxu0 %v264
  %4394 = vmatprep.subr.bf16.mxu0 %v269
  %4395 = vmatpush1.bf16.msra.mxu0 %v268
  %4396 = vmatprep.subr.bf16.mxu0 %v273
  %4397 = vmatpush1.bf16.msra.mxu0 %v272
  %4398 = vmatprep.subr.bf16.mxu0 %v277
  %4399 = vmatpush1.bf16.msra.mxu0 %v276
  %4400 = vmatprep.subr.bf16.mxu0 0
  %4401 = vmatpush1.bf16.msra.mxu0 0
  %4402 = vmatprep.subr.bf16.mxu0 0
  %4403 = vmatpush1.bf16.msra.mxu0 0
  %4404 = vmatprep.subr.bf16.mxu0 0
  %4405 = vmatpush1.bf16.msra.mxu0 0
  %4406 = vmatprep.subr.bf16.mxu0 0
  %4407 = vmatpush1.bf16.msra.mxu0 0
  %4408 = vmatprep.subr.bf16.mxu0 0
  %4409 = vmatpush1.bf16.msra.mxu0 0
  %4410 = vmatprep.subr.bf16.mxu0 0
  %4411 = vmatpush1.bf16.msra.mxu0 0
  %4412 = vmatprep.subr.bf16.mxu0 0
  %4413 = vmatpush1.bf16.msra.mxu0 0
  %4414 = vmatprep.subr.bf16.mxu0 0
  %4415 = vmatpush1.bf16.msra.mxu0 0
  %4416 = vmatprep.mubr.bf16.mxu0 0
  %4417 = vmatmul.mubr.bf16.gmra.mrb[0].mxu0 %v4188
  %v4418 = vpop.f32.mrb[0].mxu0
  %v4419 = vadd.f32 0.0, %v4418
  %v4420 = vpop.f32.mrb[0].mxu0
  %v4421 = vadd.f32 0.0, %v4420
  %v4422 = vpop.f32.mrb[0].mxu0
  %v4423 = vpop.f32.mrb[0].mxu0
  %4424 = vdwg.mxu0
  %4425 = vmatprep.subr.bf16.mxu0 %v251
  %4426 = vmatpush1.bf16.msra.mxu0 %v250
  %4427 = vmatprep.subr.bf16.mxu0 %v255
  %4428 = vmatpush1.bf16.msra.mxu0 %v254
  %4429 = vmatprep.subr.bf16.mxu0 %v259
  %4430 = vmatpush1.bf16.msra.mxu0 %v258
  %4431 = vmatprep.subr.bf16.mxu0 %v263
  %4432 = vmatpush1.bf16.msra.mxu0 %v262
  %4433 = vmatprep.subr.bf16.mxu0 %v267
  %4434 = vmatpush1.bf16.msra.mxu0 %v266
  %4435 = vmatprep.subr.bf16.mxu0 %v271
  %4436 = vmatpush1.bf16.msra.mxu0 %v270
  %4437 = vmatprep.subr.bf16.mxu0 %v275
  %4438 = vmatpush1.bf16.msra.mxu0 %v274
  %4439 = vmatprep.subr.bf16.mxu0 %v279
  %4440 = vmatpush1.bf16.msra.mxu0 %v278
  %4441 = vmatprep.subr.bf16.mxu0 0
  %4442 = vmatpush1.bf16.msra.mxu0 0
  %4443 = vmatprep.subr.bf16.mxu0 0
  %4444 = vmatpush1.bf16.msra.mxu0 0
  %4445 = vmatprep.subr.bf16.mxu0 0
  %4446 = vmatpush1.bf16.msra.mxu0 0
  %4447 = vmatprep.subr.bf16.mxu0 0
  %4448 = vmatpush1.bf16.msra.mxu0 0
  %4449 = vmatprep.subr.bf16.mxu0 0
  %4450 = vmatpush1.bf16.msra.mxu0 0
  %4451 = vmatprep.subr.bf16.mxu0 0
  %4452 = vmatpush1.bf16.msra.mxu0 0
  %4453 = vmatprep.subr.bf16.mxu0 0
  %4454 = vmatpush1.bf16.msra.mxu0 0
  %4455 = vmatprep.subr.bf16.mxu0 0
  %4456 = vmatpush1.bf16.msra.mxu0 0
  %4457 = vmatprep.mubr.bf16.mxu0 0
  %4458 = vmatmul.mubr.bf16.gmra.mrb[0].mxu0 %v4188
  %v4459 = vpop.f32.mrb[0].mxu0
  %v4460 = vadd.f32 0.0, %v4459
  %v4461 = vpop.f32.mrb[0].mxu0
  %v4462 = vadd.f32 0.0, %v4461
  %v4463 = vpop.f32.mrb[0].mxu0
  %v4464 = vpop.f32.mrb[0].mxu0
  %4465 = vdwg.mxu0
  %s4466 = scalar_lea.vmem %s0, 384
  %v4467 = vld [vmem:[%s4466] sm:$0xff]
  %v4468 = vld [vmem:[%s4466 + $0x8] sm:$0xff]
  %v4469 = vld [vmem:[%s4466 + $0x10] sm:$0xff]
  %v4470 = vld [vmem:[%s4466 + $0x18] sm:$0xff]
  %v4471 = vadd.f32 %v4467, %v4419
  %v4472 = vadd.f32 %v4468, %v4421
  %v4473 = vadd.f32 %v4469, %v4460
  %v4474 = vadd.f32 %v4470, %v4462
  %v4475 = vxor.u32 %v4471, 2147483648
  %v4476 = vxor.u32 %v4472, 2147483648
  %v4477 = vxor.u32 %v4473, 2147483648
  %v4478 = vmul.f32 %v4475, 1.442695
  %v4479 = vpow.pop %v4478
  %v4480 = vmul.f32 %v4476, 1.442695
  %v4481 = vpow.pop %v4480
  %v4482 = vmul.f32 %v4477, 1.442695
  %v4483 = vpow.pop %v4482
  %v4484 = vadd.f32 %v4479, 1.0
  %v4485 = vadd.f32 %v4481, 1.0
  %v4486 = vadd.f32 %v4483, 1.0
  %v4487 = vrcp.pop %v4484
  %v4488 = vmul.f32 1.0, %v4487
  %v4489 = vrcp.pop %v4485
  %v4490 = vmul.f32 1.0, %v4489
  %v4491 = vrcp.pop %v4486
  %v4492 = vmul.f32 1.0, %v4491
  %v4493 = vtanh.pop %v4474
  %v4494 = vmul.f32 %v4490, %v4185
  %v4495 = vmul.f32 %v4488, %v4493
  %v4496 = vadd.f32 %v4494, %v4495
  %v4497 = vtanh.pop %v4496
  %v4498 = vmul.f32 %v4492, %v4497
  %v4499 = vpack.c.bf16 %v4498, %v4498
  %4500 = vmatprep.subr.bf16.mxu0 %v525
  %4501 = vmatpush1.bf16.msra.mxu0 %v524
  %4502 = vmatprep.subr.bf16.mxu0 %v529
  %4503 = vmatpush1.bf16.msra.mxu0 %v528
  %4504 = vmatprep.subr.bf16.mxu0 %v533
  %4505 = vmatpush1.bf16.msra.mxu0 %v532
  %4506 = vmatprep.subr.bf16.mxu0 %v537
  %4507 = vmatpush1.bf16.msra.mxu0 %v536
  %4508 = vmatprep.subr.bf16.mxu0 %v541
  %4509 = vmatpush1.bf16.msra.mxu0 %v540
  %4510 = vmatprep.subr.bf16.mxu0 %v545
  %4511 = vmatpush1.bf16.msra.mxu0 %v544
  %4512 = vmatprep.subr.bf16.mxu0 %v549
  %4513 = vmatpush1.bf16.msra.mxu0 %v548
  %4514 = vmatprep.subr.bf16.mxu0 %v553
  %4515 = vmatpush1.bf16.msra.mxu0 %v552
  %4516 = vmatprep.subr.bf16.mxu0 0
  %4517 = vmatpush1.bf16.msra.mxu0 0
  %4518 = vmatprep.subr.bf16.mxu0 0
  %4519 = vmatpush1.bf16.msra.mxu0 0
  %4520 = vmatprep.subr.bf16.mxu0 0
  %4521 = vmatpush1.bf16.msra.mxu0 0
  %4522 = vmatprep.subr.bf16.mxu0 0
  %4523 = vmatpush1.bf16.msra.mxu0 0
  %4524 = vmatprep.subr.bf16.mxu0 0
  %4525 = vmatpush1.bf16.msra.mxu0 0
  %4526 = vmatprep.subr.bf16.mxu0 0
  %4527 = vmatpush1.bf16.msra.mxu0 0
  %4528 = vmatprep.subr.bf16.mxu0 0
  %4529 = vmatpush1.bf16.msra.mxu0 0
  %4530 = vmatprep.subr.bf16.mxu0 0
  %4531 = vmatpush1.bf16.msra.mxu0 0
  %4532 = vmatprep.mubr.bf16.mxu0 0
  %4533 = vmatmul.mubr.bf16.gmra.mrb[0].mxu0 %v4499
  %v4534 = vpop.f32.mrb[0].mxu0
  %v4535 = vadd.f32 0.0, %v4534
  %v4536 = vpop.f32.mrb[0].mxu0
  %v4537 = vadd.f32 0.0, %v4536
  %v4538 = vpop.f32.mrb[0].mxu0
  %v4539 = vpop.f32.mrb[0].mxu0
  %4540 = vdwg.mxu0
  %4541 = vmatprep.subr.bf16.mxu0 %v527
  %4542 = vmatpush1.bf16.msra.mxu0 %v526
  %4543 = vmatprep.subr.bf16.mxu0 %v531
  %4544 = vmatpush1.bf16.msra.mxu0 %v530
  %4545 = vmatprep.subr.bf16.mxu0 %v535
  %4546 = vmatpush1.bf16.msra.mxu0 %v534
  %4547 = vmatprep.subr.bf16.mxu0 %v539
  %4548 = vmatpush1.bf16.msra.mxu0 %v538
  %4549 = vmatprep.subr.bf16.mxu0 %v543
  %4550 = vmatpush1.bf16.msra.mxu0 %v542
  %4551 = vmatprep.subr.bf16.mxu0 %v547
  %4552 = vmatpush1.bf16.msra.mxu0 %v546
  %4553 = vmatprep.subr.bf16.mxu0 %v551
  %4554 = vmatpush1.bf16.msra.mxu0 %v550
  %4555 = vmatprep.subr.bf16.mxu0 %v555
  %4556 = vmatpush1.bf16.msra.mxu0 %v554
  %4557 = vmatprep.subr.bf16.mxu0 0
  %4558 = vmatpush1.bf16.msra.mxu0 0
  %4559 = vmatprep.subr.bf16.mxu0 0
  %4560 = vmatpush1.bf16.msra.mxu0 0
  %4561 = vmatprep.subr.bf16.mxu0 0
  %4562 = vmatpush1.bf16.msra.mxu0 0
  %4563 = vmatprep.subr.bf16.mxu0 0
  %4564 = vmatpush1.bf16.msra.mxu0 0
  %4565 = vmatprep.subr.bf16.mxu0 0
  %4566 = vmatpush1.bf16.msra.mxu0 0
  %4567 = vmatprep.subr.bf16.mxu0 0
  %4568 = vmatpush1.bf16.msra.mxu0 0
  %4569 = vmatprep.subr.bf16.mxu0 0
  %4570 = vmatpush1.bf16.msra.mxu0 0
  %4571 = vmatprep.subr.bf16.mxu0 0
  %4572 = vmatpush1.bf16.msra.mxu0 0
  %4573 = vmatprep.mubr.bf16.mxu0 0
  %4574 = vmatmul.mubr.bf16.gmra.mrb[0].mxu0 %v4499
  %v4575 = vpop.f32.mrb[0].mxu0
  %v4576 = vadd.f32 0.0, %v4575
  %v4577 = vpop.f32.mrb[0].mxu0
  %v4578 = vadd.f32 0.0, %v4577
  %v4579 = vpop.f32.mrb[0].mxu0
  %v4580 = vpop.f32.mrb[0].mxu0
  %4581 = vdwg.mxu0
  %4582 = vmatprep.subr.bf16.mxu0 %v767
  %4583 = vmatpush1.bf16.msra.mxu0 %v766
  %4584 = vmatprep.subr.bf16.mxu0 %v771
  %4585 = vmatpush1.bf16.msra.mxu0 %v770
  %4586 = vmatprep.subr.bf16.mxu0 %v775
  %4587 = vmatpush1.bf16.msra.mxu0 %v774
  %4588 = vmatprep.subr.bf16.mxu0 %v779
  %4589 = vmatpush1.bf16.msra.mxu0 %v778
  %4590 = vmatprep.subr.bf16.mxu0 %v783
  %4591 = vmatpush1.bf16.msra.mxu0 %v782
  %4592 = vmatprep.subr.bf16.mxu0 %v787
  %4593 = vmatpush1.bf16.msra.mxu0 %v786
  %4594 = vmatprep.subr.bf16.mxu0 %v791
  %4595 = vmatpush1.bf16.msra.mxu0 %v790
  %4596 = vmatprep.subr.bf16.mxu0 %v795
  %4597 = vmatpush1.bf16.msra.mxu0 %v794
  %4598 = vmatprep.subr.bf16.mxu0 0
  %4599 = vmatpush1.bf16.msra.mxu0 0
  %4600 = vmatprep.subr.bf16.mxu0 0
  %4601 = vmatpush1.bf16.msra.mxu0 0
  %4602 = vmatprep.subr.bf16.mxu0 0
  %4603 = vmatpush1.bf16.msra.mxu0 0
  %4604 = vmatprep.subr.bf16.mxu0 0
  %4605 = vmatpush1.bf16.msra.mxu0 0
  %4606 = vmatprep.subr.bf16.mxu0 0
  %4607 = vmatpush1.bf16.msra.mxu0 0
  %4608 = vmatprep.subr.bf16.mxu0 0
  %4609 = vmatpush1.bf16.msra.mxu0 0
  %4610 = vmatprep.subr.bf16.mxu0 0
  %4611 = vmatpush1.bf16.msra.mxu0 0
  %4612 = vmatprep.subr.bf16.mxu0 0
  %4613 = vmatpush1.bf16.msra.mxu0 0
  %4614 = vmatprep.mubr.bf16.mxu0 0
  %4615 = vmatmul.mubr.bf16.gmra.mrb[0].mxu0 %v4381
  %v4616 = vpop.f32.mrb[0].mxu0
  %v4617 = vadd.f32 %v4535, %v4616
  %v4618 = vpop.f32.mrb[0].mxu0
  %v4619 = vadd.f32 %v4537, %v4618
  %v4620 = vpop.f32.mrb[0].mxu0
  %v4621 = vpop.f32.mrb[0].mxu0
  %4622 = vdwg.mxu0
  %4623 = vmatprep.subr.bf16.mxu0 %v769
  %4624 = vmatpush1.bf16.msra.mxu0 %v768
  %4625 = vmatprep.subr.bf16.mxu0 %v773
  %4626 = vmatpush1.bf16.msra.mxu0 %v772
  %4627 = vmatprep.subr.bf16.mxu0 %v777
  %4628 = vmatpush1.bf16.msra.mxu0 %v776
  %4629 = vmatprep.subr.bf16.mxu0 %v781
  %4630 = vmatpush1.bf16.msra.mxu0 %v780
  %4631 = vmatprep.subr.bf16.mxu0 %v785
  %4632 = vmatpush1.bf16.msra.mxu0 %v784
  %4633 = vmatprep.subr.bf16.mxu0 %v789
  %4634 = vmatpush1.bf16.msra.mxu0 %v788
  %4635 = vmatprep.subr.bf16.mxu0 %v793
  %4636 = vmatpush1.bf16.msra.mxu0 %v792
  %4637 = vmatprep.subr.bf16.mxu0 %v797
  %4638 = vmatpush1.bf16.msra.mxu0 %v796
  %4639 = vmatprep.subr.bf16.mxu0 0
  %4640 = vmatpush1.bf16.msra.mxu0 0
  %4641 = vmatprep.subr.bf16.mxu0 0
  %4642 = vmatpush1.bf16.msra.mxu0 0
  %4643 = vmatprep.subr.bf16.mxu0 0
  %4644 = vmatpush1.bf16.msra.mxu0 0
  %4645 = vmatprep.subr.bf16.mxu0 0
  %4646 = vmatpush1.bf16.msra.mxu0 0
  %4647 = vmatprep.subr.bf16.mxu0 0
  %4648 = vmatpush1.bf16.msra.mxu0 0
  %4649 = vmatprep.subr.bf16.mxu0 0
  %4650 = vmatpush1.bf16.msra.mxu0 0
  %4651 = vmatprep.subr.bf16.mxu0 0
  %4652 = vmatpush1.bf16.msra.mxu0 0
  %4653 = vmatprep.subr.bf16.mxu0 0
  %4654 = vmatpush1.bf16.msra.mxu0 0
  %4655 = vmatprep.mubr.bf16.mxu0 0
  %4656 = vmatmul.mubr.bf16.gmra.mrb[0].mxu0 %v4381
  %v4657 = vpop.f32.mrb[0].mxu0
  %v4658 = vadd.f32 %v4576, %v4657
  %v4659 = vpop.f32.mrb[0].mxu0
  %v4660 = vadd.f32 %v4578, %v4659
  %v4661 = vpop.f32.mrb[0].mxu0
  %v4662 = vpop.f32.mrb[0].mxu0
  %4663 = vdwg.mxu0
  %v4664 = vadd.f32 %v4617, %v916
  %v4665 = vadd.f32 %v4619, %v920
  %v4666 = vadd.f32 %v4658, %v924
  %v4667 = vadd.f32 %v4660, %v928
  %v4668 = vxor.u32 %v4664, 2147483648
  %v4669 = vxor.u32 %v4665, 2147483648
  %v4670 = vxor.u32 %v4666, 2147483648
  %v4671 = vmul.f32 %v4668, 1.442695
  %v4672 = vpow.pop %v4671
  %v4673 = vmul.f32 %v4669, 1.442695
  %v4674 = vpow.pop %v4673
  %v4675 = vmul.f32 %v4670, 1.442695
  %v4676 = vpow.pop %v4675
  %v4677 = vadd.f32 %v4672, 1.0
  %v4678 = vadd.f32 %v4674, 1.0
  %v4679 = vadd.f32 %v4676, 1.0
  %v4680 = vrcp.pop %v4677
  %v4681 = vmul.f32 1.0, %v4680
  %v4682 = vrcp.pop %v4678
  %v4683 = vmul.f32 1.0, %v4682
  %v4684 = vrcp.pop %v4679
  %v4685 = vmul.f32 1.0, %v4684
  %v4686 = vtanh.pop %v4667
  %v4687 = vmul.f32 %v4683, %v4378
  %v4688 = vmul.f32 %v4681, %v4686
  %v4689 = vadd.f32 %v4687, %v4688
  %v4690 = vtanh.pop %v4689
  %v4691 = vmul.f32 %v4685, %v4690
  %v4692 = vpack.c.bf16 %v4691, %v4691
  %s4693 = scalar_lea.vmem %s9, 48
  %4694 = vst [vmem:[%s4693] sm:$0xf] %v4692
  %4695 = vmatprep.subr.bf16.mxu0 %v249
  %4696 = vmatpush1.bf16.msra.mxu0 %v248
  %4697 = vmatprep.subr.bf16.mxu0 %v253
  %4698 = vmatpush1.bf16.msra.mxu0 %v252
  %4699 = vmatprep.subr.bf16.mxu0 %v257
  %4700 = vmatpush1.bf16.msra.mxu0 %v256
  %4701 = vmatprep.subr.bf16.mxu0 %v261
  %4702 = vmatpush1.bf16.msra.mxu0 %v260
  %4703 = vmatprep.subr.bf16.mxu0 %v265
  %4704 = vmatpush1.bf16.msra.mxu0 %v264
  %4705 = vmatprep.subr.bf16.mxu0 %v269
  %4706 = vmatpush1.bf16.msra.mxu0 %v268
  %4707 = vmatprep.subr.bf16.mxu0 %v273
  %4708 = vmatpush1.bf16.msra.mxu0 %v272
  %4709 = vmatprep.subr.bf16.mxu0 %v277
  %4710 = vmatpush1.bf16.msra.mxu0 %v276
  %4711 = vmatprep.subr.bf16.mxu0 0
  %4712 = vmatpush1.bf16.msra.mxu0 0
  %4713 = vmatprep.subr.bf16.mxu0 0
  %4714 = vmatpush1.bf16.msra.mxu0 0
  %4715 = vmatprep.subr.bf16.mxu0 0
  %4716 = vmatpush1.bf16.msra.mxu0 0
  %4717 = vmatprep.subr.bf16.mxu0 0
  %4718 = vmatpush1.bf16.msra.mxu0 0
  %4719 = vmatprep.subr.bf16.mxu0 0
  %4720 = vmatpush1.bf16.msra.mxu0 0
  %4721 = vmatprep.subr.bf16.mxu0 0
  %4722 = vmatpush1.bf16.msra.mxu0 0
  %4723 = vmatprep.subr.bf16.mxu0 0
  %4724 = vmatpush1.bf16.msra.mxu0 0
  %4725 = vmatprep.subr.bf16.mxu0 0
  %4726 = vmatpush1.bf16.msra.mxu0 0
  %4727 = vmatprep.mubr.bf16.mxu0 0
  %4728 = vmatmul.mubr.bf16.gmra.mrb[0].mxu0 %v4499
  %v4729 = vpop.f32.mrb[0].mxu0
  %v4730 = vadd.f32 0.0, %v4729
  %v4731 = vpop.f32.mrb[0].mxu0
  %v4732 = vadd.f32 0.0, %v4731
  %v4733 = vpop.f32.mrb[0].mxu0
  %v4734 = vpop.f32.mrb[0].mxu0
  %4735 = vdwg.mxu0
  %4736 = vmatprep.subr.bf16.mxu0 %v251
  %4737 = vmatpush1.bf16.msra.mxu0 %v250
  %4738 = vmatprep.subr.bf16.mxu0 %v255
  %4739 = vmatpush1.bf16.msra.mxu0 %v254
  %4740 = vmatprep.subr.bf16.mxu0 %v259
  %4741 = vmatpush1.bf16.msra.mxu0 %v258
  %4742 = vmatprep.subr.bf16.mxu0 %v263
  %4743 = vmatpush1.bf16.msra.mxu0 %v262
  %4744 = vmatprep.subr.bf16.mxu0 %v267
  %4745 = vmatpush1.bf16.msra.mxu0 %v266
  %4746 = vmatprep.subr.bf16.mxu0 %v271
  %4747 = vmatpush1.bf16.msra.mxu0 %v270
  %4748 = vmatprep.subr.bf16.mxu0 %v275
  %4749 = vmatpush1.bf16.msra.mxu0 %v274
  %4750 = vmatprep.subr.bf16.mxu0 %v279
  %4751 = vmatpush1.bf16.msra.mxu0 %v278
  %4752 = vmatprep.subr.bf16.mxu0 0
  %4753 = vmatpush1.bf16.msra.mxu0 0
  %4754 = vmatprep.subr.bf16.mxu0 0
  %4755 = vmatpush1.bf16.msra.mxu0 0
  %4756 = vmatprep.subr.bf16.mxu0 0
  %4757 = vmatpush1.bf16.msra.mxu0 0
  %4758 = vmatprep.subr.bf16.mxu0 0
  %4759 = vmatpush1.bf16.msra.mxu0 0
  %4760 = vmatprep.subr.bf16.mxu0 0
  %4761 = vmatpush1.bf16.msra.mxu0 0
  %4762 = vmatprep.subr.bf16.mxu0 0
  %4763 = vmatpush1.bf16.msra.mxu0 0
  %4764 = vmatprep.subr.bf16.mxu0 0
  %4765 = vmatpush1.bf16.msra.mxu0 0
  %4766 = vmatprep.subr.bf16.mxu0 0
  %4767 = vmatpush1.bf16.msra.mxu0 0
  %4768 = vmatprep.mubr.bf16.mxu0 0
  %4769 = vmatmul.mubr.bf16.gmra.mrb[0].mxu0 %v4499
  %v4770 = vpop.f32.mrb[0].mxu0
  %v4771 = vadd.f32 0.0, %v4770
  %v4772 = vpop.f32.mrb[0].mxu0
  %v4773 = vadd.f32 0.0, %v4772
  %v4774 = vpop.f32.mrb[0].mxu0
  %v4775 = vpop.f32.mrb[0].mxu0
  %4776 = vdwg.mxu0
  %s4777 = scalar_lea.vmem %s0, 416
  %v4778 = vld [vmem:[%s4777] sm:$0xff]
  %v4779 = vld [vmem:[%s4777 + $0x8] sm:$0xff]
  %v4780 = vld [vmem:[%s4777 + $0x10] sm:$0xff]
  %v4781 = vld [vmem:[%s4777 + $0x18] sm:$0xff]
  %v4782 = vadd.f32 %v4778, %v4730
  %v4783 = vadd.f32 %v4779, %v4732
  %v4784 = vadd.f32 %v4780, %v4771
  %v4785 = vadd.f32 %v4781, %v4773
  %v4786 = vxor.u32 %v4782, 2147483648
  %v4787 = vxor.u32 %v4783, 2147483648
  %v4788 = vxor.u32 %v4784, 2147483648
  %v4789 = vmul.f32 %v4786, 1.442695
  %v4790 = vpow.pop %v4789
  %v4791 = vmul.f32 %v4787, 1.442695
  %v4792 = vpow.pop %v4791
  %v4793 = vmul.f32 %v4788, 1.442695
  %v4794 = vpow.pop %v4793
  %v4795 = vadd.f32 %v4790, 1.0
  %v4796 = vadd.f32 %v4792, 1.0
  %v4797 = vadd.f32 %v4794, 1.0
  %v4798 = vrcp.pop %v4795
  %v4799 = vmul.f32 1.0, %v4798
  %v4800 = vrcp.pop %v4796
  %v4801 = vmul.f32 1.0, %v4800
  %v4802 = vrcp.pop %v4797
  %v4803 = vmul.f32 1.0, %v4802
  %v4804 = vtanh.pop %v4785
  %v4805 = vmul.f32 %v4801, %v4496
  %v4806 = vmul.f32 %v4799, %v4804
  %v4807 = vadd.f32 %v4805, %v4806
  %v4808 = vtanh.pop %v4807
  %v4809 = vmul.f32 %v4803, %v4808
  %v4810 = vpack.c.bf16 %v4809, %v4809
  %4811 = vmatprep.subr.bf16.mxu0 %v525
  %4812 = vmatpush1.bf16.msra.mxu0 %v524
  %4813 = vmatprep.subr.bf16.mxu0 %v529
  %4814 = vmatpush1.bf16.msra.mxu0 %v528
  %4815 = vmatprep.subr.bf16.mxu0 %v533
  %4816 = vmatpush1.bf16.msra.mxu0 %v532
  %4817 = vmatprep.subr.bf16.mxu0 %v537
  %4818 = vmatpush1.bf16.msra.mxu0 %v536
  %4819 = vmatprep.subr.bf16.mxu0 %v541
  %4820 = vmatpush1.bf16.msra.mxu0 %v540
  %4821 = vmatprep.subr.bf16.mxu0 %v545
  %4822 = vmatpush1.bf16.msra.mxu0 %v544
  %4823 = vmatprep.subr.bf16.mxu0 %v549
  %4824 = vmatpush1.bf16.msra.mxu0 %v548
  %4825 = vmatprep.subr.bf16.mxu0 %v553
  %4826 = vmatpush1.bf16.msra.mxu0 %v552
  %4827 = vmatprep.subr.bf16.mxu0 0
  %4828 = vmatpush1.bf16.msra.mxu0 0
  %4829 = vmatprep.subr.bf16.mxu0 0
  %4830 = vmatpush1.bf16.msra.mxu0 0
  %4831 = vmatprep.subr.bf16.mxu0 0
  %4832 = vmatpush1.bf16.msra.mxu0 0
  %4833 = vmatprep.subr.bf16.mxu0 0
  %4834 = vmatpush1.bf16.msra.mxu0 0
  %4835 = vmatprep.subr.bf16.mxu0 0
  %4836 = vmatpush1.bf16.msra.mxu0 0
  %4837 = vmatprep.subr.bf16.mxu0 0
  %4838 = vmatpush1.bf16.msra.mxu0 0
  %4839 = vmatprep.subr.bf16.mxu0 0
  %4840 = vmatpush1.bf16.msra.mxu0 0
  %4841 = vmatprep.subr.bf16.mxu0 0
  %4842 = vmatpush1.bf16.msra.mxu0 0
  %4843 = vmatprep.mubr.bf16.mxu0 0
  %4844 = vmatmul.mubr.bf16.gmra.mrb[0].mxu0 %v4810
  %v4845 = vpop.f32.mrb[0].mxu0
  %v4846 = vadd.f32 0.0, %v4845
  %v4847 = vpop.f32.mrb[0].mxu0
  %v4848 = vadd.f32 0.0, %v4847
  %v4849 = vpop.f32.mrb[0].mxu0
  %v4850 = vpop.f32.mrb[0].mxu0
  %4851 = vdwg.mxu0
  %4852 = vmatprep.subr.bf16.mxu0 %v527
  %4853 = vmatpush1.bf16.msra.mxu0 %v526
  %4854 = vmatprep.subr.bf16.mxu0 %v531
  %4855 = vmatpush1.bf16.msra.mxu0 %v530
  %4856 = vmatprep.subr.bf16.mxu0 %v535
  %4857 = vmatpush1.bf16.msra.mxu0 %v534
  %4858 = vmatprep.subr.bf16.mxu0 %v539
  %4859 = vmatpush1.bf16.msra.mxu0 %v538
  %4860 = vmatprep.subr.bf16.mxu0 %v543
  %4861 = vmatpush1.bf16.msra.mxu0 %v542
  %4862 = vmatprep.subr.bf16.mxu0 %v547
  %4863 = vmatpush1.bf16.msra.mxu0 %v546
  %4864 = vmatprep.subr.bf16.mxu0 %v551
  %4865 = vmatpush1.bf16.msra.mxu0 %v550
  %4866 = vmatprep.subr.bf16.mxu0 %v555
  %4867 = vmatpush1.bf16.msra.mxu0 %v554
  %4868 = vmatprep.subr.bf16.mxu0 0
  %4869 = vmatpush1.bf16.msra.mxu0 0
  %4870 = vmatprep.subr.bf16.mxu0 0
  %4871 = vmatpush1.bf16.msra.mxu0 0
  %4872 = vmatprep.subr.bf16.mxu0 0
  %4873 = vmatpush1.bf16.msra.mxu0 0
  %4874 = vmatprep.subr.bf16.mxu0 0
  %4875 = vmatpush1.bf16.msra.mxu0 0
  %4876 = vmatprep.subr.bf16.mxu0 0
  %4877 = vmatpush1.bf16.msra.mxu0 0
  %4878 = vmatprep.subr.bf16.mxu0 0
  %4879 = vmatpush1.bf16.msra.mxu0 0
  %4880 = vmatprep.subr.bf16.mxu0 0
  %4881 = vmatpush1.bf16.msra.mxu0 0
  %4882 = vmatprep.subr.bf16.mxu0 0
  %4883 = vmatpush1.bf16.msra.mxu0 0
  %4884 = vmatprep.mubr.bf16.mxu0 0
  %4885 = vmatmul.mubr.bf16.gmra.mrb[0].mxu0 %v4810
  %v4886 = vpop.f32.mrb[0].mxu0
  %v4887 = vadd.f32 0.0, %v4886
  %v4888 = vpop.f32.mrb[0].mxu0
  %v4889 = vadd.f32 0.0, %v4888
  %v4890 = vpop.f32.mrb[0].mxu0
  %v4891 = vpop.f32.mrb[0].mxu0
  %4892 = vdwg.mxu0
  %4893 = vmatprep.subr.bf16.mxu0 %v767
  %4894 = vmatpush1.bf16.msra.mxu0 %v766
  %4895 = vmatprep.subr.bf16.mxu0 %v771
  %4896 = vmatpush1.bf16.msra.mxu0 %v770
  %4897 = vmatprep.subr.bf16.mxu0 %v775
  %4898 = vmatpush1.bf16.msra.mxu0 %v774
  %4899 = vmatprep.subr.bf16.mxu0 %v779
  %4900 = vmatpush1.bf16.msra.mxu0 %v778
  %4901 = vmatprep.subr.bf16.mxu0 %v783
  %4902 = vmatpush1.bf16.msra.mxu0 %v782
  %4903 = vmatprep.subr.bf16.mxu0 %v787
  %4904 = vmatpush1.bf16.msra.mxu0 %v786
  %4905 = vmatprep.subr.bf16.mxu0 %v791
  %4906 = vmatpush1.bf16.msra.mxu0 %v790
  %4907 = vmatprep.subr.bf16.mxu0 %v795
  %4908 = vmatpush1.bf16.msra.mxu0 %v794
  %4909 = vmatprep.subr.bf16.mxu0 0
  %4910 = vmatpush1.bf16.msra.mxu0 0
  %4911 = vmatprep.subr.bf16.mxu0 0
  %4912 = vmatpush1.bf16.msra.mxu0 0
  %4913 = vmatprep.subr.bf16.mxu0 0
  %4914 = vmatpush1.bf16.msra.mxu0 0
  %4915 = vmatprep.subr.bf16.mxu0 0
  %4916 = vmatpush1.bf16.msra.mxu0 0
  %4917 = vmatprep.subr.bf16.mxu0 0
  %4918 = vmatpush1.bf16.msra.mxu0 0
  %4919 = vmatprep.subr.bf16.mxu0 0
  %4920 = vmatpush1.bf16.msra.mxu0 0
  %4921 = vmatprep.subr.bf16.mxu0 0
  %4922 = vmatpush1.bf16.msra.mxu0 0
  %4923 = vmatprep.subr.bf16.mxu0 0
  %4924 = vmatpush1.bf16.msra.mxu0 0
  %4925 = vmatprep.mubr.bf16.mxu0 0
  %4926 = vmatmul.mubr.bf16.gmra.mrb[0].mxu0 %v4692
  %v4927 = vpop.f32.mrb[0].mxu0
  %v4928 = vadd.f32 %v4846, %v4927
  %v4929 = vpop.f32.mrb[0].mxu0
  %v4930 = vadd.f32 %v4848, %v4929
  %v4931 = vpop.f32.mrb[0].mxu0
  %v4932 = vpop.f32.mrb[0].mxu0
  %4933 = vdwg.mxu0
  %4934 = vmatprep.subr.bf16.mxu0 %v769
  %4935 = vmatpush1.bf16.msra.mxu0 %v768
  %4936 = vmatprep.subr.bf16.mxu0 %v773
  %4937 = vmatpush1.bf16.msra.mxu0 %v772
  %4938 = vmatprep.subr.bf16.mxu0 %v777
  %4939 = vmatpush1.bf16.msra.mxu0 %v776
  %4940 = vmatprep.subr.bf16.mxu0 %v781
  %4941 = vmatpush1.bf16.msra.mxu0 %v780
  %4942 = vmatprep.subr.bf16.mxu0 %v785
  %4943 = vmatpush1.bf16.msra.mxu0 %v784
  %4944 = vmatprep.subr.bf16.mxu0 %v789
  %4945 = vmatpush1.bf16.msra.mxu0 %v788
  %4946 = vmatprep.subr.bf16.mxu0 %v793
  %4947 = vmatpush1.bf16.msra.mxu0 %v792
  %4948 = vmatprep.subr.bf16.mxu0 %v797
  %4949 = vmatpush1.bf16.msra.mxu0 %v796
  %4950 = vmatprep.subr.bf16.mxu0 0
  %4951 = vmatpush1.bf16.msra.mxu0 0
  %4952 = vmatprep.subr.bf16.mxu0 0
  %4953 = vmatpush1.bf16.msra.mxu0 0
  %4954 = vmatprep.subr.bf16.mxu0 0
  %4955 = vmatpush1.bf16.msra.mxu0 0
  %4956 = vmatprep.subr.bf16.mxu0 0
  %4957 = vmatpush1.bf16.msra.mxu0 0
  %4958 = vmatprep.subr.bf16.mxu0 0
  %4959 = vmatpush1.bf16.msra.mxu0 0
  %4960 = vmatprep.subr.bf16.mxu0 0
  %4961 = vmatpush1.bf16.msra.mxu0 0
  %4962 = vmatprep.subr.bf16.mxu0 0
  %4963 = vmatpush1.bf16.msra.mxu0 0
  %4964 = vmatprep.subr.bf16.mxu0 0
  %4965 = vmatpush1.bf16.msra.mxu0 0
  %4966 = vmatprep.mubr.bf16.mxu0 0
  %4967 = vmatmul.mubr.bf16.gmra.mrb[0].mxu0 %v4692
  %v4968 = vpop.f32.mrb[0].mxu0
  %v4969 = vadd.f32 %v4887, %v4968
  %v4970 = vpop.f32.mrb[0].mxu0
  %v4971 = vadd.f32 %v4889, %v4970
  %v4972 = vpop.f32.mrb[0].mxu0
  %v4973 = vpop.f32.mrb[0].mxu0
  %4974 = vdwg.mxu0
  %v4975 = vadd.f32 %v4928, %v916
  %v4976 = vadd.f32 %v4930, %v920
  %v4977 = vadd.f32 %v4969, %v924
  %v4978 = vadd.f32 %v4971, %v928
  %v4979 = vxor.u32 %v4975, 2147483648
  %v4980 = vxor.u32 %v4976, 2147483648
  %v4981 = vxor.u32 %v4977, 2147483648
  %v4982 = vmul.f32 %v4979, 1.442695
  %v4983 = vpow.pop %v4982
  %v4984 = vmul.f32 %v4980, 1.442695
  %v4985 = vpow.pop %v4984
  %v4986 = vmul.f32 %v4981, 1.442695
  %v4987 = vpow.pop %v4986
  %v4988 = vadd.f32 %v4983, 1.0
  %v4989 = vadd.f32 %v4985, 1.0
  %v4990 = vadd.f32 %v4987, 1.0
  %v4991 = vrcp.pop %v4988
  %v4992 = vmul.f32 1.0, %v4991
  %v4993 = vrcp.pop %v4989
  %v4994 = vmul.f32 1.0, %v4993
  %v4995 = vrcp.pop %v4990
  %v4996 = vmul.f32 1.0, %v4995
  %v4997 = vtanh.pop %v4978
  %v4998 = vmul.f32 %v4994, %v4689
  %v4999 = vmul.f32 %v4992, %v4997
  %v5000 = vadd.f32 %v4998, %v4999
  %v5001 = vtanh.pop %v5000
  %v5002 = vmul.f32 %v4996, %v5001
  %v5003 = vpack.c.bf16 %v5002, %v5002
  %s5004 = scalar_lea.vmem %s9, 52
  %5005 = vst [vmem:[%s5004] sm:$0xf] %v5003
  %5006 = vmatprep.subr.bf16.mxu0 %v249
  %5007 = vmatpush1.bf16.msra.mxu0 %v248
  %5008 = vmatprep.subr.bf16.mxu0 %v253
  %5009 = vmatpush1.bf16.msra.mxu0 %v252
  %5010 = vmatprep.subr.bf16.mxu0 %v257
  %5011 = vmatpush1.bf16.msra.mxu0 %v256
  %5012 = vmatprep.subr.bf16.mxu0 %v261
  %5013 = vmatpush1.bf16.msra.mxu0 %v260
  %5014 = vmatprep.subr.bf16.mxu0 %v265
  %5015 = vmatpush1.bf16.msra.mxu0 %v264
  %5016 = vmatprep.subr.bf16.mxu0 %v269
  %5017 = vmatpush1.bf16.msra.mxu0 %v268
  %5018 = vmatprep.subr.bf16.mxu0 %v273
  %5019 = vmatpush1.bf16.msra.mxu0 %v272
  %5020 = vmatprep.subr.bf16.mxu0 %v277
  %5021 = vmatpush1.bf16.msra.mxu0 %v276
  %5022 = vmatprep.subr.bf16.mxu0 0
  %5023 = vmatpush1.bf16.msra.mxu0 0
  %5024 = vmatprep.subr.bf16.mxu0 0
  %5025 = vmatpush1.bf16.msra.mxu0 0
  %5026 = vmatprep.subr.bf16.mxu0 0
  %5027 = vmatpush1.bf16.msra.mxu0 0
  %5028 = vmatprep.subr.bf16.mxu0 0
  %5029 = vmatpush1.bf16.msra.mxu0 0
  %5030 = vmatprep.subr.bf16.mxu0 0
  %5031 = vmatpush1.bf16.msra.mxu0 0
  %5032 = vmatprep.subr.bf16.mxu0 0
  %5033 = vmatpush1.bf16.msra.mxu0 0
  %5034 = vmatprep.subr.bf16.mxu0 0
  %5035 = vmatpush1.bf16.msra.mxu0 0
  %5036 = vmatprep.subr.bf16.mxu0 0
  %5037 = vmatpush1.bf16.msra.mxu0 0
  %5038 = vmatprep.mubr.bf16.mxu0 0
  %5039 = vmatmul.mubr.bf16.gmra.mrb[0].mxu0 %v4810
  %v5040 = vpop.f32.mrb[0].mxu0
  %v5041 = vadd.f32 0.0, %v5040
  %v5042 = vpop.f32.mrb[0].mxu0
  %v5043 = vadd.f32 0.0, %v5042
  %v5044 = vpop.f32.mrb[0].mxu0
  %v5045 = vpop.f32.mrb[0].mxu0
  %5046 = vdwg.mxu0
  %5047 = vmatprep.subr.bf16.mxu0 %v251
  %5048 = vmatpush1.bf16.msra.mxu0 %v250
  %5049 = vmatprep.subr.bf16.mxu0 %v255
  %5050 = vmatpush1.bf16.msra.mxu0 %v254
  %5051 = vmatprep.subr.bf16.mxu0 %v259
  %5052 = vmatpush1.bf16.msra.mxu0 %v258
  %5053 = vmatprep.subr.bf16.mxu0 %v263
  %5054 = vmatpush1.bf16.msra.mxu0 %v262
  %5055 = vmatprep.subr.bf16.mxu0 %v267
  %5056 = vmatpush1.bf16.msra.mxu0 %v266
  %5057 = vmatprep.subr.bf16.mxu0 %v271
  %5058 = vmatpush1.bf16.msra.mxu0 %v270
  %5059 = vmatprep.subr.bf16.mxu0 %v275
  %5060 = vmatpush1.bf16.msra.mxu0 %v274
  %5061 = vmatprep.subr.bf16.mxu0 %v279
  %5062 = vmatpush1.bf16.msra.mxu0 %v278
  %5063 = vmatprep.subr.bf16.mxu0 0
  %5064 = vmatpush1.bf16.msra.mxu0 0
  %5065 = vmatprep.subr.bf16.mxu0 0
  %5066 = vmatpush1.bf16.msra.mxu0 0
  %5067 = vmatprep.subr.bf16.mxu0 0
  %5068 = vmatpush1.bf16.msra.mxu0 0
  %5069 = vmatprep.subr.bf16.mxu0 0
  %5070 = vmatpush1.bf16.msra.mxu0 0
  %5071 = vmatprep.subr.bf16.mxu0 0
  %5072 = vmatpush1.bf16.msra.mxu0 0
  %5073 = vmatprep.subr.bf16.mxu0 0
  %5074 = vmatpush1.bf16.msra.mxu0 0
  %5075 = vmatprep.subr.bf16.mxu0 0
  %5076 = vmatpush1.bf16.msra.mxu0 0
  %5077 = vmatprep.subr.bf16.mxu0 0
  %5078 = vmatpush1.bf16.msra.mxu0 0
  %5079 = vmatprep.mubr.bf16.mxu0 0
  %5080 = vmatmul.mubr.bf16.gmra.mrb[0].mxu0 %v4810
  %v5081 = vpop.f32.mrb[0].mxu0
  %v5082 = vadd.f32 0.0, %v5081
  %v5083 = vpop.f32.mrb[0].mxu0
  %v5084 = vadd.f32 0.0, %v5083
  %v5085 = vpop.f32.mrb[0].mxu0
  %v5086 = vpop.f32.mrb[0].mxu0
  %5087 = vdwg.mxu0
  %s5088 = scalar_lea.vmem %s0, 448
  %v5089 = vld [vmem:[%s5088] sm:$0xff]
  %v5090 = vld [vmem:[%s5088 + $0x8] sm:$0xff]
  %v5091 = vld [vmem:[%s5088 + $0x10] sm:$0xff]
  %v5092 = vld [vmem:[%s5088 + $0x18] sm:$0xff]
  %v5093 = vadd.f32 %v5089, %v5041
  %v5094 = vadd.f32 %v5090, %v5043
  %v5095 = vadd.f32 %v5091, %v5082
  %v5096 = vadd.f32 %v5092, %v5084
  %v5097 = vxor.u32 %v5093, 2147483648
  %v5098 = vxor.u32 %v5094, 2147483648
  %v5099 = vxor.u32 %v5095, 2147483648
  %v5100 = vmul.f32 %v5097, 1.442695
  %v5101 = vpow.pop %v5100
  %v5102 = vmul.f32 %v5098, 1.442695
  %v5103 = vpow.pop %v5102
  %v5104 = vmul.f32 %v5099, 1.442695
  %v5105 = vpow.pop %v5104
  %v5106 = vadd.f32 %v5101, 1.0
  %v5107 = vadd.f32 %v5103, 1.0
  %v5108 = vadd.f32 %v5105, 1.0
  %v5109 = vrcp.pop %v5106
  %v5110 = vmul.f32 1.0, %v5109
  %v5111 = vrcp.pop %v5107
  %v5112 = vmul.f32 1.0, %v5111
  %v5113 = vrcp.pop %v5108
  %v5114 = vmul.f32 1.0, %v5113
  %v5115 = vtanh.pop %v5096
  %v5116 = vmul.f32 %v5112, %v4807
  %v5117 = vmul.f32 %v5110, %v5115
  %v5118 = vadd.f32 %v5116, %v5117
  %v5119 = vtanh.pop %v5118
  %v5120 = vmul.f32 %v5114, %v5119
  %v5121 = vpack.c.bf16 %v5120, %v5120
  %5122 = vmatprep.subr.bf16.mxu0 %v525
  %5123 = vmatpush1.bf16.msra.mxu0 %v524
  %5124 = vmatprep.subr.bf16.mxu0 %v529
  %5125 = vmatpush1.bf16.msra.mxu0 %v528
  %5126 = vmatprep.subr.bf16.mxu0 %v533
  %5127 = vmatpush1.bf16.msra.mxu0 %v532
  %5128 = vmatprep.subr.bf16.mxu0 %v537
  %5129 = vmatpush1.bf16.msra.mxu0 %v536
  %5130 = vmatprep.subr.bf16.mxu0 %v541
  %5131 = vmatpush1.bf16.msra.mxu0 %v540
  %5132 = vmatprep.subr.bf16.mxu0 %v545
  %5133 = vmatpush1.bf16.msra.mxu0 %v544
  %5134 = vmatprep.subr.bf16.mxu0 %v549
  %5135 = vmatpush1.bf16.msra.mxu0 %v548
  %5136 = vmatprep.subr.bf16.mxu0 %v553
  %5137 = vmatpush1.bf16.msra.mxu0 %v552
  %5138 = vmatprep.subr.bf16.mxu0 0
  %5139 = vmatpush1.bf16.msra.mxu0 0
  %5140 = vmatprep.subr.bf16.mxu0 0
  %5141 = vmatpush1.bf16.msra.mxu0 0
  %5142 = vmatprep.subr.bf16.mxu0 0
  %5143 = vmatpush1.bf16.msra.mxu0 0
  %5144 = vmatprep.subr.bf16.mxu0 0
  %5145 = vmatpush1.bf16.msra.mxu0 0
  %5146 = vmatprep.subr.bf16.mxu0 0
  %5147 = vmatpush1.bf16.msra.mxu0 0
  %5148 = vmatprep.subr.bf16.mxu0 0
  %5149 = vmatpush1.bf16.msra.mxu0 0
  %5150 = vmatprep.subr.bf16.mxu0 0
  %5151 = vmatpush1.bf16.msra.mxu0 0
  %5152 = vmatprep.subr.bf16.mxu0 0
  %5153 = vmatpush1.bf16.msra.mxu0 0
  %5154 = vmatprep.mubr.bf16.mxu0 0
  %5155 = vmatmul.mubr.bf16.gmra.mrb[0].mxu0 %v5121
  %v5156 = vpop.f32.mrb[0].mxu0
  %v5157 = vadd.f32 0.0, %v5156
  %v5158 = vpop.f32.mrb[0].mxu0
  %v5159 = vadd.f32 0.0, %v5158
  %v5160 = vpop.f32.mrb[0].mxu0
  %v5161 = vpop.f32.mrb[0].mxu0
  %5162 = vdwg.mxu0
  %5163 = vmatprep.subr.bf16.mxu0 %v527
  %5164 = vmatpush1.bf16.msra.mxu0 %v526
  %5165 = vmatprep.subr.bf16.mxu0 %v531
  %5166 = vmatpush1.bf16.msra.mxu0 %v530
  %5167 = vmatprep.subr.bf16.mxu0 %v535
  %5168 = vmatpush1.bf16.msra.mxu0 %v534
  %5169 = vmatprep.subr.bf16.mxu0 %v539
  %5170 = vmatpush1.bf16.msra.mxu0 %v538
  %5171 = vmatprep.subr.bf16.mxu0 %v543
  %5172 = vmatpush1.bf16.msra.mxu0 %v542
  %5173 = vmatprep.subr.bf16.mxu0 %v547
  %5174 = vmatpush1.bf16.msra.mxu0 %v546
  %5175 = vmatprep.subr.bf16.mxu0 %v551
  %5176 = vmatpush1.bf16.msra.mxu0 %v550
  %5177 = vmatprep.subr.bf16.mxu0 %v555
  %5178 = vmatpush1.bf16.msra.mxu0 %v554
  %5179 = vmatprep.subr.bf16.mxu0 0
  %5180 = vmatpush1.bf16.msra.mxu0 0
  %5181 = vmatprep.subr.bf16.mxu0 0
  %5182 = vmatpush1.bf16.msra.mxu0 0
  %5183 = vmatprep.subr.bf16.mxu0 0
  %5184 = vmatpush1.bf16.msra.mxu0 0
  %5185 = vmatprep.subr.bf16.mxu0 0
  %5186 = vmatpush1.bf16.msra.mxu0 0
  %5187 = vmatprep.subr.bf16.mxu0 0
  %5188 = vmatpush1.bf16.msra.mxu0 0
  %5189 = vmatprep.subr.bf16.mxu0 0
  %5190 = vmatpush1.bf16.msra.mxu0 0
  %5191 = vmatprep.subr.bf16.mxu0 0
  %5192 = vmatpush1.bf16.msra.mxu0 0
  %5193 = vmatprep.subr.bf16.mxu0 0
  %5194 = vmatpush1.bf16.msra.mxu0 0
  %5195 = vmatprep.mubr.bf16.mxu0 0
  %5196 = vmatmul.mubr.bf16.gmra.mrb[0].mxu0 %v5121
  %v5197 = vpop.f32.mrb[0].mxu0
  %v5198 = vadd.f32 0.0, %v5197
  %v5199 = vpop.f32.mrb[0].mxu0
  %v5200 = vadd.f32 0.0, %v5199
  %v5201 = vpop.f32.mrb[0].mxu0
  %v5202 = vpop.f32.mrb[0].mxu0
  %5203 = vdwg.mxu0
  %5204 = vmatprep.subr.bf16.mxu0 %v767
  %5205 = vmatpush1.bf16.msra.mxu0 %v766
  %5206 = vmatprep.subr.bf16.mxu0 %v771
  %5207 = vmatpush1.bf16.msra.mxu0 %v770
  %5208 = vmatprep.subr.bf16.mxu0 %v775
  %5209 = vmatpush1.bf16.msra.mxu0 %v774
  %5210 = vmatprep.subr.bf16.mxu0 %v779
  %5211 = vmatpush1.bf16.msra.mxu0 %v778
  %5212 = vmatprep.subr.bf16.mxu0 %v783
  %5213 = vmatpush1.bf16.msra.mxu0 %v782
  %5214 = vmatprep.subr.bf16.mxu0 %v787
  %5215 = vmatpush1.bf16.msra.mxu0 %v786
  %5216 = vmatprep.subr.bf16.mxu0 %v791
  %5217 = vmatpush1.bf16.msra.mxu0 %v790
  %5218 = vmatprep.subr.bf16.mxu0 %v795
  %5219 = vmatpush1.bf16.msra.mxu0 %v794
  %5220 = vmatprep.subr.bf16.mxu0 0
  %5221 = vmatpush1.bf16.msra.mxu0 0
  %5222 = vmatprep.subr.bf16.mxu0 0
  %5223 = vmatpush1.bf16.msra.mxu0 0
  %5224 = vmatprep.subr.bf16.mxu0 0
  %5225 = vmatpush1.bf16.msra.mxu0 0
  %5226 = vmatprep.subr.bf16.mxu0 0
  %5227 = vmatpush1.bf16.msra.mxu0 0
  %5228 = vmatprep.subr.bf16.mxu0 0
  %5229 = vmatpush1.bf16.msra.mxu0 0
  %5230 = vmatprep.subr.bf16.mxu0 0
  %5231 = vmatpush1.bf16.msra.mxu0 0
  %5232 = vmatprep.subr.bf16.mxu0 0
  %5233 = vmatpush1.bf16.msra.mxu0 0
  %5234 = vmatprep.subr.bf16.mxu0 0
  %5235 = vmatpush1.bf16.msra.mxu0 0
  %5236 = vmatprep.mubr.bf16.mxu0 0
  %5237 = vmatmul.mubr.bf16.gmra.mrb[0].mxu0 %v5003
  %v5238 = vpop.f32.mrb[0].mxu0
  %v5239 = vadd.f32 %v5157, %v5238
  %v5240 = vpop.f32.mrb[0].mxu0
  %v5241 = vadd.f32 %v5159, %v5240
  %v5242 = vpop.f32.mrb[0].mxu0
  %v5243 = vpop.f32.mrb[0].mxu0
  %5244 = vdwg.mxu0
  %5245 = vmatprep.subr.bf16.mxu0 %v769
  %5246 = vmatpush1.bf16.msra.mxu0 %v768
  %5247 = vmatprep.subr.bf16.mxu0 %v773
  %5248 = vmatpush1.bf16.msra.mxu0 %v772
  %5249 = vmatprep.subr.bf16.mxu0 %v777
  %5250 = vmatpush1.bf16.msra.mxu0 %v776
  %5251 = vmatprep.subr.bf16.mxu0 %v781
  %5252 = vmatpush1.bf16.msra.mxu0 %v780
  %5253 = vmatprep.subr.bf16.mxu0 %v785
  %5254 = vmatpush1.bf16.msra.mxu0 %v784
  %5255 = vmatprep.subr.bf16.mxu0 %v789
  %5256 = vmatpush1.bf16.msra.mxu0 %v788
  %5257 = vmatprep.subr.bf16.mxu0 %v793
  %5258 = vmatpush1.bf16.msra.mxu0 %v792
  %5259 = vmatprep.subr.bf16.mxu0 %v797
  %5260 = vmatpush1.bf16.msra.mxu0 %v796
  %5261 = vmatprep.subr.bf16.mxu0 0
  %5262 = vmatpush1.bf16.msra.mxu0 0
  %5263 = vmatprep.subr.bf16.mxu0 0
  %5264 = vmatpush1.bf16.msra.mxu0 0
  %5265 = vmatprep.subr.bf16.mxu0 0
  %5266 = vmatpush1.bf16.msra.mxu0 0
  %5267 = vmatprep.subr.bf16.mxu0 0
  %5268 = vmatpush1.bf16.msra.mxu0 0
  %5269 = vmatprep.subr.bf16.mxu0 0
  %5270 = vmatpush1.bf16.msra.mxu0 0
  %5271 = vmatprep.subr.bf16.mxu0 0
  %5272 = vmatpush1.bf16.msra.mxu0 0
  %5273 = vmatprep.subr.bf16.mxu0 0
  %5274 = vmatpush1.bf16.msra.mxu0 0
  %5275 = vmatprep.subr.bf16.mxu0 0
  %5276 = vmatpush1.bf16.msra.mxu0 0
  %5277 = vmatprep.mubr.bf16.mxu0 0
  %5278 = vmatmul.mubr.bf16.gmra.mrb[0].mxu0 %v5003
  %v5279 = vpop.f32.mrb[0].mxu0
  %v5280 = vadd.f32 %v5198, %v5279
  %v5281 = vpop.f32.mrb[0].mxu0
  %v5282 = vadd.f32 %v5200, %v5281
  %v5283 = vpop.f32.mrb[0].mxu0
  %v5284 = vpop.f32.mrb[0].mxu0
  %5285 = vdwg.mxu0
  %v5286 = vadd.f32 %v5239, %v916
  %v5287 = vadd.f32 %v5241, %v920
  %v5288 = vadd.f32 %v5280, %v924
  %v5289 = vadd.f32 %v5282, %v928
  %v5290 = vxor.u32 %v5286, 2147483648
  %v5291 = vxor.u32 %v5287, 2147483648
  %v5292 = vxor.u32 %v5288, 2147483648
  %v5293 = vmul.f32 %v5290, 1.442695
  %v5294 = vpow.pop %v5293
  %v5295 = vmul.f32 %v5291, 1.442695
  %v5296 = vpow.pop %v5295
  %v5297 = vmul.f32 %v5292, 1.442695
  %v5298 = vpow.pop %v5297
  %v5299 = vadd.f32 %v5294, 1.0
  %v5300 = vadd.f32 %v5296, 1.0
  %v5301 = vadd.f32 %v5298, 1.0
  %v5302 = vrcp.pop %v5299
  %v5303 = vmul.f32 1.0, %v5302
  %v5304 = vrcp.pop %v5300
  %v5305 = vmul.f32 1.0, %v5304
  %v5306 = vrcp.pop %v5301
  %v5307 = vmul.f32 1.0, %v5306
  %v5308 = vtanh.pop %v5289
  %v5309 = vmul.f32 %v5305, %v5000
  %v5310 = vmul.f32 %v5303, %v5308
  %v5311 = vadd.f32 %v5309, %v5310
  %v5312 = vtanh.pop %v5311
  %v5313 = vmul.f32 %v5307, %v5312
  %v5314 = vpack.c.bf16 %v5313, %v5313
  %s5315 = scalar_lea.vmem %s9, 56
  %5316 = vst [vmem:[%s5315] sm:$0xf] %v5314
  %5317 = vmatprep.subr.bf16.mxu0 %v249
  %5318 = vmatpush1.bf16.msra.mxu0 %v248
  %5319 = vmatprep.subr.bf16.mxu0 %v253
  %5320 = vmatpush1.bf16.msra.mxu0 %v252
  %5321 = vmatprep.subr.bf16.mxu0 %v257
  %5322 = vmatpush1.bf16.msra.mxu0 %v256
  %5323 = vmatprep.subr.bf16.mxu0 %v261
  %5324 = vmatpush1.bf16.msra.mxu0 %v260
  %5325 = vmatprep.subr.bf16.mxu0 %v265
  %5326 = vmatpush1.bf16.msra.mxu0 %v264
  %5327 = vmatprep.subr.bf16.mxu0 %v269
  %5328 = vmatpush1.bf16.msra.mxu0 %v268
  %5329 = vmatprep.subr.bf16.mxu0 %v273
  %5330 = vmatpush1.bf16.msra.mxu0 %v272
  %5331 = vmatprep.subr.bf16.mxu0 %v277
  %5332 = vmatpush1.bf16.msra.mxu0 %v276
  %5333 = vmatprep.subr.bf16.mxu0 0
  %5334 = vmatpush1.bf16.msra.mxu0 0
  %5335 = vmatprep.subr.bf16.mxu0 0
  %5336 = vmatpush1.bf16.msra.mxu0 0
  %5337 = vmatprep.subr.bf16.mxu0 0
  %5338 = vmatpush1.bf16.msra.mxu0 0
  %5339 = vmatprep.subr.bf16.mxu0 0
  %5340 = vmatpush1.bf16.msra.mxu0 0
  %5341 = vmatprep.subr.bf16.mxu0 0
  %5342 = vmatpush1.bf16.msra.mxu0 0
  %5343 = vmatprep.subr.bf16.mxu0 0
  %5344 = vmatpush1.bf16.msra.mxu0 0
  %5345 = vmatprep.subr.bf16.mxu0 0
  %5346 = vmatpush1.bf16.msra.mxu0 0
  %5347 = vmatprep.subr.bf16.mxu0 0
  %5348 = vmatpush1.bf16.msra.mxu0 0
  %5349 = vmatprep.mubr.bf16.mxu0 0
  %5350 = vmatmul.mubr.bf16.gmra.mrb[0].mxu0 %v5121
  %v5351 = vpop.f32.mrb[0].mxu0
  %v5352 = vadd.f32 0.0, %v5351
  %v5353 = vpop.f32.mrb[0].mxu0
  %v5354 = vadd.f32 0.0, %v5353
  %v5355 = vpop.f32.mrb[0].mxu0
  %v5356 = vpop.f32.mrb[0].mxu0
  %5357 = vdwg.mxu0
  %5358 = vmatprep.subr.bf16.mxu0 %v251
  %5359 = vmatpush1.bf16.msra.mxu0 %v250
  %5360 = vmatprep.subr.bf16.mxu0 %v255
  %5361 = vmatpush1.bf16.msra.mxu0 %v254
  %5362 = vmatprep.subr.bf16.mxu0 %v259
  %5363 = vmatpush1.bf16.msra.mxu0 %v258
  %5364 = vmatprep.subr.bf16.mxu0 %v263
  %5365 = vmatpush1.bf16.msra.mxu0 %v262
  %5366 = vmatprep.subr.bf16.mxu0 %v267
  %5367 = vmatpush1.bf16.msra.mxu0 %v266
  %5368 = vmatprep.subr.bf16.mxu0 %v271
  %5369 = vmatpush1.bf16.msra.mxu0 %v270
  %5370 = vmatprep.subr.bf16.mxu0 %v275
  %5371 = vmatpush1.bf16.msra.mxu0 %v274
  %5372 = vmatprep.subr.bf16.mxu0 %v279
  %5373 = vmatpush1.bf16.msra.mxu0 %v278
  %5374 = vmatprep.subr.bf16.mxu0 0
  %5375 = vmatpush1.bf16.msra.mxu0 0
  %5376 = vmatprep.subr.bf16.mxu0 0
  %5377 = vmatpush1.bf16.msra.mxu0 0
  %5378 = vmatprep.subr.bf16.mxu0 0
  %5379 = vmatpush1.bf16.msra.mxu0 0
  %5380 = vmatprep.subr.bf16.mxu0 0
  %5381 = vmatpush1.bf16.msra.mxu0 0
  %5382 = vmatprep.subr.bf16.mxu0 0
  %5383 = vmatpush1.bf16.msra.mxu0 0
  %5384 = vmatprep.subr.bf16.mxu0 0
  %5385 = vmatpush1.bf16.msra.mxu0 0
  %5386 = vmatprep.subr.bf16.mxu0 0
  %5387 = vmatpush1.bf16.msra.mxu0 0
  %5388 = vmatprep.subr.bf16.mxu0 0
  %5389 = vmatpush1.bf16.msra.mxu0 0
  %5390 = vmatprep.mubr.bf16.mxu0 0
  %5391 = vmatmul.mubr.bf16.gmra.mrb[0].mxu0 %v5121
  %v5392 = vpop.f32.mrb[0].mxu0
  %v5393 = vadd.f32 0.0, %v5392
  %v5394 = vpop.f32.mrb[0].mxu0
  %v5395 = vadd.f32 0.0, %v5394
  %v5396 = vpop.f32.mrb[0].mxu0
  %v5397 = vpop.f32.mrb[0].mxu0
  %5398 = vdwg.mxu0
  %s5399 = scalar_lea.vmem %s0, 480
  %v5400 = vld [vmem:[%s5399] sm:$0xff]
  %v5401 = vld [vmem:[%s5399 + $0x8] sm:$0xff]
  %v5402 = vld [vmem:[%s5399 + $0x10] sm:$0xff]
  %v5403 = vld [vmem:[%s5399 + $0x18] sm:$0xff]
  %v5404 = vadd.f32 %v5400, %v5352
  %v5405 = vadd.f32 %v5401, %v5354
  %v5406 = vadd.f32 %v5402, %v5393
  %v5407 = vadd.f32 %v5403, %v5395
  %v5408 = vxor.u32 %v5404, 2147483648
  %v5409 = vxor.u32 %v5405, 2147483648
  %v5410 = vxor.u32 %v5406, 2147483648
  %v5411 = vmul.f32 %v5408, 1.442695
  %v5412 = vpow.pop %v5411
  %v5413 = vmul.f32 %v5409, 1.442695
  %v5414 = vpow.pop %v5413
  %v5415 = vmul.f32 %v5410, 1.442695
  %v5416 = vpow.pop %v5415
  %v5417 = vadd.f32 %v5412, 1.0
  %v5418 = vadd.f32 %v5414, 1.0
  %v5419 = vadd.f32 %v5416, 1.0
  %v5420 = vrcp.pop %v5417
  %v5421 = vmul.f32 1.0, %v5420
  %v5422 = vrcp.pop %v5418
  %v5423 = vmul.f32 1.0, %v5422
  %v5424 = vrcp.pop %v5419
  %v5425 = vmul.f32 1.0, %v5424
  %v5426 = vtanh.pop %v5407
  %v5427 = vmul.f32 %v5423, %v5118
  %v5428 = vmul.f32 %v5421, %v5426
  %v5429 = vadd.f32 %v5427, %v5428
  %v5430 = vtanh.pop %v5429
  %v5431 = vmul.f32 %v5425, %v5430
  %v5432 = vpack.c.bf16 %v5431, %v5431
  %5433 = vmatprep.subr.bf16.mxu0 %v525
  %5434 = vmatpush1.bf16.msra.mxu0 %v524
  %5435 = vmatprep.subr.bf16.mxu0 %v529
  %5436 = vmatpush1.bf16.msra.mxu0 %v528
  %5437 = vmatprep.subr.bf16.mxu0 %v533
  %5438 = vmatpush1.bf16.msra.mxu0 %v532
  %5439 = vmatprep.subr.bf16.mxu0 %v537
  %5440 = vmatpush1.bf16.msra.mxu0 %v536
  %5441 = vmatprep.subr.bf16.mxu0 %v541
  %5442 = vmatpush1.bf16.msra.mxu0 %v540
  %5443 = vmatprep.subr.bf16.mxu0 %v545
  %5444 = vmatpush1.bf16.msra.mxu0 %v544
  %5445 = vmatprep.subr.bf16.mxu0 %v549
  %5446 = vmatpush1.bf16.msra.mxu0 %v548
  %5447 = vmatprep.subr.bf16.mxu0 %v553
  %5448 = vmatpush1.bf16.msra.mxu0 %v552
  %5449 = vmatprep.subr.bf16.mxu0 0
  %5450 = vmatpush1.bf16.msra.mxu0 0
  %5451 = vmatprep.subr.bf16.mxu0 0
  %5452 = vmatpush1.bf16.msra.mxu0 0
  %5453 = vmatprep.subr.bf16.mxu0 0
  %5454 = vmatpush1.bf16.msra.mxu0 0
  %5455 = vmatprep.subr.bf16.mxu0 0
  %5456 = vmatpush1.bf16.msra.mxu0 0
  %5457 = vmatprep.subr.bf16.mxu0 0
  %5458 = vmatpush1.bf16.msra.mxu0 0
  %5459 = vmatprep.subr.bf16.mxu0 0
  %5460 = vmatpush1.bf16.msra.mxu0 0
  %5461 = vmatprep.subr.bf16.mxu0 0
  %5462 = vmatpush1.bf16.msra.mxu0 0
  %5463 = vmatprep.subr.bf16.mxu0 0
  %5464 = vmatpush1.bf16.msra.mxu0 0
  %5465 = vmatprep.mubr.bf16.mxu0 0
  %5466 = vmatmul.mubr.bf16.gmra.mrb[0].mxu0 %v5432
  %v5467 = vpop.f32.mrb[0].mxu0
  %v5468 = vadd.f32 0.0, %v5467
  %v5469 = vpop.f32.mrb[0].mxu0
  %v5470 = vadd.f32 0.0, %v5469
  %v5471 = vpop.f32.mrb[0].mxu0
  %v5472 = vpop.f32.mrb[0].mxu0
  %5473 = vdwg.mxu0
  %5474 = vmatprep.subr.bf16.mxu0 %v527
  %5475 = vmatpush1.bf16.msra.mxu0 %v526
  %5476 = vmatprep.subr.bf16.mxu0 %v531
  %5477 = vmatpush1.bf16.msra.mxu0 %v530
  %5478 = vmatprep.subr.bf16.mxu0 %v535
  %5479 = vmatpush1.bf16.msra.mxu0 %v534
  %5480 = vmatprep.subr.bf16.mxu0 %v539
  %5481 = vmatpush1.bf16.msra.mxu0 %v538
  %5482 = vmatprep.subr.bf16.mxu0 %v543
  %5483 = vmatpush1.bf16.msra.mxu0 %v542
  %5484 = vmatprep.subr.bf16.mxu0 %v547
  %5485 = vmatpush1.bf16.msra.mxu0 %v546
  %5486 = vmatprep.subr.bf16.mxu0 %v551
  %5487 = vmatpush1.bf16.msra.mxu0 %v550
  %5488 = vmatprep.subr.bf16.mxu0 %v555
  %5489 = vmatpush1.bf16.msra.mxu0 %v554
  %5490 = vmatprep.subr.bf16.mxu0 0
  %5491 = vmatpush1.bf16.msra.mxu0 0
  %5492 = vmatprep.subr.bf16.mxu0 0
  %5493 = vmatpush1.bf16.msra.mxu0 0
  %5494 = vmatprep.subr.bf16.mxu0 0
  %5495 = vmatpush1.bf16.msra.mxu0 0
  %5496 = vmatprep.subr.bf16.mxu0 0
  %5497 = vmatpush1.bf16.msra.mxu0 0
  %5498 = vmatprep.subr.bf16.mxu0 0
  %5499 = vmatpush1.bf16.msra.mxu0 0
  %5500 = vmatprep.subr.bf16.mxu0 0
  %5501 = vmatpush1.bf16.msra.mxu0 0
  %5502 = vmatprep.subr.bf16.mxu0 0
  %5503 = vmatpush1.bf16.msra.mxu0 0
  %5504 = vmatprep.subr.bf16.mxu0 0
  %5505 = vmatpush1.bf16.msra.mxu0 0
  %5506 = vmatprep.mubr.bf16.mxu0 0
  %5507 = vmatmul.mubr.bf16.gmra.mrb[0].mxu0 %v5432
  %v5508 = vpop.f32.mrb[0].mxu0
  %v5509 = vadd.f32 0.0, %v5508
  %v5510 = vpop.f32.mrb[0].mxu0
  %v5511 = vadd.f32 0.0, %v5510
  %v5512 = vpop.f32.mrb[0].mxu0
  %v5513 = vpop.f32.mrb[0].mxu0
  %5514 = vdwg.mxu0
  %5515 = vmatprep.subr.bf16.mxu0 %v767
  %5516 = vmatpush1.bf16.msra.mxu0 %v766
  %5517 = vmatprep.subr.bf16.mxu0 %v771
  %5518 = vmatpush1.bf16.msra.mxu0 %v770
  %5519 = vmatprep.subr.bf16.mxu0 %v775
  %5520 = vmatpush1.bf16.msra.mxu0 %v774
  %5521 = vmatprep.subr.bf16.mxu0 %v779
  %5522 = vmatpush1.bf16.msra.mxu0 %v778
  %5523 = vmatprep.subr.bf16.mxu0 %v783
  %5524 = vmatpush1.bf16.msra.mxu0 %v782
  %5525 = vmatprep.subr.bf16.mxu0 %v787
  %5526 = vmatpush1.bf16.msra.mxu0 %v786
  %5527 = vmatprep.subr.bf16.mxu0 %v791
  %5528 = vmatpush1.bf16.msra.mxu0 %v790
  %5529 = vmatprep.subr.bf16.mxu0 %v795
  %5530 = vmatpush1.bf16.msra.mxu0 %v794
  %5531 = vmatprep.subr.bf16.mxu0 0
  %5532 = vmatpush1.bf16.msra.mxu0 0
  %5533 = vmatprep.subr.bf16.mxu0 0
  %5534 = vmatpush1.bf16.msra.mxu0 0
  %5535 = vmatprep.subr.bf16.mxu0 0
  %5536 = vmatpush1.bf16.msra.mxu0 0
  %5537 = vmatprep.subr.bf16.mxu0 0
  %5538 = vmatpush1.bf16.msra.mxu0 0
  %5539 = vmatprep.subr.bf16.mxu0 0
  %5540 = vmatpush1.bf16.msra.mxu0 0
  %5541 = vmatprep.subr.bf16.mxu0 0
  %5542 = vmatpush1.bf16.msra.mxu0 0
  %5543 = vmatprep.subr.bf16.mxu0 0
  %5544 = vmatpush1.bf16.msra.mxu0 0
  %5545 = vmatprep.subr.bf16.mxu0 0
  %5546 = vmatpush1.bf16.msra.mxu0 0
  %5547 = vmatprep.mubr.bf16.mxu0 0
  %5548 = vmatmul.mubr.bf16.gmra.mrb[0].mxu0 %v5314
  %v5549 = vpop.f32.mrb[0].mxu0
  %v5550 = vadd.f32 %v5468, %v5549
  %v5551 = vpop.f32.mrb[0].mxu0
  %v5552 = vadd.f32 %v5470, %v5551
  %v5553 = vpop.f32.mrb[0].mxu0
  %v5554 = vpop.f32.mrb[0].mxu0
  %5555 = vdwg.mxu0
  %5556 = vmatprep.subr.bf16.mxu0 %v769
  %5557 = vmatpush1.bf16.msra.mxu0 %v768
  %5558 = vmatprep.subr.bf16.mxu0 %v773
  %5559 = vmatpush1.bf16.msra.mxu0 %v772
  %5560 = vmatprep.subr.bf16.mxu0 %v777
  %5561 = vmatpush1.bf16.msra.mxu0 %v776
  %5562 = vmatprep.subr.bf16.mxu0 %v781
  %5563 = vmatpush1.bf16.msra.mxu0 %v780
  %5564 = vmatprep.subr.bf16.mxu0 %v785
  %5565 = vmatpush1.bf16.msra.mxu0 %v784
  %5566 = vmatprep.subr.bf16.mxu0 %v789
  %5567 = vmatpush1.bf16.msra.mxu0 %v788
  %5568 = vmatprep.subr.bf16.mxu0 %v793
  %5569 = vmatpush1.bf16.msra.mxu0 %v792
  %5570 = vmatprep.subr.bf16.mxu0 %v797
  %5571 = vmatpush1.bf16.msra.mxu0 %v796
  %5572 = vmatprep.subr.bf16.mxu0 0
  %5573 = vmatpush1.bf16.msra.mxu0 0
  %5574 = vmatprep.subr.bf16.mxu0 0
  %5575 = vmatpush1.bf16.msra.mxu0 0
  %5576 = vmatprep.subr.bf16.mxu0 0
  %5577 = vmatpush1.bf16.msra.mxu0 0
  %5578 = vmatprep.subr.bf16.mxu0 0
  %5579 = vmatpush1.bf16.msra.mxu0 0
  %5580 = vmatprep.subr.bf16.mxu0 0
  %5581 = vmatpush1.bf16.msra.mxu0 0
  %5582 = vmatprep.subr.bf16.mxu0 0
  %5583 = vmatpush1.bf16.msra.mxu0 0
  %5584 = vmatprep.subr.bf16.mxu0 0
  %5585 = vmatpush1.bf16.msra.mxu0 0
  %5586 = vmatprep.subr.bf16.mxu0 0
  %5587 = vmatpush1.bf16.msra.mxu0 0
  %5588 = vmatprep.mubr.bf16.mxu0 0
  %5589 = vmatmul.mubr.bf16.gmra.mrb[0].mxu0 %v5314
  %v5590 = vpop.f32.mrb[0].mxu0
  %v5591 = vadd.f32 %v5509, %v5590
  %v5592 = vpop.f32.mrb[0].mxu0
  %v5593 = vadd.f32 %v5511, %v5592
  %v5594 = vpop.f32.mrb[0].mxu0
  %v5595 = vpop.f32.mrb[0].mxu0
  %5596 = vdwg.mxu0
  %v5597 = vadd.f32 %v5550, %v916
  %v5598 = vadd.f32 %v5552, %v920
  %v5599 = vadd.f32 %v5591, %v924
  %v5600 = vadd.f32 %v5593, %v928
  %v5601 = vxor.u32 %v5597, 2147483648
  %v5602 = vxor.u32 %v5598, 2147483648
  %v5603 = vxor.u32 %v5599, 2147483648
  %v5604 = vmul.f32 %v5601, 1.442695
  %v5605 = vpow.pop %v5604
  %v5606 = vmul.f32 %v5602, 1.442695
  %v5607 = vpow.pop %v5606
  %v5608 = vmul.f32 %v5603, 1.442695
  %v5609 = vpow.pop %v5608
  %v5610 = vadd.f32 %v5605, 1.0
  %v5611 = vadd.f32 %v5607, 1.0
  %v5612 = vadd.f32 %v5609, 1.0
  %v5613 = vrcp.pop %v5610
  %v5614 = vmul.f32 1.0, %v5613
  %v5615 = vrcp.pop %v5611
  %v5616 = vmul.f32 1.0, %v5615
  %v5617 = vrcp.pop %v5612
  %v5618 = vmul.f32 1.0, %v5617
  %v5619 = vtanh.pop %v5600
  %v5620 = vmul.f32 %v5616, %v5311
  %v5621 = vmul.f32 %v5614, %v5619
  %v5622 = vadd.f32 %v5620, %v5621
  %v5623 = vtanh.pop %v5622
  %v5624 = vmul.f32 %v5618, %v5623
  %v5625 = vpack.c.bf16 %v5624, %v5624
  %s5626 = scalar_lea.vmem %s9, 60
  %5627 = vst [vmem:[%s5626] sm:$0xf] %v5625
  %5628 = vst [vmem:[#allocation2] sm:$0xff] %v5431
  %5629 = vst [vmem:[#allocation3] sm:$0xff] %v5429
  %5630 = vst [vmem:[#allocation4] sm:$0xff] %v5624
  %5631 = vst [vmem:[#allocation5] sm:$0xff] %v5622
  // Predicated region
  $region42: #{rnn_forward.2} parent=0 // pred_check
    %p5632 = pneg %p38
  $region43: #{rnn_forward.2} parent=0 // pred_check_branch
    %5634 = sbr.rel (%p5632) target = $region45
  $region44: #{rnn_forward.2} parent=0 // pred_region
    %5635 = vst [vmem:[%s10] sm:$0xff] %v5431
    %5636 = vst [vmem:[%s11] sm:$0xff] %v5429
    %5637 = vst [vmem:[%s12] sm:$0xff] %v5624
    %5638 = vst [vmem:[%s13] sm:$0xff] %v5622
  $region45: #{rnn_forward.2} parent=0 // pred_fallthru
    _
  // Predicated region
  $region46: #{rnn_forward.2} parent=0 // pred_check
    _
  $region47: #{rnn_forward.2} parent=0 // pred_check_branch
    %5640 = sbr.rel (0) target = $region49
  $region48: #{rnn_forward.2} parent=0 // pred_region
    _
  $region49: #{rnn_forward.2} parent=0 // pred_fallthru
    _
  // Predicated region
  $region50: #{rnn_forward.2} parent=0 // pred_check
    _
  $region51: #{rnn_forward.2} parent=0 // pred_check_branch
    %5642 = sbr.rel (0) target = $region53
  $region52: #{rnn_forward.2} parent=0 // pred_region
    _
  $region53: #{rnn_forward.2} parent=0 // pred_fallthru
    _
  // Predicated region
  $region54: #{rnn_forward.2} parent=0 // pred_check
    _
  $region55: #{rnn_forward.2} parent=0 // pred_check_branch
    %5644 = sbr.rel (0) target = $region57
  $region56: #{rnn_forward.2} parent=0 // pred_region
    _
  $region57: #{rnn_forward.2} parent=0 // pred_fallthru
    _
  // Predicated region
  $region58: #{rnn_forward.2} parent=0 // pred_check
    _
  $region59: #{rnn_forward.2} parent=0 // pred_check_branch
    %5646 = sbr.rel (0) target = $region61
  $region60: #{rnn_forward.2} parent=0 // pred_region
    _
  $region61: #{rnn_forward.2} parent=0 // pred_fallthru
    _
  // Predicated region
  $region62: #{rnn_forward.2} parent=0 // pred_check
    _
  $region63: #{rnn_forward.2} parent=0 // pred_check_branch
    %5648 = sbr.rel (0) target = $region65
  $region64: #{rnn_forward.2} parent=0 // pred_region
    _
  $region65: #{rnn_forward.2} parent=0 // pred_fallthru
    _
  // Predicated region
  $region66: #{rnn_forward.2} parent=0 // pred_check
    _
  $region67: #{rnn_forward.2} parent=0 // pred_check_branch
    %5650 = sbr.rel (0) target = $region69
  $region68: #{rnn_forward.2} parent=0 // pred_region
    _
  $region69: #{rnn_forward.2} parent=0 // pred_fallthru
    _
  // Predicated region
  $region70: #{rnn_forward.2} parent=0 // pred_check
    _
  $region71: #{rnn_forward.2} parent=0 // pred_check_branch
    %5652 = sbr.rel (0) target = $region73
  $region72: #{rnn_forward.2} parent=0 // pred_region
    _
  $region73: #{rnn_forward.2} parent=0 // pred_fallthru
    _
  // Predicated region
  $region74: #{rnn_forward.2} parent=0 // pred_check
    _
  $region75: #{rnn_forward.2} parent=0 // pred_check_branch
    %5654 = sbr.rel (0) target = $region77
  $region76: #{rnn_forward.2} parent=0 // pred_region
    _
  $region77: #{rnn_forward.2} parent=0 // pred_fallthru
    _
  // Predicated region
  $region78: #{rnn_forward.2} parent=0 // pred_check
    _
  $region79: #{rnn_forward.2} parent=0 // pred_check_branch
    %5656 = sbr.rel (0) target = $region81
  $region80: #{rnn_forward.2} parent=0 // pred_region
    _
  $region81: #{rnn_forward.2} parent=0 // pred_fallthru
    _
  // Predicated region
  $region82: #{rnn_forward.2} parent=0 // pred_check
    _
  $region83: #{rnn_forward.2} parent=0 // pred_check_branch
    %5658 = sbr.rel (0) target = $region85
  $region84: #{rnn_forward.2} parent=0 // pred_region
    _
  $region85: #{rnn_forward.2} parent=0 // pred_fallthru
    _

</llo_original>
